<compile_context>
chip_gen: v7x
topology: tpu7x:2x2x1
jax: 0.10.0
libtpu: 0.0.40
codegen_flags: <defaults>
</compile_context>

<pallas_src>
from functools import partial

import jax
import jax.numpy as jnp
from jax import lax
from jax.experimental import pallas as pl
from jax.experimental.pallas import tpu as pltpu

MATMUL_DTYPE = jnp.float32  # f32 keeps PyTorch-f32 numerics at demo scale (see TODO above)

_TAPS = tuple((dy, dx) for dy in range(3) for dx in range(3))


# ----------------------------------------------------------------------------
# In-kernel helpers
# ----------------------------------------------------------------------------
def _pad_into(xp_ref, x, H, W, C, dtype):
    """Write x into the interior of the padded scratch; zero ONLY the border strips."""
    N = x.shape[0]
    zrow = jnp.zeros((N, 1, W + 2, C), dtype)
    zcol = jnp.zeros((N, H + 2, 1, C), dtype)
    xp_ref[:, 0:1, :, :] = zrow
    xp_ref[:, H + 1:H + 2, :, :] = zrow
    xp_ref[:, :, 0:1, :] = zcol
    xp_ref[:, :, W + 1:W + 2, :] = zcol
    # NOTE: interior lands at sublane offset 1 (unavoidable with a padded scratch);
    # it is a single small store at demo scale.
    xp_ref[:, 1:H + 1, 1:W + 1, :] = x.astype(dtype)


def _im2col(xp_ref, col_ref, M, H, W, C):
    """Pack the 9 taps into one (M, 9*C) slab -> single MXU contraction with K=9*C."""
    # TODO(synk): at production Cin (e.g. 64) use a 3*C / lane-aligned layout instead.
    for k, (dy, dx) in enumerate(_TAPS):
        col_ref[:, k * C:(k + 1) * C] = (
            xp_ref[:, dy:dy + H, dx:dx + W, :].reshape(M, C))


def _bn_affine(acc, gamma, beta, inv_cnt, eps):
    """Training-mode BatchNorm affine from in-kernel totals (acc is (M, C) f32)."""
    mean = jnp.sum(acc, axis=0, keepdims=True) * inv_cnt
    var = jnp.sum(acc * acc, axis=0, keepdims=True) * inv_cnt - mean * mean
    scale = gamma * lax.rsqrt(var + eps)
    shift = beta - mean * scale
    return scale, shift


# ----------------------------------------------------------------------------
# Single fused kernel: conv1 -> BN1 -> ReLU -> conv2 -> BN2 -> ReLU
# ----------------------------------------------------------------------------
def _double_conv_kernel(x_ref, w1_ref, w2_ref, bn_ref, o_ref,
                        xp_ref, col1_ref, yp_ref, col2_ref,
                        *, N, H, W, Cin, Cout, eps):
    M = N * H * W
    inv_cnt = 1.0 / float(M)

    # ---- conv1: border-zero pad -> im2col -> one MXU dot (K = 9*Cin) ----
    # conv bias intentionally omitted: it cancels exactly in training-mode BN.
    _pad_into(xp_ref, x_ref[...], H, W, Cin, MATMUL_DTYPE)
    _im2col(xp_ref, col1_ref, M, H, W, Cin)
    acc1 = jnp.dot(col1_ref[...], w1_ref[...],
                   preferred_element_type=jnp.float32)          # (M, Cout) f32

    # ---- BN1 (batch totals computed in-kernel) + ReLU ----
    scale1, shift1 = _bn_affine(acc1, bn_ref[0:1, :], bn_ref[1:2, :], inv_cnt, eps)
    z1 = jnp.maximum(acc1 * scale1 + shift1, 0.0)

    # ---- conv2 on the normalized activations (never touches HBM) ----
    _pad_into(yp_ref, z1.reshape(N, H, W, Cout), H, W, Cout, MATMUL_DTYPE)
    _im2col(yp_ref, col2_ref, M, H, W, Cout)
    acc2 = jnp.dot(col2_ref[...], w2_ref[...],
                   preferred_element_type=jnp.float32)          # (M, Cout) f32

    # ---- BN2 + ReLU, written flat (no tile-crossing reshape in-kernel) ----
    scale2, shift2 = _bn_affine(acc2, bn_ref[2:3, :], bn_ref[3:4, :], inv_cnt, eps)
    o_ref[...] = jnp.maximum(acc2 * scale2 + shift2, 0.0)


# ----------------------------------------------------------------------------
# double_conv forward: NCHW in / NCHW out
# ----------------------------------------------------------------------------
def double_conv_forward(x_nchw, params, eps=1e-5):
    N, Cin, H, W = x_nchw.shape
    Cout = params["w1"].shape[-1]
    M = N * H * W

    # TODO(synk): at production sizes fuse these transposes into the kernel (in-kernel
    # XLU transpose of the input block, NCHW-layout out_spec) to drop two full-tensor
    # HBM round trips; at the 16x16 demo they are negligible.
    x = jnp.transpose(x_nchw, (0, 2, 3, 1)).astype(jnp.float32)   # NCHW -> NHWC

    w1 = params["w1"].reshape(9 * Cin, Cout).astype(MATMUL_DTYPE)   # (9*Cin, Cout)
    w2 = params["w2"].reshape(9 * Cout, Cout).astype(MATMUL_DTYPE)  # (9*Cout, Cout)
    bn = jnp.stack([params["gamma1"], params["beta1"],
                    params["gamma2"], params["beta2"]]).astype(jnp.float32)  # (4, Cout)

    kernel = partial(_double_conv_kernel,
                     N=N, H=H, W=W, Cin=Cin, Cout=Cout, eps=float(eps))

    y_flat = pl.pallas_call(
        kernel,
        out_shape=jax.ShapeDtypeStruct((M, Cout), jnp.float32),
        grid=(1,),
        in_specs=[
            pl.BlockSpec((N, H, W, Cin), lambda i: (0, 0, 0, 0)),
            pl.BlockSpec((9 * Cin, Cout), lambda i: (0, 0)),
            pl.BlockSpec((9 * Cout, Cout), lambda i: (0, 0)),
            pl.BlockSpec((4, Cout), lambda i: (0, 0)),
        ],
        out_specs=pl.BlockSpec((M, Cout), lambda i: (0, 0)),
        scratch_shapes=[
            pltpu.VMEM((N, H + 2, W + 2, Cin), MATMUL_DTYPE),    # padded input (conv1)
            pltpu.VMEM((M, 9 * Cin), MATMUL_DTYPE),              # im2col slab (conv1)
            pltpu.VMEM((N, H + 2, W + 2, Cout), MATMUL_DTYPE),   # padded BN1+ReLU act
            pltpu.VMEM((M, 9 * Cout), MATMUL_DTYPE),             # im2col slab (conv2)
        ],
        compiler_params=pltpu.CompilerParams(
            dimension_semantics=("arbitrary",)),
    )(x, w1, w2, bn)

    y = y_flat.reshape(N, H, W, Cout)        # contiguous -> free metadata reshape in HBM
    return jnp.transpose(y, (0, 3, 1, 2))    # NHWC -> NCHW


def init_params(in_ch, out_ch, key):
    k1, k2, k3, k4 = jax.random.split(key, 4)
    return {
        # conv weights stored HWIO (kh, kw, cin, cout)
        "w1": 0.1 * jax.random.normal(k1, (3, 3, in_ch, out_ch), jnp.float32),
        "b1": 0.1 * jax.random.normal(k2, (out_ch,), jnp.float32),   # unused by kernel:
        "w2": 0.1 * jax.random.normal(k3, (3, 3, out_ch, out_ch), jnp.float32),
        "b2": 0.1 * jax.random.normal(k4, (out_ch,), jnp.float32),   # bias cancels in BN
        # BatchNorm2d default init: weight=1, bias=0
        "gamma1": jnp.ones((out_ch,), jnp.float32),
        "beta1": jnp.zeros((out_ch,), jnp.float32),
        "gamma2": jnp.ones((out_ch,), jnp.float32),
        "beta2": jnp.zeros((out_ch,), jnp.float32),
    }


# Pure-JAX reference (uses the biases explicitly; must match because they cancel in BN).
def _reference_double_conv(x_nchw, params, eps=1e-5):
    x = jnp.transpose(x_nchw, (0, 2, 3, 1))

    def block(z, w, b, gamma, beta):
        y = jax.lax.conv_general_dilated(
            z, w, window_strides=(1, 1), padding="SAME",
            dimension_numbers=("NHWC", "HWIO", "NHWC"),
            precision=jax.lax.Precision.HIGHEST) + b
        mean = jnp.mean(y, axis=(0, 1, 2))
        var = jnp.mean((y - mean) ** 2, axis=(0, 1, 2))
        return jnp.maximum(gamma * (y - mean) / jnp.sqrt(var + eps) + beta, 0.0)

    z = block(x, params["w1"], params["b1"], params["gamma1"], params["beta1"])
    z = block(z, params["w2"], params["b2"], params["gamma2"], params["beta2"])
    return jnp.transpose(z, (0, 3, 1, 2))


if __name__ == "__main__":
    in_ch, out_ch = 4, 8
    N, H, W = 2, 16, 16

    key = jax.random.PRNGKey(0)
    k_x, k_p = jax.random.split(key)
    x = jax.random.normal(k_x, (N, in_ch, H, W), jnp.float32)
    params = init_params(in_ch, out_ch, k_p)

    out = jax.jit(double_conv_forward)(x, params)
    out = jax.block_until_ready(out)

    assert out.shape == (N, out_ch, H, W)
    assert out.dtype == jnp.float32

    ref = jax.block_until_ready(jax.jit(_reference_double_conv)(x, params))
    err = float(jnp.max(jnp.abs(out - ref)))
    assert err < 1e-2, f"mismatch vs reference: max abs err {err}"

    print("KERNEL_OK")
</pallas_src>

<mosaic_0001>
module attributes {stable_mosaic.version = 11 : i64} {
  func.func @_double_conv_kernel(%arg0: i32, %arg1: memref<2x16x16x4xf32, #tpu.memory_space<vmem>>, %arg2: memref<36x8xf32, #tpu.memory_space<vmem>>, %arg3: memref<72x8xf32, #tpu.memory_space<vmem>>, %arg4: memref<4x8xf32, #tpu.memory_space<vmem>>, %arg5: memref<512x8xf32, #tpu.memory_space<vmem>>, %arg6: memref<2x18x18x4xf32, #tpu.memory_space<vmem>>, %arg7: memref<512x36xf32, #tpu.memory_space<vmem>>, %arg8: memref<2x18x18x8xf32, #tpu.memory_space<vmem>>, %arg9: memref<512x72xf32, #tpu.memory_space<vmem>>) attributes {dimension_semantics = [#tpu.dimension_semantics<arbitrary>], iteration_bounds = array<i64: 1>, scalar_prefetch = 0 : i64, scratch_operands = 4 : i64, tpu.core_type = #tpu.core_type<tc>, window_params = [{pipeline_mode = #tpu.pipeline_mode<synchronous>, transform_indices = @transform_0, window_bounds = array<i64: 2, 16, 16, 4>}, {pipeline_mode = #tpu.pipeline_mode<synchronous>, transform_indices = @transform_1, window_bounds = array<i64: 36, 8>}, {pipeline_mode = #tpu.pipeline_mode<synchronous>, transform_indices = @transform_2, window_bounds = array<i64: 72, 8>}, {pipeline_mode = #tpu.pipeline_mode<synchronous>, transform_indices = @transform_3, window_bounds = array<i64: 4, 8>}, {pipeline_mode = #tpu.pipeline_mode<synchronous>, transform_indices = @transform_4, window_bounds = array<i64: 512, 8>}]} {
    %c0 = arith.constant 0 : index
    %c0_0 = arith.constant 0 : index
    %c0_1 = arith.constant 0 : index
    %c0_2 = arith.constant 0 : index
    %0 = vector.load %arg1[%c0, %c0_0, %c0_1, %c0_2] : memref<2x16x16x4xf32, #tpu.memory_space<vmem>>, vector<2x16x16x4xf32>
    %cst = arith.constant 0.000000e+00 : f32
    %1 = vector.broadcast %cst : f32 to vector<2x1x18x4xf32>
    %cst_3 = arith.constant 0.000000e+00 : f32
    %2 = vector.broadcast %cst_3 : f32 to vector<2x18x1x4xf32>
    %c0_4 = arith.constant 0 : index
    %c0_5 = arith.constant 0 : index
    %c0_6 = arith.constant 0 : index
    %c0_7 = arith.constant 0 : index
    %3 = vector.load %arg6[%c0_4, %c0_5, %c0_6, %c0_7] : memref<2x18x18x4xf32, #tpu.memory_space<vmem>>, vector<2x1x18x4xf32>
    tpu.vector_store %arg6[%c0_4, %c0_5, %c0_6, %c0_7], %1 {strides = array<i32>} : memref<2x18x18x4xf32, #tpu.memory_space<vmem>>, vector<2x1x18x4xf32>,
    %c0_8 = arith.constant 0 : index
    %c17 = arith.constant 17 : index
    %c0_9 = arith.constant 0 : index
    %c0_10 = arith.constant 0 : index
    %4 = vector.load %arg6[%c0_8, %c17, %c0_9, %c0_10] : memref<2x18x18x4xf32, #tpu.memory_space<vmem>>, vector<2x1x18x4xf32>
    tpu.vector_store %arg6[%c0_8, %c17, %c0_9, %c0_10], %1 {strides = array<i32>} : memref<2x18x18x4xf32, #tpu.memory_space<vmem>>, vector<2x1x18x4xf32>,
    %c0_11 = arith.constant 0 : index
    %c0_12 = arith.constant 0 : index
    %c0_13 = arith.constant 0 : index
    %c0_14 = arith.constant 0 : index
    %5 = vector.load %arg6[%c0_11, %c0_12, %c0_13, %c0_14] : memref<2x18x18x4xf32, #tpu.memory_space<vmem>>, vector<2x18x1x4xf32>
    tpu.vector_store %arg6[%c0_11, %c0_12, %c0_13, %c0_14], %2 {strides = array<i32>} : memref<2x18x18x4xf32, #tpu.memory_space<vmem>>, vector<2x18x1x4xf32>,
    %c0_15 = arith.constant 0 : index
    %c0_16 = arith.constant 0 : index
    %c17_17 = arith.constant 17 : index
    %c0_18 = arith.constant 0 : index
    %6 = vector.load %arg6[%c0_15, %c0_16, %c17_17, %c0_18] : memref<2x18x18x4xf32, #tpu.memory_space<vmem>>, vector<2x18x1x4xf32>
    tpu.vector_store %arg6[%c0_15, %c0_16, %c17_17, %c0_18], %2 {strides = array<i32>} : memref<2x18x18x4xf32, #tpu.memory_space<vmem>>, vector<2x18x1x4xf32>,
    %c0_19 = arith.constant 0 : index
    %c1 = arith.constant 1 : index
    %c1_20 = arith.constant 1 : index
    %c0_21 = arith.constant 0 : index
    %7 = vector.load %arg6[%c0_19, %c1, %c1_20, %c0_21] : memref<2x18x18x4xf32, #tpu.memory_space<vmem>>, vector<2x16x16x4xf32>
    tpu.vector_store %arg6[%c0_19, %c1, %c1_20, %c0_21], %0 {strides = array<i32>} : memref<2x18x18x4xf32, #tpu.memory_space<vmem>>, vector<2x16x16x4xf32>,
    %c0_22 = arith.constant 0 : index
    %c0_23 = arith.constant 0 : index
    %c0_24 = arith.constant 0 : index
    %c0_25 = arith.constant 0 : index
    %8 = vector.load %arg6[%c0_22, %c0_23, %c0_24, %c0_25] : memref<2x18x18x4xf32, #tpu.memory_space<vmem>>, vector<2x16x16x4xf32>
    %9 = vector.shape_cast %8 : vector<2x16x16x4xf32> to vector<512x4xf32>
    %c0_26 = arith.constant 0 : index
    %c0_27 = arith.constant 0 : index
    %10 = vector.load %arg7[%c0_26, %c0_27] : memref<512x36xf32, #tpu.memory_space<vmem>>, vector<512x4xf32>
    tpu.vector_store %arg7[%c0_26, %c0_27], %9 {strides = array<i32>} : memref<512x36xf32, #tpu.memory_space<vmem>>, vector<512x4xf32>,
    %c0_28 = arith.constant 0 : index
    %c0_29 = arith.constant 0 : index
    %c1_30 = arith.constant 1 : index
    %c0_31 = arith.constant 0 : index
    %11 = vector.load %arg6[%c0_28, %c0_29, %c1_30, %c0_31] : memref<2x18x18x4xf32, #tpu.memory_space<vmem>>, vector<2x16x16x4xf32>
    %12 = vector.shape_cast %11 : vector<2x16x16x4xf32> to vector<512x4xf32>
    %c0_32 = arith.constant 0 : index
    %c4 = arith.constant 4 : index
    %13 = vector.load %arg7[%c0_32, %c4] : memref<512x36xf32, #tpu.memory_space<vmem>>, vector<512x4xf32>
    tpu.vector_store %arg7[%c0_32, %c4], %12 {strides = array<i32>} : memref<512x36xf32, #tpu.memory_space<vmem>>, vector<512x4xf32>,
    %c0_33 = arith.constant 0 : index
    %c0_34 = arith.constant 0 : index
    %c2 = arith.constant 2 : index
    %c0_35 = arith.constant 0 : index
    %14 = vector.load %arg6[%c0_33, %c0_34, %c2, %c0_35] : memref<2x18x18x4xf32, #tpu.memory_space<vmem>>, vector<2x16x16x4xf32>
    %15 = vector.shape_cast %14 : vector<2x16x16x4xf32> to vector<512x4xf32>
    %c0_36 = arith.constant 0 : index
    %c8 = arith.constant 8 : index
    %16 = vector.load %arg7[%c0_36, %c8] : memref<512x36xf32, #tpu.memory_space<vmem>>, vector<512x4xf32>
    tpu.vector_store %arg7[%c0_36, %c8], %15 {strides = array<i32>} : memref<512x36xf32, #tpu.memory_space<vmem>>, vector<512x4xf32>,
    %c0_37 = arith.constant 0 : index
    %c1_38 = arith.constant 1 : index
    %c0_39 = arith.constant 0 : index
    %c0_40 = arith.constant 0 : index
    %17 = vector.load %arg6[%c0_37, %c1_38, %c0_39, %c0_40] : memref<2x18x18x4xf32, #tpu.memory_space<vmem>>, vector<2x16x16x4xf32>
    %18 = vector.shape_cast %17 : vector<2x16x16x4xf32> to vector<512x4xf32>
    %c0_41 = arith.constant 0 : index
    %c12 = arith.constant 12 : index
    %19 = vector.load %arg7[%c0_41, %c12] : memref<512x36xf32, #tpu.memory_space<vmem>>, vector<512x4xf32>
    tpu.vector_store %arg7[%c0_41, %c12], %18 {strides = array<i32>} : memref<512x36xf32, #tpu.memory_space<vmem>>, vector<512x4xf32>,
    %c0_42 = arith.constant 0 : index
    %c1_43 = arith.constant 1 : index
    %c1_44 = arith.constant 1 : index
    %c0_45 = arith.constant 0 : index
    %20 = vector.load %arg6[%c0_42, %c1_43, %c1_44, %c0_45] : memref<2x18x18x4xf32, #tpu.memory_space<vmem>>, vector<2x16x16x4xf32>
    %21 = vector.shape_cast %20 : vector<2x16x16x4xf32> to vector<512x4xf32>
    %c0_46 = arith.constant 0 : index
    %c16 = arith.constant 16 : index
    %22 = vector.load %arg7[%c0_46, %c16] : memref<512x36xf32, #tpu.memory_space<vmem>>, vector<512x4xf32>
    tpu.vector_store %arg7[%c0_46, %c16], %21 {strides = array<i32>} : memref<512x36xf32, #tpu.memory_space<vmem>>, vector<512x4xf32>,
    %c0_47 = arith.constant 0 : index
    %c1_48 = arith.constant 1 : index
    %c2_49 = arith.constant 2 : index
    %c0_50 = arith.constant 0 : index
    %23 = vector.load %arg6[%c0_47, %c1_48, %c2_49, %c0_50] : memref<2x18x18x4xf32, #tpu.memory_space<vmem>>, vector<2x16x16x4xf32>
    %24 = vector.shape_cast %23 : vector<2x16x16x4xf32> to vector<512x4xf32>
    %c0_51 = arith.constant 0 : index
    %c20 = arith.constant 20 : index
    %25 = vector.load %arg7[%c0_51, %c20] : memref<512x36xf32, #tpu.memory_space<vmem>>, vector<512x4xf32>
    tpu.vector_store %arg7[%c0_51, %c20], %24 {strides = array<i32>} : memref<512x36xf32, #tpu.memory_space<vmem>>, vector<512x4xf32>,
    %c0_52 = arith.constant 0 : index
    %c2_53 = arith.constant 2 : index
    %c0_54 = arith.constant 0 : index
    %c0_55 = arith.constant 0 : index
    %26 = vector.load %arg6[%c0_52, %c2_53, %c0_54, %c0_55] : memref<2x18x18x4xf32, #tpu.memory_space<vmem>>, vector<2x16x16x4xf32>
    %27 = vector.shape_cast %26 : vector<2x16x16x4xf32> to vector<512x4xf32>
    %c0_56 = arith.constant 0 : index
    %c24 = arith.constant 24 : index
    %28 = vector.load %arg7[%c0_56, %c24] : memref<512x36xf32, #tpu.memory_space<vmem>>, vector<512x4xf32>
    tpu.vector_store %arg7[%c0_56, %c24], %27 {strides = array<i32>} : memref<512x36xf32, #tpu.memory_space<vmem>>, vector<512x4xf32>,
    %c0_57 = arith.constant 0 : index
    %c2_58 = arith.constant 2 : index
    %c1_59 = arith.constant 1 : index
    %c0_60 = arith.constant 0 : index
    %29 = vector.load %arg6[%c0_57, %c2_58, %c1_59, %c0_60] : memref<2x18x18x4xf32, #tpu.memory_space<vmem>>, vector<2x16x16x4xf32>
    %30 = vector.shape_cast %29 : vector<2x16x16x4xf32> to vector<512x4xf32>
    %c0_61 = arith.constant 0 : index
    %c28 = arith.constant 28 : index
    %31 = vector.load %arg7[%c0_61, %c28] : memref<512x36xf32, #tpu.memory_space<vmem>>, vector<512x4xf32>
    tpu.vector_store %arg7[%c0_61, %c28], %30 {strides = array<i32>} : memref<512x36xf32, #tpu.memory_space<vmem>>, vector<512x4xf32>,
    %c0_62 = arith.constant 0 : index
    %c2_63 = arith.constant 2 : index
    %c2_64 = arith.constant 2 : index
    %c0_65 = arith.constant 0 : index
    %32 = vector.load %arg6[%c0_62, %c2_63, %c2_64, %c0_65] : memref<2x18x18x4xf32, #tpu.memory_space<vmem>>, vector<2x16x16x4xf32>
    %33 = vector.shape_cast %32 : vector<2x16x16x4xf32> to vector<512x4xf32>
    %c0_66 = arith.constant 0 : index
    %c32 = arith.constant 32 : index
    %34 = vector.load %arg7[%c0_66, %c32] : memref<512x36xf32, #tpu.memory_space<vmem>>, vector<512x4xf32>
    tpu.vector_store %arg7[%c0_66, %c32], %33 {strides = array<i32>} : memref<512x36xf32, #tpu.memory_space<vmem>>, vector<512x4xf32>,
    %c0_67 = arith.constant 0 : index
    %c0_68 = arith.constant 0 : index
    %35 = vector.load %arg7[%c0_67, %c0_68] : memref<512x36xf32, #tpu.memory_space<vmem>>, vector<512x36xf32>
    %c0_69 = arith.constant 0 : index
    %c0_70 = arith.constant 0 : index
    %36 = vector.load %arg2[%c0_69, %c0_70] : memref<36x8xf32, #tpu.memory_space<vmem>>, vector<36x8xf32>
    %cst_71 = arith.constant dense<0.000000e+00> : vector<512x8xf32>
    %37 = tpu.matmul %35, %36, %cst_71 {dimension_numbers = #tpu.dot_dimension_numbers<[1], [0], [0], [1], [0, 0, 1, 1], [], []>} : vector<512x36xf32>, vector<36x8xf32>, vector<512x8xf32> -> vector<512x8xf32>
    %c0_72 = arith.constant 0 : index
    %c0_73 = arith.constant 0 : index
    %38 = vector.load %arg4[%c0_72, %c0_73] : memref<4x8xf32, #tpu.memory_space<vmem>>, vector<1x8xf32>
    %c1_74 = arith.constant 1 : index
    %c0_75 = arith.constant 0 : index
    %39 = vector.load %arg4[%c1_74, %c0_75] : memref<4x8xf32, #tpu.memory_space<vmem>>, vector<1x8xf32>
    %cst_76 = arith.constant dense<0.000000e+00> : vector<8xf32>
    %40 = vector.multi_reduction <add>, %37, %cst_76 [0] : vector<512x8xf32> to vector<8xf32>
    %41 = vector.shape_cast %40 : vector<8xf32> to vector<1x8xf32>
    %cst_77 = arith.constant 0.001953125 : f32
    %42 = vector.broadcast %cst_77 : f32 to vector<1x8xf32>
    %43 = arith.mulf %41, %42 : vector<1x8xf32>
    %44 = arith.mulf %37, %37 : vector<512x8xf32>
    %cst_78 = arith.constant dense<0.000000e+00> : vector<8xf32>
    %45 = vector.multi_reduction <add>, %44, %cst_78 [0] : vector<512x8xf32> to vector<8xf32>
    %46 = vector.shape_cast %45 : vector<8xf32> to vector<1x8xf32>
    %cst_79 = arith.constant 0.001953125 : f32
    %47 = vector.broadcast %cst_79 : f32 to vector<1x8xf32>
    %48 = arith.mulf %46, %47 : vector<1x8xf32>
    %49 = arith.mulf %43, %43 : vector<1x8xf32>
    %50 = arith.subf %48, %49 : vector<1x8xf32>
    %cst_80 = arith.constant 9.99999974E-6 : f32
    %51 = vector.broadcast %cst_80 : f32 to vector<1x8xf32>
    %52 = arith.addf %50, %51 : vector<1x8xf32>
    %53 = math.rsqrt %52 : vector<1x8xf32>
    %54 = arith.mulf %38, %53 : vector<1x8xf32>
    %55 = arith.mulf %43, %54 : vector<1x8xf32>
    %56 = arith.subf %39, %55 : vector<1x8xf32>
    %57 = vector.broadcast %54 : vector<1x8xf32> to vector<512x8xf32>
    %58 = arith.mulf %37, %57 : vector<512x8xf32>
    %59 = vector.broadcast %56 : vector<1x8xf32> to vector<512x8xf32>
    %60 = arith.addf %58, %59 : vector<512x8xf32>
    %cst_81 = arith.constant 0.000000e+00 : f32
    %61 = vector.broadcast %cst_81 : f32 to vector<512x8xf32>
    %62 = arith.maximumf %60, %61 : vector<512x8xf32>
    %63 = vector.shape_cast %62 : vector<512x8xf32> to vector<2x16x16x8xf32>
    %cst_82 = arith.constant 0.000000e+00 : f32
    %64 = vector.broadcast %cst_82 : f32 to vector<2x1x18x8xf32>
    %cst_83 = arith.constant 0.000000e+00 : f32
    %65 = vector.broadcast %cst_83 : f32 to vector<2x18x1x8xf32>
    %c0_84 = arith.constant 0 : index
    %c0_85 = arith.constant 0 : index
    %c0_86 = arith.constant 0 : index
    %c0_87 = arith.constant 0 : index
    %66 = vector.load %arg8[%c0_84, %c0_85, %c0_86, %c0_87] : memref<2x18x18x8xf32, #tpu.memory_space<vmem>>, vector<2x1x18x8xf32>
    tpu.vector_store %arg8[%c0_84, %c0_85, %c0_86, %c0_87], %64 {strides = array<i32>} : memref<2x18x18x8xf32, #tpu.memory_space<vmem>>, vector<2x1x18x8xf32>,
    %c0_88 = arith.constant 0 : index
    %c17_89 = arith.constant 17 : index
    %c0_90 = arith.constant 0 : index
    %c0_91 = arith.constant 0 : index
    %67 = vector.load %arg8[%c0_88, %c17_89, %c0_90, %c0_91] : memref<2x18x18x8xf32, #tpu.memory_space<vmem>>, vector<2x1x18x8xf32>
    tpu.vector_store %arg8[%c0_88, %c17_89, %c0_90, %c0_91], %64 {strides = array<i32>} : memref<2x18x18x8xf32, #tpu.memory_space<vmem>>, vector<2x1x18x8xf32>,
    %c0_92 = arith.constant 0 : index
    %c0_93 = arith.constant 0 : index
    %c0_94 = arith.constant 0 : index
    %c0_95 = arith.constant 0 : index
    %68 = vector.load %arg8[%c0_92, %c0_93, %c0_94, %c0_95] : memref<2x18x18x8xf32, #tpu.memory_space<vmem>>, vector<2x18x1x8xf32>
    tpu.vector_store %arg8[%c0_92, %c0_93, %c0_94, %c0_95], %65 {strides = array<i32>} : memref<2x18x18x8xf32, #tpu.memory_space<vmem>>, vector<2x18x1x8xf32>,
    %c0_96 = arith.constant 0 : index
    %c0_97 = arith.constant 0 : index
    %c17_98 = arith.constant 17 : index
    %c0_99 = arith.constant 0 : index
    %69 = vector.load %arg8[%c0_96, %c0_97, %c17_98, %c0_99] : memref<2x18x18x8xf32, #tpu.memory_space<vmem>>, vector<2x18x1x8xf32>
    tpu.vector_store %arg8[%c0_96, %c0_97, %c17_98, %c0_99], %65 {strides = array<i32>} : memref<2x18x18x8xf32, #tpu.memory_space<vmem>>, vector<2x18x1x8xf32>,
    %c0_100 = arith.constant 0 : index
    %c1_101 = arith.constant 1 : index
    %c1_102 = arith.constant 1 : index
    %c0_103 = arith.constant 0 : index
    %70 = vector.load %arg8[%c0_100, %c1_101, %c1_102, %c0_103] : memref<2x18x18x8xf32, #tpu.memory_space<vmem>>, vector<2x16x16x8xf32>
    tpu.vector_store %arg8[%c0_100, %c1_101, %c1_102, %c0_103], %63 {strides = array<i32>} : memref<2x18x18x8xf32, #tpu.memory_space<vmem>>, vector<2x16x16x8xf32>,
    %c0_104 = arith.constant 0 : index
    %c0_105 = arith.constant 0 : index
    %c0_106 = arith.constant 0 : index
    %c0_107 = arith.constant 0 : index
    %71 = vector.load %arg8[%c0_104, %c0_105, %c0_106, %c0_107] : memref<2x18x18x8xf32, #tpu.memory_space<vmem>>, vector<2x16x16x8xf32>
    %72 = vector.shape_cast %71 : vector<2x16x16x8xf32> to vector<512x8xf32>
    %c0_108 = arith.constant 0 : index
    %c0_109 = arith.constant 0 : index
    %73 = vector.load %arg9[%c0_108, %c0_109] : memref<512x72xf32, #tpu.memory_space<vmem>>, vector<512x8xf32>
    tpu.vector_store %arg9[%c0_108, %c0_109], %72 {strides = array<i32>} : memref<512x72xf32, #tpu.memory_space<vmem>>, vector<512x8xf32>,
    %c0_110 = arith.constant 0 : index
    %c0_111 = arith.constant 0 : index
    %c1_112 = arith.constant 1 : index
    %c0_113 = arith.constant 0 : index
    %74 = vector.load %arg8[%c0_110, %c0_111, %c1_112, %c0_113] : memref<2x18x18x8xf32, #tpu.memory_space<vmem>>, vector<2x16x16x8xf32>
    %75 = vector.shape_cast %74 : vector<2x16x16x8xf32> to vector<512x8xf32>
    %c0_114 = arith.constant 0 : index
    %c8_115 = arith.constant 8 : index
    %76 = vector.load %arg9[%c0_114, %c8_115] : memref<512x72xf32, #tpu.memory_space<vmem>>, vector<512x8xf32>
    tpu.vector_store %arg9[%c0_114, %c8_115], %75 {strides = array<i32>} : memref<512x72xf32, #tpu.memory_space<vmem>>, vector<512x8xf32>,
    %c0_116 = arith.constant 0 : index
    %c0_117 = arith.constant 0 : index
    %c2_118 = arith.constant 2 : index
    %c0_119 = arith.constant 0 : index
    %77 = vector.load %arg8[%c0_116, %c0_117, %c2_118, %c0_119] : memref<2x18x18x8xf32, #tpu.memory_space<vmem>>, vector<2x16x16x8xf32>
    %78 = vector.shape_cast %77 : vector<2x16x16x8xf32> to vector<512x8xf32>
    %c0_120 = arith.constant 0 : index
    %c16_121 = arith.constant 16 : index
    %79 = vector.load %arg9[%c0_120, %c16_121] : memref<512x72xf32, #tpu.memory_space<vmem>>, vector<512x8xf32>
    tpu.vector_store %arg9[%c0_120, %c16_121], %78 {strides = array<i32>} : memref<512x72xf32, #tpu.memory_space<vmem>>, vector<512x8xf32>,
    %c0_122 = arith.constant 0 : index
    %c1_123 = arith.constant 1 : index
    %c0_124 = arith.constant 0 : index
    %c0_125 = arith.constant 0 : index
    %80 = vector.load %arg8[%c0_122, %c1_123, %c0_124, %c0_125] : memref<2x18x18x8xf32, #tpu.memory_space<vmem>>, vector<2x16x16x8xf32>
    %81 = vector.shape_cast %80 : vector<2x16x16x8xf32> to vector<512x8xf32>
    %c0_126 = arith.constant 0 : index
    %c24_127 = arith.constant 24 : index
    %82 = vector.load %arg9[%c0_126, %c24_127] : memref<512x72xf32, #tpu.memory_space<vmem>>, vector<512x8xf32>
    tpu.vector_store %arg9[%c0_126, %c24_127], %81 {strides = array<i32>} : memref<512x72xf32, #tpu.memory_space<vmem>>, vector<512x8xf32>,
    %c0_128 = arith.constant 0 : index
    %c1_129 = arith.constant 1 : index
    %c1_130 = arith.constant 1 : index
    %c0_131 = arith.constant 0 : index
    %83 = vector.load %arg8[%c0_128, %c1_129, %c1_130, %c0_131] : memref<2x18x18x8xf32, #tpu.memory_space<vmem>>, vector<2x16x16x8xf32>
    %84 = vector.shape_cast %83 : vector<2x16x16x8xf32> to vector<512x8xf32>
    %c0_132 = arith.constant 0 : index
    %c32_133 = arith.constant 32 : index
    %85 = vector.load %arg9[%c0_132, %c32_133] : memref<512x72xf32, #tpu.memory_space<vmem>>, vector<512x8xf32>
    tpu.vector_store %arg9[%c0_132, %c32_133], %84 {strides = array<i32>} : memref<512x72xf32, #tpu.memory_space<vmem>>, vector<512x8xf32>,
    %c0_134 = arith.constant 0 : index
    %c1_135 = arith.constant 1 : index
    %c2_136 = arith.constant 2 : index
    %c0_137 = arith.constant 0 : index
    %86 = vector.load %arg8[%c0_134, %c1_135, %c2_136, %c0_137] : memref<2x18x18x8xf32, #tpu.memory_space<vmem>>, vector<2x16x16x8xf32>
    %87 = vector.shape_cast %86 : vector<2x16x16x8xf32> to vector<512x8xf32>
    %c0_138 = arith.constant 0 : index
    %c40 = arith.constant 40 : index
    %88 = vector.load %arg9[%c0_138, %c40] : memref<512x72xf32, #tpu.memory_space<vmem>>, vector<512x8xf32>
    tpu.vector_store %arg9[%c0_138, %c40], %87 {strides = array<i32>} : memref<512x72xf32, #tpu.memory_space<vmem>>, vector<512x8xf32>,
    %c0_139 = arith.constant 0 : index
    %c2_140 = arith.constant 2 : index
    %c0_141 = arith.constant 0 : index
    %c0_142 = arith.constant 0 : index
    %89 = vector.load %arg8[%c0_139, %c2_140, %c0_141, %c0_142] : memref<2x18x18x8xf32, #tpu.memory_space<vmem>>, vector<2x16x16x8xf32>
    %90 = vector.shape_cast %89 : vector<2x16x16x8xf32> to vector<512x8xf32>
    %c0_143 = arith.constant 0 : index
    %c48 = arith.constant 48 : index
    %91 = vector.load %arg9[%c0_143, %c48] : memref<512x72xf32, #tpu.memory_space<vmem>>, vector<512x8xf32>
    tpu.vector_store %arg9[%c0_143, %c48], %90 {strides = array<i32>} : memref<512x72xf32, #tpu.memory_space<vmem>>, vector<512x8xf32>,
    %c0_144 = arith.constant 0 : index
    %c2_145 = arith.constant 2 : index
    %c1_146 = arith.constant 1 : index
    %c0_147 = arith.constant 0 : index
    %92 = vector.load %arg8[%c0_144, %c2_145, %c1_146, %c0_147] : memref<2x18x18x8xf32, #tpu.memory_space<vmem>>, vector<2x16x16x8xf32>
    %93 = vector.shape_cast %92 : vector<2x16x16x8xf32> to vector<512x8xf32>
    %c0_148 = arith.constant 0 : index
    %c56 = arith.constant 56 : index
    %94 = vector.load %arg9[%c0_148, %c56] : memref<512x72xf32, #tpu.memory_space<vmem>>, vector<512x8xf32>
    tpu.vector_store %arg9[%c0_148, %c56], %93 {strides = array<i32>} : memref<512x72xf32, #tpu.memory_space<vmem>>, vector<512x8xf32>,
    %c0_149 = arith.constant 0 : index
    %c2_150 = arith.constant 2 : index
    %c2_151 = arith.constant 2 : index
    %c0_152 = arith.constant 0 : index
    %95 = vector.load %arg8[%c0_149, %c2_150, %c2_151, %c0_152] : memref<2x18x18x8xf32, #tpu.memory_space<vmem>>, vector<2x16x16x8xf32>
    %96 = vector.shape_cast %95 : vector<2x16x16x8xf32> to vector<512x8xf32>
    %c0_153 = arith.constant 0 : index
    %c64 = arith.constant 64 : index
    %97 = vector.load %arg9[%c0_153, %c64] : memref<512x72xf32, #tpu.memory_space<vmem>>, vector<512x8xf32>
    tpu.vector_store %arg9[%c0_153, %c64], %96 {strides = array<i32>} : memref<512x72xf32, #tpu.memory_space<vmem>>, vector<512x8xf32>,
    %c0_154 = arith.constant 0 : index
    %c0_155 = arith.constant 0 : index
    %98 = vector.load %arg9[%c0_154, %c0_155] : memref<512x72xf32, #tpu.memory_space<vmem>>, vector<512x72xf32>
    %c0_156 = arith.constant 0 : index
    %c0_157 = arith.constant 0 : index
    %99 = vector.load %arg3[%c0_156, %c0_157] : memref<72x8xf32, #tpu.memory_space<vmem>>, vector<72x8xf32>
    %cst_158 = arith.constant dense<0.000000e+00> : vector<512x8xf32>
    %100 = tpu.matmul %98, %99, %cst_158 {dimension_numbers = #tpu.dot_dimension_numbers<[1], [0], [0], [1], [0, 0, 1, 1], [], []>} : vector<512x72xf32>, vector<72x8xf32>, vector<512x8xf32> -> vector<512x8xf32>
    %c2_159 = arith.constant 2 : index
    %c0_160 = arith.constant 0 : index
    %101 = vector.load %arg4[%c2_159, %c0_160] : memref<4x8xf32, #tpu.memory_space<vmem>>, vector<1x8xf32>
    %c3 = arith.constant 3 : index
    %c0_161 = arith.constant 0 : index
    %102 = vector.load %arg4[%c3, %c0_161] : memref<4x8xf32, #tpu.memory_space<vmem>>, vector<1x8xf32>
    %cst_162 = arith.constant dense<0.000000e+00> : vector<8xf32>
    %103 = vector.multi_reduction <add>, %100, %cst_162 [0] : vector<512x8xf32> to vector<8xf32>
    %104 = vector.shape_cast %103 : vector<8xf32> to vector<1x8xf32>
    %cst_163 = arith.constant 0.001953125 : f32
    %105 = vector.broadcast %cst_163 : f32 to vector<1x8xf32>
    %106 = arith.mulf %104, %105 : vector<1x8xf32>
    %107 = arith.mulf %100, %100 : vector<512x8xf32>
    %cst_164 = arith.constant dense<0.000000e+00> : vector<8xf32>
    %108 = vector.multi_reduction <add>, %107, %cst_164 [0] : vector<512x8xf32> to vector<8xf32>
    %109 = vector.shape_cast %108 : vector<8xf32> to vector<1x8xf32>
    %cst_165 = arith.constant 0.001953125 : f32
    %110 = vector.broadcast %cst_165 : f32 to vector<1x8xf32>
    %111 = arith.mulf %109, %110 : vector<1x8xf32>
    %112 = arith.mulf %106, %106 : vector<1x8xf32>
    %113 = arith.subf %111, %112 : vector<1x8xf32>
    %cst_166 = arith.constant 9.99999974E-6 : f32
    %114 = vector.broadcast %cst_166 : f32 to vector<1x8xf32>
    %115 = arith.addf %113, %114 : vector<1x8xf32>
    %116 = math.rsqrt %115 : vector<1x8xf32>
    %117 = arith.mulf %101, %116 : vector<1x8xf32>
    %118 = arith.mulf %106, %117 : vector<1x8xf32>
    %119 = arith.subf %102, %118 : vector<1x8xf32>
    %120 = vector.broadcast %117 : vector<1x8xf32> to vector<512x8xf32>
    %121 = arith.mulf %100, %120 : vector<512x8xf32>
    %122 = vector.broadcast %119 : vector<1x8xf32> to vector<512x8xf32>
    %123 = arith.addf %121, %122 : vector<512x8xf32>
    %cst_167 = arith.constant 0.000000e+00 : f32
    %124 = vector.broadcast %cst_167 : f32 to vector<512x8xf32>
    %125 = arith.maximumf %123, %124 : vector<512x8xf32>
    %c0_168 = arith.constant 0 : index
    %c0_169 = arith.constant 0 : index
    %126 = vector.load %arg5[%c0_168, %c0_169] : memref<512x8xf32, #tpu.memory_space<vmem>>, vector<512x8xf32>
    tpu.vector_store %arg5[%c0_168, %c0_169], %125 {strides = array<i32>} : memref<512x8xf32, #tpu.memory_space<vmem>>, vector<512x8xf32>,
    return
  }
  func.func @transform_0(%arg0: i32) -> (i32, i32, i32, i32) {
    %c0_i32 = arith.constant 0 : i32
    %c0_i32_0 = arith.constant 0 : i32
    %c0_i32_1 = arith.constant 0 : i32
    %c0_i32_2 = arith.constant 0 : i32
    %c0_i32_3 = arith.constant 0 : i32
    return %c0_i32, %c0_i32_0, %c0_i32_1, %c0_i32_2 : i32, i32, i32, i32
  }
  func.func @transform_1(%arg0: i32) -> (i32, i32) {
    %c0_i32 = arith.constant 0 : i32
    %c0_i32_0 = arith.constant 0 : i32
    %c0_i32_1 = arith.constant 0 : i32
    return %c0_i32, %c0_i32_0 : i32, i32
  }
  func.func @transform_2(%arg0: i32) -> (i32, i32) {
    %c0_i32 = arith.constant 0 : i32
    %c0_i32_0 = arith.constant 0 : i32
    %c0_i32_1 = arith.constant 0 : i32
    return %c0_i32, %c0_i32_0 : i32, i32
  }
  func.func @transform_3(%arg0: i32) -> (i32, i32) {
    %c0_i32 = arith.constant 0 : i32
    %c0_i32_0 = arith.constant 0 : i32
    %c0_i32_1 = arith.constant 0 : i32
    return %c0_i32, %c0_i32_0 : i32, i32
  }
  func.func @transform_4(%arg0: i32) -> (i32, i32) {
    %c0_i32 = arith.constant 0 : i32
    %c0_i32_0 = arith.constant 0 : i32
    %c0_i32_1 = arith.constant 0 : i32
    return %c0_i32, %c0_i32_0 : i32, i32
  }
}

</mosaic_0001>

<llo_original>
// kernel: double_conv_forward.1
$region0: #{double_conv_forward.1}
  #allocation0 [shape = 'u32[]', space=smem, size = 0x4, offset = 0x4, fixed_abs, tag = 'smem constant byte address 0x4 - core index']
  #allocation1 [shape = 'u32[144,128]{1,0:T(1,128)}', space=vmem, size = 0x12000, scoped, tag = 'internal scratch']
  #allocation2 [shape = 'f32[2,18,18,4]{3,2,1,0:T(8,128)}', space=vmem, size = 0x6c000, scoped, tag = 'scratch operand']
  #allocation3 [shape = 'f32[512,36]{1,0:T(8,128)}', space=vmem, size = 0x40000, scoped, tag = 'scratch operand']
  #allocation4 [shape = 'f32[2,18,18,8]{3,2,1,0:T(8,128)}', space=vmem, size = 0x6c000, scoped, tag = 'scratch operand']
  #allocation5 [shape = 'f32[512,72]{1,0:T(8,128)}', space=vmem, size = 0x40000, scoped, tag = 'scratch operand']
  %s0 = inlined_call_operand.vmem [shape: f32[2,16,16,4], index: 0, kind: input, shape index: {}]
  %s1 = inlined_call_operand.vmem [shape: f32[36,8], index: 1, kind: input, shape index: {}]
  %s2 = inlined_call_operand.vmem [shape: f32[72,8], index: 2, kind: input, shape index: {}]
  %s3 = inlined_call_operand.vmem [shape: f32[4,8], index: 3, kind: input, shape index: {}]
  %s4 = inlined_call_operand.vmem [shape: f32[512,8], index: 4, kind: output, shape index: {}]
  %s5 = sld [smem:[#allocation0]]
  $region26: #{double_conv_forward.1} parent=0
    _
  %s7 = ssub.s32 1, %s5
  %s8 = scalar_select 0, %s7, %s5
  // Predicated region
  $region2: #{double_conv_forward.1} parent=0 // pred_check
    _
  $region3: #{double_conv_forward.1} parent=0 // pred_check_branch
    %10 = sbr.rel (0) target = $region5
  $region4: #{double_conv_forward.1} parent=0 // pred_region
    _
  $region5: #{double_conv_forward.1} parent=0 // pred_fallthru
    _
  // Predicated region
  $region6: #{double_conv_forward.1} parent=0 // pred_check
    _
  $region7: #{double_conv_forward.1} parent=0 // pred_check_branch
    %12 = sbr.rel (0) target = $region9
  $region8: #{double_conv_forward.1} parent=0 // pred_region
    _
  $region9: #{double_conv_forward.1} parent=0 // pred_fallthru
    _
  // Predicated region
  $region10: #{double_conv_forward.1} parent=0 // pred_check
    _
  $region11: #{double_conv_forward.1} parent=0 // pred_check_branch
    %14 = sbr.rel (0) target = $region13
  $region12: #{double_conv_forward.1} parent=0 // pred_region
    _
  $region13: #{double_conv_forward.1} parent=0 // pred_fallthru
    _
  // Predicated region
  $region14: #{double_conv_forward.1} parent=0 // pred_check
    _
  $region15: #{double_conv_forward.1} parent=0 // pred_check_branch
    %16 = sbr.rel (0) target = $region17
  $region16: #{double_conv_forward.1} parent=0 // pred_region
    _
  $region17: #{double_conv_forward.1} parent=0 // pred_fallthru
    _
  %v17 = vld [vmem:[%s0] sm:$0xff]
  %v18 = vld [vmem:[%s0 + $0x8] sm:$0xff]
  %v19 = vld [vmem:[%s0 + $0x10] sm:$0xff]
  %v20 = vld [vmem:[%s0 + $0x18] sm:$0xff]
  %v21 = vld [vmem:[%s0 + $0x20] sm:$0xff]
  %v22 = vld [vmem:[%s0 + $0x28] sm:$0xff]
  %v23 = vld [vmem:[%s0 + $0x30] sm:$0xff]
  %v24 = vld [vmem:[%s0 + $0x38] sm:$0xff]
  %v25 = vld [vmem:[%s0 + $0x40] sm:$0xff]
  %v26 = vld [vmem:[%s0 + $0x48] sm:$0xff]
  %v27 = vld [vmem:[%s0 + $0x50] sm:$0xff]
  %v28 = vld [vmem:[%s0 + $0x58] sm:$0xff]
  %v29 = vld [vmem:[%s0 + $0x60] sm:$0xff]
  %v30 = vld [vmem:[%s0 + $0x68] sm:$0xff]
  %v31 = vld [vmem:[%s0 + $0x70] sm:$0xff]
  %v32 = vld [vmem:[%s0 + $0x78] sm:$0xff]
  %v33 = vld [vmem:[%s0 + $0x80] sm:$0xff]
  %v34 = vld [vmem:[%s0 + $0x88] sm:$0xff]
  %v35 = vld [vmem:[%s0 + $0x90] sm:$0xff]
  %v36 = vld [vmem:[%s0 + $0x98] sm:$0xff]
  %v37 = vld [vmem:[%s0 + $0xa0] sm:$0xff]
  %v38 = vld [vmem:[%s0 + $0xa8] sm:$0xff]
  %v39 = vld [vmem:[%s0 + $0xb0] sm:$0xff]
  %v40 = vld [vmem:[%s0 + $0xb8] sm:$0xff]
  %v41 = vld [vmem:[%s0 + $0xc0] sm:$0xff]
  %v42 = vld [vmem:[%s0 + $0xc8] sm:$0xff]
  %v43 = vld [vmem:[%s0 + $0xd0] sm:$0xff]
  %v44 = vld [vmem:[%s0 + $0xd8] sm:$0xff]
  %v45 = vld [vmem:[%s0 + $0xe0] sm:$0xff]
  %v46 = vld [vmem:[%s0 + $0xe8] sm:$0xff]
  %v47 = vld [vmem:[%s0 + $0xf0] sm:$0xff]
  %v48 = vld [vmem:[%s0 + $0xf8] sm:$0xff]
  %v49 = vld [vmem:[%s0 + $0x100] sm:$0xff]
  %v50 = vld [vmem:[%s0 + $0x108] sm:$0xff]
  %v51 = vld [vmem:[%s0 + $0x110] sm:$0xff]
  %v52 = vld [vmem:[%s0 + $0x118] sm:$0xff]
  %v53 = vld [vmem:[%s0 + $0x120] sm:$0xff]
  %v54 = vld [vmem:[%s0 + $0x128] sm:$0xff]
  %v55 = vld [vmem:[%s0 + $0x130] sm:$0xff]
  %v56 = vld [vmem:[%s0 + $0x138] sm:$0xff]
  %v57 = vld [vmem:[%s0 + $0x140] sm:$0xff]
  %v58 = vld [vmem:[%s0 + $0x148] sm:$0xff]
  %v59 = vld [vmem:[%s0 + $0x150] sm:$0xff]
  %v60 = vld [vmem:[%s0 + $0x158] sm:$0xff]
  %v61 = vld [vmem:[%s0 + $0x160] sm:$0xff]
  %v62 = vld [vmem:[%s0 + $0x168] sm:$0xff]
  %v63 = vld [vmem:[%s0 + $0x170] sm:$0xff]
  %v64 = vld [vmem:[%s0 + $0x178] sm:$0xff]
  %v65 = vld [vmem:[%s0 + $0x180] sm:$0xff]
  %v66 = vld [vmem:[%s0 + $0x188] sm:$0xff]
  %v67 = vld [vmem:[%s0 + $0x190] sm:$0xff]
  %v68 = vld [vmem:[%s0 + $0x198] sm:$0xff]
  %v69 = vld [vmem:[%s0 + $0x1a0] sm:$0xff]
  %v70 = vld [vmem:[%s0 + $0x1a8] sm:$0xff]
  %v71 = vld [vmem:[%s0 + $0x1b0] sm:$0xff]
  %v72 = vld [vmem:[%s0 + $0x1b8] sm:$0xff]
  %v73 = vld [vmem:[%s0 + $0x1c0] sm:$0xff]
  %v74 = vld [vmem:[%s0 + $0x1c8] sm:$0xff]
  %v75 = vld [vmem:[%s0 + $0x1d0] sm:$0xff]
  %v76 = vld [vmem:[%s0 + $0x1d8] sm:$0xff]
  %v77 = vld [vmem:[%s0 + $0x1e0] sm:$0xff]
  %v78 = vld [vmem:[%s0 + $0x1e8] sm:$0xff]
  %v79 = vld [vmem:[%s0 + $0x1f0] sm:$0xff]
  %v80 = vld [vmem:[%s0 + $0x1f8] sm:$0xff]
  %vm81 = vcmask 31744
  %82 = vst.msk [vmem:[#allocation2] sm:$0xff] %vm81, 0.0
  %83 = vst.msk [vmem:[#allocation2 + $0x8] sm:$0xff] %vm81, 0.0
  %vm84 = vcmask 25600
  %85 = vst.msk [vmem:[#allocation2 + $0x10] sm:$0x3] %vm84, 0.0
  %86 = vst.msk [vmem:[#allocation2 + $0x1b0] sm:$0xff] %vm81, 0.0
  %87 = vst.msk [vmem:[#allocation2 + $0x1b8] sm:$0xff] %vm81, 0.0
  %88 = vst.msk [vmem:[#allocation2 + $0x1c0] sm:$0x3] %vm84, 0.0
  %s89 = scalar_lea.vmem [#allocation2], 408
  %90 = vst.msk [vmem:[%s89] sm:$0xff] %vm81, 0.0
  %91 = vst.msk [vmem:[%s89 + $0x8] sm:$0xff] %vm81, 0.0
  %92 = vst.msk [vmem:[%s89 + $0x10] sm:$0x3] %vm84, 0.0
  %93 = vst.msk [vmem:[%s89 + $0x1b0] sm:$0xff] %vm81, 0.0
  %94 = vst.msk [vmem:[%s89 + $0x1b8] sm:$0xff] %vm81, 0.0
  %95 = vst.msk [vmem:[%s89 + $0x1c0] sm:$0x3] %vm84, 0.0
  %vm96 = vcmask 24576
  %97 = vst.msk [vmem:[#allocation2] sm:$0x1] %vm96, 0.0
  %98 = vst.msk [vmem:[#allocation2 + $0x18] sm:$0x1] %vm96, 0.0
  %99 = vst.msk [vmem:[#allocation2 + $0x30] sm:$0x1] %vm96, 0.0
  %100 = vst.msk [vmem:[#allocation2 + $0x48] sm:$0x1] %vm96, 0.0
  %101 = vst.msk [vmem:[#allocation2 + $0x60] sm:$0x1] %vm96, 0.0
  %102 = vst.msk [vmem:[#allocation2 + $0x78] sm:$0x1] %vm96, 0.0
  %103 = vst.msk [vmem:[#allocation2 + $0x90] sm:$0x1] %vm96, 0.0
  %104 = vst.msk [vmem:[#allocation2 + $0xa8] sm:$0x1] %vm96, 0.0
  %105 = vst.msk [vmem:[#allocation2 + $0xc0] sm:$0x1] %vm96, 0.0
  %106 = vst.msk [vmem:[#allocation2 + $0xd8] sm:$0x1] %vm96, 0.0
  %107 = vst.msk [vmem:[#allocation2 + $0xf0] sm:$0x1] %vm96, 0.0
  %108 = vst.msk [vmem:[#allocation2 + $0x108] sm:$0x1] %vm96, 0.0
  %109 = vst.msk [vmem:[#allocation2 + $0x120] sm:$0x1] %vm96, 0.0
  %110 = vst.msk [vmem:[#allocation2 + $0x138] sm:$0x1] %vm96, 0.0
  %111 = vst.msk [vmem:[#allocation2 + $0x150] sm:$0x1] %vm96, 0.0
  %112 = vst.msk [vmem:[#allocation2 + $0x168] sm:$0x1] %vm96, 0.0
  %113 = vst.msk [vmem:[#allocation2 + $0x180] sm:$0x1] %vm96, 0.0
  %114 = vst.msk [vmem:[#allocation2 + $0x198] sm:$0x1] %vm96, 0.0
  %115 = vst.msk [vmem:[#allocation2 + $0x1b0] sm:$0x1] %vm96, 0.0
  %116 = vst.msk [vmem:[#allocation2 + $0x1c8] sm:$0x1] %vm96, 0.0
  %117 = vst.msk [vmem:[#allocation2 + $0x1e0] sm:$0x1] %vm96, 0.0
  %118 = vst.msk [vmem:[#allocation2 + $0x1f8] sm:$0x1] %vm96, 0.0
  %119 = vst.msk [vmem:[#allocation2 + $0x210] sm:$0x1] %vm96, 0.0
  %120 = vst.msk [vmem:[#allocation2 + $0x228] sm:$0x1] %vm96, 0.0
  %121 = vst.msk [vmem:[#allocation2 + $0x240] sm:$0x1] %vm96, 0.0
  %122 = vst.msk [vmem:[#allocation2 + $0x258] sm:$0x1] %vm96, 0.0
  %123 = vst.msk [vmem:[#allocation2 + $0x270] sm:$0x1] %vm96, 0.0
  %124 = vst.msk [vmem:[#allocation2 + $0x288] sm:$0x1] %vm96, 0.0
  %125 = vst.msk [vmem:[#allocation2 + $0x2a0] sm:$0x1] %vm96, 0.0
  %126 = vst.msk [vmem:[#allocation2 + $0x2b8] sm:$0x1] %vm96, 0.0
  %127 = vst.msk [vmem:[#allocation2 + $0x2d0] sm:$0x1] %vm96, 0.0
  %128 = vst.msk [vmem:[#allocation2 + $0x2e8] sm:$0x1] %vm96, 0.0
  %129 = vst.msk [vmem:[#allocation2 + $0x300] sm:$0x1] %vm96, 0.0
  %130 = vst.msk [vmem:[#allocation2 + $0x318] sm:$0x1] %vm96, 0.0
  %131 = vst.msk [vmem:[#allocation2 + $0x330] sm:$0x1] %vm96, 0.0
  %132 = vst.msk [vmem:[#allocation2 + $0x348] sm:$0x1] %vm96, 0.0
  %133 = vst.msk [vmem:[#allocation2 + $0x11] sm:$0x1] %vm96, 0.0
  %134 = vst.msk [vmem:[#allocation2 + $0x29] sm:$0x1] %vm96, 0.0
  %135 = vst.msk [vmem:[#allocation2 + $0x41] sm:$0x1] %vm96, 0.0
  %136 = vst.msk [vmem:[#allocation2 + $0x59] sm:$0x1] %vm96, 0.0
  %137 = vst.msk [vmem:[#allocation2 + $0x71] sm:$0x1] %vm96, 0.0
  %138 = vst.msk [vmem:[#allocation2 + $0x89] sm:$0x1] %vm96, 0.0
  %139 = vst.msk [vmem:[#allocation2 + $0xa1] sm:$0x1] %vm96, 0.0
  %140 = vst.msk [vmem:[#allocation2 + $0xb9] sm:$0x1] %vm96, 0.0
  %141 = vst.msk [vmem:[#allocation2 + $0xd1] sm:$0x1] %vm96, 0.0
  %142 = vst.msk [vmem:[#allocation2 + $0xe9] sm:$0x1] %vm96, 0.0
  %143 = vst.msk [vmem:[#allocation2 + $0x101] sm:$0x1] %vm96, 0.0
  %144 = vst.msk [vmem:[#allocation2 + $0x119] sm:$0x1] %vm96, 0.0
  %145 = vst.msk [vmem:[#allocation2 + $0x131] sm:$0x1] %vm96, 0.0
  %146 = vst.msk [vmem:[#allocation2 + $0x149] sm:$0x1] %vm96, 0.0
  %147 = vst.msk [vmem:[#allocation2 + $0x161] sm:$0x1] %vm96, 0.0
  %148 = vst.msk [vmem:[#allocation2 + $0x179] sm:$0x1] %vm96, 0.0
  %149 = vst.msk [vmem:[#allocation2 + $0x191] sm:$0x1] %vm96, 0.0
  %150 = vst.msk [vmem:[#allocation2 + $0x1a9] sm:$0x1] %vm96, 0.0
  %151 = vst.msk [vmem:[#allocation2 + $0x1c1] sm:$0x1] %vm96, 0.0
  %152 = vst.msk [vmem:[#allocation2 + $0x1d9] sm:$0x1] %vm96, 0.0
  %153 = vst.msk [vmem:[#allocation2 + $0x1f1] sm:$0x1] %vm96, 0.0
  %154 = vst.msk [vmem:[#allocation2 + $0x209] sm:$0x1] %vm96, 0.0
  %155 = vst.msk [vmem:[#allocation2 + $0x221] sm:$0x1] %vm96, 0.0
  %156 = vst.msk [vmem:[#allocation2 + $0x239] sm:$0x1] %vm96, 0.0
  %157 = vst.msk [vmem:[#allocation2 + $0x251] sm:$0x1] %vm96, 0.0
  %158 = vst.msk [vmem:[#allocation2 + $0x269] sm:$0x1] %vm96, 0.0
  %159 = vst.msk [vmem:[#allocation2 + $0x281] sm:$0x1] %vm96, 0.0
  %160 = vst.msk [vmem:[#allocation2 + $0x299] sm:$0x1] %vm96, 0.0
  %161 = vst.msk [vmem:[#allocation2 + $0x2b1] sm:$0x1] %vm96, 0.0
  %162 = vst.msk [vmem:[#allocation2 + $0x2c9] sm:$0x1] %vm96, 0.0
  %163 = vst.msk [vmem:[#allocation2 + $0x2e1] sm:$0x1] %vm96, 0.0
  %164 = vst.msk [vmem:[#allocation2 + $0x2f9] sm:$0x1] %vm96, 0.0
  %165 = vst.msk [vmem:[#allocation2 + $0x311] sm:$0x1] %vm96, 0.0
  %166 = vst.msk [vmem:[#allocation2 + $0x329] sm:$0x1] %vm96, 0.0
  %167 = vst.msk [vmem:[#allocation2 + $0x341] sm:$0x1] %vm96, 0.0
  %168 = vst.msk [vmem:[#allocation2 + $0x359] sm:$0x1] %vm96, 0.0
  %s169 = scalar_lea.vmem [#allocation2], 24
  %170 = vst.msk [vmem:[%s169 + $0x1] sm:$0xff] %vm81, %v17
  %171 = vst.msk [vmem:[%s169 + $0x9] sm:$0xff] %vm81, %v18
  %172 = vst.msk [vmem:[%s169 + $0x19] sm:$0xff] %vm81, %v19
  %173 = vst.msk [vmem:[%s169 + $0x21] sm:$0xff] %vm81, %v20
  %174 = vst.msk [vmem:[%s169 + $0x31] sm:$0xff] %vm81, %v21
  %175 = vst.msk [vmem:[%s169 + $0x39] sm:$0xff] %vm81, %v22
  %176 = vst.msk [vmem:[%s169 + $0x49] sm:$0xff] %vm81, %v23
  %177 = vst.msk [vmem:[%s169 + $0x51] sm:$0xff] %vm81, %v24
  %178 = vst.msk [vmem:[%s169 + $0x61] sm:$0xff] %vm81, %v25
  %179 = vst.msk [vmem:[%s169 + $0x69] sm:$0xff] %vm81, %v26
  %180 = vst.msk [vmem:[%s169 + $0x79] sm:$0xff] %vm81, %v27
  %181 = vst.msk [vmem:[%s169 + $0x81] sm:$0xff] %vm81, %v28
  %182 = vst.msk [vmem:[%s169 + $0x91] sm:$0xff] %vm81, %v29
  %183 = vst.msk [vmem:[%s169 + $0x99] sm:$0xff] %vm81, %v30
  %184 = vst.msk [vmem:[%s169 + $0xa9] sm:$0xff] %vm81, %v31
  %185 = vst.msk [vmem:[%s169 + $0xb1] sm:$0xff] %vm81, %v32
  %186 = vst.msk [vmem:[%s169 + $0xc1] sm:$0xff] %vm81, %v33
  %187 = vst.msk [vmem:[%s169 + $0xc9] sm:$0xff] %vm81, %v34
  %188 = vst.msk [vmem:[%s169 + $0xd9] sm:$0xff] %vm81, %v35
  %189 = vst.msk [vmem:[%s169 + $0xe1] sm:$0xff] %vm81, %v36
  %190 = vst.msk [vmem:[%s169 + $0xf1] sm:$0xff] %vm81, %v37
  %191 = vst.msk [vmem:[%s169 + $0xf9] sm:$0xff] %vm81, %v38
  %192 = vst.msk [vmem:[%s169 + $0x109] sm:$0xff] %vm81, %v39
  %193 = vst.msk [vmem:[%s169 + $0x111] sm:$0xff] %vm81, %v40
  %194 = vst.msk [vmem:[%s169 + $0x121] sm:$0xff] %vm81, %v41
  %195 = vst.msk [vmem:[%s169 + $0x129] sm:$0xff] %vm81, %v42
  %196 = vst.msk [vmem:[%s169 + $0x139] sm:$0xff] %vm81, %v43
  %197 = vst.msk [vmem:[%s169 + $0x141] sm:$0xff] %vm81, %v44
  %198 = vst.msk [vmem:[%s169 + $0x151] sm:$0xff] %vm81, %v45
  %199 = vst.msk [vmem:[%s169 + $0x159] sm:$0xff] %vm81, %v46
  %200 = vst.msk [vmem:[%s169 + $0x169] sm:$0xff] %vm81, %v47
  %201 = vst.msk [vmem:[%s169 + $0x171] sm:$0xff] %vm81, %v48
  %202 = vst.msk [vmem:[%s169 + $0x1b1] sm:$0xff] %vm81, %v49
  %203 = vst.msk [vmem:[%s169 + $0x1b9] sm:$0xff] %vm81, %v50
  %204 = vst.msk [vmem:[%s169 + $0x1c9] sm:$0xff] %vm81, %v51
  %205 = vst.msk [vmem:[%s169 + $0x1d1] sm:$0xff] %vm81, %v52
  %206 = vst.msk [vmem:[%s169 + $0x1e1] sm:$0xff] %vm81, %v53
  %207 = vst.msk [vmem:[%s169 + $0x1e9] sm:$0xff] %vm81, %v54
  %208 = vst.msk [vmem:[%s169 + $0x1f9] sm:$0xff] %vm81, %v55
  %209 = vst.msk [vmem:[%s169 + $0x201] sm:$0xff] %vm81, %v56
  %210 = vst.msk [vmem:[%s169 + $0x211] sm:$0xff] %vm81, %v57
  %211 = vst.msk [vmem:[%s169 + $0x219] sm:$0xff] %vm81, %v58
  %212 = vst.msk [vmem:[%s169 + $0x229] sm:$0xff] %vm81, %v59
  %213 = vst.msk [vmem:[%s169 + $0x231] sm:$0xff] %vm81, %v60
  %214 = vst.msk [vmem:[%s169 + $0x241] sm:$0xff] %vm81, %v61
  %215 = vst.msk [vmem:[%s169 + $0x249] sm:$0xff] %vm81, %v62
  %216 = vst.msk [vmem:[%s169 + $0x259] sm:$0xff] %vm81, %v63
  %217 = vst.msk [vmem:[%s169 + $0x261] sm:$0xff] %vm81, %v64
  %218 = vst.msk [vmem:[%s169 + $0x271] sm:$0xff] %vm81, %v65
  %219 = vst.msk [vmem:[%s169 + $0x279] sm:$0xff] %vm81, %v66
  %220 = vst.msk [vmem:[%s169 + $0x289] sm:$0xff] %vm81, %v67
  %221 = vst.msk [vmem:[%s169 + $0x291] sm:$0xff] %vm81, %v68
  %222 = vst.msk [vmem:[%s169 + $0x2a1] sm:$0xff] %vm81, %v69
  %223 = vst.msk [vmem:[%s169 + $0x2a9] sm:$0xff] %vm81, %v70
  %224 = vst.msk [vmem:[%s169 + $0x2b9] sm:$0xff] %vm81, %v71
  %225 = vst.msk [vmem:[%s169 + $0x2c1] sm:$0xff] %vm81, %v72
  %226 = vst.msk [vmem:[%s169 + $0x2d1] sm:$0xff] %vm81, %v73
  %227 = vst.msk [vmem:[%s169 + $0x2d9] sm:$0xff] %vm81, %v74
  %228 = vst.msk [vmem:[%s169 + $0x2e9] sm:$0xff] %vm81, %v75
  %229 = vst.msk [vmem:[%s169 + $0x2f1] sm:$0xff] %vm81, %v76
  %230 = vst.msk [vmem:[%s169 + $0x301] sm:$0xff] %vm81, %v77
  %231 = vst.msk [vmem:[%s169 + $0x309] sm:$0xff] %vm81, %v78
  %232 = vst.msk [vmem:[%s169 + $0x319] sm:$0xff] %vm81, %v79
  %233 = vst.msk [vmem:[%s169 + $0x321] sm:$0xff] %vm81, %v80
  %v234 = vld [vmem:[#allocation2] sm:$0xff]
  %v235 = vld [vmem:[#allocation2 + $0x8] sm:$0xff]
  %v236 = vld [vmem:[#allocation2 + $0x18] sm:$0xff]
  %v237 = vld [vmem:[#allocation2 + $0x20] sm:$0xff]
  %v238 = vld [vmem:[#allocation2 + $0x30] sm:$0xff]
  %v239 = vld [vmem:[#allocation2 + $0x38] sm:$0xff]
  %v240 = vld [vmem:[#allocation2 + $0x48] sm:$0xff]
  %v241 = vld [vmem:[#allocation2 + $0x50] sm:$0xff]
  %v242 = vld [vmem:[#allocation2 + $0x60] sm:$0xff]
  %v243 = vld [vmem:[#allocation2 + $0x68] sm:$0xff]
  %v244 = vld [vmem:[#allocation2 + $0x78] sm:$0xff]
  %v245 = vld [vmem:[#allocation2 + $0x80] sm:$0xff]
  %v246 = vld [vmem:[#allocation2 + $0x90] sm:$0xff]
  %v247 = vld [vmem:[#allocation2 + $0x98] sm:$0xff]
  %v248 = vld [vmem:[#allocation2 + $0xa8] sm:$0xff]
  %v249 = vld [vmem:[#allocation2 + $0xb0] sm:$0xff]
  %v250 = vld [vmem:[#allocation2 + $0xc0] sm:$0xff]
  %v251 = vld [vmem:[#allocation2 + $0xc8] sm:$0xff]
  %v252 = vld [vmem:[#allocation2 + $0xd8] sm:$0xff]
  %v253 = vld [vmem:[#allocation2 + $0xe0] sm:$0xff]
  %v254 = vld [vmem:[#allocation2 + $0xf0] sm:$0xff]
  %v255 = vld [vmem:[#allocation2 + $0xf8] sm:$0xff]
  %v256 = vld [vmem:[#allocation2 + $0x108] sm:$0xff]
  %v257 = vld [vmem:[#allocation2 + $0x110] sm:$0xff]
  %v258 = vld [vmem:[#allocation2 + $0x120] sm:$0xff]
  %v259 = vld [vmem:[#allocation2 + $0x128] sm:$0xff]
  %v260 = vld [vmem:[#allocation2 + $0x138] sm:$0xff]
  %v261 = vld [vmem:[#allocation2 + $0x140] sm:$0xff]
  %v262 = vld [vmem:[#allocation2 + $0x150] sm:$0xff]
  %v263 = vld [vmem:[#allocation2 + $0x158] sm:$0xff]
  %v264 = vld [vmem:[#allocation2 + $0x168] sm:$0xff]
  %v265 = vld [vmem:[#allocation2 + $0x170] sm:$0xff]
  %v266 = vld [vmem:[#allocation2 + $0x1b0] sm:$0xff]
  %v267 = vld [vmem:[#allocation2 + $0x1b8] sm:$0xff]
  %v268 = vld [vmem:[#allocation2 + $0x1c8] sm:$0xff]
  %v269 = vld [vmem:[#allocation2 + $0x1d0] sm:$0xff]
  %v270 = vld [vmem:[#allocation2 + $0x1e0] sm:$0xff]
  %v271 = vld [vmem:[#allocation2 + $0x1e8] sm:$0xff]
  %v272 = vld [vmem:[#allocation2 + $0x1f8] sm:$0xff]
  %v273 = vld [vmem:[#allocation2 + $0x200] sm:$0xff]
  %v274 = vld [vmem:[#allocation2 + $0x210] sm:$0xff]
  %v275 = vld [vmem:[#allocation2 + $0x218] sm:$0xff]
  %v276 = vld [vmem:[#allocation2 + $0x228] sm:$0xff]
  %v277 = vld [vmem:[#allocation2 + $0x230] sm:$0xff]
  %v278 = vld [vmem:[#allocation2 + $0x240] sm:$0xff]
  %v279 = vld [vmem:[#allocation2 + $0x248] sm:$0xff]
  %v280 = vld [vmem:[#allocation2 + $0x258] sm:$0xff]
  %v281 = vld [vmem:[#allocation2 + $0x260] sm:$0xff]
  %v282 = vld [vmem:[#allocation2 + $0x270] sm:$0xff]
  %v283 = vld [vmem:[#allocation2 + $0x278] sm:$0xff]
  %v284 = vld [vmem:[#allocation2 + $0x288] sm:$0xff]
  %v285 = vld [vmem:[#allocation2 + $0x290] sm:$0xff]
  %v286 = vld [vmem:[#allocation2 + $0x2a0] sm:$0xff]
  %v287 = vld [vmem:[#allocation2 + $0x2a8] sm:$0xff]
  %v288 = vld [vmem:[#allocation2 + $0x2b8] sm:$0xff]
  %v289 = vld [vmem:[#allocation2 + $0x2c0] sm:$0xff]
  %v290 = vld [vmem:[#allocation2 + $0x2d0] sm:$0xff]
  %v291 = vld [vmem:[#allocation2 + $0x2d8] sm:$0xff]
  %v292 = vld [vmem:[#allocation2 + $0x2e8] sm:$0xff]
  %v293 = vld [vmem:[#allocation2 + $0x2f0] sm:$0xff]
  %v294 = vld [vmem:[#allocation2 + $0x300] sm:$0xff]
  %v295 = vld [vmem:[#allocation2 + $0x308] sm:$0xff]
  %v296 = vld [vmem:[#allocation2 + $0x318] sm:$0xff]
  %v297 = vld [vmem:[#allocation2 + $0x320] sm:$0xff]
  %298 = vst.msk [vmem:[#allocation3] sm:$0xff] %vm81, %v234
  %299 = vst.msk [vmem:[#allocation3 + $0x8] sm:$0xff] %vm81, %v235
  %300 = vst.msk [vmem:[#allocation3 + $0x10] sm:$0xff] %vm81, %v236
  %301 = vst.msk [vmem:[#allocation3 + $0x18] sm:$0xff] %vm81, %v237
  %302 = vst.msk [vmem:[#allocation3 + $0x20] sm:$0xff] %vm81, %v238
  %303 = vst.msk [vmem:[#allocation3 + $0x28] sm:$0xff] %vm81, %v239
  %304 = vst.msk [vmem:[#allocation3 + $0x30] sm:$0xff] %vm81, %v240
  %305 = vst.msk [vmem:[#allocation3 + $0x38] sm:$0xff] %vm81, %v241
  %306 = vst.msk [vmem:[#allocation3 + $0x40] sm:$0xff] %vm81, %v242
  %307 = vst.msk [vmem:[#allocation3 + $0x48] sm:$0xff] %vm81, %v243
  %308 = vst.msk [vmem:[#allocation3 + $0x50] sm:$0xff] %vm81, %v244
  %309 = vst.msk [vmem:[#allocation3 + $0x58] sm:$0xff] %vm81, %v245
  %310 = vst.msk [vmem:[#allocation3 + $0x60] sm:$0xff] %vm81, %v246
  %311 = vst.msk [vmem:[#allocation3 + $0x68] sm:$0xff] %vm81, %v247
  %312 = vst.msk [vmem:[#allocation3 + $0x70] sm:$0xff] %vm81, %v248
  %313 = vst.msk [vmem:[#allocation3 + $0x78] sm:$0xff] %vm81, %v249
  %314 = vst.msk [vmem:[#allocation3 + $0x80] sm:$0xff] %vm81, %v250
  %315 = vst.msk [vmem:[#allocation3 + $0x88] sm:$0xff] %vm81, %v251
  %316 = vst.msk [vmem:[#allocation3 + $0x90] sm:$0xff] %vm81, %v252
  %317 = vst.msk [vmem:[#allocation3 + $0x98] sm:$0xff] %vm81, %v253
  %318 = vst.msk [vmem:[#allocation3 + $0xa0] sm:$0xff] %vm81, %v254
  %319 = vst.msk [vmem:[#allocation3 + $0xa8] sm:$0xff] %vm81, %v255
  %320 = vst.msk [vmem:[#allocation3 + $0xb0] sm:$0xff] %vm81, %v256
  %321 = vst.msk [vmem:[#allocation3 + $0xb8] sm:$0xff] %vm81, %v257
  %322 = vst.msk [vmem:[#allocation3 + $0xc0] sm:$0xff] %vm81, %v258
  %323 = vst.msk [vmem:[#allocation3 + $0xc8] sm:$0xff] %vm81, %v259
  %324 = vst.msk [vmem:[#allocation3 + $0xd0] sm:$0xff] %vm81, %v260
  %325 = vst.msk [vmem:[#allocation3 + $0xd8] sm:$0xff] %vm81, %v261
  %326 = vst.msk [vmem:[#allocation3 + $0xe0] sm:$0xff] %vm81, %v262
  %327 = vst.msk [vmem:[#allocation3 + $0xe8] sm:$0xff] %vm81, %v263
  %328 = vst.msk [vmem:[#allocation3 + $0xf0] sm:$0xff] %vm81, %v264
  %329 = vst.msk [vmem:[#allocation3 + $0xf8] sm:$0xff] %vm81, %v265
  %330 = vst.msk [vmem:[#allocation3 + $0x100] sm:$0xff] %vm81, %v266
  %331 = vst.msk [vmem:[#allocation3 + $0x108] sm:$0xff] %vm81, %v267
  %332 = vst.msk [vmem:[#allocation3 + $0x110] sm:$0xff] %vm81, %v268
  %333 = vst.msk [vmem:[#allocation3 + $0x118] sm:$0xff] %vm81, %v269
  %334 = vst.msk [vmem:[#allocation3 + $0x120] sm:$0xff] %vm81, %v270
  %335 = vst.msk [vmem:[#allocation3 + $0x128] sm:$0xff] %vm81, %v271
  %336 = vst.msk [vmem:[#allocation3 + $0x130] sm:$0xff] %vm81, %v272
  %337 = vst.msk [vmem:[#allocation3 + $0x138] sm:$0xff] %vm81, %v273
  %338 = vst.msk [vmem:[#allocation3 + $0x140] sm:$0xff] %vm81, %v274
  %339 = vst.msk [vmem:[#allocation3 + $0x148] sm:$0xff] %vm81, %v275
  %340 = vst.msk [vmem:[#allocation3 + $0x150] sm:$0xff] %vm81, %v276
  %341 = vst.msk [vmem:[#allocation3 + $0x158] sm:$0xff] %vm81, %v277
  %342 = vst.msk [vmem:[#allocation3 + $0x160] sm:$0xff] %vm81, %v278
  %343 = vst.msk [vmem:[#allocation3 + $0x168] sm:$0xff] %vm81, %v279
  %344 = vst.msk [vmem:[#allocation3 + $0x170] sm:$0xff] %vm81, %v280
  %345 = vst.msk [vmem:[#allocation3 + $0x178] sm:$0xff] %vm81, %v281
  %346 = vst.msk [vmem:[#allocation3 + $0x180] sm:$0xff] %vm81, %v282
  %347 = vst.msk [vmem:[#allocation3 + $0x188] sm:$0xff] %vm81, %v283
  %348 = vst.msk [vmem:[#allocation3 + $0x190] sm:$0xff] %vm81, %v284
  %349 = vst.msk [vmem:[#allocation3 + $0x198] sm:$0xff] %vm81, %v285
  %350 = vst.msk [vmem:[#allocation3 + $0x1a0] sm:$0xff] %vm81, %v286
  %351 = vst.msk [vmem:[#allocation3 + $0x1a8] sm:$0xff] %vm81, %v287
  %352 = vst.msk [vmem:[#allocation3 + $0x1b0] sm:$0xff] %vm81, %v288
  %353 = vst.msk [vmem:[#allocation3 + $0x1b8] sm:$0xff] %vm81, %v289
  %354 = vst.msk [vmem:[#allocation3 + $0x1c0] sm:$0xff] %vm81, %v290
  %355 = vst.msk [vmem:[#allocation3 + $0x1c8] sm:$0xff] %vm81, %v291
  %356 = vst.msk [vmem:[#allocation3 + $0x1d0] sm:$0xff] %vm81, %v292
  %357 = vst.msk [vmem:[#allocation3 + $0x1d8] sm:$0xff] %vm81, %v293
  %358 = vst.msk [vmem:[#allocation3 + $0x1e0] sm:$0xff] %vm81, %v294
  %359 = vst.msk [vmem:[#allocation3 + $0x1e8] sm:$0xff] %vm81, %v295
  %360 = vst.msk [vmem:[#allocation3 + $0x1f0] sm:$0xff] %vm81, %v296
  %361 = vst.msk [vmem:[#allocation3 + $0x1f8] sm:$0xff] %vm81, %v297
  %v362 = vld [vmem:[#allocation2 + $0x1] sm:$0xff]
  %v363 = vld [vmem:[#allocation2 + $0x9] sm:$0xff]
  %v364 = vld [vmem:[#allocation2 + $0x19] sm:$0xff]
  %v365 = vld [vmem:[#allocation2 + $0x21] sm:$0xff]
  %v366 = vld [vmem:[#allocation2 + $0x31] sm:$0xff]
  %v367 = vld [vmem:[#allocation2 + $0x39] sm:$0xff]
  %v368 = vld [vmem:[#allocation2 + $0x49] sm:$0xff]
  %v369 = vld [vmem:[#allocation2 + $0x51] sm:$0xff]
  %v370 = vld [vmem:[#allocation2 + $0x61] sm:$0xff]
  %v371 = vld [vmem:[#allocation2 + $0x69] sm:$0xff]
  %v372 = vld [vmem:[#allocation2 + $0x79] sm:$0xff]
  %v373 = vld [vmem:[#allocation2 + $0x81] sm:$0xff]
  %v374 = vld [vmem:[#allocation2 + $0x91] sm:$0xff]
  %v375 = vld [vmem:[#allocation2 + $0x99] sm:$0xff]
  %v376 = vld [vmem:[#allocation2 + $0xa9] sm:$0xff]
  %v377 = vld [vmem:[#allocation2 + $0xb1] sm:$0xff]
  %v378 = vld [vmem:[#allocation2 + $0xc1] sm:$0xff]
  %v379 = vld [vmem:[#allocation2 + $0xc9] sm:$0xff]
  %v380 = vld [vmem:[#allocation2 + $0xd9] sm:$0xff]
  %v381 = vld [vmem:[#allocation2 + $0xe1] sm:$0xff]
  %v382 = vld [vmem:[#allocation2 + $0xf1] sm:$0xff]
  %v383 = vld [vmem:[#allocation2 + $0xf9] sm:$0xff]
  %v384 = vld [vmem:[#allocation2 + $0x109] sm:$0xff]
  %v385 = vld [vmem:[#allocation2 + $0x111] sm:$0xff]
  %v386 = vld [vmem:[#allocation2 + $0x121] sm:$0xff]
  %v387 = vld [vmem:[#allocation2 + $0x129] sm:$0xff]
  %v388 = vld [vmem:[#allocation2 + $0x139] sm:$0xff]
  %v389 = vld [vmem:[#allocation2 + $0x141] sm:$0xff]
  %v390 = vld [vmem:[#allocation2 + $0x151] sm:$0xff]
  %v391 = vld [vmem:[#allocation2 + $0x159] sm:$0xff]
  %v392 = vld [vmem:[#allocation2 + $0x169] sm:$0xff]
  %v393 = vld [vmem:[#allocation2 + $0x171] sm:$0xff]
  %v394 = vld [vmem:[#allocation2 + $0x1b1] sm:$0xff]
  %v395 = vld [vmem:[#allocation2 + $0x1b9] sm:$0xff]
  %v396 = vld [vmem:[#allocation2 + $0x1c9] sm:$0xff]
  %v397 = vld [vmem:[#allocation2 + $0x1d1] sm:$0xff]
  %v398 = vld [vmem:[#allocation2 + $0x1e1] sm:$0xff]
  %v399 = vld [vmem:[#allocation2 + $0x1e9] sm:$0xff]
  %v400 = vld [vmem:[#allocation2 + $0x1f9] sm:$0xff]
  %v401 = vld [vmem:[#allocation2 + $0x201] sm:$0xff]
  %v402 = vld [vmem:[#allocation2 + $0x211] sm:$0xff]
  %v403 = vld [vmem:[#allocation2 + $0x219] sm:$0xff]
  %v404 = vld [vmem:[#allocation2 + $0x229] sm:$0xff]
  %v405 = vld [vmem:[#allocation2 + $0x231] sm:$0xff]
  %v406 = vld [vmem:[#allocation2 + $0x241] sm:$0xff]
  %v407 = vld [vmem:[#allocation2 + $0x249] sm:$0xff]
  %v408 = vld [vmem:[#allocation2 + $0x259] sm:$0xff]
  %v409 = vld [vmem:[#allocation2 + $0x261] sm:$0xff]
  %v410 = vld [vmem:[#allocation2 + $0x271] sm:$0xff]
  %v411 = vld [vmem:[#allocation2 + $0x279] sm:$0xff]
  %v412 = vld [vmem:[#allocation2 + $0x289] sm:$0xff]
  %v413 = vld [vmem:[#allocation2 + $0x291] sm:$0xff]
  %v414 = vld [vmem:[#allocation2 + $0x2a1] sm:$0xff]
  %v415 = vld [vmem:[#allocation2 + $0x2a9] sm:$0xff]
  %v416 = vld [vmem:[#allocation2 + $0x2b9] sm:$0xff]
  %v417 = vld [vmem:[#allocation2 + $0x2c1] sm:$0xff]
  %v418 = vld [vmem:[#allocation2 + $0x2d1] sm:$0xff]
  %v419 = vld [vmem:[#allocation2 + $0x2d9] sm:$0xff]
  %v420 = vld [vmem:[#allocation2 + $0x2e9] sm:$0xff]
  %v421 = vld [vmem:[#allocation2 + $0x2f1] sm:$0xff]
  %v422 = vld [vmem:[#allocation2 + $0x301] sm:$0xff]
  %v423 = vld [vmem:[#allocation2 + $0x309] sm:$0xff]
  %v424 = vld [vmem:[#allocation2 + $0x319] sm:$0xff]
  %v425 = vld [vmem:[#allocation2 + $0x321] sm:$0xff]
  %490 = vrot.lane.b32.xlu0 %v362, 4
  %v491 = vpop.permute.xlu0 %490
  %492 = vrot.lane.b32.xlu0 %v363, 4
  %v493 = vpop.permute.xlu0 %492
  %494 = vrot.lane.b32.xlu0 %v364, 4
  %v495 = vpop.permute.xlu0 %494
  %496 = vrot.lane.b32.xlu0 %v365, 4
  %v497 = vpop.permute.xlu0 %496
  %498 = vrot.lane.b32.xlu0 %v366, 4
  %v499 = vpop.permute.xlu0 %498
  %500 = vrot.lane.b32.xlu0 %v367, 4
  %v501 = vpop.permute.xlu0 %500
  %502 = vrot.lane.b32.xlu0 %v368, 4
  %v503 = vpop.permute.xlu0 %502
  %504 = vrot.lane.b32.xlu0 %v369, 4
  %v505 = vpop.permute.xlu0 %504
  %506 = vrot.lane.b32.xlu0 %v370, 4
  %v507 = vpop.permute.xlu0 %506
  %508 = vrot.lane.b32.xlu0 %v371, 4
  %v509 = vpop.permute.xlu0 %508
  %510 = vrot.lane.b32.xlu0 %v372, 4
  %v511 = vpop.permute.xlu0 %510
  %512 = vrot.lane.b32.xlu0 %v373, 4
  %v513 = vpop.permute.xlu0 %512
  %514 = vrot.lane.b32.xlu0 %v374, 4
  %v515 = vpop.permute.xlu0 %514
  %516 = vrot.lane.b32.xlu0 %v375, 4
  %v517 = vpop.permute.xlu0 %516
  %518 = vrot.lane.b32.xlu0 %v376, 4
  %v519 = vpop.permute.xlu0 %518
  %520 = vrot.lane.b32.xlu0 %v377, 4
  %v521 = vpop.permute.xlu0 %520
  %522 = vrot.lane.b32.xlu0 %v378, 4
  %v523 = vpop.permute.xlu0 %522
  %524 = vrot.lane.b32.xlu0 %v379, 4
  %v525 = vpop.permute.xlu0 %524
  %526 = vrot.lane.b32.xlu0 %v380, 4
  %v527 = vpop.permute.xlu0 %526
  %528 = vrot.lane.b32.xlu0 %v381, 4
  %v529 = vpop.permute.xlu0 %528
  %530 = vrot.lane.b32.xlu0 %v382, 4
  %v531 = vpop.permute.xlu0 %530
  %532 = vrot.lane.b32.xlu0 %v383, 4
  %v533 = vpop.permute.xlu0 %532
  %534 = vrot.lane.b32.xlu0 %v384, 4
  %v535 = vpop.permute.xlu0 %534
  %536 = vrot.lane.b32.xlu0 %v385, 4
  %v537 = vpop.permute.xlu0 %536
  %538 = vrot.lane.b32.xlu0 %v386, 4
  %v539 = vpop.permute.xlu0 %538
  %540 = vrot.lane.b32.xlu0 %v387, 4
  %v541 = vpop.permute.xlu0 %540
  %542 = vrot.lane.b32.xlu0 %v388, 4
  %v543 = vpop.permute.xlu0 %542
  %544 = vrot.lane.b32.xlu0 %v389, 4
  %v545 = vpop.permute.xlu0 %544
  %546 = vrot.lane.b32.xlu0 %v390, 4
  %v547 = vpop.permute.xlu0 %546
  %548 = vrot.lane.b32.xlu0 %v391, 4
  %v549 = vpop.permute.xlu0 %548
  %550 = vrot.lane.b32.xlu0 %v392, 4
  %v551 = vpop.permute.xlu0 %550
  %552 = vrot.lane.b32.xlu0 %v393, 4
  %v553 = vpop.permute.xlu0 %552
  %554 = vrot.lane.b32.xlu0 %v394, 4
  %v555 = vpop.permute.xlu0 %554
  %556 = vrot.lane.b32.xlu0 %v395, 4
  %v557 = vpop.permute.xlu0 %556
  %558 = vrot.lane.b32.xlu0 %v396, 4
  %v559 = vpop.permute.xlu0 %558
  %560 = vrot.lane.b32.xlu0 %v397, 4
  %v561 = vpop.permute.xlu0 %560
  %562 = vrot.lane.b32.xlu0 %v398, 4
  %v563 = vpop.permute.xlu0 %562
  %564 = vrot.lane.b32.xlu0 %v399, 4
  %v565 = vpop.permute.xlu0 %564
  %566 = vrot.lane.b32.xlu0 %v400, 4
  %v567 = vpop.permute.xlu0 %566
  %568 = vrot.lane.b32.xlu0 %v401, 4
  %v569 = vpop.permute.xlu0 %568
  %570 = vrot.lane.b32.xlu0 %v402, 4
  %v571 = vpop.permute.xlu0 %570
  %572 = vrot.lane.b32.xlu0 %v403, 4
  %v573 = vpop.permute.xlu0 %572
  %574 = vrot.lane.b32.xlu0 %v404, 4
  %v575 = vpop.permute.xlu0 %574
  %576 = vrot.lane.b32.xlu0 %v405, 4
  %v577 = vpop.permute.xlu0 %576
  %578 = vrot.lane.b32.xlu0 %v406, 4
  %v579 = vpop.permute.xlu0 %578
  %580 = vrot.lane.b32.xlu0 %v407, 4
  %v581 = vpop.permute.xlu0 %580
  %582 = vrot.lane.b32.xlu0 %v408, 4
  %v583 = vpop.permute.xlu0 %582
  %584 = vrot.lane.b32.xlu0 %v409, 4
  %v585 = vpop.permute.xlu0 %584
  %586 = vrot.lane.b32.xlu0 %v410, 4
  %v587 = vpop.permute.xlu0 %586
  %588 = vrot.lane.b32.xlu0 %v411, 4
  %v589 = vpop.permute.xlu0 %588
  %590 = vrot.lane.b32.xlu0 %v412, 4
  %v591 = vpop.permute.xlu0 %590
  %592 = vrot.lane.b32.xlu0 %v413, 4
  %v593 = vpop.permute.xlu0 %592
  %594 = vrot.lane.b32.xlu0 %v414, 4
  %v595 = vpop.permute.xlu0 %594
  %596 = vrot.lane.b32.xlu0 %v415, 4
  %v597 = vpop.permute.xlu0 %596
  %598 = vrot.lane.b32.xlu0 %v416, 4
  %v599 = vpop.permute.xlu0 %598
  %600 = vrot.lane.b32.xlu0 %v417, 4
  %v601 = vpop.permute.xlu0 %600
  %602 = vrot.lane.b32.xlu0 %v418, 4
  %v603 = vpop.permute.xlu0 %602
  %604 = vrot.lane.b32.xlu0 %v419, 4
  %v605 = vpop.permute.xlu0 %604
  %606 = vrot.lane.b32.xlu0 %v420, 4
  %v607 = vpop.permute.xlu0 %606
  %608 = vrot.lane.b32.xlu0 %v421, 4
  %v609 = vpop.permute.xlu0 %608
  %610 = vrot.lane.b32.xlu0 %v422, 4
  %v611 = vpop.permute.xlu0 %610
  %612 = vrot.lane.b32.xlu0 %v423, 4
  %v613 = vpop.permute.xlu0 %612
  %614 = vrot.lane.b32.xlu0 %v424, 4
  %v615 = vpop.permute.xlu0 %614
  %616 = vrot.lane.b32.xlu0 %v425, 4
  %v617 = vpop.permute.xlu0 %616
  %vm682 = vcmask 64544
  %683 = vst.msk [vmem:[#allocation3] sm:$0xff] %vm682, %v491
  %684 = vst.msk [vmem:[#allocation3 + $0x8] sm:$0xff] %vm682, %v493
  %685 = vst.msk [vmem:[#allocation3 + $0x10] sm:$0xff] %vm682, %v495
  %686 = vst.msk [vmem:[#allocation3 + $0x18] sm:$0xff] %vm682, %v497
  %687 = vst.msk [vmem:[#allocation3 + $0x20] sm:$0xff] %vm682, %v499
  %688 = vst.msk [vmem:[#allocation3 + $0x28] sm:$0xff] %vm682, %v501
  %689 = vst.msk [vmem:[#allocation3 + $0x30] sm:$0xff] %vm682, %v503
  %690 = vst.msk [vmem:[#allocation3 + $0x38] sm:$0xff] %vm682, %v505
  %691 = vst.msk [vmem:[#allocation3 + $0x40] sm:$0xff] %vm682, %v507
  %692 = vst.msk [vmem:[#allocation3 + $0x48] sm:$0xff] %vm682, %v509
  %693 = vst.msk [vmem:[#allocation3 + $0x50] sm:$0xff] %vm682, %v511
  %694 = vst.msk [vmem:[#allocation3 + $0x58] sm:$0xff] %vm682, %v513
  %695 = vst.msk [vmem:[#allocation3 + $0x60] sm:$0xff] %vm682, %v515
  %696 = vst.msk [vmem:[#allocation3 + $0x68] sm:$0xff] %vm682, %v517
  %697 = vst.msk [vmem:[#allocation3 + $0x70] sm:$0xff] %vm682, %v519
  %698 = vst.msk [vmem:[#allocation3 + $0x78] sm:$0xff] %vm682, %v521
  %699 = vst.msk [vmem:[#allocation3 + $0x80] sm:$0xff] %vm682, %v523
  %700 = vst.msk [vmem:[#allocation3 + $0x88] sm:$0xff] %vm682, %v525
  %701 = vst.msk [vmem:[#allocation3 + $0x90] sm:$0xff] %vm682, %v527
  %702 = vst.msk [vmem:[#allocation3 + $0x98] sm:$0xff] %vm682, %v529
  %703 = vst.msk [vmem:[#allocation3 + $0xa0] sm:$0xff] %vm682, %v531
  %704 = vst.msk [vmem:[#allocation3 + $0xa8] sm:$0xff] %vm682, %v533
  %705 = vst.msk [vmem:[#allocation3 + $0xb0] sm:$0xff] %vm682, %v535
  %706 = vst.msk [vmem:[#allocation3 + $0xb8] sm:$0xff] %vm682, %v537
  %707 = vst.msk [vmem:[#allocation3 + $0xc0] sm:$0xff] %vm682, %v539
  %708 = vst.msk [vmem:[#allocation3 + $0xc8] sm:$0xff] %vm682, %v541
  %709 = vst.msk [vmem:[#allocation3 + $0xd0] sm:$0xff] %vm682, %v543
  %710 = vst.msk [vmem:[#allocation3 + $0xd8] sm:$0xff] %vm682, %v545
  %711 = vst.msk [vmem:[#allocation3 + $0xe0] sm:$0xff] %vm682, %v547
  %712 = vst.msk [vmem:[#allocation3 + $0xe8] sm:$0xff] %vm682, %v549
  %713 = vst.msk [vmem:[#allocation3 + $0xf0] sm:$0xff] %vm682, %v551
  %714 = vst.msk [vmem:[#allocation3 + $0xf8] sm:$0xff] %vm682, %v553
  %715 = vst.msk [vmem:[#allocation3 + $0x100] sm:$0xff] %vm682, %v555
  %716 = vst.msk [vmem:[#allocation3 + $0x108] sm:$0xff] %vm682, %v557
  %717 = vst.msk [vmem:[#allocation3 + $0x110] sm:$0xff] %vm682, %v559
  %718 = vst.msk [vmem:[#allocation3 + $0x118] sm:$0xff] %vm682, %v561
  %719 = vst.msk [vmem:[#allocation3 + $0x120] sm:$0xff] %vm682, %v563
  %720 = vst.msk [vmem:[#allocation3 + $0x128] sm:$0xff] %vm682, %v565
  %721 = vst.msk [vmem:[#allocation3 + $0x130] sm:$0xff] %vm682, %v567
  %722 = vst.msk [vmem:[#allocation3 + $0x138] sm:$0xff] %vm682, %v569
  %723 = vst.msk [vmem:[#allocation3 + $0x140] sm:$0xff] %vm682, %v571
  %724 = vst.msk [vmem:[#allocation3 + $0x148] sm:$0xff] %vm682, %v573
  %725 = vst.msk [vmem:[#allocation3 + $0x150] sm:$0xff] %vm682, %v575
  %726 = vst.msk [vmem:[#allocation3 + $0x158] sm:$0xff] %vm682, %v577
  %727 = vst.msk [vmem:[#allocation3 + $0x160] sm:$0xff] %vm682, %v579
  %728 = vst.msk [vmem:[#allocation3 + $0x168] sm:$0xff] %vm682, %v581
  %729 = vst.msk [vmem:[#allocation3 + $0x170] sm:$0xff] %vm682, %v583
  %730 = vst.msk [vmem:[#allocation3 + $0x178] sm:$0xff] %vm682, %v585
  %731 = vst.msk [vmem:[#allocation3 + $0x180] sm:$0xff] %vm682, %v587
  %732 = vst.msk [vmem:[#allocation3 + $0x188] sm:$0xff] %vm682, %v589
  %733 = vst.msk [vmem:[#allocation3 + $0x190] sm:$0xff] %vm682, %v591
  %734 = vst.msk [vmem:[#allocation3 + $0x198] sm:$0xff] %vm682, %v593
  %735 = vst.msk [vmem:[#allocation3 + $0x1a0] sm:$0xff] %vm682, %v595
  %736 = vst.msk [vmem:[#allocation3 + $0x1a8] sm:$0xff] %vm682, %v597
  %737 = vst.msk [vmem:[#allocation3 + $0x1b0] sm:$0xff] %vm682, %v599
  %738 = vst.msk [vmem:[#allocation3 + $0x1b8] sm:$0xff] %vm682, %v601
  %739 = vst.msk [vmem:[#allocation3 + $0x1c0] sm:$0xff] %vm682, %v603
  %740 = vst.msk [vmem:[#allocation3 + $0x1c8] sm:$0xff] %vm682, %v605
  %741 = vst.msk [vmem:[#allocation3 + $0x1d0] sm:$0xff] %vm682, %v607
  %742 = vst.msk [vmem:[#allocation3 + $0x1d8] sm:$0xff] %vm682, %v609
  %743 = vst.msk [vmem:[#allocation3 + $0x1e0] sm:$0xff] %vm682, %v611
  %744 = vst.msk [vmem:[#allocation3 + $0x1e8] sm:$0xff] %vm682, %v613
  %745 = vst.msk [vmem:[#allocation3 + $0x1f0] sm:$0xff] %vm682, %v615
  %746 = vst.msk [vmem:[#allocation3 + $0x1f8] sm:$0xff] %vm682, %v617
  %v747 = vld [vmem:[#allocation2 + $0x2] sm:$0xff]
  %v748 = vld [vmem:[#allocation2 + $0xa] sm:$0xff]
  %v749 = vld [vmem:[#allocation2 + $0x1a] sm:$0xff]
  %v750 = vld [vmem:[#allocation2 + $0x22] sm:$0xff]
  %v751 = vld [vmem:[#allocation2 + $0x32] sm:$0xff]
  %v752 = vld [vmem:[#allocation2 + $0x3a] sm:$0xff]
  %v753 = vld [vmem:[#allocation2 + $0x4a] sm:$0xff]
  %v754 = vld [vmem:[#allocation2 + $0x52] sm:$0xff]
  %v755 = vld [vmem:[#allocation2 + $0x62] sm:$0xff]
  %v756 = vld [vmem:[#allocation2 + $0x6a] sm:$0xff]
  %v757 = vld [vmem:[#allocation2 + $0x7a] sm:$0xff]
  %v758 = vld [vmem:[#allocation2 + $0x82] sm:$0xff]
  %v759 = vld [vmem:[#allocation2 + $0x92] sm:$0xff]
  %v760 = vld [vmem:[#allocation2 + $0x9a] sm:$0xff]
  %v761 = vld [vmem:[#allocation2 + $0xaa] sm:$0xff]
  %v762 = vld [vmem:[#allocation2 + $0xb2] sm:$0xff]
  %v763 = vld [vmem:[#allocation2 + $0xc2] sm:$0xff]
  %v764 = vld [vmem:[#allocation2 + $0xca] sm:$0xff]
  %v765 = vld [vmem:[#allocation2 + $0xda] sm:$0xff]
  %v766 = vld [vmem:[#allocation2 + $0xe2] sm:$0xff]
  %v767 = vld [vmem:[#allocation2 + $0xf2] sm:$0xff]
  %v768 = vld [vmem:[#allocation2 + $0xfa] sm:$0xff]
  %v769 = vld [vmem:[#allocation2 + $0x10a] sm:$0xff]
  %v770 = vld [vmem:[#allocation2 + $0x112] sm:$0xff]
  %v771 = vld [vmem:[#allocation2 + $0x122] sm:$0xff]
  %v772 = vld [vmem:[#allocation2 + $0x12a] sm:$0xff]
  %v773 = vld [vmem:[#allocation2 + $0x13a] sm:$0xff]
  %v774 = vld [vmem:[#allocation2 + $0x142] sm:$0xff]
  %v775 = vld [vmem:[#allocation2 + $0x152] sm:$0xff]
  %v776 = vld [vmem:[#allocation2 + $0x15a] sm:$0xff]
  %v777 = vld [vmem:[#allocation2 + $0x16a] sm:$0xff]
  %v778 = vld [vmem:[#allocation2 + $0x172] sm:$0xff]
  %v779 = vld [vmem:[#allocation2 + $0x1b2] sm:$0xff]
  %v780 = vld [vmem:[#allocation2 + $0x1ba] sm:$0xff]
  %v781 = vld [vmem:[#allocation2 + $0x1ca] sm:$0xff]
  %v782 = vld [vmem:[#allocation2 + $0x1d2] sm:$0xff]
  %v783 = vld [vmem:[#allocation2 + $0x1e2] sm:$0xff]
  %v784 = vld [vmem:[#allocation2 + $0x1ea] sm:$0xff]
  %v785 = vld [vmem:[#allocation2 + $0x1fa] sm:$0xff]
  %v786 = vld [vmem:[#allocation2 + $0x202] sm:$0xff]
  %v787 = vld [vmem:[#allocation2 + $0x212] sm:$0xff]
  %v788 = vld [vmem:[#allocation2 + $0x21a] sm:$0xff]
  %v789 = vld [vmem:[#allocation2 + $0x22a] sm:$0xff]
  %v790 = vld [vmem:[#allocation2 + $0x232] sm:$0xff]
  %v791 = vld [vmem:[#allocation2 + $0x242] sm:$0xff]
  %v792 = vld [vmem:[#allocation2 + $0x24a] sm:$0xff]
  %v793 = vld [vmem:[#allocation2 + $0x25a] sm:$0xff]
  %v794 = vld [vmem:[#allocation2 + $0x262] sm:$0xff]
  %v795 = vld [vmem:[#allocation2 + $0x272] sm:$0xff]
  %v796 = vld [vmem:[#allocation2 + $0x27a] sm:$0xff]
  %v797 = vld [vmem:[#allocation2 + $0x28a] sm:$0xff]
  %v798 = vld [vmem:[#allocation2 + $0x292] sm:$0xff]
  %v799 = vld [vmem:[#allocation2 + $0x2a2] sm:$0xff]
  %v800 = vld [vmem:[#allocation2 + $0x2aa] sm:$0xff]
  %v801 = vld [vmem:[#allocation2 + $0x2ba] sm:$0xff]
  %v802 = vld [vmem:[#allocation2 + $0x2c2] sm:$0xff]
  %v803 = vld [vmem:[#allocation2 + $0x2d2] sm:$0xff]
  %v804 = vld [vmem:[#allocation2 + $0x2da] sm:$0xff]
  %v805 = vld [vmem:[#allocation2 + $0x2ea] sm:$0xff]
  %v806 = vld [vmem:[#allocation2 + $0x2f2] sm:$0xff]
  %v807 = vld [vmem:[#allocation2 + $0x302] sm:$0xff]
  %v808 = vld [vmem:[#allocation2 + $0x30a] sm:$0xff]
  %v809 = vld [vmem:[#allocation2 + $0x31a] sm:$0xff]
  %v810 = vld [vmem:[#allocation2 + $0x322] sm:$0xff]
  %875 = vrot.lane.b32.xlu0 %v747, 8
  %v876 = vpop.permute.xlu0 %875
  %877 = vrot.lane.b32.xlu0 %v748, 8
  %v878 = vpop.permute.xlu0 %877
  %879 = vrot.lane.b32.xlu0 %v749, 8
  %v880 = vpop.permute.xlu0 %879
  %881 = vrot.lane.b32.xlu0 %v750, 8
  %v882 = vpop.permute.xlu0 %881
  %883 = vrot.lane.b32.xlu0 %v751, 8
  %v884 = vpop.permute.xlu0 %883
  %885 = vrot.lane.b32.xlu0 %v752, 8
  %v886 = vpop.permute.xlu0 %885
  %887 = vrot.lane.b32.xlu0 %v753, 8
  %v888 = vpop.permute.xlu0 %887
  %889 = vrot.lane.b32.xlu0 %v754, 8
  %v890 = vpop.permute.xlu0 %889
  %891 = vrot.lane.b32.xlu0 %v755, 8
  %v892 = vpop.permute.xlu0 %891
  %893 = vrot.lane.b32.xlu0 %v756, 8
  %v894 = vpop.permute.xlu0 %893
  %895 = vrot.lane.b32.xlu0 %v757, 8
  %v896 = vpop.permute.xlu0 %895
  %897 = vrot.lane.b32.xlu0 %v758, 8
  %v898 = vpop.permute.xlu0 %897
  %899 = vrot.lane.b32.xlu0 %v759, 8
  %v900 = vpop.permute.xlu0 %899
  %901 = vrot.lane.b32.xlu0 %v760, 8
  %v902 = vpop.permute.xlu0 %901
  %903 = vrot.lane.b32.xlu0 %v761, 8
  %v904 = vpop.permute.xlu0 %903
  %905 = vrot.lane.b32.xlu0 %v762, 8
  %v906 = vpop.permute.xlu0 %905
  %907 = vrot.lane.b32.xlu0 %v763, 8
  %v908 = vpop.permute.xlu0 %907
  %909 = vrot.lane.b32.xlu0 %v764, 8
  %v910 = vpop.permute.xlu0 %909
  %911 = vrot.lane.b32.xlu0 %v765, 8
  %v912 = vpop.permute.xlu0 %911
  %913 = vrot.lane.b32.xlu0 %v766, 8
  %v914 = vpop.permute.xlu0 %913
  %915 = vrot.lane.b32.xlu0 %v767, 8
  %v916 = vpop.permute.xlu0 %915
  %917 = vrot.lane.b32.xlu0 %v768, 8
  %v918 = vpop.permute.xlu0 %917
  %919 = vrot.lane.b32.xlu0 %v769, 8
  %v920 = vpop.permute.xlu0 %919
  %921 = vrot.lane.b32.xlu0 %v770, 8
  %v922 = vpop.permute.xlu0 %921
  %923 = vrot.lane.b32.xlu0 %v771, 8
  %v924 = vpop.permute.xlu0 %923
  %925 = vrot.lane.b32.xlu0 %v772, 8
  %v926 = vpop.permute.xlu0 %925
  %927 = vrot.lane.b32.xlu0 %v773, 8
  %v928 = vpop.permute.xlu0 %927
  %929 = vrot.lane.b32.xlu0 %v774, 8
  %v930 = vpop.permute.xlu0 %929
  %931 = vrot.lane.b32.xlu0 %v775, 8
  %v932 = vpop.permute.xlu0 %931
  %933 = vrot.lane.b32.xlu0 %v776, 8
  %v934 = vpop.permute.xlu0 %933
  %935 = vrot.lane.b32.xlu0 %v777, 8
  %v936 = vpop.permute.xlu0 %935
  %937 = vrot.lane.b32.xlu0 %v778, 8
  %v938 = vpop.permute.xlu0 %937
  %939 = vrot.lane.b32.xlu0 %v779, 8
  %v940 = vpop.permute.xlu0 %939
  %941 = vrot.lane.b32.xlu0 %v780, 8
  %v942 = vpop.permute.xlu0 %941
  %943 = vrot.lane.b32.xlu0 %v781, 8
  %v944 = vpop.permute.xlu0 %943
  %945 = vrot.lane.b32.xlu0 %v782, 8
  %v946 = vpop.permute.xlu0 %945
  %947 = vrot.lane.b32.xlu0 %v783, 8
  %v948 = vpop.permute.xlu0 %947
  %949 = vrot.lane.b32.xlu0 %v784, 8
  %v950 = vpop.permute.xlu0 %949
  %951 = vrot.lane.b32.xlu0 %v785, 8
  %v952 = vpop.permute.xlu0 %951
  %953 = vrot.lane.b32.xlu0 %v786, 8
  %v954 = vpop.permute.xlu0 %953
  %955 = vrot.lane.b32.xlu0 %v787, 8
  %v956 = vpop.permute.xlu0 %955
  %957 = vrot.lane.b32.xlu0 %v788, 8
  %v958 = vpop.permute.xlu0 %957
  %959 = vrot.lane.b32.xlu0 %v789, 8
  %v960 = vpop.permute.xlu0 %959
  %961 = vrot.lane.b32.xlu0 %v790, 8
  %v962 = vpop.permute.xlu0 %961
  %963 = vrot.lane.b32.xlu0 %v791, 8
  %v964 = vpop.permute.xlu0 %963
  %965 = vrot.lane.b32.xlu0 %v792, 8
  %v966 = vpop.permute.xlu0 %965
  %967 = vrot.lane.b32.xlu0 %v793, 8
  %v968 = vpop.permute.xlu0 %967
  %969 = vrot.lane.b32.xlu0 %v794, 8
  %v970 = vpop.permute.xlu0 %969
  %971 = vrot.lane.b32.xlu0 %v795, 8
  %v972 = vpop.permute.xlu0 %971
  %973 = vrot.lane.b32.xlu0 %v796, 8
  %v974 = vpop.permute.xlu0 %973
  %975 = vrot.lane.b32.xlu0 %v797, 8
  %v976 = vpop.permute.xlu0 %975
  %977 = vrot.lane.b32.xlu0 %v798, 8
  %v978 = vpop.permute.xlu0 %977
  %979 = vrot.lane.b32.xlu0 %v799, 8
  %v980 = vpop.permute.xlu0 %979
  %981 = vrot.lane.b32.xlu0 %v800, 8
  %v982 = vpop.permute.xlu0 %981
  %983 = vrot.lane.b32.xlu0 %v801, 8
  %v984 = vpop.permute.xlu0 %983
  %985 = vrot.lane.b32.xlu0 %v802, 8
  %v986 = vpop.permute.xlu0 %985
  %987 = vrot.lane.b32.xlu0 %v803, 8
  %v988 = vpop.permute.xlu0 %987
  %989 = vrot.lane.b32.xlu0 %v804, 8
  %v990 = vpop.permute.xlu0 %989
  %991 = vrot.lane.b32.xlu0 %v805, 8
  %v992 = vpop.permute.xlu0 %991
  %993 = vrot.lane.b32.xlu0 %v806, 8
  %v994 = vpop.permute.xlu0 %993
  %995 = vrot.lane.b32.xlu0 %v807, 8
  %v996 = vpop.permute.xlu0 %995
  %997 = vrot.lane.b32.xlu0 %v808, 8
  %v998 = vpop.permute.xlu0 %997
  %999 = vrot.lane.b32.xlu0 %v809, 8
  %v1000 = vpop.permute.xlu0 %999
  %1001 = vrot.lane.b32.xlu0 %v810, 8
  %v1002 = vpop.permute.xlu0 %1001
  %vm1067 = vcmask 97344
  %1068 = vst.msk [vmem:[#allocation3] sm:$0xff] %vm1067, %v876
  %1069 = vst.msk [vmem:[#allocation3 + $0x8] sm:$0xff] %vm1067, %v878
  %1070 = vst.msk [vmem:[#allocation3 + $0x10] sm:$0xff] %vm1067, %v880
  %1071 = vst.msk [vmem:[#allocation3 + $0x18] sm:$0xff] %vm1067, %v882
  %1072 = vst.msk [vmem:[#allocation3 + $0x20] sm:$0xff] %vm1067, %v884
  %1073 = vst.msk [vmem:[#allocation3 + $0x28] sm:$0xff] %vm1067, %v886
  %1074 = vst.msk [vmem:[#allocation3 + $0x30] sm:$0xff] %vm1067, %v888
  %1075 = vst.msk [vmem:[#allocation3 + $0x38] sm:$0xff] %vm1067, %v890
  %1076 = vst.msk [vmem:[#allocation3 + $0x40] sm:$0xff] %vm1067, %v892
  %1077 = vst.msk [vmem:[#allocation3 + $0x48] sm:$0xff] %vm1067, %v894
  %1078 = vst.msk [vmem:[#allocation3 + $0x50] sm:$0xff] %vm1067, %v896
  %1079 = vst.msk [vmem:[#allocation3 + $0x58] sm:$0xff] %vm1067, %v898
  %1080 = vst.msk [vmem:[#allocation3 + $0x60] sm:$0xff] %vm1067, %v900
  %1081 = vst.msk [vmem:[#allocation3 + $0x68] sm:$0xff] %vm1067, %v902
  %1082 = vst.msk [vmem:[#allocation3 + $0x70] sm:$0xff] %vm1067, %v904
  %1083 = vst.msk [vmem:[#allocation3 + $0x78] sm:$0xff] %vm1067, %v906
  %1084 = vst.msk [vmem:[#allocation3 + $0x80] sm:$0xff] %vm1067, %v908
  %1085 = vst.msk [vmem:[#allocation3 + $0x88] sm:$0xff] %vm1067, %v910
  %1086 = vst.msk [vmem:[#allocation3 + $0x90] sm:$0xff] %vm1067, %v912
  %1087 = vst.msk [vmem:[#allocation3 + $0x98] sm:$0xff] %vm1067, %v914
  %1088 = vst.msk [vmem:[#allocation3 + $0xa0] sm:$0xff] %vm1067, %v916
  %1089 = vst.msk [vmem:[#allocation3 + $0xa8] sm:$0xff] %vm1067, %v918
  %1090 = vst.msk [vmem:[#allocation3 + $0xb0] sm:$0xff] %vm1067, %v920
  %1091 = vst.msk [vmem:[#allocation3 + $0xb8] sm:$0xff] %vm1067, %v922
  %1092 = vst.msk [vmem:[#allocation3 + $0xc0] sm:$0xff] %vm1067, %v924
  %1093 = vst.msk [vmem:[#allocation3 + $0xc8] sm:$0xff] %vm1067, %v926
  %1094 = vst.msk [vmem:[#allocation3 + $0xd0] sm:$0xff] %vm1067, %v928
  %1095 = vst.msk [vmem:[#allocation3 + $0xd8] sm:$0xff] %vm1067, %v930
  %1096 = vst.msk [vmem:[#allocation3 + $0xe0] sm:$0xff] %vm1067, %v932
  %1097 = vst.msk [vmem:[#allocation3 + $0xe8] sm:$0xff] %vm1067, %v934
  %1098 = vst.msk [vmem:[#allocation3 + $0xf0] sm:$0xff] %vm1067, %v936
  %1099 = vst.msk [vmem:[#allocation3 + $0xf8] sm:$0xff] %vm1067, %v938
  %1100 = vst.msk [vmem:[#allocation3 + $0x100] sm:$0xff] %vm1067, %v940
  %1101 = vst.msk [vmem:[#allocation3 + $0x108] sm:$0xff] %vm1067, %v942
  %1102 = vst.msk [vmem:[#allocation3 + $0x110] sm:$0xff] %vm1067, %v944
  %1103 = vst.msk [vmem:[#allocation3 + $0x118] sm:$0xff] %vm1067, %v946
  %1104 = vst.msk [vmem:[#allocation3 + $0x120] sm:$0xff] %vm1067, %v948
  %1105 = vst.msk [vmem:[#allocation3 + $0x128] sm:$0xff] %vm1067, %v950
  %1106 = vst.msk [vmem:[#allocation3 + $0x130] sm:$0xff] %vm1067, %v952
  %1107 = vst.msk [vmem:[#allocation3 + $0x138] sm:$0xff] %vm1067, %v954
  %1108 = vst.msk [vmem:[#allocation3 + $0x140] sm:$0xff] %vm1067, %v956
  %1109 = vst.msk [vmem:[#allocation3 + $0x148] sm:$0xff] %vm1067, %v958
  %1110 = vst.msk [vmem:[#allocation3 + $0x150] sm:$0xff] %vm1067, %v960
  %1111 = vst.msk [vmem:[#allocation3 + $0x158] sm:$0xff] %vm1067, %v962
  %1112 = vst.msk [vmem:[#allocation3 + $0x160] sm:$0xff] %vm1067, %v964
  %1113 = vst.msk [vmem:[#allocation3 + $0x168] sm:$0xff] %vm1067, %v966
  %1114 = vst.msk [vmem:[#allocation3 + $0x170] sm:$0xff] %vm1067, %v968
  %1115 = vst.msk [vmem:[#allocation3 + $0x178] sm:$0xff] %vm1067, %v970
  %1116 = vst.msk [vmem:[#allocation3 + $0x180] sm:$0xff] %vm1067, %v972
  %1117 = vst.msk [vmem:[#allocation3 + $0x188] sm:$0xff] %vm1067, %v974
  %1118 = vst.msk [vmem:[#allocation3 + $0x190] sm:$0xff] %vm1067, %v976
  %1119 = vst.msk [vmem:[#allocation3 + $0x198] sm:$0xff] %vm1067, %v978
  %1120 = vst.msk [vmem:[#allocation3 + $0x1a0] sm:$0xff] %vm1067, %v980
  %1121 = vst.msk [vmem:[#allocation3 + $0x1a8] sm:$0xff] %vm1067, %v982
  %1122 = vst.msk [vmem:[#allocation3 + $0x1b0] sm:$0xff] %vm1067, %v984
  %1123 = vst.msk [vmem:[#allocation3 + $0x1b8] sm:$0xff] %vm1067, %v986
  %1124 = vst.msk [vmem:[#allocation3 + $0x1c0] sm:$0xff] %vm1067, %v988
  %1125 = vst.msk [vmem:[#allocation3 + $0x1c8] sm:$0xff] %vm1067, %v990
  %1126 = vst.msk [vmem:[#allocation3 + $0x1d0] sm:$0xff] %vm1067, %v992
  %1127 = vst.msk [vmem:[#allocation3 + $0x1d8] sm:$0xff] %vm1067, %v994
  %1128 = vst.msk [vmem:[#allocation3 + $0x1e0] sm:$0xff] %vm1067, %v996
  %1129 = vst.msk [vmem:[#allocation3 + $0x1e8] sm:$0xff] %vm1067, %v998
  %1130 = vst.msk [vmem:[#allocation3 + $0x1f0] sm:$0xff] %vm1067, %v1000
  %1131 = vst.msk [vmem:[#allocation3 + $0x1f8] sm:$0xff] %vm1067, %v1002
  %v1132 = vld [vmem:[%s169] sm:$0xff]
  %v1133 = vld [vmem:[%s169 + $0x8] sm:$0xff]
  %v1134 = vld [vmem:[%s169 + $0x18] sm:$0xff]
  %v1135 = vld [vmem:[%s169 + $0x20] sm:$0xff]
  %v1136 = vld [vmem:[%s169 + $0x30] sm:$0xff]
  %v1137 = vld [vmem:[%s169 + $0x38] sm:$0xff]
  %v1138 = vld [vmem:[%s169 + $0x48] sm:$0xff]
  %v1139 = vld [vmem:[%s169 + $0x50] sm:$0xff]
  %v1140 = vld [vmem:[%s169 + $0x60] sm:$0xff]
  %v1141 = vld [vmem:[%s169 + $0x68] sm:$0xff]
  %v1142 = vld [vmem:[%s169 + $0x78] sm:$0xff]
  %v1143 = vld [vmem:[%s169 + $0x80] sm:$0xff]
  %v1144 = vld [vmem:[%s169 + $0x90] sm:$0xff]
  %v1145 = vld [vmem:[%s169 + $0x98] sm:$0xff]
  %v1146 = vld [vmem:[%s169 + $0xa8] sm:$0xff]
  %v1147 = vld [vmem:[%s169 + $0xb0] sm:$0xff]
  %v1148 = vld [vmem:[%s169 + $0xc0] sm:$0xff]
  %v1149 = vld [vmem:[%s169 + $0xc8] sm:$0xff]
  %v1150 = vld [vmem:[%s169 + $0xd8] sm:$0xff]
  %v1151 = vld [vmem:[%s169 + $0xe0] sm:$0xff]
  %v1152 = vld [vmem:[%s169 + $0xf0] sm:$0xff]
  %v1153 = vld [vmem:[%s169 + $0xf8] sm:$0xff]
  %v1154 = vld [vmem:[%s169 + $0x108] sm:$0xff]
  %v1155 = vld [vmem:[%s169 + $0x110] sm:$0xff]
  %v1156 = vld [vmem:[%s169 + $0x120] sm:$0xff]
  %v1157 = vld [vmem:[%s169 + $0x128] sm:$0xff]
  %v1158 = vld [vmem:[%s169 + $0x138] sm:$0xff]
  %v1159 = vld [vmem:[%s169 + $0x140] sm:$0xff]
  %v1160 = vld [vmem:[%s169 + $0x150] sm:$0xff]
  %v1161 = vld [vmem:[%s169 + $0x158] sm:$0xff]
  %v1162 = vld [vmem:[%s169 + $0x168] sm:$0xff]
  %v1163 = vld [vmem:[%s169 + $0x170] sm:$0xff]
  %v1164 = vld [vmem:[%s169 + $0x1b0] sm:$0xff]
  %v1165 = vld [vmem:[%s169 + $0x1b8] sm:$0xff]
  %v1166 = vld [vmem:[%s169 + $0x1c8] sm:$0xff]
  %v1167 = vld [vmem:[%s169 + $0x1d0] sm:$0xff]
  %v1168 = vld [vmem:[%s169 + $0x1e0] sm:$0xff]
  %v1169 = vld [vmem:[%s169 + $0x1e8] sm:$0xff]
  %v1170 = vld [vmem:[%s169 + $0x1f8] sm:$0xff]
  %v1171 = vld [vmem:[%s169 + $0x200] sm:$0xff]
  %v1172 = vld [vmem:[%s169 + $0x210] sm:$0xff]
  %v1173 = vld [vmem:[%s169 + $0x218] sm:$0xff]
  %v1174 = vld [vmem:[%s169 + $0x228] sm:$0xff]
  %v1175 = vld [vmem:[%s169 + $0x230] sm:$0xff]
  %v1176 = vld [vmem:[%s169 + $0x240] sm:$0xff]
  %v1177 = vld [vmem:[%s169 + $0x248] sm:$0xff]
  %v1178 = vld [vmem:[%s169 + $0x258] sm:$0xff]
  %v1179 = vld [vmem:[%s169 + $0x260] sm:$0xff]
  %v1180 = vld [vmem:[%s169 + $0x270] sm:$0xff]
  %v1181 = vld [vmem:[%s169 + $0x278] sm:$0xff]
  %v1182 = vld [vmem:[%s169 + $0x288] sm:$0xff]
  %v1183 = vld [vmem:[%s169 + $0x290] sm:$0xff]
  %v1184 = vld [vmem:[%s169 + $0x2a0] sm:$0xff]
  %v1185 = vld [vmem:[%s169 + $0x2a8] sm:$0xff]
  %v1186 = vld [vmem:[%s169 + $0x2b8] sm:$0xff]
  %v1187 = vld [vmem:[%s169 + $0x2c0] sm:$0xff]
  %v1188 = vld [vmem:[%s169 + $0x2d0] sm:$0xff]
  %v1189 = vld [vmem:[%s169 + $0x2d8] sm:$0xff]
  %v1190 = vld [vmem:[%s169 + $0x2e8] sm:$0xff]
  %v1191 = vld [vmem:[%s169 + $0x2f0] sm:$0xff]
  %v1192 = vld [vmem:[%s169 + $0x300] sm:$0xff]
  %v1193 = vld [vmem:[%s169 + $0x308] sm:$0xff]
  %v1194 = vld [vmem:[%s169 + $0x318] sm:$0xff]
  %v1195 = vld [vmem:[%s169 + $0x320] sm:$0xff]
  %1260 = vrot.lane.b32.xlu0 %v1132, 12
  %v1261 = vpop.permute.xlu0 %1260
  %1262 = vrot.lane.b32.xlu0 %v1133, 12
  %v1263 = vpop.permute.xlu0 %1262
  %1264 = vrot.lane.b32.xlu0 %v1134, 12
  %v1265 = vpop.permute.xlu0 %1264
  %1266 = vrot.lane.b32.xlu0 %v1135, 12
  %v1267 = vpop.permute.xlu0 %1266
  %1268 = vrot.lane.b32.xlu0 %v1136, 12
  %v1269 = vpop.permute.xlu0 %1268
  %1270 = vrot.lane.b32.xlu0 %v1137, 12
  %v1271 = vpop.permute.xlu0 %1270
  %1272 = vrot.lane.b32.xlu0 %v1138, 12
  %v1273 = vpop.permute.xlu0 %1272
  %1274 = vrot.lane.b32.xlu0 %v1139, 12
  %v1275 = vpop.permute.xlu0 %1274
  %1276 = vrot.lane.b32.xlu0 %v1140, 12
  %v1277 = vpop.permute.xlu0 %1276
  %1278 = vrot.lane.b32.xlu0 %v1141, 12
  %v1279 = vpop.permute.xlu0 %1278
  %1280 = vrot.lane.b32.xlu0 %v1142, 12
  %v1281 = vpop.permute.xlu0 %1280
  %1282 = vrot.lane.b32.xlu0 %v1143, 12
  %v1283 = vpop.permute.xlu0 %1282
  %1284 = vrot.lane.b32.xlu0 %v1144, 12
  %v1285 = vpop.permute.xlu0 %1284
  %1286 = vrot.lane.b32.xlu0 %v1145, 12
  %v1287 = vpop.permute.xlu0 %1286
  %1288 = vrot.lane.b32.xlu0 %v1146, 12
  %v1289 = vpop.permute.xlu0 %1288
  %1290 = vrot.lane.b32.xlu0 %v1147, 12
  %v1291 = vpop.permute.xlu0 %1290
  %1292 = vrot.lane.b32.xlu0 %v1148, 12
  %v1293 = vpop.permute.xlu0 %1292
  %1294 = vrot.lane.b32.xlu0 %v1149, 12
  %v1295 = vpop.permute.xlu0 %1294
  %1296 = vrot.lane.b32.xlu0 %v1150, 12
  %v1297 = vpop.permute.xlu0 %1296
  %1298 = vrot.lane.b32.xlu0 %v1151, 12
  %v1299 = vpop.permute.xlu0 %1298
  %1300 = vrot.lane.b32.xlu0 %v1152, 12
  %v1301 = vpop.permute.xlu0 %1300
  %1302 = vrot.lane.b32.xlu0 %v1153, 12
  %v1303 = vpop.permute.xlu0 %1302
  %1304 = vrot.lane.b32.xlu0 %v1154, 12
  %v1305 = vpop.permute.xlu0 %1304
  %1306 = vrot.lane.b32.xlu0 %v1155, 12
  %v1307 = vpop.permute.xlu0 %1306
  %1308 = vrot.lane.b32.xlu0 %v1156, 12
  %v1309 = vpop.permute.xlu0 %1308
  %1310 = vrot.lane.b32.xlu0 %v1157, 12
  %v1311 = vpop.permute.xlu0 %1310
  %1312 = vrot.lane.b32.xlu0 %v1158, 12
  %v1313 = vpop.permute.xlu0 %1312
  %1314 = vrot.lane.b32.xlu0 %v1159, 12
  %v1315 = vpop.permute.xlu0 %1314
  %1316 = vrot.lane.b32.xlu0 %v1160, 12
  %v1317 = vpop.permute.xlu0 %1316
  %1318 = vrot.lane.b32.xlu0 %v1161, 12
  %v1319 = vpop.permute.xlu0 %1318
  %1320 = vrot.lane.b32.xlu0 %v1162, 12
  %v1321 = vpop.permute.xlu0 %1320
  %1322 = vrot.lane.b32.xlu0 %v1163, 12
  %v1323 = vpop.permute.xlu0 %1322
  %1324 = vrot.lane.b32.xlu0 %v1164, 12
  %v1325 = vpop.permute.xlu0 %1324
  %1326 = vrot.lane.b32.xlu0 %v1165, 12
  %v1327 = vpop.permute.xlu0 %1326
  %1328 = vrot.lane.b32.xlu0 %v1166, 12
  %v1329 = vpop.permute.xlu0 %1328
  %1330 = vrot.lane.b32.xlu0 %v1167, 12
  %v1331 = vpop.permute.xlu0 %1330
  %1332 = vrot.lane.b32.xlu0 %v1168, 12
  %v1333 = vpop.permute.xlu0 %1332
  %1334 = vrot.lane.b32.xlu0 %v1169, 12
  %v1335 = vpop.permute.xlu0 %1334
  %1336 = vrot.lane.b32.xlu0 %v1170, 12
  %v1337 = vpop.permute.xlu0 %1336
  %1338 = vrot.lane.b32.xlu0 %v1171, 12
  %v1339 = vpop.permute.xlu0 %1338
  %1340 = vrot.lane.b32.xlu0 %v1172, 12
  %v1341 = vpop.permute.xlu0 %1340
  %1342 = vrot.lane.b32.xlu0 %v1173, 12
  %v1343 = vpop.permute.xlu0 %1342
  %1344 = vrot.lane.b32.xlu0 %v1174, 12
  %v1345 = vpop.permute.xlu0 %1344
  %1346 = vrot.lane.b32.xlu0 %v1175, 12
  %v1347 = vpop.permute.xlu0 %1346
  %1348 = vrot.lane.b32.xlu0 %v1176, 12
  %v1349 = vpop.permute.xlu0 %1348
  %1350 = vrot.lane.b32.xlu0 %v1177, 12
  %v1351 = vpop.permute.xlu0 %1350
  %1352 = vrot.lane.b32.xlu0 %v1178, 12
  %v1353 = vpop.permute.xlu0 %1352
  %1354 = vrot.lane.b32.xlu0 %v1179, 12
  %v1355 = vpop.permute.xlu0 %1354
  %1356 = vrot.lane.b32.xlu0 %v1180, 12
  %v1357 = vpop.permute.xlu0 %1356
  %1358 = vrot.lane.b32.xlu0 %v1181, 12
  %v1359 = vpop.permute.xlu0 %1358
  %1360 = vrot.lane.b32.xlu0 %v1182, 12
  %v1361 = vpop.permute.xlu0 %1360
  %1362 = vrot.lane.b32.xlu0 %v1183, 12
  %v1363 = vpop.permute.xlu0 %1362
  %1364 = vrot.lane.b32.xlu0 %v1184, 12
  %v1365 = vpop.permute.xlu0 %1364
  %1366 = vrot.lane.b32.xlu0 %v1185, 12
  %v1367 = vpop.permute.xlu0 %1366
  %1368 = vrot.lane.b32.xlu0 %v1186, 12
  %v1369 = vpop.permute.xlu0 %1368
  %1370 = vrot.lane.b32.xlu0 %v1187, 12
  %v1371 = vpop.permute.xlu0 %1370
  %1372 = vrot.lane.b32.xlu0 %v1188, 12
  %v1373 = vpop.permute.xlu0 %1372
  %1374 = vrot.lane.b32.xlu0 %v1189, 12
  %v1375 = vpop.permute.xlu0 %1374
  %1376 = vrot.lane.b32.xlu0 %v1190, 12
  %v1377 = vpop.permute.xlu0 %1376
  %1378 = vrot.lane.b32.xlu0 %v1191, 12
  %v1379 = vpop.permute.xlu0 %1378
  %1380 = vrot.lane.b32.xlu0 %v1192, 12
  %v1381 = vpop.permute.xlu0 %1380
  %1382 = vrot.lane.b32.xlu0 %v1193, 12
  %v1383 = vpop.permute.xlu0 %1382
  %1384 = vrot.lane.b32.xlu0 %v1194, 12
  %v1385 = vpop.permute.xlu0 %1384
  %1386 = vrot.lane.b32.xlu0 %v1195, 12
  %v1387 = vpop.permute.xlu0 %1386
  %vm1452 = vcmask 130144
  %1453 = vst.msk [vmem:[#allocation3] sm:$0xff] %vm1452, %v1261
  %1454 = vst.msk [vmem:[#allocation3 + $0x8] sm:$0xff] %vm1452, %v1263
  %1455 = vst.msk [vmem:[#allocation3 + $0x10] sm:$0xff] %vm1452, %v1265
  %1456 = vst.msk [vmem:[#allocation3 + $0x18] sm:$0xff] %vm1452, %v1267
  %1457 = vst.msk [vmem:[#allocation3 + $0x20] sm:$0xff] %vm1452, %v1269
  %1458 = vst.msk [vmem:[#allocation3 + $0x28] sm:$0xff] %vm1452, %v1271
  %1459 = vst.msk [vmem:[#allocation3 + $0x30] sm:$0xff] %vm1452, %v1273
  %1460 = vst.msk [vmem:[#allocation3 + $0x38] sm:$0xff] %vm1452, %v1275
  %1461 = vst.msk [vmem:[#allocation3 + $0x40] sm:$0xff] %vm1452, %v1277
  %1462 = vst.msk [vmem:[#allocation3 + $0x48] sm:$0xff] %vm1452, %v1279
  %1463 = vst.msk [vmem:[#allocation3 + $0x50] sm:$0xff] %vm1452, %v1281
  %1464 = vst.msk [vmem:[#allocation3 + $0x58] sm:$0xff] %vm1452, %v1283
  %1465 = vst.msk [vmem:[#allocation3 + $0x60] sm:$0xff] %vm1452, %v1285
  %1466 = vst.msk [vmem:[#allocation3 + $0x68] sm:$0xff] %vm1452, %v1287
  %1467 = vst.msk [vmem:[#allocation3 + $0x70] sm:$0xff] %vm1452, %v1289
  %1468 = vst.msk [vmem:[#allocation3 + $0x78] sm:$0xff] %vm1452, %v1291
  %1469 = vst.msk [vmem:[#allocation3 + $0x80] sm:$0xff] %vm1452, %v1293
  %1470 = vst.msk [vmem:[#allocation3 + $0x88] sm:$0xff] %vm1452, %v1295
  %1471 = vst.msk [vmem:[#allocation3 + $0x90] sm:$0xff] %vm1452, %v1297
  %1472 = vst.msk [vmem:[#allocation3 + $0x98] sm:$0xff] %vm1452, %v1299
  %1473 = vst.msk [vmem:[#allocation3 + $0xa0] sm:$0xff] %vm1452, %v1301
  %1474 = vst.msk [vmem:[#allocation3 + $0xa8] sm:$0xff] %vm1452, %v1303
  %1475 = vst.msk [vmem:[#allocation3 + $0xb0] sm:$0xff] %vm1452, %v1305
  %1476 = vst.msk [vmem:[#allocation3 + $0xb8] sm:$0xff] %vm1452, %v1307
  %1477 = vst.msk [vmem:[#allocation3 + $0xc0] sm:$0xff] %vm1452, %v1309
  %1478 = vst.msk [vmem:[#allocation3 + $0xc8] sm:$0xff] %vm1452, %v1311
  %1479 = vst.msk [vmem:[#allocation3 + $0xd0] sm:$0xff] %vm1452, %v1313
  %1480 = vst.msk [vmem:[#allocation3 + $0xd8] sm:$0xff] %vm1452, %v1315
  %1481 = vst.msk [vmem:[#allocation3 + $0xe0] sm:$0xff] %vm1452, %v1317
  %1482 = vst.msk [vmem:[#allocation3 + $0xe8] sm:$0xff] %vm1452, %v1319
  %1483 = vst.msk [vmem:[#allocation3 + $0xf0] sm:$0xff] %vm1452, %v1321
  %1484 = vst.msk [vmem:[#allocation3 + $0xf8] sm:$0xff] %vm1452, %v1323
  %1485 = vst.msk [vmem:[#allocation3 + $0x100] sm:$0xff] %vm1452, %v1325
  %1486 = vst.msk [vmem:[#allocation3 + $0x108] sm:$0xff] %vm1452, %v1327
  %1487 = vst.msk [vmem:[#allocation3 + $0x110] sm:$0xff] %vm1452, %v1329
  %1488 = vst.msk [vmem:[#allocation3 + $0x118] sm:$0xff] %vm1452, %v1331
  %1489 = vst.msk [vmem:[#allocation3 + $0x120] sm:$0xff] %vm1452, %v1333
  %1490 = vst.msk [vmem:[#allocation3 + $0x128] sm:$0xff] %vm1452, %v1335
  %1491 = vst.msk [vmem:[#allocation3 + $0x130] sm:$0xff] %vm1452, %v1337
  %1492 = vst.msk [vmem:[#allocation3 + $0x138] sm:$0xff] %vm1452, %v1339
  %1493 = vst.msk [vmem:[#allocation3 + $0x140] sm:$0xff] %vm1452, %v1341
  %1494 = vst.msk [vmem:[#allocation3 + $0x148] sm:$0xff] %vm1452, %v1343
  %1495 = vst.msk [vmem:[#allocation3 + $0x150] sm:$0xff] %vm1452, %v1345
  %1496 = vst.msk [vmem:[#allocation3 + $0x158] sm:$0xff] %vm1452, %v1347
  %1497 = vst.msk [vmem:[#allocation3 + $0x160] sm:$0xff] %vm1452, %v1349
  %1498 = vst.msk [vmem:[#allocation3 + $0x168] sm:$0xff] %vm1452, %v1351
  %1499 = vst.msk [vmem:[#allocation3 + $0x170] sm:$0xff] %vm1452, %v1353
  %1500 = vst.msk [vmem:[#allocation3 + $0x178] sm:$0xff] %vm1452, %v1355
  %1501 = vst.msk [vmem:[#allocation3 + $0x180] sm:$0xff] %vm1452, %v1357
  %1502 = vst.msk [vmem:[#allocation3 + $0x188] sm:$0xff] %vm1452, %v1359
  %1503 = vst.msk [vmem:[#allocation3 + $0x190] sm:$0xff] %vm1452, %v1361
  %1504 = vst.msk [vmem:[#allocation3 + $0x198] sm:$0xff] %vm1452, %v1363
  %1505 = vst.msk [vmem:[#allocation3 + $0x1a0] sm:$0xff] %vm1452, %v1365
  %1506 = vst.msk [vmem:[#allocation3 + $0x1a8] sm:$0xff] %vm1452, %v1367
  %1507 = vst.msk [vmem:[#allocation3 + $0x1b0] sm:$0xff] %vm1452, %v1369
  %1508 = vst.msk [vmem:[#allocation3 + $0x1b8] sm:$0xff] %vm1452, %v1371
  %1509 = vst.msk [vmem:[#allocation3 + $0x1c0] sm:$0xff] %vm1452, %v1373
  %1510 = vst.msk [vmem:[#allocation3 + $0x1c8] sm:$0xff] %vm1452, %v1375
  %1511 = vst.msk [vmem:[#allocation3 + $0x1d0] sm:$0xff] %vm1452, %v1377
  %1512 = vst.msk [vmem:[#allocation3 + $0x1d8] sm:$0xff] %vm1452, %v1379
  %1513 = vst.msk [vmem:[#allocation3 + $0x1e0] sm:$0xff] %vm1452, %v1381
  %1514 = vst.msk [vmem:[#allocation3 + $0x1e8] sm:$0xff] %vm1452, %v1383
  %1515 = vst.msk [vmem:[#allocation3 + $0x1f0] sm:$0xff] %vm1452, %v1385
  %1516 = vst.msk [vmem:[#allocation3 + $0x1f8] sm:$0xff] %vm1452, %v1387
  %v1517 = vld [vmem:[%s169 + $0x1] sm:$0xff]
  %v1518 = vld [vmem:[%s169 + $0x9] sm:$0xff]
  %v1519 = vld [vmem:[%s169 + $0x19] sm:$0xff]
  %v1520 = vld [vmem:[%s169 + $0x21] sm:$0xff]
  %v1521 = vld [vmem:[%s169 + $0x31] sm:$0xff]
  %v1522 = vld [vmem:[%s169 + $0x39] sm:$0xff]
  %v1523 = vld [vmem:[%s169 + $0x49] sm:$0xff]
  %v1524 = vld [vmem:[%s169 + $0x51] sm:$0xff]
  %v1525 = vld [vmem:[%s169 + $0x61] sm:$0xff]
  %v1526 = vld [vmem:[%s169 + $0x69] sm:$0xff]
  %v1527 = vld [vmem:[%s169 + $0x79] sm:$0xff]
  %v1528 = vld [vmem:[%s169 + $0x81] sm:$0xff]
  %v1529 = vld [vmem:[%s169 + $0x91] sm:$0xff]
  %v1530 = vld [vmem:[%s169 + $0x99] sm:$0xff]
  %v1531 = vld [vmem:[%s169 + $0xa9] sm:$0xff]
  %v1532 = vld [vmem:[%s169 + $0xb1] sm:$0xff]
  %v1533 = vld [vmem:[%s169 + $0xc1] sm:$0xff]
  %v1534 = vld [vmem:[%s169 + $0xc9] sm:$0xff]
  %v1535 = vld [vmem:[%s169 + $0xd9] sm:$0xff]
  %v1536 = vld [vmem:[%s169 + $0xe1] sm:$0xff]
  %v1537 = vld [vmem:[%s169 + $0xf1] sm:$0xff]
  %v1538 = vld [vmem:[%s169 + $0xf9] sm:$0xff]
  %v1539 = vld [vmem:[%s169 + $0x109] sm:$0xff]
  %v1540 = vld [vmem:[%s169 + $0x111] sm:$0xff]
  %v1541 = vld [vmem:[%s169 + $0x121] sm:$0xff]
  %v1542 = vld [vmem:[%s169 + $0x129] sm:$0xff]
  %v1543 = vld [vmem:[%s169 + $0x139] sm:$0xff]
  %v1544 = vld [vmem:[%s169 + $0x141] sm:$0xff]
  %v1545 = vld [vmem:[%s169 + $0x151] sm:$0xff]
  %v1546 = vld [vmem:[%s169 + $0x159] sm:$0xff]
  %v1547 = vld [vmem:[%s169 + $0x169] sm:$0xff]
  %v1548 = vld [vmem:[%s169 + $0x171] sm:$0xff]
  %v1549 = vld [vmem:[%s169 + $0x1b1] sm:$0xff]
  %v1550 = vld [vmem:[%s169 + $0x1b9] sm:$0xff]
  %v1551 = vld [vmem:[%s169 + $0x1c9] sm:$0xff]
  %v1552 = vld [vmem:[%s169 + $0x1d1] sm:$0xff]
  %v1553 = vld [vmem:[%s169 + $0x1e1] sm:$0xff]
  %v1554 = vld [vmem:[%s169 + $0x1e9] sm:$0xff]
  %v1555 = vld [vmem:[%s169 + $0x1f9] sm:$0xff]
  %v1556 = vld [vmem:[%s169 + $0x201] sm:$0xff]
  %v1557 = vld [vmem:[%s169 + $0x211] sm:$0xff]
  %v1558 = vld [vmem:[%s169 + $0x219] sm:$0xff]
  %v1559 = vld [vmem:[%s169 + $0x229] sm:$0xff]
  %v1560 = vld [vmem:[%s169 + $0x231] sm:$0xff]
  %v1561 = vld [vmem:[%s169 + $0x241] sm:$0xff]
  %v1562 = vld [vmem:[%s169 + $0x249] sm:$0xff]
  %v1563 = vld [vmem:[%s169 + $0x259] sm:$0xff]
  %v1564 = vld [vmem:[%s169 + $0x261] sm:$0xff]
  %v1565 = vld [vmem:[%s169 + $0x271] sm:$0xff]
  %v1566 = vld [vmem:[%s169 + $0x279] sm:$0xff]
  %v1567 = vld [vmem:[%s169 + $0x289] sm:$0xff]
  %v1568 = vld [vmem:[%s169 + $0x291] sm:$0xff]
  %v1569 = vld [vmem:[%s169 + $0x2a1] sm:$0xff]
  %v1570 = vld [vmem:[%s169 + $0x2a9] sm:$0xff]
  %v1571 = vld [vmem:[%s169 + $0x2b9] sm:$0xff]
  %v1572 = vld [vmem:[%s169 + $0x2c1] sm:$0xff]
  %v1573 = vld [vmem:[%s169 + $0x2d1] sm:$0xff]
  %v1574 = vld [vmem:[%s169 + $0x2d9] sm:$0xff]
  %v1575 = vld [vmem:[%s169 + $0x2e9] sm:$0xff]
  %v1576 = vld [vmem:[%s169 + $0x2f1] sm:$0xff]
  %v1577 = vld [vmem:[%s169 + $0x301] sm:$0xff]
  %v1578 = vld [vmem:[%s169 + $0x309] sm:$0xff]
  %v1579 = vld [vmem:[%s169 + $0x319] sm:$0xff]
  %v1580 = vld [vmem:[%s169 + $0x321] sm:$0xff]
  %1645 = vrot.lane.b32.xlu0 %v1517, 16
  %v1646 = vpop.permute.xlu0 %1645
  %1647 = vrot.lane.b32.xlu0 %v1518, 16
  %v1648 = vpop.permute.xlu0 %1647
  %1649 = vrot.lane.b32.xlu0 %v1519, 16
  %v1650 = vpop.permute.xlu0 %1649
  %1651 = vrot.lane.b32.xlu0 %v1520, 16
  %v1652 = vpop.permute.xlu0 %1651
  %1653 = vrot.lane.b32.xlu0 %v1521, 16
  %v1654 = vpop.permute.xlu0 %1653
  %1655 = vrot.lane.b32.xlu0 %v1522, 16
  %v1656 = vpop.permute.xlu0 %1655
  %1657 = vrot.lane.b32.xlu0 %v1523, 16
  %v1658 = vpop.permute.xlu0 %1657
  %1659 = vrot.lane.b32.xlu0 %v1524, 16
  %v1660 = vpop.permute.xlu0 %1659
  %1661 = vrot.lane.b32.xlu0 %v1525, 16
  %v1662 = vpop.permute.xlu0 %1661
  %1663 = vrot.lane.b32.xlu0 %v1526, 16
  %v1664 = vpop.permute.xlu0 %1663
  %1665 = vrot.lane.b32.xlu0 %v1527, 16
  %v1666 = vpop.permute.xlu0 %1665
  %1667 = vrot.lane.b32.xlu0 %v1528, 16
  %v1668 = vpop.permute.xlu0 %1667
  %1669 = vrot.lane.b32.xlu0 %v1529, 16
  %v1670 = vpop.permute.xlu0 %1669
  %1671 = vrot.lane.b32.xlu0 %v1530, 16
  %v1672 = vpop.permute.xlu0 %1671
  %1673 = vrot.lane.b32.xlu0 %v1531, 16
  %v1674 = vpop.permute.xlu0 %1673
  %1675 = vrot.lane.b32.xlu0 %v1532, 16
  %v1676 = vpop.permute.xlu0 %1675
  %1677 = vrot.lane.b32.xlu0 %v1533, 16
  %v1678 = vpop.permute.xlu0 %1677
  %1679 = vrot.lane.b32.xlu0 %v1534, 16
  %v1680 = vpop.permute.xlu0 %1679
  %1681 = vrot.lane.b32.xlu0 %v1535, 16
  %v1682 = vpop.permute.xlu0 %1681
  %1683 = vrot.lane.b32.xlu0 %v1536, 16
  %v1684 = vpop.permute.xlu0 %1683
  %1685 = vrot.lane.b32.xlu0 %v1537, 16
  %v1686 = vpop.permute.xlu0 %1685
  %1687 = vrot.lane.b32.xlu0 %v1538, 16
  %v1688 = vpop.permute.xlu0 %1687
  %1689 = vrot.lane.b32.xlu0 %v1539, 16
  %v1690 = vpop.permute.xlu0 %1689
  %1691 = vrot.lane.b32.xlu0 %v1540, 16
  %v1692 = vpop.permute.xlu0 %1691
  %1693 = vrot.lane.b32.xlu0 %v1541, 16
  %v1694 = vpop.permute.xlu0 %1693
  %1695 = vrot.lane.b32.xlu0 %v1542, 16
  %v1696 = vpop.permute.xlu0 %1695
  %1697 = vrot.lane.b32.xlu0 %v1543, 16
  %v1698 = vpop.permute.xlu0 %1697
  %1699 = vrot.lane.b32.xlu0 %v1544, 16
  %v1700 = vpop.permute.xlu0 %1699
  %1701 = vrot.lane.b32.xlu0 %v1545, 16
  %v1702 = vpop.permute.xlu0 %1701
  %1703 = vrot.lane.b32.xlu0 %v1546, 16
  %v1704 = vpop.permute.xlu0 %1703
  %1705 = vrot.lane.b32.xlu0 %v1547, 16
  %v1706 = vpop.permute.xlu0 %1705
  %1707 = vrot.lane.b32.xlu0 %v1548, 16
  %v1708 = vpop.permute.xlu0 %1707
  %1709 = vrot.lane.b32.xlu0 %v1549, 16
  %v1710 = vpop.permute.xlu0 %1709
  %1711 = vrot.lane.b32.xlu0 %v1550, 16
  %v1712 = vpop.permute.xlu0 %1711
  %1713 = vrot.lane.b32.xlu0 %v1551, 16
  %v1714 = vpop.permute.xlu0 %1713
  %1715 = vrot.lane.b32.xlu0 %v1552, 16
  %v1716 = vpop.permute.xlu0 %1715
  %1717 = vrot.lane.b32.xlu0 %v1553, 16
  %v1718 = vpop.permute.xlu0 %1717
  %1719 = vrot.lane.b32.xlu0 %v1554, 16
  %v1720 = vpop.permute.xlu0 %1719
  %1721 = vrot.lane.b32.xlu0 %v1555, 16
  %v1722 = vpop.permute.xlu0 %1721
  %1723 = vrot.lane.b32.xlu0 %v1556, 16
  %v1724 = vpop.permute.xlu0 %1723
  %1725 = vrot.lane.b32.xlu0 %v1557, 16
  %v1726 = vpop.permute.xlu0 %1725
  %1727 = vrot.lane.b32.xlu0 %v1558, 16
  %v1728 = vpop.permute.xlu0 %1727
  %1729 = vrot.lane.b32.xlu0 %v1559, 16
  %v1730 = vpop.permute.xlu0 %1729
  %1731 = vrot.lane.b32.xlu0 %v1560, 16
  %v1732 = vpop.permute.xlu0 %1731
  %1733 = vrot.lane.b32.xlu0 %v1561, 16
  %v1734 = vpop.permute.xlu0 %1733
  %1735 = vrot.lane.b32.xlu0 %v1562, 16
  %v1736 = vpop.permute.xlu0 %1735
  %1737 = vrot.lane.b32.xlu0 %v1563, 16
  %v1738 = vpop.permute.xlu0 %1737
  %1739 = vrot.lane.b32.xlu0 %v1564, 16
  %v1740 = vpop.permute.xlu0 %1739
  %1741 = vrot.lane.b32.xlu0 %v1565, 16
  %v1742 = vpop.permute.xlu0 %1741
  %1743 = vrot.lane.b32.xlu0 %v1566, 16
  %v1744 = vpop.permute.xlu0 %1743
  %1745 = vrot.lane.b32.xlu0 %v1567, 16
  %v1746 = vpop.permute.xlu0 %1745
  %1747 = vrot.lane.b32.xlu0 %v1568, 16
  %v1748 = vpop.permute.xlu0 %1747
  %1749 = vrot.lane.b32.xlu0 %v1569, 16
  %v1750 = vpop.permute.xlu0 %1749
  %1751 = vrot.lane.b32.xlu0 %v1570, 16
  %v1752 = vpop.permute.xlu0 %1751
  %1753 = vrot.lane.b32.xlu0 %v1571, 16
  %v1754 = vpop.permute.xlu0 %1753
  %1755 = vrot.lane.b32.xlu0 %v1572, 16
  %v1756 = vpop.permute.xlu0 %1755
  %1757 = vrot.lane.b32.xlu0 %v1573, 16
  %v1758 = vpop.permute.xlu0 %1757
  %1759 = vrot.lane.b32.xlu0 %v1574, 16
  %v1760 = vpop.permute.xlu0 %1759
  %1761 = vrot.lane.b32.xlu0 %v1575, 16
  %v1762 = vpop.permute.xlu0 %1761
  %1763 = vrot.lane.b32.xlu0 %v1576, 16
  %v1764 = vpop.permute.xlu0 %1763
  %1765 = vrot.lane.b32.xlu0 %v1577, 16
  %v1766 = vpop.permute.xlu0 %1765
  %1767 = vrot.lane.b32.xlu0 %v1578, 16
  %v1768 = vpop.permute.xlu0 %1767
  %1769 = vrot.lane.b32.xlu0 %v1579, 16
  %v1770 = vpop.permute.xlu0 %1769
  %1771 = vrot.lane.b32.xlu0 %v1580, 16
  %v1772 = vpop.permute.xlu0 %1771
  %vm1837 = vcmask 162944
  %1838 = vst.msk [vmem:[#allocation3] sm:$0xff] %vm1837, %v1646
  %1839 = vst.msk [vmem:[#allocation3 + $0x8] sm:$0xff] %vm1837, %v1648
  %1840 = vst.msk [vmem:[#allocation3 + $0x10] sm:$0xff] %vm1837, %v1650
  %1841 = vst.msk [vmem:[#allocation3 + $0x18] sm:$0xff] %vm1837, %v1652
  %1842 = vst.msk [vmem:[#allocation3 + $0x20] sm:$0xff] %vm1837, %v1654
  %1843 = vst.msk [vmem:[#allocation3 + $0x28] sm:$0xff] %vm1837, %v1656
  %1844 = vst.msk [vmem:[#allocation3 + $0x30] sm:$0xff] %vm1837, %v1658
  %1845 = vst.msk [vmem:[#allocation3 + $0x38] sm:$0xff] %vm1837, %v1660
  %1846 = vst.msk [vmem:[#allocation3 + $0x40] sm:$0xff] %vm1837, %v1662
  %1847 = vst.msk [vmem:[#allocation3 + $0x48] sm:$0xff] %vm1837, %v1664
  %1848 = vst.msk [vmem:[#allocation3 + $0x50] sm:$0xff] %vm1837, %v1666
  %1849 = vst.msk [vmem:[#allocation3 + $0x58] sm:$0xff] %vm1837, %v1668
  %1850 = vst.msk [vmem:[#allocation3 + $0x60] sm:$0xff] %vm1837, %v1670
  %1851 = vst.msk [vmem:[#allocation3 + $0x68] sm:$0xff] %vm1837, %v1672
  %1852 = vst.msk [vmem:[#allocation3 + $0x70] sm:$0xff] %vm1837, %v1674
  %1853 = vst.msk [vmem:[#allocation3 + $0x78] sm:$0xff] %vm1837, %v1676
  %1854 = vst.msk [vmem:[#allocation3 + $0x80] sm:$0xff] %vm1837, %v1678
  %1855 = vst.msk [vmem:[#allocation3 + $0x88] sm:$0xff] %vm1837, %v1680
  %1856 = vst.msk [vmem:[#allocation3 + $0x90] sm:$0xff] %vm1837, %v1682
  %1857 = vst.msk [vmem:[#allocation3 + $0x98] sm:$0xff] %vm1837, %v1684
  %1858 = vst.msk [vmem:[#allocation3 + $0xa0] sm:$0xff] %vm1837, %v1686
  %1859 = vst.msk [vmem:[#allocation3 + $0xa8] sm:$0xff] %vm1837, %v1688
  %1860 = vst.msk [vmem:[#allocation3 + $0xb0] sm:$0xff] %vm1837, %v1690
  %1861 = vst.msk [vmem:[#allocation3 + $0xb8] sm:$0xff] %vm1837, %v1692
  %1862 = vst.msk [vmem:[#allocation3 + $0xc0] sm:$0xff] %vm1837, %v1694
  %1863 = vst.msk [vmem:[#allocation3 + $0xc8] sm:$0xff] %vm1837, %v1696
  %1864 = vst.msk [vmem:[#allocation3 + $0xd0] sm:$0xff] %vm1837, %v1698
  %1865 = vst.msk [vmem:[#allocation3 + $0xd8] sm:$0xff] %vm1837, %v1700
  %1866 = vst.msk [vmem:[#allocation3 + $0xe0] sm:$0xff] %vm1837, %v1702
  %1867 = vst.msk [vmem:[#allocation3 + $0xe8] sm:$0xff] %vm1837, %v1704
  %1868 = vst.msk [vmem:[#allocation3 + $0xf0] sm:$0xff] %vm1837, %v1706
  %1869 = vst.msk [vmem:[#allocation3 + $0xf8] sm:$0xff] %vm1837, %v1708
  %1870 = vst.msk [vmem:[#allocation3 + $0x100] sm:$0xff] %vm1837, %v1710
  %1871 = vst.msk [vmem:[#allocation3 + $0x108] sm:$0xff] %vm1837, %v1712
  %1872 = vst.msk [vmem:[#allocation3 + $0x110] sm:$0xff] %vm1837, %v1714
  %1873 = vst.msk [vmem:[#allocation3 + $0x118] sm:$0xff] %vm1837, %v1716
  %1874 = vst.msk [vmem:[#allocation3 + $0x120] sm:$0xff] %vm1837, %v1718
  %1875 = vst.msk [vmem:[#allocation3 + $0x128] sm:$0xff] %vm1837, %v1720
  %1876 = vst.msk [vmem:[#allocation3 + $0x130] sm:$0xff] %vm1837, %v1722
  %1877 = vst.msk [vmem:[#allocation3 + $0x138] sm:$0xff] %vm1837, %v1724
  %1878 = vst.msk [vmem:[#allocation3 + $0x140] sm:$0xff] %vm1837, %v1726
  %1879 = vst.msk [vmem:[#allocation3 + $0x148] sm:$0xff] %vm1837, %v1728
  %1880 = vst.msk [vmem:[#allocation3 + $0x150] sm:$0xff] %vm1837, %v1730
  %1881 = vst.msk [vmem:[#allocation3 + $0x158] sm:$0xff] %vm1837, %v1732
  %1882 = vst.msk [vmem:[#allocation3 + $0x160] sm:$0xff] %vm1837, %v1734
  %1883 = vst.msk [vmem:[#allocation3 + $0x168] sm:$0xff] %vm1837, %v1736
  %1884 = vst.msk [vmem:[#allocation3 + $0x170] sm:$0xff] %vm1837, %v1738
  %1885 = vst.msk [vmem:[#allocation3 + $0x178] sm:$0xff] %vm1837, %v1740
  %1886 = vst.msk [vmem:[#allocation3 + $0x180] sm:$0xff] %vm1837, %v1742
  %1887 = vst.msk [vmem:[#allocation3 + $0x188] sm:$0xff] %vm1837, %v1744
  %1888 = vst.msk [vmem:[#allocation3 + $0x190] sm:$0xff] %vm1837, %v1746
  %1889 = vst.msk [vmem:[#allocation3 + $0x198] sm:$0xff] %vm1837, %v1748
  %1890 = vst.msk [vmem:[#allocation3 + $0x1a0] sm:$0xff] %vm1837, %v1750
  %1891 = vst.msk [vmem:[#allocation3 + $0x1a8] sm:$0xff] %vm1837, %v1752
  %1892 = vst.msk [vmem:[#allocation3 + $0x1b0] sm:$0xff] %vm1837, %v1754
  %1893 = vst.msk [vmem:[#allocation3 + $0x1b8] sm:$0xff] %vm1837, %v1756
  %1894 = vst.msk [vmem:[#allocation3 + $0x1c0] sm:$0xff] %vm1837, %v1758
  %1895 = vst.msk [vmem:[#allocation3 + $0x1c8] sm:$0xff] %vm1837, %v1760
  %1896 = vst.msk [vmem:[#allocation3 + $0x1d0] sm:$0xff] %vm1837, %v1762
  %1897 = vst.msk [vmem:[#allocation3 + $0x1d8] sm:$0xff] %vm1837, %v1764
  %1898 = vst.msk [vmem:[#allocation3 + $0x1e0] sm:$0xff] %vm1837, %v1766
  %1899 = vst.msk [vmem:[#allocation3 + $0x1e8] sm:$0xff] %vm1837, %v1768
  %1900 = vst.msk [vmem:[#allocation3 + $0x1f0] sm:$0xff] %vm1837, %v1770
  %1901 = vst.msk [vmem:[#allocation3 + $0x1f8] sm:$0xff] %vm1837, %v1772
  %v1902 = vld [vmem:[%s169 + $0x2] sm:$0xff]
  %v1903 = vld [vmem:[%s169 + $0xa] sm:$0xff]
  %v1904 = vld [vmem:[%s169 + $0x1a] sm:$0xff]
  %v1905 = vld [vmem:[%s169 + $0x22] sm:$0xff]
  %v1906 = vld [vmem:[%s169 + $0x32] sm:$0xff]
  %v1907 = vld [vmem:[%s169 + $0x3a] sm:$0xff]
  %v1908 = vld [vmem:[%s169 + $0x4a] sm:$0xff]
  %v1909 = vld [vmem:[%s169 + $0x52] sm:$0xff]
  %v1910 = vld [vmem:[%s169 + $0x62] sm:$0xff]
  %v1911 = vld [vmem:[%s169 + $0x6a] sm:$0xff]
  %v1912 = vld [vmem:[%s169 + $0x7a] sm:$0xff]
  %v1913 = vld [vmem:[%s169 + $0x82] sm:$0xff]
  %v1914 = vld [vmem:[%s169 + $0x92] sm:$0xff]
  %v1915 = vld [vmem:[%s169 + $0x9a] sm:$0xff]
  %v1916 = vld [vmem:[%s169 + $0xaa] sm:$0xff]
  %v1917 = vld [vmem:[%s169 + $0xb2] sm:$0xff]
  %v1918 = vld [vmem:[%s169 + $0xc2] sm:$0xff]
  %v1919 = vld [vmem:[%s169 + $0xca] sm:$0xff]
  %v1920 = vld [vmem:[%s169 + $0xda] sm:$0xff]
  %v1921 = vld [vmem:[%s169 + $0xe2] sm:$0xff]
  %v1922 = vld [vmem:[%s169 + $0xf2] sm:$0xff]
  %v1923 = vld [vmem:[%s169 + $0xfa] sm:$0xff]
  %v1924 = vld [vmem:[%s169 + $0x10a] sm:$0xff]
  %v1925 = vld [vmem:[%s169 + $0x112] sm:$0xff]
  %v1926 = vld [vmem:[%s169 + $0x122] sm:$0xff]
  %v1927 = vld [vmem:[%s169 + $0x12a] sm:$0xff]
  %v1928 = vld [vmem:[%s169 + $0x13a] sm:$0xff]
  %v1929 = vld [vmem:[%s169 + $0x142] sm:$0xff]
  %v1930 = vld [vmem:[%s169 + $0x152] sm:$0xff]
  %v1931 = vld [vmem:[%s169 + $0x15a] sm:$0xff]
  %v1932 = vld [vmem:[%s169 + $0x16a] sm:$0xff]
  %v1933 = vld [vmem:[%s169 + $0x172] sm:$0xff]
  %v1934 = vld [vmem:[%s169 + $0x1b2] sm:$0xff]
  %v1935 = vld [vmem:[%s169 + $0x1ba] sm:$0xff]
  %v1936 = vld [vmem:[%s169 + $0x1ca] sm:$0xff]
  %v1937 = vld [vmem:[%s169 + $0x1d2] sm:$0xff]
  %v1938 = vld [vmem:[%s169 + $0x1e2] sm:$0xff]
  %v1939 = vld [vmem:[%s169 + $0x1ea] sm:$0xff]
  %v1940 = vld [vmem:[%s169 + $0x1fa] sm:$0xff]
  %v1941 = vld [vmem:[%s169 + $0x202] sm:$0xff]
  %v1942 = vld [vmem:[%s169 + $0x212] sm:$0xff]
  %v1943 = vld [vmem:[%s169 + $0x21a] sm:$0xff]
  %v1944 = vld [vmem:[%s169 + $0x22a] sm:$0xff]
  %v1945 = vld [vmem:[%s169 + $0x232] sm:$0xff]
  %v1946 = vld [vmem:[%s169 + $0x242] sm:$0xff]
  %v1947 = vld [vmem:[%s169 + $0x24a] sm:$0xff]
  %v1948 = vld [vmem:[%s169 + $0x25a] sm:$0xff]
  %v1949 = vld [vmem:[%s169 + $0x262] sm:$0xff]
  %v1950 = vld [vmem:[%s169 + $0x272] sm:$0xff]
  %v1951 = vld [vmem:[%s169 + $0x27a] sm:$0xff]
  %v1952 = vld [vmem:[%s169 + $0x28a] sm:$0xff]
  %v1953 = vld [vmem:[%s169 + $0x292] sm:$0xff]
  %v1954 = vld [vmem:[%s169 + $0x2a2] sm:$0xff]
  %v1955 = vld [vmem:[%s169 + $0x2aa] sm:$0xff]
  %v1956 = vld [vmem:[%s169 + $0x2ba] sm:$0xff]
  %v1957 = vld [vmem:[%s169 + $0x2c2] sm:$0xff]
  %v1958 = vld [vmem:[%s169 + $0x2d2] sm:$0xff]
  %v1959 = vld [vmem:[%s169 + $0x2da] sm:$0xff]
  %v1960 = vld [vmem:[%s169 + $0x2ea] sm:$0xff]
  %v1961 = vld [vmem:[%s169 + $0x2f2] sm:$0xff]
  %v1962 = vld [vmem:[%s169 + $0x302] sm:$0xff]
  %v1963 = vld [vmem:[%s169 + $0x30a] sm:$0xff]
  %v1964 = vld [vmem:[%s169 + $0x31a] sm:$0xff]
  %v1965 = vld [vmem:[%s169 + $0x322] sm:$0xff]
  %2030 = vrot.lane.b32.xlu0 %v1902, 20
  %v2031 = vpop.permute.xlu0 %2030
  %2032 = vrot.lane.b32.xlu0 %v1903, 20
  %v2033 = vpop.permute.xlu0 %2032
  %2034 = vrot.lane.b32.xlu0 %v1904, 20
  %v2035 = vpop.permute.xlu0 %2034
  %2036 = vrot.lane.b32.xlu0 %v1905, 20
  %v2037 = vpop.permute.xlu0 %2036
  %2038 = vrot.lane.b32.xlu0 %v1906, 20
  %v2039 = vpop.permute.xlu0 %2038
  %2040 = vrot.lane.b32.xlu0 %v1907, 20
  %v2041 = vpop.permute.xlu0 %2040
  %2042 = vrot.lane.b32.xlu0 %v1908, 20
  %v2043 = vpop.permute.xlu0 %2042
  %2044 = vrot.lane.b32.xlu0 %v1909, 20
  %v2045 = vpop.permute.xlu0 %2044
  %2046 = vrot.lane.b32.xlu0 %v1910, 20
  %v2047 = vpop.permute.xlu0 %2046
  %2048 = vrot.lane.b32.xlu0 %v1911, 20
  %v2049 = vpop.permute.xlu0 %2048
  %2050 = vrot.lane.b32.xlu0 %v1912, 20
  %v2051 = vpop.permute.xlu0 %2050
  %2052 = vrot.lane.b32.xlu0 %v1913, 20
  %v2053 = vpop.permute.xlu0 %2052
  %2054 = vrot.lane.b32.xlu0 %v1914, 20
  %v2055 = vpop.permute.xlu0 %2054
  %2056 = vrot.lane.b32.xlu0 %v1915, 20
  %v2057 = vpop.permute.xlu0 %2056
  %2058 = vrot.lane.b32.xlu0 %v1916, 20
  %v2059 = vpop.permute.xlu0 %2058
  %2060 = vrot.lane.b32.xlu0 %v1917, 20
  %v2061 = vpop.permute.xlu0 %2060
  %2062 = vrot.lane.b32.xlu0 %v1918, 20
  %v2063 = vpop.permute.xlu0 %2062
  %2064 = vrot.lane.b32.xlu0 %v1919, 20
  %v2065 = vpop.permute.xlu0 %2064
  %2066 = vrot.lane.b32.xlu0 %v1920, 20
  %v2067 = vpop.permute.xlu0 %2066
  %2068 = vrot.lane.b32.xlu0 %v1921, 20
  %v2069 = vpop.permute.xlu0 %2068
  %2070 = vrot.lane.b32.xlu0 %v1922, 20
  %v2071 = vpop.permute.xlu0 %2070
  %2072 = vrot.lane.b32.xlu0 %v1923, 20
  %v2073 = vpop.permute.xlu0 %2072
  %2074 = vrot.lane.b32.xlu0 %v1924, 20
  %v2075 = vpop.permute.xlu0 %2074
  %2076 = vrot.lane.b32.xlu0 %v1925, 20
  %v2077 = vpop.permute.xlu0 %2076
  %2078 = vrot.lane.b32.xlu0 %v1926, 20
  %v2079 = vpop.permute.xlu0 %2078
  %2080 = vrot.lane.b32.xlu0 %v1927, 20
  %v2081 = vpop.permute.xlu0 %2080
  %2082 = vrot.lane.b32.xlu0 %v1928, 20
  %v2083 = vpop.permute.xlu0 %2082
  %2084 = vrot.lane.b32.xlu0 %v1929, 20
  %v2085 = vpop.permute.xlu0 %2084
  %2086 = vrot.lane.b32.xlu0 %v1930, 20
  %v2087 = vpop.permute.xlu0 %2086
  %2088 = vrot.lane.b32.xlu0 %v1931, 20
  %v2089 = vpop.permute.xlu0 %2088
  %2090 = vrot.lane.b32.xlu0 %v1932, 20
  %v2091 = vpop.permute.xlu0 %2090
  %2092 = vrot.lane.b32.xlu0 %v1933, 20
  %v2093 = vpop.permute.xlu0 %2092
  %2094 = vrot.lane.b32.xlu0 %v1934, 20
  %v2095 = vpop.permute.xlu0 %2094
  %2096 = vrot.lane.b32.xlu0 %v1935, 20
  %v2097 = vpop.permute.xlu0 %2096
  %2098 = vrot.lane.b32.xlu0 %v1936, 20
  %v2099 = vpop.permute.xlu0 %2098
  %2100 = vrot.lane.b32.xlu0 %v1937, 20
  %v2101 = vpop.permute.xlu0 %2100
  %2102 = vrot.lane.b32.xlu0 %v1938, 20
  %v2103 = vpop.permute.xlu0 %2102
  %2104 = vrot.lane.b32.xlu0 %v1939, 20
  %v2105 = vpop.permute.xlu0 %2104
  %2106 = vrot.lane.b32.xlu0 %v1940, 20
  %v2107 = vpop.permute.xlu0 %2106
  %2108 = vrot.lane.b32.xlu0 %v1941, 20
  %v2109 = vpop.permute.xlu0 %2108
  %2110 = vrot.lane.b32.xlu0 %v1942, 20
  %v2111 = vpop.permute.xlu0 %2110
  %2112 = vrot.lane.b32.xlu0 %v1943, 20
  %v2113 = vpop.permute.xlu0 %2112
  %2114 = vrot.lane.b32.xlu0 %v1944, 20
  %v2115 = vpop.permute.xlu0 %2114
  %2116 = vrot.lane.b32.xlu0 %v1945, 20
  %v2117 = vpop.permute.xlu0 %2116
  %2118 = vrot.lane.b32.xlu0 %v1946, 20
  %v2119 = vpop.permute.xlu0 %2118
  %2120 = vrot.lane.b32.xlu0 %v1947, 20
  %v2121 = vpop.permute.xlu0 %2120
  %2122 = vrot.lane.b32.xlu0 %v1948, 20
  %v2123 = vpop.permute.xlu0 %2122
  %2124 = vrot.lane.b32.xlu0 %v1949, 20
  %v2125 = vpop.permute.xlu0 %2124
  %2126 = vrot.lane.b32.xlu0 %v1950, 20
  %v2127 = vpop.permute.xlu0 %2126
  %2128 = vrot.lane.b32.xlu0 %v1951, 20
  %v2129 = vpop.permute.xlu0 %2128
  %2130 = vrot.lane.b32.xlu0 %v1952, 20
  %v2131 = vpop.permute.xlu0 %2130
  %2132 = vrot.lane.b32.xlu0 %v1953, 20
  %v2133 = vpop.permute.xlu0 %2132
  %2134 = vrot.lane.b32.xlu0 %v1954, 20
  %v2135 = vpop.permute.xlu0 %2134
  %2136 = vrot.lane.b32.xlu0 %v1955, 20
  %v2137 = vpop.permute.xlu0 %2136
  %2138 = vrot.lane.b32.xlu0 %v1956, 20
  %v2139 = vpop.permute.xlu0 %2138
  %2140 = vrot.lane.b32.xlu0 %v1957, 20
  %v2141 = vpop.permute.xlu0 %2140
  %2142 = vrot.lane.b32.xlu0 %v1958, 20
  %v2143 = vpop.permute.xlu0 %2142
  %2144 = vrot.lane.b32.xlu0 %v1959, 20
  %v2145 = vpop.permute.xlu0 %2144
  %2146 = vrot.lane.b32.xlu0 %v1960, 20
  %v2147 = vpop.permute.xlu0 %2146
  %2148 = vrot.lane.b32.xlu0 %v1961, 20
  %v2149 = vpop.permute.xlu0 %2148
  %2150 = vrot.lane.b32.xlu0 %v1962, 20
  %v2151 = vpop.permute.xlu0 %2150
  %2152 = vrot.lane.b32.xlu0 %v1963, 20
  %v2153 = vpop.permute.xlu0 %2152
  %2154 = vrot.lane.b32.xlu0 %v1964, 20
  %v2155 = vpop.permute.xlu0 %2154
  %2156 = vrot.lane.b32.xlu0 %v1965, 20
  %v2157 = vpop.permute.xlu0 %2156
  %vm2222 = vcmask 195744
  %2223 = vst.msk [vmem:[#allocation3] sm:$0xff] %vm2222, %v2031
  %2224 = vst.msk [vmem:[#allocation3 + $0x8] sm:$0xff] %vm2222, %v2033
  %2225 = vst.msk [vmem:[#allocation3 + $0x10] sm:$0xff] %vm2222, %v2035
  %2226 = vst.msk [vmem:[#allocation3 + $0x18] sm:$0xff] %vm2222, %v2037
  %2227 = vst.msk [vmem:[#allocation3 + $0x20] sm:$0xff] %vm2222, %v2039
  %2228 = vst.msk [vmem:[#allocation3 + $0x28] sm:$0xff] %vm2222, %v2041
  %2229 = vst.msk [vmem:[#allocation3 + $0x30] sm:$0xff] %vm2222, %v2043
  %2230 = vst.msk [vmem:[#allocation3 + $0x38] sm:$0xff] %vm2222, %v2045
  %2231 = vst.msk [vmem:[#allocation3 + $0x40] sm:$0xff] %vm2222, %v2047
  %2232 = vst.msk [vmem:[#allocation3 + $0x48] sm:$0xff] %vm2222, %v2049
  %2233 = vst.msk [vmem:[#allocation3 + $0x50] sm:$0xff] %vm2222, %v2051
  %2234 = vst.msk [vmem:[#allocation3 + $0x58] sm:$0xff] %vm2222, %v2053
  %2235 = vst.msk [vmem:[#allocation3 + $0x60] sm:$0xff] %vm2222, %v2055
  %2236 = vst.msk [vmem:[#allocation3 + $0x68] sm:$0xff] %vm2222, %v2057
  %2237 = vst.msk [vmem:[#allocation3 + $0x70] sm:$0xff] %vm2222, %v2059
  %2238 = vst.msk [vmem:[#allocation3 + $0x78] sm:$0xff] %vm2222, %v2061
  %2239 = vst.msk [vmem:[#allocation3 + $0x80] sm:$0xff] %vm2222, %v2063
  %2240 = vst.msk [vmem:[#allocation3 + $0x88] sm:$0xff] %vm2222, %v2065
  %2241 = vst.msk [vmem:[#allocation3 + $0x90] sm:$0xff] %vm2222, %v2067
  %2242 = vst.msk [vmem:[#allocation3 + $0x98] sm:$0xff] %vm2222, %v2069
  %2243 = vst.msk [vmem:[#allocation3 + $0xa0] sm:$0xff] %vm2222, %v2071
  %2244 = vst.msk [vmem:[#allocation3 + $0xa8] sm:$0xff] %vm2222, %v2073
  %2245 = vst.msk [vmem:[#allocation3 + $0xb0] sm:$0xff] %vm2222, %v2075
  %2246 = vst.msk [vmem:[#allocation3 + $0xb8] sm:$0xff] %vm2222, %v2077
  %2247 = vst.msk [vmem:[#allocation3 + $0xc0] sm:$0xff] %vm2222, %v2079
  %2248 = vst.msk [vmem:[#allocation3 + $0xc8] sm:$0xff] %vm2222, %v2081
  %2249 = vst.msk [vmem:[#allocation3 + $0xd0] sm:$0xff] %vm2222, %v2083
  %2250 = vst.msk [vmem:[#allocation3 + $0xd8] sm:$0xff] %vm2222, %v2085
  %2251 = vst.msk [vmem:[#allocation3 + $0xe0] sm:$0xff] %vm2222, %v2087
  %2252 = vst.msk [vmem:[#allocation3 + $0xe8] sm:$0xff] %vm2222, %v2089
  %2253 = vst.msk [vmem:[#allocation3 + $0xf0] sm:$0xff] %vm2222, %v2091
  %2254 = vst.msk [vmem:[#allocation3 + $0xf8] sm:$0xff] %vm2222, %v2093
  %2255 = vst.msk [vmem:[#allocation3 + $0x100] sm:$0xff] %vm2222, %v2095
  %2256 = vst.msk [vmem:[#allocation3 + $0x108] sm:$0xff] %vm2222, %v2097
  %2257 = vst.msk [vmem:[#allocation3 + $0x110] sm:$0xff] %vm2222, %v2099
  %2258 = vst.msk [vmem:[#allocation3 + $0x118] sm:$0xff] %vm2222, %v2101
  %2259 = vst.msk [vmem:[#allocation3 + $0x120] sm:$0xff] %vm2222, %v2103
  %2260 = vst.msk [vmem:[#allocation3 + $0x128] sm:$0xff] %vm2222, %v2105
  %2261 = vst.msk [vmem:[#allocation3 + $0x130] sm:$0xff] %vm2222, %v2107
  %2262 = vst.msk [vmem:[#allocation3 + $0x138] sm:$0xff] %vm2222, %v2109
  %2263 = vst.msk [vmem:[#allocation3 + $0x140] sm:$0xff] %vm2222, %v2111
  %2264 = vst.msk [vmem:[#allocation3 + $0x148] sm:$0xff] %vm2222, %v2113
  %2265 = vst.msk [vmem:[#allocation3 + $0x150] sm:$0xff] %vm2222, %v2115
  %2266 = vst.msk [vmem:[#allocation3 + $0x158] sm:$0xff] %vm2222, %v2117
  %2267 = vst.msk [vmem:[#allocation3 + $0x160] sm:$0xff] %vm2222, %v2119
  %2268 = vst.msk [vmem:[#allocation3 + $0x168] sm:$0xff] %vm2222, %v2121
  %2269 = vst.msk [vmem:[#allocation3 + $0x170] sm:$0xff] %vm2222, %v2123
  %2270 = vst.msk [vmem:[#allocation3 + $0x178] sm:$0xff] %vm2222, %v2125
  %2271 = vst.msk [vmem:[#allocation3 + $0x180] sm:$0xff] %vm2222, %v2127
  %2272 = vst.msk [vmem:[#allocation3 + $0x188] sm:$0xff] %vm2222, %v2129
  %2273 = vst.msk [vmem:[#allocation3 + $0x190] sm:$0xff] %vm2222, %v2131
  %2274 = vst.msk [vmem:[#allocation3 + $0x198] sm:$0xff] %vm2222, %v2133
  %2275 = vst.msk [vmem:[#allocation3 + $0x1a0] sm:$0xff] %vm2222, %v2135
  %2276 = vst.msk [vmem:[#allocation3 + $0x1a8] sm:$0xff] %vm2222, %v2137
  %2277 = vst.msk [vmem:[#allocation3 + $0x1b0] sm:$0xff] %vm2222, %v2139
  %2278 = vst.msk [vmem:[#allocation3 + $0x1b8] sm:$0xff] %vm2222, %v2141
  %2279 = vst.msk [vmem:[#allocation3 + $0x1c0] sm:$0xff] %vm2222, %v2143
  %2280 = vst.msk [vmem:[#allocation3 + $0x1c8] sm:$0xff] %vm2222, %v2145
  %2281 = vst.msk [vmem:[#allocation3 + $0x1d0] sm:$0xff] %vm2222, %v2147
  %2282 = vst.msk [vmem:[#allocation3 + $0x1d8] sm:$0xff] %vm2222, %v2149
  %2283 = vst.msk [vmem:[#allocation3 + $0x1e0] sm:$0xff] %vm2222, %v2151
  %2284 = vst.msk [vmem:[#allocation3 + $0x1e8] sm:$0xff] %vm2222, %v2153
  %2285 = vst.msk [vmem:[#allocation3 + $0x1f0] sm:$0xff] %vm2222, %v2155
  %2286 = vst.msk [vmem:[#allocation3 + $0x1f8] sm:$0xff] %vm2222, %v2157
  %s2287 = scalar_lea.vmem [#allocation2], 48
  %v2288 = vld [vmem:[%s2287] sm:$0xff]
  %v2289 = vld [vmem:[%s2287 + $0x8] sm:$0xff]
  %v2290 = vld [vmem:[%s2287 + $0x18] sm:$0xff]
  %v2291 = vld [vmem:[%s2287 + $0x20] sm:$0xff]
  %v2292 = vld [vmem:[%s2287 + $0x30] sm:$0xff]
  %v2293 = vld [vmem:[%s2287 + $0x38] sm:$0xff]
  %v2294 = vld [vmem:[%s2287 + $0x48] sm:$0xff]
  %v2295 = vld [vmem:[%s2287 + $0x50] sm:$0xff]
  %v2296 = vld [vmem:[%s2287 + $0x60] sm:$0xff]
  %v2297 = vld [vmem:[%s2287 + $0x68] sm:$0xff]
  %v2298 = vld [vmem:[%s2287 + $0x78] sm:$0xff]
  %v2299 = vld [vmem:[%s2287 + $0x80] sm:$0xff]
  %v2300 = vld [vmem:[%s2287 + $0x90] sm:$0xff]
  %v2301 = vld [vmem:[%s2287 + $0x98] sm:$0xff]
  %v2302 = vld [vmem:[%s2287 + $0xa8] sm:$0xff]
  %v2303 = vld [vmem:[%s2287 + $0xb0] sm:$0xff]
  %v2304 = vld [vmem:[%s2287 + $0xc0] sm:$0xff]
  %v2305 = vld [vmem:[%s2287 + $0xc8] sm:$0xff]
  %v2306 = vld [vmem:[%s2287 + $0xd8] sm:$0xff]
  %v2307 = vld [vmem:[%s2287 + $0xe0] sm:$0xff]
  %v2308 = vld [vmem:[%s2287 + $0xf0] sm:$0xff]
  %v2309 = vld [vmem:[%s2287 + $0xf8] sm:$0xff]
  %v2310 = vld [vmem:[%s2287 + $0x108] sm:$0xff]
  %v2311 = vld [vmem:[%s2287 + $0x110] sm:$0xff]
  %v2312 = vld [vmem:[%s2287 + $0x120] sm:$0xff]
  %v2313 = vld [vmem:[%s2287 + $0x128] sm:$0xff]
  %v2314 = vld [vmem:[%s2287 + $0x138] sm:$0xff]
  %v2315 = vld [vmem:[%s2287 + $0x140] sm:$0xff]
  %v2316 = vld [vmem:[%s2287 + $0x150] sm:$0xff]
  %v2317 = vld [vmem:[%s2287 + $0x158] sm:$0xff]
  %v2318 = vld [vmem:[%s2287 + $0x168] sm:$0xff]
  %v2319 = vld [vmem:[%s2287 + $0x170] sm:$0xff]
  %v2320 = vld [vmem:[%s2287 + $0x1b0] sm:$0xff]
  %v2321 = vld [vmem:[%s2287 + $0x1b8] sm:$0xff]
  %v2322 = vld [vmem:[%s2287 + $0x1c8] sm:$0xff]
  %v2323 = vld [vmem:[%s2287 + $0x1d0] sm:$0xff]
  %v2324 = vld [vmem:[%s2287 + $0x1e0] sm:$0xff]
  %v2325 = vld [vmem:[%s2287 + $0x1e8] sm:$0xff]
  %v2326 = vld [vmem:[%s2287 + $0x1f8] sm:$0xff]
  %v2327 = vld [vmem:[%s2287 + $0x200] sm:$0xff]
  %v2328 = vld [vmem:[%s2287 + $0x210] sm:$0xff]
  %v2329 = vld [vmem:[%s2287 + $0x218] sm:$0xff]
  %v2330 = vld [vmem:[%s2287 + $0x228] sm:$0xff]
  %v2331 = vld [vmem:[%s2287 + $0x230] sm:$0xff]
  %v2332 = vld [vmem:[%s2287 + $0x240] sm:$0xff]
  %v2333 = vld [vmem:[%s2287 + $0x248] sm:$0xff]
  %v2334 = vld [vmem:[%s2287 + $0x258] sm:$0xff]
  %v2335 = vld [vmem:[%s2287 + $0x260] sm:$0xff]
  %v2336 = vld [vmem:[%s2287 + $0x270] sm:$0xff]
  %v2337 = vld [vmem:[%s2287 + $0x278] sm:$0xff]
  %v2338 = vld [vmem:[%s2287 + $0x288] sm:$0xff]
  %v2339 = vld [vmem:[%s2287 + $0x290] sm:$0xff]
  %v2340 = vld [vmem:[%s2287 + $0x2a0] sm:$0xff]
  %v2341 = vld [vmem:[%s2287 + $0x2a8] sm:$0xff]
  %v2342 = vld [vmem:[%s2287 + $0x2b8] sm:$0xff]
  %v2343 = vld [vmem:[%s2287 + $0x2c0] sm:$0xff]
  %v2344 = vld [vmem:[%s2287 + $0x2d0] sm:$0xff]
  %v2345 = vld [vmem:[%s2287 + $0x2d8] sm:$0xff]
  %v2346 = vld [vmem:[%s2287 + $0x2e8] sm:$0xff]
  %v2347 = vld [vmem:[%s2287 + $0x2f0] sm:$0xff]
  %v2348 = vld [vmem:[%s2287 + $0x300] sm:$0xff]
  %v2349 = vld [vmem:[%s2287 + $0x308] sm:$0xff]
  %v2350 = vld [vmem:[%s2287 + $0x318] sm:$0xff]
  %v2351 = vld [vmem:[%s2287 + $0x320] sm:$0xff]
  %2416 = vrot.lane.b32.xlu0 %v2288, 24
  %v2417 = vpop.permute.xlu0 %2416
  %2418 = vrot.lane.b32.xlu0 %v2289, 24
  %v2419 = vpop.permute.xlu0 %2418
  %2420 = vrot.lane.b32.xlu0 %v2290, 24
  %v2421 = vpop.permute.xlu0 %2420
  %2422 = vrot.lane.b32.xlu0 %v2291, 24
  %v2423 = vpop.permute.xlu0 %2422
  %2424 = vrot.lane.b32.xlu0 %v2292, 24
  %v2425 = vpop.permute.xlu0 %2424
  %2426 = vrot.lane.b32.xlu0 %v2293, 24
  %v2427 = vpop.permute.xlu0 %2426
  %2428 = vrot.lane.b32.xlu0 %v2294, 24
  %v2429 = vpop.permute.xlu0 %2428
  %2430 = vrot.lane.b32.xlu0 %v2295, 24
  %v2431 = vpop.permute.xlu0 %2430
  %2432 = vrot.lane.b32.xlu0 %v2296, 24
  %v2433 = vpop.permute.xlu0 %2432
  %2434 = vrot.lane.b32.xlu0 %v2297, 24
  %v2435 = vpop.permute.xlu0 %2434
  %2436 = vrot.lane.b32.xlu0 %v2298, 24
  %v2437 = vpop.permute.xlu0 %2436
  %2438 = vrot.lane.b32.xlu0 %v2299, 24
  %v2439 = vpop.permute.xlu0 %2438
  %2440 = vrot.lane.b32.xlu0 %v2300, 24
  %v2441 = vpop.permute.xlu0 %2440
  %2442 = vrot.lane.b32.xlu0 %v2301, 24
  %v2443 = vpop.permute.xlu0 %2442
  %2444 = vrot.lane.b32.xlu0 %v2302, 24
  %v2445 = vpop.permute.xlu0 %2444
  %2446 = vrot.lane.b32.xlu0 %v2303, 24
  %v2447 = vpop.permute.xlu0 %2446
  %2448 = vrot.lane.b32.xlu0 %v2304, 24
  %v2449 = vpop.permute.xlu0 %2448
  %2450 = vrot.lane.b32.xlu0 %v2305, 24
  %v2451 = vpop.permute.xlu0 %2450
  %2452 = vrot.lane.b32.xlu0 %v2306, 24
  %v2453 = vpop.permute.xlu0 %2452
  %2454 = vrot.lane.b32.xlu0 %v2307, 24
  %v2455 = vpop.permute.xlu0 %2454
  %2456 = vrot.lane.b32.xlu0 %v2308, 24
  %v2457 = vpop.permute.xlu0 %2456
  %2458 = vrot.lane.b32.xlu0 %v2309, 24
  %v2459 = vpop.permute.xlu0 %2458
  %2460 = vrot.lane.b32.xlu0 %v2310, 24
  %v2461 = vpop.permute.xlu0 %2460
  %2462 = vrot.lane.b32.xlu0 %v2311, 24
  %v2463 = vpop.permute.xlu0 %2462
  %2464 = vrot.lane.b32.xlu0 %v2312, 24
  %v2465 = vpop.permute.xlu0 %2464
  %2466 = vrot.lane.b32.xlu0 %v2313, 24
  %v2467 = vpop.permute.xlu0 %2466
  %2468 = vrot.lane.b32.xlu0 %v2314, 24
  %v2469 = vpop.permute.xlu0 %2468
  %2470 = vrot.lane.b32.xlu0 %v2315, 24
  %v2471 = vpop.permute.xlu0 %2470
  %2472 = vrot.lane.b32.xlu0 %v2316, 24
  %v2473 = vpop.permute.xlu0 %2472
  %2474 = vrot.lane.b32.xlu0 %v2317, 24
  %v2475 = vpop.permute.xlu0 %2474
  %2476 = vrot.lane.b32.xlu0 %v2318, 24
  %v2477 = vpop.permute.xlu0 %2476
  %2478 = vrot.lane.b32.xlu0 %v2319, 24
  %v2479 = vpop.permute.xlu0 %2478
  %2480 = vrot.lane.b32.xlu0 %v2320, 24
  %v2481 = vpop.permute.xlu0 %2480
  %2482 = vrot.lane.b32.xlu0 %v2321, 24
  %v2483 = vpop.permute.xlu0 %2482
  %2484 = vrot.lane.b32.xlu0 %v2322, 24
  %v2485 = vpop.permute.xlu0 %2484
  %2486 = vrot.lane.b32.xlu0 %v2323, 24
  %v2487 = vpop.permute.xlu0 %2486
  %2488 = vrot.lane.b32.xlu0 %v2324, 24
  %v2489 = vpop.permute.xlu0 %2488
  %2490 = vrot.lane.b32.xlu0 %v2325, 24
  %v2491 = vpop.permute.xlu0 %2490
  %2492 = vrot.lane.b32.xlu0 %v2326, 24
  %v2493 = vpop.permute.xlu0 %2492
  %2494 = vrot.lane.b32.xlu0 %v2327, 24
  %v2495 = vpop.permute.xlu0 %2494
  %2496 = vrot.lane.b32.xlu0 %v2328, 24
  %v2497 = vpop.permute.xlu0 %2496
  %2498 = vrot.lane.b32.xlu0 %v2329, 24
  %v2499 = vpop.permute.xlu0 %2498
  %2500 = vrot.lane.b32.xlu0 %v2330, 24
  %v2501 = vpop.permute.xlu0 %2500
  %2502 = vrot.lane.b32.xlu0 %v2331, 24
  %v2503 = vpop.permute.xlu0 %2502
  %2504 = vrot.lane.b32.xlu0 %v2332, 24
  %v2505 = vpop.permute.xlu0 %2504
  %2506 = vrot.lane.b32.xlu0 %v2333, 24
  %v2507 = vpop.permute.xlu0 %2506
  %2508 = vrot.lane.b32.xlu0 %v2334, 24
  %v2509 = vpop.permute.xlu0 %2508
  %2510 = vrot.lane.b32.xlu0 %v2335, 24
  %v2511 = vpop.permute.xlu0 %2510
  %2512 = vrot.lane.b32.xlu0 %v2336, 24
  %v2513 = vpop.permute.xlu0 %2512
  %2514 = vrot.lane.b32.xlu0 %v2337, 24
  %v2515 = vpop.permute.xlu0 %2514
  %2516 = vrot.lane.b32.xlu0 %v2338, 24
  %v2517 = vpop.permute.xlu0 %2516
  %2518 = vrot.lane.b32.xlu0 %v2339, 24
  %v2519 = vpop.permute.xlu0 %2518
  %2520 = vrot.lane.b32.xlu0 %v2340, 24
  %v2521 = vpop.permute.xlu0 %2520
  %2522 = vrot.lane.b32.xlu0 %v2341, 24
  %v2523 = vpop.permute.xlu0 %2522
  %2524 = vrot.lane.b32.xlu0 %v2342, 24
  %v2525 = vpop.permute.xlu0 %2524
  %2526 = vrot.lane.b32.xlu0 %v2343, 24
  %v2527 = vpop.permute.xlu0 %2526
  %2528 = vrot.lane.b32.xlu0 %v2344, 24
  %v2529 = vpop.permute.xlu0 %2528
  %2530 = vrot.lane.b32.xlu0 %v2345, 24
  %v2531 = vpop.permute.xlu0 %2530
  %2532 = vrot.lane.b32.xlu0 %v2346, 24
  %v2533 = vpop.permute.xlu0 %2532
  %2534 = vrot.lane.b32.xlu0 %v2347, 24
  %v2535 = vpop.permute.xlu0 %2534
  %2536 = vrot.lane.b32.xlu0 %v2348, 24
  %v2537 = vpop.permute.xlu0 %2536
  %2538 = vrot.lane.b32.xlu0 %v2349, 24
  %v2539 = vpop.permute.xlu0 %2538
  %2540 = vrot.lane.b32.xlu0 %v2350, 24
  %v2541 = vpop.permute.xlu0 %2540
  %2542 = vrot.lane.b32.xlu0 %v2351, 24
  %v2543 = vpop.permute.xlu0 %2542
  %vm2608 = vcmask 228544
  %2609 = vst.msk [vmem:[#allocation3] sm:$0xff] %vm2608, %v2417
  %2610 = vst.msk [vmem:[#allocation3 + $0x8] sm:$0xff] %vm2608, %v2419
  %2611 = vst.msk [vmem:[#allocation3 + $0x10] sm:$0xff] %vm2608, %v2421
  %2612 = vst.msk [vmem:[#allocation3 + $0x18] sm:$0xff] %vm2608, %v2423
  %2613 = vst.msk [vmem:[#allocation3 + $0x20] sm:$0xff] %vm2608, %v2425
  %2614 = vst.msk [vmem:[#allocation3 + $0x28] sm:$0xff] %vm2608, %v2427
  %2615 = vst.msk [vmem:[#allocation3 + $0x30] sm:$0xff] %vm2608, %v2429
  %2616 = vst.msk [vmem:[#allocation3 + $0x38] sm:$0xff] %vm2608, %v2431
  %2617 = vst.msk [vmem:[#allocation3 + $0x40] sm:$0xff] %vm2608, %v2433
  %2618 = vst.msk [vmem:[#allocation3 + $0x48] sm:$0xff] %vm2608, %v2435
  %2619 = vst.msk [vmem:[#allocation3 + $0x50] sm:$0xff] %vm2608, %v2437
  %2620 = vst.msk [vmem:[#allocation3 + $0x58] sm:$0xff] %vm2608, %v2439
  %2621 = vst.msk [vmem:[#allocation3 + $0x60] sm:$0xff] %vm2608, %v2441
  %2622 = vst.msk [vmem:[#allocation3 + $0x68] sm:$0xff] %vm2608, %v2443
  %2623 = vst.msk [vmem:[#allocation3 + $0x70] sm:$0xff] %vm2608, %v2445
  %2624 = vst.msk [vmem:[#allocation3 + $0x78] sm:$0xff] %vm2608, %v2447
  %2625 = vst.msk [vmem:[#allocation3 + $0x80] sm:$0xff] %vm2608, %v2449
  %2626 = vst.msk [vmem:[#allocation3 + $0x88] sm:$0xff] %vm2608, %v2451
  %2627 = vst.msk [vmem:[#allocation3 + $0x90] sm:$0xff] %vm2608, %v2453
  %2628 = vst.msk [vmem:[#allocation3 + $0x98] sm:$0xff] %vm2608, %v2455
  %2629 = vst.msk [vmem:[#allocation3 + $0xa0] sm:$0xff] %vm2608, %v2457
  %2630 = vst.msk [vmem:[#allocation3 + $0xa8] sm:$0xff] %vm2608, %v2459
  %2631 = vst.msk [vmem:[#allocation3 + $0xb0] sm:$0xff] %vm2608, %v2461
  %2632 = vst.msk [vmem:[#allocation3 + $0xb8] sm:$0xff] %vm2608, %v2463
  %2633 = vst.msk [vmem:[#allocation3 + $0xc0] sm:$0xff] %vm2608, %v2465
  %2634 = vst.msk [vmem:[#allocation3 + $0xc8] sm:$0xff] %vm2608, %v2467
  %2635 = vst.msk [vmem:[#allocation3 + $0xd0] sm:$0xff] %vm2608, %v2469
  %2636 = vst.msk [vmem:[#allocation3 + $0xd8] sm:$0xff] %vm2608, %v2471
  %2637 = vst.msk [vmem:[#allocation3 + $0xe0] sm:$0xff] %vm2608, %v2473
  %2638 = vst.msk [vmem:[#allocation3 + $0xe8] sm:$0xff] %vm2608, %v2475
  %2639 = vst.msk [vmem:[#allocation3 + $0xf0] sm:$0xff] %vm2608, %v2477
  %2640 = vst.msk [vmem:[#allocation3 + $0xf8] sm:$0xff] %vm2608, %v2479
  %2641 = vst.msk [vmem:[#allocation3 + $0x100] sm:$0xff] %vm2608, %v2481
  %2642 = vst.msk [vmem:[#allocation3 + $0x108] sm:$0xff] %vm2608, %v2483
  %2643 = vst.msk [vmem:[#allocation3 + $0x110] sm:$0xff] %vm2608, %v2485
  %2644 = vst.msk [vmem:[#allocation3 + $0x118] sm:$0xff] %vm2608, %v2487
  %2645 = vst.msk [vmem:[#allocation3 + $0x120] sm:$0xff] %vm2608, %v2489
  %2646 = vst.msk [vmem:[#allocation3 + $0x128] sm:$0xff] %vm2608, %v2491
  %2647 = vst.msk [vmem:[#allocation3 + $0x130] sm:$0xff] %vm2608, %v2493
  %2648 = vst.msk [vmem:[#allocation3 + $0x138] sm:$0xff] %vm2608, %v2495
  %2649 = vst.msk [vmem:[#allocation3 + $0x140] sm:$0xff] %vm2608, %v2497
  %2650 = vst.msk [vmem:[#allocation3 + $0x148] sm:$0xff] %vm2608, %v2499
  %2651 = vst.msk [vmem:[#allocation3 + $0x150] sm:$0xff] %vm2608, %v2501
  %2652 = vst.msk [vmem:[#allocation3 + $0x158] sm:$0xff] %vm2608, %v2503
  %2653 = vst.msk [vmem:[#allocation3 + $0x160] sm:$0xff] %vm2608, %v2505
  %2654 = vst.msk [vmem:[#allocation3 + $0x168] sm:$0xff] %vm2608, %v2507
  %2655 = vst.msk [vmem:[#allocation3 + $0x170] sm:$0xff] %vm2608, %v2509
  %2656 = vst.msk [vmem:[#allocation3 + $0x178] sm:$0xff] %vm2608, %v2511
  %2657 = vst.msk [vmem:[#allocation3 + $0x180] sm:$0xff] %vm2608, %v2513
  %2658 = vst.msk [vmem:[#allocation3 + $0x188] sm:$0xff] %vm2608, %v2515
  %2659 = vst.msk [vmem:[#allocation3 + $0x190] sm:$0xff] %vm2608, %v2517
  %2660 = vst.msk [vmem:[#allocation3 + $0x198] sm:$0xff] %vm2608, %v2519
  %2661 = vst.msk [vmem:[#allocation3 + $0x1a0] sm:$0xff] %vm2608, %v2521
  %2662 = vst.msk [vmem:[#allocation3 + $0x1a8] sm:$0xff] %vm2608, %v2523
  %2663 = vst.msk [vmem:[#allocation3 + $0x1b0] sm:$0xff] %vm2608, %v2525
  %2664 = vst.msk [vmem:[#allocation3 + $0x1b8] sm:$0xff] %vm2608, %v2527
  %2665 = vst.msk [vmem:[#allocation3 + $0x1c0] sm:$0xff] %vm2608, %v2529
  %2666 = vst.msk [vmem:[#allocation3 + $0x1c8] sm:$0xff] %vm2608, %v2531
  %2667 = vst.msk [vmem:[#allocation3 + $0x1d0] sm:$0xff] %vm2608, %v2533
  %2668 = vst.msk [vmem:[#allocation3 + $0x1d8] sm:$0xff] %vm2608, %v2535
  %2669 = vst.msk [vmem:[#allocation3 + $0x1e0] sm:$0xff] %vm2608, %v2537
  %2670 = vst.msk [vmem:[#allocation3 + $0x1e8] sm:$0xff] %vm2608, %v2539
  %2671 = vst.msk [vmem:[#allocation3 + $0x1f0] sm:$0xff] %vm2608, %v2541
  %2672 = vst.msk [vmem:[#allocation3 + $0x1f8] sm:$0xff] %vm2608, %v2543
  %v2673 = vld [vmem:[%s2287 + $0x1] sm:$0xff]
  %v2674 = vld [vmem:[%s2287 + $0x9] sm:$0xff]
  %v2675 = vld [vmem:[%s2287 + $0x19] sm:$0xff]
  %v2676 = vld [vmem:[%s2287 + $0x21] sm:$0xff]
  %v2677 = vld [vmem:[%s2287 + $0x31] sm:$0xff]
  %v2678 = vld [vmem:[%s2287 + $0x39] sm:$0xff]
  %v2679 = vld [vmem:[%s2287 + $0x49] sm:$0xff]
  %v2680 = vld [vmem:[%s2287 + $0x51] sm:$0xff]
  %v2681 = vld [vmem:[%s2287 + $0x61] sm:$0xff]
  %v2682 = vld [vmem:[%s2287 + $0x69] sm:$0xff]
  %v2683 = vld [vmem:[%s2287 + $0x79] sm:$0xff]
  %v2684 = vld [vmem:[%s2287 + $0x81] sm:$0xff]
  %v2685 = vld [vmem:[%s2287 + $0x91] sm:$0xff]
  %v2686 = vld [vmem:[%s2287 + $0x99] sm:$0xff]
  %v2687 = vld [vmem:[%s2287 + $0xa9] sm:$0xff]
  %v2688 = vld [vmem:[%s2287 + $0xb1] sm:$0xff]
  %v2689 = vld [vmem:[%s2287 + $0xc1] sm:$0xff]
  %v2690 = vld [vmem:[%s2287 + $0xc9] sm:$0xff]
  %v2691 = vld [vmem:[%s2287 + $0xd9] sm:$0xff]
  %v2692 = vld [vmem:[%s2287 + $0xe1] sm:$0xff]
  %v2693 = vld [vmem:[%s2287 + $0xf1] sm:$0xff]
  %v2694 = vld [vmem:[%s2287 + $0xf9] sm:$0xff]
  %v2695 = vld [vmem:[%s2287 + $0x109] sm:$0xff]
  %v2696 = vld [vmem:[%s2287 + $0x111] sm:$0xff]
  %v2697 = vld [vmem:[%s2287 + $0x121] sm:$0xff]
  %v2698 = vld [vmem:[%s2287 + $0x129] sm:$0xff]
  %v2699 = vld [vmem:[%s2287 + $0x139] sm:$0xff]
  %v2700 = vld [vmem:[%s2287 + $0x141] sm:$0xff]
  %v2701 = vld [vmem:[%s2287 + $0x151] sm:$0xff]
  %v2702 = vld [vmem:[%s2287 + $0x159] sm:$0xff]
  %v2703 = vld [vmem:[%s2287 + $0x169] sm:$0xff]
  %v2704 = vld [vmem:[%s2287 + $0x171] sm:$0xff]
  %v2705 = vld [vmem:[%s2287 + $0x1b1] sm:$0xff]
  %v2706 = vld [vmem:[%s2287 + $0x1b9] sm:$0xff]
  %v2707 = vld [vmem:[%s2287 + $0x1c9] sm:$0xff]
  %v2708 = vld [vmem:[%s2287 + $0x1d1] sm:$0xff]
  %v2709 = vld [vmem:[%s2287 + $0x1e1] sm:$0xff]
  %v2710 = vld [vmem:[%s2287 + $0x1e9] sm:$0xff]
  %v2711 = vld [vmem:[%s2287 + $0x1f9] sm:$0xff]
  %v2712 = vld [vmem:[%s2287 + $0x201] sm:$0xff]
  %v2713 = vld [vmem:[%s2287 + $0x211] sm:$0xff]
  %v2714 = vld [vmem:[%s2287 + $0x219] sm:$0xff]
  %v2715 = vld [vmem:[%s2287 + $0x229] sm:$0xff]
  %v2716 = vld [vmem:[%s2287 + $0x231] sm:$0xff]
  %v2717 = vld [vmem:[%s2287 + $0x241] sm:$0xff]
  %v2718 = vld [vmem:[%s2287 + $0x249] sm:$0xff]
  %v2719 = vld [vmem:[%s2287 + $0x259] sm:$0xff]
  %v2720 = vld [vmem:[%s2287 + $0x261] sm:$0xff]
  %v2721 = vld [vmem:[%s2287 + $0x271] sm:$0xff]
  %v2722 = vld [vmem:[%s2287 + $0x279] sm:$0xff]
  %v2723 = vld [vmem:[%s2287 + $0x289] sm:$0xff]
  %v2724 = vld [vmem:[%s2287 + $0x291] sm:$0xff]
  %v2725 = vld [vmem:[%s2287 + $0x2a1] sm:$0xff]
  %v2726 = vld [vmem:[%s2287 + $0x2a9] sm:$0xff]
  %v2727 = vld [vmem:[%s2287 + $0x2b9] sm:$0xff]
  %v2728 = vld [vmem:[%s2287 + $0x2c1] sm:$0xff]
  %v2729 = vld [vmem:[%s2287 + $0x2d1] sm:$0xff]
  %v2730 = vld [vmem:[%s2287 + $0x2d9] sm:$0xff]
  %v2731 = vld [vmem:[%s2287 + $0x2e9] sm:$0xff]
  %v2732 = vld [vmem:[%s2287 + $0x2f1] sm:$0xff]
  %v2733 = vld [vmem:[%s2287 + $0x301] sm:$0xff]
  %v2734 = vld [vmem:[%s2287 + $0x309] sm:$0xff]
  %v2735 = vld [vmem:[%s2287 + $0x319] sm:$0xff]
  %v2736 = vld [vmem:[%s2287 + $0x321] sm:$0xff]
  %2801 = vrot.lane.b32.xlu0 %v2673, 28
  %v2802 = vpop.permute.xlu0 %2801
  %2803 = vrot.lane.b32.xlu0 %v2674, 28
  %v2804 = vpop.permute.xlu0 %2803
  %2805 = vrot.lane.b32.xlu0 %v2675, 28
  %v2806 = vpop.permute.xlu0 %2805
  %2807 = vrot.lane.b32.xlu0 %v2676, 28
  %v2808 = vpop.permute.xlu0 %2807
  %2809 = vrot.lane.b32.xlu0 %v2677, 28
  %v2810 = vpop.permute.xlu0 %2809
  %2811 = vrot.lane.b32.xlu0 %v2678, 28
  %v2812 = vpop.permute.xlu0 %2811
  %2813 = vrot.lane.b32.xlu0 %v2679, 28
  %v2814 = vpop.permute.xlu0 %2813
  %2815 = vrot.lane.b32.xlu0 %v2680, 28
  %v2816 = vpop.permute.xlu0 %2815
  %2817 = vrot.lane.b32.xlu0 %v2681, 28
  %v2818 = vpop.permute.xlu0 %2817
  %2819 = vrot.lane.b32.xlu0 %v2682, 28
  %v2820 = vpop.permute.xlu0 %2819
  %2821 = vrot.lane.b32.xlu0 %v2683, 28
  %v2822 = vpop.permute.xlu0 %2821
  %2823 = vrot.lane.b32.xlu0 %v2684, 28
  %v2824 = vpop.permute.xlu0 %2823
  %2825 = vrot.lane.b32.xlu0 %v2685, 28
  %v2826 = vpop.permute.xlu0 %2825
  %2827 = vrot.lane.b32.xlu0 %v2686, 28
  %v2828 = vpop.permute.xlu0 %2827
  %2829 = vrot.lane.b32.xlu0 %v2687, 28
  %v2830 = vpop.permute.xlu0 %2829
  %2831 = vrot.lane.b32.xlu0 %v2688, 28
  %v2832 = vpop.permute.xlu0 %2831
  %2833 = vrot.lane.b32.xlu0 %v2689, 28
  %v2834 = vpop.permute.xlu0 %2833
  %2835 = vrot.lane.b32.xlu0 %v2690, 28
  %v2836 = vpop.permute.xlu0 %2835
  %2837 = vrot.lane.b32.xlu0 %v2691, 28
  %v2838 = vpop.permute.xlu0 %2837
  %2839 = vrot.lane.b32.xlu0 %v2692, 28
  %v2840 = vpop.permute.xlu0 %2839
  %2841 = vrot.lane.b32.xlu0 %v2693, 28
  %v2842 = vpop.permute.xlu0 %2841
  %2843 = vrot.lane.b32.xlu0 %v2694, 28
  %v2844 = vpop.permute.xlu0 %2843
  %2845 = vrot.lane.b32.xlu0 %v2695, 28
  %v2846 = vpop.permute.xlu0 %2845
  %2847 = vrot.lane.b32.xlu0 %v2696, 28
  %v2848 = vpop.permute.xlu0 %2847
  %2849 = vrot.lane.b32.xlu0 %v2697, 28
  %v2850 = vpop.permute.xlu0 %2849
  %2851 = vrot.lane.b32.xlu0 %v2698, 28
  %v2852 = vpop.permute.xlu0 %2851
  %2853 = vrot.lane.b32.xlu0 %v2699, 28
  %v2854 = vpop.permute.xlu0 %2853
  %2855 = vrot.lane.b32.xlu0 %v2700, 28
  %v2856 = vpop.permute.xlu0 %2855
  %2857 = vrot.lane.b32.xlu0 %v2701, 28
  %v2858 = vpop.permute.xlu0 %2857
  %2859 = vrot.lane.b32.xlu0 %v2702, 28
  %v2860 = vpop.permute.xlu0 %2859
  %2861 = vrot.lane.b32.xlu0 %v2703, 28
  %v2862 = vpop.permute.xlu0 %2861
  %2863 = vrot.lane.b32.xlu0 %v2704, 28
  %v2864 = vpop.permute.xlu0 %2863
  %2865 = vrot.lane.b32.xlu0 %v2705, 28
  %v2866 = vpop.permute.xlu0 %2865
  %2867 = vrot.lane.b32.xlu0 %v2706, 28
  %v2868 = vpop.permute.xlu0 %2867
  %2869 = vrot.lane.b32.xlu0 %v2707, 28
  %v2870 = vpop.permute.xlu0 %2869
  %2871 = vrot.lane.b32.xlu0 %v2708, 28
  %v2872 = vpop.permute.xlu0 %2871
  %2873 = vrot.lane.b32.xlu0 %v2709, 28
  %v2874 = vpop.permute.xlu0 %2873
  %2875 = vrot.lane.b32.xlu0 %v2710, 28
  %v2876 = vpop.permute.xlu0 %2875
  %2877 = vrot.lane.b32.xlu0 %v2711, 28
  %v2878 = vpop.permute.xlu0 %2877
  %2879 = vrot.lane.b32.xlu0 %v2712, 28
  %v2880 = vpop.permute.xlu0 %2879
  %2881 = vrot.lane.b32.xlu0 %v2713, 28
  %v2882 = vpop.permute.xlu0 %2881
  %2883 = vrot.lane.b32.xlu0 %v2714, 28
  %v2884 = vpop.permute.xlu0 %2883
  %2885 = vrot.lane.b32.xlu0 %v2715, 28
  %v2886 = vpop.permute.xlu0 %2885
  %2887 = vrot.lane.b32.xlu0 %v2716, 28
  %v2888 = vpop.permute.xlu0 %2887
  %2889 = vrot.lane.b32.xlu0 %v2717, 28
  %v2890 = vpop.permute.xlu0 %2889
  %2891 = vrot.lane.b32.xlu0 %v2718, 28
  %v2892 = vpop.permute.xlu0 %2891
  %2893 = vrot.lane.b32.xlu0 %v2719, 28
  %v2894 = vpop.permute.xlu0 %2893
  %2895 = vrot.lane.b32.xlu0 %v2720, 28
  %v2896 = vpop.permute.xlu0 %2895
  %2897 = vrot.lane.b32.xlu0 %v2721, 28
  %v2898 = vpop.permute.xlu0 %2897
  %2899 = vrot.lane.b32.xlu0 %v2722, 28
  %v2900 = vpop.permute.xlu0 %2899
  %2901 = vrot.lane.b32.xlu0 %v2723, 28
  %v2902 = vpop.permute.xlu0 %2901
  %2903 = vrot.lane.b32.xlu0 %v2724, 28
  %v2904 = vpop.permute.xlu0 %2903
  %2905 = vrot.lane.b32.xlu0 %v2725, 28
  %v2906 = vpop.permute.xlu0 %2905
  %2907 = vrot.lane.b32.xlu0 %v2726, 28
  %v2908 = vpop.permute.xlu0 %2907
  %2909 = vrot.lane.b32.xlu0 %v2727, 28
  %v2910 = vpop.permute.xlu0 %2909
  %2911 = vrot.lane.b32.xlu0 %v2728, 28
  %v2912 = vpop.permute.xlu0 %2911
  %2913 = vrot.lane.b32.xlu0 %v2729, 28
  %v2914 = vpop.permute.xlu0 %2913
  %2915 = vrot.lane.b32.xlu0 %v2730, 28
  %v2916 = vpop.permute.xlu0 %2915
  %2917 = vrot.lane.b32.xlu0 %v2731, 28
  %v2918 = vpop.permute.xlu0 %2917
  %2919 = vrot.lane.b32.xlu0 %v2732, 28
  %v2920 = vpop.permute.xlu0 %2919
  %2921 = vrot.lane.b32.xlu0 %v2733, 28
  %v2922 = vpop.permute.xlu0 %2921
  %2923 = vrot.lane.b32.xlu0 %v2734, 28
  %v2924 = vpop.permute.xlu0 %2923
  %2925 = vrot.lane.b32.xlu0 %v2735, 28
  %v2926 = vpop.permute.xlu0 %2925
  %2927 = vrot.lane.b32.xlu0 %v2736, 28
  %v2928 = vpop.permute.xlu0 %2927
  %vm2993 = vcmask 261344
  %2994 = vst.msk [vmem:[#allocation3] sm:$0xff] %vm2993, %v2802
  %2995 = vst.msk [vmem:[#allocation3 + $0x8] sm:$0xff] %vm2993, %v2804
  %2996 = vst.msk [vmem:[#allocation3 + $0x10] sm:$0xff] %vm2993, %v2806
  %2997 = vst.msk [vmem:[#allocation3 + $0x18] sm:$0xff] %vm2993, %v2808
  %2998 = vst.msk [vmem:[#allocation3 + $0x20] sm:$0xff] %vm2993, %v2810
  %2999 = vst.msk [vmem:[#allocation3 + $0x28] sm:$0xff] %vm2993, %v2812
  %3000 = vst.msk [vmem:[#allocation3 + $0x30] sm:$0xff] %vm2993, %v2814
  %3001 = vst.msk [vmem:[#allocation3 + $0x38] sm:$0xff] %vm2993, %v2816
  %3002 = vst.msk [vmem:[#allocation3 + $0x40] sm:$0xff] %vm2993, %v2818
  %3003 = vst.msk [vmem:[#allocation3 + $0x48] sm:$0xff] %vm2993, %v2820
  %3004 = vst.msk [vmem:[#allocation3 + $0x50] sm:$0xff] %vm2993, %v2822
  %3005 = vst.msk [vmem:[#allocation3 + $0x58] sm:$0xff] %vm2993, %v2824
  %3006 = vst.msk [vmem:[#allocation3 + $0x60] sm:$0xff] %vm2993, %v2826
  %3007 = vst.msk [vmem:[#allocation3 + $0x68] sm:$0xff] %vm2993, %v2828
  %3008 = vst.msk [vmem:[#allocation3 + $0x70] sm:$0xff] %vm2993, %v2830
  %3009 = vst.msk [vmem:[#allocation3 + $0x78] sm:$0xff] %vm2993, %v2832
  %3010 = vst.msk [vmem:[#allocation3 + $0x80] sm:$0xff] %vm2993, %v2834
  %3011 = vst.msk [vmem:[#allocation3 + $0x88] sm:$0xff] %vm2993, %v2836
  %3012 = vst.msk [vmem:[#allocation3 + $0x90] sm:$0xff] %vm2993, %v2838
  %3013 = vst.msk [vmem:[#allocation3 + $0x98] sm:$0xff] %vm2993, %v2840
  %3014 = vst.msk [vmem:[#allocation3 + $0xa0] sm:$0xff] %vm2993, %v2842
  %3015 = vst.msk [vmem:[#allocation3 + $0xa8] sm:$0xff] %vm2993, %v2844
  %3016 = vst.msk [vmem:[#allocation3 + $0xb0] sm:$0xff] %vm2993, %v2846
  %3017 = vst.msk [vmem:[#allocation3 + $0xb8] sm:$0xff] %vm2993, %v2848
  %3018 = vst.msk [vmem:[#allocation3 + $0xc0] sm:$0xff] %vm2993, %v2850
  %3019 = vst.msk [vmem:[#allocation3 + $0xc8] sm:$0xff] %vm2993, %v2852
  %3020 = vst.msk [vmem:[#allocation3 + $0xd0] sm:$0xff] %vm2993, %v2854
  %3021 = vst.msk [vmem:[#allocation3 + $0xd8] sm:$0xff] %vm2993, %v2856
  %3022 = vst.msk [vmem:[#allocation3 + $0xe0] sm:$0xff] %vm2993, %v2858
  %3023 = vst.msk [vmem:[#allocation3 + $0xe8] sm:$0xff] %vm2993, %v2860
  %3024 = vst.msk [vmem:[#allocation3 + $0xf0] sm:$0xff] %vm2993, %v2862
  %3025 = vst.msk [vmem:[#allocation3 + $0xf8] sm:$0xff] %vm2993, %v2864
  %3026 = vst.msk [vmem:[#allocation3 + $0x100] sm:$0xff] %vm2993, %v2866
  %3027 = vst.msk [vmem:[#allocation3 + $0x108] sm:$0xff] %vm2993, %v2868
  %3028 = vst.msk [vmem:[#allocation3 + $0x110] sm:$0xff] %vm2993, %v2870
  %3029 = vst.msk [vmem:[#allocation3 + $0x118] sm:$0xff] %vm2993, %v2872
  %3030 = vst.msk [vmem:[#allocation3 + $0x120] sm:$0xff] %vm2993, %v2874
  %3031 = vst.msk [vmem:[#allocation3 + $0x128] sm:$0xff] %vm2993, %v2876
  %3032 = vst.msk [vmem:[#allocation3 + $0x130] sm:$0xff] %vm2993, %v2878
  %3033 = vst.msk [vmem:[#allocation3 + $0x138] sm:$0xff] %vm2993, %v2880
  %3034 = vst.msk [vmem:[#allocation3 + $0x140] sm:$0xff] %vm2993, %v2882
  %3035 = vst.msk [vmem:[#allocation3 + $0x148] sm:$0xff] %vm2993, %v2884
  %3036 = vst.msk [vmem:[#allocation3 + $0x150] sm:$0xff] %vm2993, %v2886
  %3037 = vst.msk [vmem:[#allocation3 + $0x158] sm:$0xff] %vm2993, %v2888
  %3038 = vst.msk [vmem:[#allocation3 + $0x160] sm:$0xff] %vm2993, %v2890
  %3039 = vst.msk [vmem:[#allocation3 + $0x168] sm:$0xff] %vm2993, %v2892
  %3040 = vst.msk [vmem:[#allocation3 + $0x170] sm:$0xff] %vm2993, %v2894
  %3041 = vst.msk [vmem:[#allocation3 + $0x178] sm:$0xff] %vm2993, %v2896
  %3042 = vst.msk [vmem:[#allocation3 + $0x180] sm:$0xff] %vm2993, %v2898
  %3043 = vst.msk [vmem:[#allocation3 + $0x188] sm:$0xff] %vm2993, %v2900
  %3044 = vst.msk [vmem:[#allocation3 + $0x190] sm:$0xff] %vm2993, %v2902
  %3045 = vst.msk [vmem:[#allocation3 + $0x198] sm:$0xff] %vm2993, %v2904
  %3046 = vst.msk [vmem:[#allocation3 + $0x1a0] sm:$0xff] %vm2993, %v2906
  %3047 = vst.msk [vmem:[#allocation3 + $0x1a8] sm:$0xff] %vm2993, %v2908
  %3048 = vst.msk [vmem:[#allocation3 + $0x1b0] sm:$0xff] %vm2993, %v2910
  %3049 = vst.msk [vmem:[#allocation3 + $0x1b8] sm:$0xff] %vm2993, %v2912
  %3050 = vst.msk [vmem:[#allocation3 + $0x1c0] sm:$0xff] %vm2993, %v2914
  %3051 = vst.msk [vmem:[#allocation3 + $0x1c8] sm:$0xff] %vm2993, %v2916
  %3052 = vst.msk [vmem:[#allocation3 + $0x1d0] sm:$0xff] %vm2993, %v2918
  %3053 = vst.msk [vmem:[#allocation3 + $0x1d8] sm:$0xff] %vm2993, %v2920
  %3054 = vst.msk [vmem:[#allocation3 + $0x1e0] sm:$0xff] %vm2993, %v2922
  %3055 = vst.msk [vmem:[#allocation3 + $0x1e8] sm:$0xff] %vm2993, %v2924
  %3056 = vst.msk [vmem:[#allocation3 + $0x1f0] sm:$0xff] %vm2993, %v2926
  %3057 = vst.msk [vmem:[#allocation3 + $0x1f8] sm:$0xff] %vm2993, %v2928
  %v3058 = vld [vmem:[%s2287 + $0x2] sm:$0xff]
  %v3059 = vld [vmem:[%s2287 + $0xa] sm:$0xff]
  %v3060 = vld [vmem:[%s2287 + $0x1a] sm:$0xff]
  %v3061 = vld [vmem:[%s2287 + $0x22] sm:$0xff]
  %v3062 = vld [vmem:[%s2287 + $0x32] sm:$0xff]
  %v3063 = vld [vmem:[%s2287 + $0x3a] sm:$0xff]
  %v3064 = vld [vmem:[%s2287 + $0x4a] sm:$0xff]
  %v3065 = vld [vmem:[%s2287 + $0x52] sm:$0xff]
  %v3066 = vld [vmem:[%s2287 + $0x62] sm:$0xff]
  %v3067 = vld [vmem:[%s2287 + $0x6a] sm:$0xff]
  %v3068 = vld [vmem:[%s2287 + $0x7a] sm:$0xff]
  %v3069 = vld [vmem:[%s2287 + $0x82] sm:$0xff]
  %v3070 = vld [vmem:[%s2287 + $0x92] sm:$0xff]
  %v3071 = vld [vmem:[%s2287 + $0x9a] sm:$0xff]
  %v3072 = vld [vmem:[%s2287 + $0xaa] sm:$0xff]
  %v3073 = vld [vmem:[%s2287 + $0xb2] sm:$0xff]
  %v3074 = vld [vmem:[%s2287 + $0xc2] sm:$0xff]
  %v3075 = vld [vmem:[%s2287 + $0xca] sm:$0xff]
  %v3076 = vld [vmem:[%s2287 + $0xda] sm:$0xff]
  %v3077 = vld [vmem:[%s2287 + $0xe2] sm:$0xff]
  %v3078 = vld [vmem:[%s2287 + $0xf2] sm:$0xff]
  %v3079 = vld [vmem:[%s2287 + $0xfa] sm:$0xff]
  %v3080 = vld [vmem:[%s2287 + $0x10a] sm:$0xff]
  %v3081 = vld [vmem:[%s2287 + $0x112] sm:$0xff]
  %v3082 = vld [vmem:[%s2287 + $0x122] sm:$0xff]
  %v3083 = vld [vmem:[%s2287 + $0x12a] sm:$0xff]
  %v3084 = vld [vmem:[%s2287 + $0x13a] sm:$0xff]
  %v3085 = vld [vmem:[%s2287 + $0x142] sm:$0xff]
  %v3086 = vld [vmem:[%s2287 + $0x152] sm:$0xff]
  %v3087 = vld [vmem:[%s2287 + $0x15a] sm:$0xff]
  %v3088 = vld [vmem:[%s2287 + $0x16a] sm:$0xff]
  %v3089 = vld [vmem:[%s2287 + $0x172] sm:$0xff]
  %v3090 = vld [vmem:[%s2287 + $0x1b2] sm:$0xff]
  %v3091 = vld [vmem:[%s2287 + $0x1ba] sm:$0xff]
  %v3092 = vld [vmem:[%s2287 + $0x1ca] sm:$0xff]
  %v3093 = vld [vmem:[%s2287 + $0x1d2] sm:$0xff]
  %v3094 = vld [vmem:[%s2287 + $0x1e2] sm:$0xff]
  %v3095 = vld [vmem:[%s2287 + $0x1ea] sm:$0xff]
  %v3096 = vld [vmem:[%s2287 + $0x1fa] sm:$0xff]
  %v3097 = vld [vmem:[%s2287 + $0x202] sm:$0xff]
  %v3098 = vld [vmem:[%s2287 + $0x212] sm:$0xff]
  %v3099 = vld [vmem:[%s2287 + $0x21a] sm:$0xff]
  %v3100 = vld [vmem:[%s2287 + $0x22a] sm:$0xff]
  %v3101 = vld [vmem:[%s2287 + $0x232] sm:$0xff]
  %v3102 = vld [vmem:[%s2287 + $0x242] sm:$0xff]
  %v3103 = vld [vmem:[%s2287 + $0x24a] sm:$0xff]
  %v3104 = vld [vmem:[%s2287 + $0x25a] sm:$0xff]
  %v3105 = vld [vmem:[%s2287 + $0x262] sm:$0xff]
  %v3106 = vld [vmem:[%s2287 + $0x272] sm:$0xff]
  %v3107 = vld [vmem:[%s2287 + $0x27a] sm:$0xff]
  %v3108 = vld [vmem:[%s2287 + $0x28a] sm:$0xff]
  %v3109 = vld [vmem:[%s2287 + $0x292] sm:$0xff]
  %v3110 = vld [vmem:[%s2287 + $0x2a2] sm:$0xff]
  %v3111 = vld [vmem:[%s2287 + $0x2aa] sm:$0xff]
  %v3112 = vld [vmem:[%s2287 + $0x2ba] sm:$0xff]
  %v3113 = vld [vmem:[%s2287 + $0x2c2] sm:$0xff]
  %v3114 = vld [vmem:[%s2287 + $0x2d2] sm:$0xff]
  %v3115 = vld [vmem:[%s2287 + $0x2da] sm:$0xff]
  %v3116 = vld [vmem:[%s2287 + $0x2ea] sm:$0xff]
  %v3117 = vld [vmem:[%s2287 + $0x2f2] sm:$0xff]
  %v3118 = vld [vmem:[%s2287 + $0x302] sm:$0xff]
  %v3119 = vld [vmem:[%s2287 + $0x30a] sm:$0xff]
  %v3120 = vld [vmem:[%s2287 + $0x31a] sm:$0xff]
  %v3121 = vld [vmem:[%s2287 + $0x322] sm:$0xff]
  %3186 = vrot.lane.b32.xlu0 %v3058, 32
  %v3187 = vpop.permute.xlu0 %3186
  %3188 = vrot.lane.b32.xlu0 %v3059, 32
  %v3189 = vpop.permute.xlu0 %3188
  %3190 = vrot.lane.b32.xlu0 %v3060, 32
  %v3191 = vpop.permute.xlu0 %3190
  %3192 = vrot.lane.b32.xlu0 %v3061, 32
  %v3193 = vpop.permute.xlu0 %3192
  %3194 = vrot.lane.b32.xlu0 %v3062, 32
  %v3195 = vpop.permute.xlu0 %3194
  %3196 = vrot.lane.b32.xlu0 %v3063, 32
  %v3197 = vpop.permute.xlu0 %3196
  %3198 = vrot.lane.b32.xlu0 %v3064, 32
  %v3199 = vpop.permute.xlu0 %3198
  %3200 = vrot.lane.b32.xlu0 %v3065, 32
  %v3201 = vpop.permute.xlu0 %3200
  %3202 = vrot.lane.b32.xlu0 %v3066, 32
  %v3203 = vpop.permute.xlu0 %3202
  %3204 = vrot.lane.b32.xlu0 %v3067, 32
  %v3205 = vpop.permute.xlu0 %3204
  %3206 = vrot.lane.b32.xlu0 %v3068, 32
  %v3207 = vpop.permute.xlu0 %3206
  %3208 = vrot.lane.b32.xlu0 %v3069, 32
  %v3209 = vpop.permute.xlu0 %3208
  %3210 = vrot.lane.b32.xlu0 %v3070, 32
  %v3211 = vpop.permute.xlu0 %3210
  %3212 = vrot.lane.b32.xlu0 %v3071, 32
  %v3213 = vpop.permute.xlu0 %3212
  %3214 = vrot.lane.b32.xlu0 %v3072, 32
  %v3215 = vpop.permute.xlu0 %3214
  %3216 = vrot.lane.b32.xlu0 %v3073, 32
  %v3217 = vpop.permute.xlu0 %3216
  %3218 = vrot.lane.b32.xlu0 %v3074, 32
  %v3219 = vpop.permute.xlu0 %3218
  %3220 = vrot.lane.b32.xlu0 %v3075, 32
  %v3221 = vpop.permute.xlu0 %3220
  %3222 = vrot.lane.b32.xlu0 %v3076, 32
  %v3223 = vpop.permute.xlu0 %3222
  %3224 = vrot.lane.b32.xlu0 %v3077, 32
  %v3225 = vpop.permute.xlu0 %3224
  %3226 = vrot.lane.b32.xlu0 %v3078, 32
  %v3227 = vpop.permute.xlu0 %3226
  %3228 = vrot.lane.b32.xlu0 %v3079, 32
  %v3229 = vpop.permute.xlu0 %3228
  %3230 = vrot.lane.b32.xlu0 %v3080, 32
  %v3231 = vpop.permute.xlu0 %3230
  %3232 = vrot.lane.b32.xlu0 %v3081, 32
  %v3233 = vpop.permute.xlu0 %3232
  %3234 = vrot.lane.b32.xlu0 %v3082, 32
  %v3235 = vpop.permute.xlu0 %3234
  %3236 = vrot.lane.b32.xlu0 %v3083, 32
  %v3237 = vpop.permute.xlu0 %3236
  %3238 = vrot.lane.b32.xlu0 %v3084, 32
  %v3239 = vpop.permute.xlu0 %3238
  %3240 = vrot.lane.b32.xlu0 %v3085, 32
  %v3241 = vpop.permute.xlu0 %3240
  %3242 = vrot.lane.b32.xlu0 %v3086, 32
  %v3243 = vpop.permute.xlu0 %3242
  %3244 = vrot.lane.b32.xlu0 %v3087, 32
  %v3245 = vpop.permute.xlu0 %3244
  %3246 = vrot.lane.b32.xlu0 %v3088, 32
  %v3247 = vpop.permute.xlu0 %3246
  %3248 = vrot.lane.b32.xlu0 %v3089, 32
  %v3249 = vpop.permute.xlu0 %3248
  %3250 = vrot.lane.b32.xlu0 %v3090, 32
  %v3251 = vpop.permute.xlu0 %3250
  %3252 = vrot.lane.b32.xlu0 %v3091, 32
  %v3253 = vpop.permute.xlu0 %3252
  %3254 = vrot.lane.b32.xlu0 %v3092, 32
  %v3255 = vpop.permute.xlu0 %3254
  %3256 = vrot.lane.b32.xlu0 %v3093, 32
  %v3257 = vpop.permute.xlu0 %3256
  %3258 = vrot.lane.b32.xlu0 %v3094, 32
  %v3259 = vpop.permute.xlu0 %3258
  %3260 = vrot.lane.b32.xlu0 %v3095, 32
  %v3261 = vpop.permute.xlu0 %3260
  %3262 = vrot.lane.b32.xlu0 %v3096, 32
  %v3263 = vpop.permute.xlu0 %3262
  %3264 = vrot.lane.b32.xlu0 %v3097, 32
  %v3265 = vpop.permute.xlu0 %3264
  %3266 = vrot.lane.b32.xlu0 %v3098, 32
  %v3267 = vpop.permute.xlu0 %3266
  %3268 = vrot.lane.b32.xlu0 %v3099, 32
  %v3269 = vpop.permute.xlu0 %3268
  %3270 = vrot.lane.b32.xlu0 %v3100, 32
  %v3271 = vpop.permute.xlu0 %3270
  %3272 = vrot.lane.b32.xlu0 %v3101, 32
  %v3273 = vpop.permute.xlu0 %3272
  %3274 = vrot.lane.b32.xlu0 %v3102, 32
  %v3275 = vpop.permute.xlu0 %3274
  %3276 = vrot.lane.b32.xlu0 %v3103, 32
  %v3277 = vpop.permute.xlu0 %3276
  %3278 = vrot.lane.b32.xlu0 %v3104, 32
  %v3279 = vpop.permute.xlu0 %3278
  %3280 = vrot.lane.b32.xlu0 %v3105, 32
  %v3281 = vpop.permute.xlu0 %3280
  %3282 = vrot.lane.b32.xlu0 %v3106, 32
  %v3283 = vpop.permute.xlu0 %3282
  %3284 = vrot.lane.b32.xlu0 %v3107, 32
  %v3285 = vpop.permute.xlu0 %3284
  %3286 = vrot.lane.b32.xlu0 %v3108, 32
  %v3287 = vpop.permute.xlu0 %3286
  %3288 = vrot.lane.b32.xlu0 %v3109, 32
  %v3289 = vpop.permute.xlu0 %3288
  %3290 = vrot.lane.b32.xlu0 %v3110, 32
  %v3291 = vpop.permute.xlu0 %3290
  %3292 = vrot.lane.b32.xlu0 %v3111, 32
  %v3293 = vpop.permute.xlu0 %3292
  %3294 = vrot.lane.b32.xlu0 %v3112, 32
  %v3295 = vpop.permute.xlu0 %3294
  %3296 = vrot.lane.b32.xlu0 %v3113, 32
  %v3297 = vpop.permute.xlu0 %3296
  %3298 = vrot.lane.b32.xlu0 %v3114, 32
  %v3299 = vpop.permute.xlu0 %3298
  %3300 = vrot.lane.b32.xlu0 %v3115, 32
  %v3301 = vpop.permute.xlu0 %3300
  %3302 = vrot.lane.b32.xlu0 %v3116, 32
  %v3303 = vpop.permute.xlu0 %3302
  %3304 = vrot.lane.b32.xlu0 %v3117, 32
  %v3305 = vpop.permute.xlu0 %3304
  %3306 = vrot.lane.b32.xlu0 %v3118, 32
  %v3307 = vpop.permute.xlu0 %3306
  %3308 = vrot.lane.b32.xlu0 %v3119, 32
  %v3309 = vpop.permute.xlu0 %3308
  %3310 = vrot.lane.b32.xlu0 %v3120, 32
  %v3311 = vpop.permute.xlu0 %3310
  %3312 = vrot.lane.b32.xlu0 %v3121, 32
  %v3313 = vpop.permute.xlu0 %3312
  %vm3378 = vcmask 294144
  %3379 = vst.msk [vmem:[#allocation3] sm:$0xff] %vm3378, %v3187
  %3380 = vst.msk [vmem:[#allocation3 + $0x8] sm:$0xff] %vm3378, %v3189
  %3381 = vst.msk [vmem:[#allocation3 + $0x10] sm:$0xff] %vm3378, %v3191
  %3382 = vst.msk [vmem:[#allocation3 + $0x18] sm:$0xff] %vm3378, %v3193
  %3383 = vst.msk [vmem:[#allocation3 + $0x20] sm:$0xff] %vm3378, %v3195
  %3384 = vst.msk [vmem:[#allocation3 + $0x28] sm:$0xff] %vm3378, %v3197
  %3385 = vst.msk [vmem:[#allocation3 + $0x30] sm:$0xff] %vm3378, %v3199
  %3386 = vst.msk [vmem:[#allocation3 + $0x38] sm:$0xff] %vm3378, %v3201
  %3387 = vst.msk [vmem:[#allocation3 + $0x40] sm:$0xff] %vm3378, %v3203
  %3388 = vst.msk [vmem:[#allocation3 + $0x48] sm:$0xff] %vm3378, %v3205
  %3389 = vst.msk [vmem:[#allocation3 + $0x50] sm:$0xff] %vm3378, %v3207
  %3390 = vst.msk [vmem:[#allocation3 + $0x58] sm:$0xff] %vm3378, %v3209
  %3391 = vst.msk [vmem:[#allocation3 + $0x60] sm:$0xff] %vm3378, %v3211
  %3392 = vst.msk [vmem:[#allocation3 + $0x68] sm:$0xff] %vm3378, %v3213
  %3393 = vst.msk [vmem:[#allocation3 + $0x70] sm:$0xff] %vm3378, %v3215
  %3394 = vst.msk [vmem:[#allocation3 + $0x78] sm:$0xff] %vm3378, %v3217
  %3395 = vst.msk [vmem:[#allocation3 + $0x80] sm:$0xff] %vm3378, %v3219
  %3396 = vst.msk [vmem:[#allocation3 + $0x88] sm:$0xff] %vm3378, %v3221
  %3397 = vst.msk [vmem:[#allocation3 + $0x90] sm:$0xff] %vm3378, %v3223
  %3398 = vst.msk [vmem:[#allocation3 + $0x98] sm:$0xff] %vm3378, %v3225
  %3399 = vst.msk [vmem:[#allocation3 + $0xa0] sm:$0xff] %vm3378, %v3227
  %3400 = vst.msk [vmem:[#allocation3 + $0xa8] sm:$0xff] %vm3378, %v3229
  %3401 = vst.msk [vmem:[#allocation3 + $0xb0] sm:$0xff] %vm3378, %v3231
  %3402 = vst.msk [vmem:[#allocation3 + $0xb8] sm:$0xff] %vm3378, %v3233
  %3403 = vst.msk [vmem:[#allocation3 + $0xc0] sm:$0xff] %vm3378, %v3235
  %3404 = vst.msk [vmem:[#allocation3 + $0xc8] sm:$0xff] %vm3378, %v3237
  %3405 = vst.msk [vmem:[#allocation3 + $0xd0] sm:$0xff] %vm3378, %v3239
  %3406 = vst.msk [vmem:[#allocation3 + $0xd8] sm:$0xff] %vm3378, %v3241
  %3407 = vst.msk [vmem:[#allocation3 + $0xe0] sm:$0xff] %vm3378, %v3243
  %3408 = vst.msk [vmem:[#allocation3 + $0xe8] sm:$0xff] %vm3378, %v3245
  %3409 = vst.msk [vmem:[#allocation3 + $0xf0] sm:$0xff] %vm3378, %v3247
  %3410 = vst.msk [vmem:[#allocation3 + $0xf8] sm:$0xff] %vm3378, %v3249
  %3411 = vst.msk [vmem:[#allocation3 + $0x100] sm:$0xff] %vm3378, %v3251
  %3412 = vst.msk [vmem:[#allocation3 + $0x108] sm:$0xff] %vm3378, %v3253
  %3413 = vst.msk [vmem:[#allocation3 + $0x110] sm:$0xff] %vm3378, %v3255
  %3414 = vst.msk [vmem:[#allocation3 + $0x118] sm:$0xff] %vm3378, %v3257
  %3415 = vst.msk [vmem:[#allocation3 + $0x120] sm:$0xff] %vm3378, %v3259
  %3416 = vst.msk [vmem:[#allocation3 + $0x128] sm:$0xff] %vm3378, %v3261
  %3417 = vst.msk [vmem:[#allocation3 + $0x130] sm:$0xff] %vm3378, %v3263
  %3418 = vst.msk [vmem:[#allocation3 + $0x138] sm:$0xff] %vm3378, %v3265
  %3419 = vst.msk [vmem:[#allocation3 + $0x140] sm:$0xff] %vm3378, %v3267
  %3420 = vst.msk [vmem:[#allocation3 + $0x148] sm:$0xff] %vm3378, %v3269
  %3421 = vst.msk [vmem:[#allocation3 + $0x150] sm:$0xff] %vm3378, %v3271
  %3422 = vst.msk [vmem:[#allocation3 + $0x158] sm:$0xff] %vm3378, %v3273
  %3423 = vst.msk [vmem:[#allocation3 + $0x160] sm:$0xff] %vm3378, %v3275
  %3424 = vst.msk [vmem:[#allocation3 + $0x168] sm:$0xff] %vm3378, %v3277
  %3425 = vst.msk [vmem:[#allocation3 + $0x170] sm:$0xff] %vm3378, %v3279
  %3426 = vst.msk [vmem:[#allocation3 + $0x178] sm:$0xff] %vm3378, %v3281
  %3427 = vst.msk [vmem:[#allocation3 + $0x180] sm:$0xff] %vm3378, %v3283
  %3428 = vst.msk [vmem:[#allocation3 + $0x188] sm:$0xff] %vm3378, %v3285
  %3429 = vst.msk [vmem:[#allocation3 + $0x190] sm:$0xff] %vm3378, %v3287
  %3430 = vst.msk [vmem:[#allocation3 + $0x198] sm:$0xff] %vm3378, %v3289
  %3431 = vst.msk [vmem:[#allocation3 + $0x1a0] sm:$0xff] %vm3378, %v3291
  %3432 = vst.msk [vmem:[#allocation3 + $0x1a8] sm:$0xff] %vm3378, %v3293
  %3433 = vst.msk [vmem:[#allocation3 + $0x1b0] sm:$0xff] %vm3378, %v3295
  %3434 = vst.msk [vmem:[#allocation3 + $0x1b8] sm:$0xff] %vm3378, %v3297
  %3435 = vst.msk [vmem:[#allocation3 + $0x1c0] sm:$0xff] %vm3378, %v3299
  %3436 = vst.msk [vmem:[#allocation3 + $0x1c8] sm:$0xff] %vm3378, %v3301
  %3437 = vst.msk [vmem:[#allocation3 + $0x1d0] sm:$0xff] %vm3378, %v3303
  %3438 = vst.msk [vmem:[#allocation3 + $0x1d8] sm:$0xff] %vm3378, %v3305
  %3439 = vst.msk [vmem:[#allocation3 + $0x1e0] sm:$0xff] %vm3378, %v3307
  %3440 = vst.msk [vmem:[#allocation3 + $0x1e8] sm:$0xff] %vm3378, %v3309
  %3441 = vst.msk [vmem:[#allocation3 + $0x1f0] sm:$0xff] %vm3378, %v3311
  %3442 = vst.msk [vmem:[#allocation3 + $0x1f8] sm:$0xff] %vm3378, %v3313
  %v3443 = vld [vmem:[#allocation3] sm:$0xff]
  %v3444 = vld [vmem:[#allocation3 + $0x8] sm:$0xff]
  %v3445 = vld [vmem:[#allocation3 + $0x10] sm:$0xff]
  %v3446 = vld [vmem:[#allocation3 + $0x18] sm:$0xff]
  %v3447 = vld [vmem:[#allocation3 + $0x20] sm:$0xff]
  %v3448 = vld [vmem:[#allocation3 + $0x28] sm:$0xff]
  %v3449 = vld [vmem:[#allocation3 + $0x30] sm:$0xff]
  %v3450 = vld [vmem:[#allocation3 + $0x38] sm:$0xff]
  %v3451 = vld [vmem:[#allocation3 + $0x40] sm:$0xff]
  %v3452 = vld [vmem:[#allocation3 + $0x48] sm:$0xff]
  %v3453 = vld [vmem:[#allocation3 + $0x50] sm:$0xff]
  %v3454 = vld [vmem:[#allocation3 + $0x58] sm:$0xff]
  %v3455 = vld [vmem:[#allocation3 + $0x60] sm:$0xff]
  %v3456 = vld [vmem:[#allocation3 + $0x68] sm:$0xff]
  %v3457 = vld [vmem:[#allocation3 + $0x70] sm:$0xff]
  %v3458 = vld [vmem:[#allocation3 + $0x78] sm:$0xff]
  %v3459 = vld [vmem:[#allocation3 + $0x80] sm:$0xff]
  %v3460 = vld [vmem:[#allocation3 + $0x88] sm:$0xff]
  %v3461 = vld [vmem:[#allocation3 + $0x90] sm:$0xff]
  %v3462 = vld [vmem:[#allocation3 + $0x98] sm:$0xff]
  %v3463 = vld [vmem:[#allocation3 + $0xa0] sm:$0xff]
  %v3464 = vld [vmem:[#allocation3 + $0xa8] sm:$0xff]
  %v3465 = vld [vmem:[#allocation3 + $0xb0] sm:$0xff]
  %v3466 = vld [vmem:[#allocation3 + $0xb8] sm:$0xff]
  %v3467 = vld [vmem:[#allocation3 + $0xc0] sm:$0xff]
  %v3468 = vld [vmem:[#allocation3 + $0xc8] sm:$0xff]
  %v3469 = vld [vmem:[#allocation3 + $0xd0] sm:$0xff]
  %v3470 = vld [vmem:[#allocation3 + $0xd8] sm:$0xff]
  %v3471 = vld [vmem:[#allocation3 + $0xe0] sm:$0xff]
  %v3472 = vld [vmem:[#allocation3 + $0xe8] sm:$0xff]
  %v3473 = vld [vmem:[#allocation3 + $0xf0] sm:$0xff]
  %v3474 = vld [vmem:[#allocation3 + $0xf8] sm:$0xff]
  %v3475 = vld [vmem:[#allocation3 + $0x100] sm:$0xff]
  %v3476 = vld [vmem:[#allocation3 + $0x108] sm:$0xff]
  %v3477 = vld [vmem:[#allocation3 + $0x110] sm:$0xff]
  %v3478 = vld [vmem:[#allocation3 + $0x118] sm:$0xff]
  %v3479 = vld [vmem:[#allocation3 + $0x120] sm:$0xff]
  %v3480 = vld [vmem:[#allocation3 + $0x128] sm:$0xff]
  %v3481 = vld [vmem:[#allocation3 + $0x130] sm:$0xff]
  %v3482 = vld [vmem:[#allocation3 + $0x138] sm:$0xff]
  %v3483 = vld [vmem:[#allocation3 + $0x140] sm:$0xff]
  %v3484 = vld [vmem:[#allocation3 + $0x148] sm:$0xff]
  %v3485 = vld [vmem:[#allocation3 + $0x150] sm:$0xff]
  %v3486 = vld [vmem:[#allocation3 + $0x158] sm:$0xff]
  %v3487 = vld [vmem:[#allocation3 + $0x160] sm:$0xff]
  %v3488 = vld [vmem:[#allocation3 + $0x168] sm:$0xff]
  %v3489 = vld [vmem:[#allocation3 + $0x170] sm:$0xff]
  %v3490 = vld [vmem:[#allocation3 + $0x178] sm:$0xff]
  %v3491 = vld [vmem:[#allocation3 + $0x180] sm:$0xff]
  %v3492 = vld [vmem:[#allocation3 + $0x188] sm:$0xff]
  %v3493 = vld [vmem:[#allocation3 + $0x190] sm:$0xff]
  %v3494 = vld [vmem:[#allocation3 + $0x198] sm:$0xff]
  %v3495 = vld [vmem:[#allocation3 + $0x1a0] sm:$0xff]
  %v3496 = vld [vmem:[#allocation3 + $0x1a8] sm:$0xff]
  %v3497 = vld [vmem:[#allocation3 + $0x1b0] sm:$0xff]
  %v3498 = vld [vmem:[#allocation3 + $0x1b8] sm:$0xff]
  %v3499 = vld [vmem:[#allocation3 + $0x1c0] sm:$0xff]
  %v3500 = vld [vmem:[#allocation3 + $0x1c8] sm:$0xff]
  %v3501 = vld [vmem:[#allocation3 + $0x1d0] sm:$0xff]
  %v3502 = vld [vmem:[#allocation3 + $0x1d8] sm:$0xff]
  %v3503 = vld [vmem:[#allocation3 + $0x1e0] sm:$0xff]
  %v3504 = vld [vmem:[#allocation3 + $0x1e8] sm:$0xff]
  %v3505 = vld [vmem:[#allocation3 + $0x1f0] sm:$0xff]
  %v3506 = vld [vmem:[#allocation3 + $0x1f8] sm:$0xff]
  %v3507 = vld [vmem:[%s1] sm:$0xff]
  %v3508 = vld [vmem:[%s1 + $0x8] sm:$0xff]
  %v3509 = vld [vmem:[%s1 + $0x10] sm:$0xff]
  %v3510 = vld [vmem:[%s1 + $0x18] sm:$0xff]
  %v3511 = vld [vmem:[%s1 + $0x20] sm:$0xf]
  %vm3512 = vcmask 293888
  %v3514 = vsel %vm3512, %v3443, 0
  %v3517 = vsel %vm3512, %v3444, 0
  %v3520 = vsel %vm3512, %v3445, 0
  %v3523 = vsel %vm3512, %v3446, 0
  %v3526 = vsel %vm3512, %v3447, 0
  %v3529 = vsel %vm3512, %v3448, 0
  %v3532 = vsel %vm3512, %v3449, 0
  %v3535 = vsel %vm3512, %v3450, 0
  %v3538 = vsel %vm3512, %v3451, 0
  %v3541 = vsel %vm3512, %v3452, 0
  %v3544 = vsel %vm3512, %v3453, 0
  %v3547 = vsel %vm3512, %v3454, 0
  %v3550 = vsel %vm3512, %v3455, 0
  %v3553 = vsel %vm3512, %v3456, 0
  %v3556 = vsel %vm3512, %v3457, 0
  %v3559 = vsel %vm3512, %v3458, 0
  %v3562 = vsel %vm3512, %v3459, 0
  %v3565 = vsel %vm3512, %v3460, 0
  %v3568 = vsel %vm3512, %v3461, 0
  %v3571 = vsel %vm3512, %v3462, 0
  %v3574 = vsel %vm3512, %v3463, 0
  %v3577 = vsel %vm3512, %v3464, 0
  %v3580 = vsel %vm3512, %v3465, 0
  %v3583 = vsel %vm3512, %v3466, 0
  %v3586 = vsel %vm3512, %v3467, 0
  %v3589 = vsel %vm3512, %v3468, 0
  %v3592 = vsel %vm3512, %v3469, 0
  %v3595 = vsel %vm3512, %v3470, 0
  %v3598 = vsel %vm3512, %v3471, 0
  %v3601 = vsel %vm3512, %v3472, 0
  %v3604 = vsel %vm3512, %v3473, 0
  %v3607 = vsel %vm3512, %v3474, 0
  %v3610 = vsel %vm3512, %v3475, 0
  %v3613 = vsel %vm3512, %v3476, 0
  %v3616 = vsel %vm3512, %v3477, 0
  %v3619 = vsel %vm3512, %v3478, 0
  %v3622 = vsel %vm3512, %v3479, 0
  %v3625 = vsel %vm3512, %v3480, 0
  %v3628 = vsel %vm3512, %v3481, 0
  %v3631 = vsel %vm3512, %v3482, 0
  %v3634 = vsel %vm3512, %v3483, 0
  %v3637 = vsel %vm3512, %v3484, 0
  %v3640 = vsel %vm3512, %v3485, 0
  %v3643 = vsel %vm3512, %v3486, 0
  %v3646 = vsel %vm3512, %v3487, 0
  %v3649 = vsel %vm3512, %v3488, 0
  %v3652 = vsel %vm3512, %v3489, 0
  %v3655 = vsel %vm3512, %v3490, 0
  %v3658 = vsel %vm3512, %v3491, 0
  %v3661 = vsel %vm3512, %v3492, 0
  %v3664 = vsel %vm3512, %v3493, 0
  %v3667 = vsel %vm3512, %v3494, 0
  %v3670 = vsel %vm3512, %v3495, 0
  %v3673 = vsel %vm3512, %v3496, 0
  %v3676 = vsel %vm3512, %v3497, 0
  %v3679 = vsel %vm3512, %v3498, 0
  %v3682 = vsel %vm3512, %v3499, 0
  %v3685 = vsel %vm3512, %v3500, 0
  %v3688 = vsel %vm3512, %v3501, 0
  %v3691 = vsel %vm3512, %v3502, 0
  %v3694 = vsel %vm3512, %v3503, 0
  %v3697 = vsel %vm3512, %v3504, 0
  %v3700 = vsel %vm3512, %v3505, 0
  %v3703 = vsel %vm3512, %v3506, 0
  %vm3705 = vcmask 1043456
  %v3707 = vsel %vm3705, %v3511, 0
  %3709 = vmatprep.subr.mxu0 0.0
  %3710 = vmatpush1.msra.mxu0 %v3507
  %3711 = vmatprep.subr.mxu0 0.0
  %3712 = vmatpush1.msra.mxu0 %v3508
  %3713 = vmatprep.subr.mxu0 0.0
  %3714 = vmatpush1.msra.mxu0 %v3509
  %3715 = vmatprep.subr.mxu0 0.0
  %3716 = vmatpush1.msra.mxu0 %v3510
  %3717 = vmatprep.subr.mxu0 0.0
  %3718 = vmatpush1.msra.mxu0 %v3707
  %3719 = vmatprep.subr.mxu0 0.0
  %3720 = vmatpush1.msra.mxu0 0.0
  %3721 = vmatprep.subr.mxu0 0.0
  %3722 = vmatpush1.msra.mxu0 0.0
  %3723 = vmatprep.subr.mxu0 0.0
  %3724 = vmatpush1.msra.mxu0 0.0
  %3725 = vmatprep.subr.mxu0 0.0
  %3726 = vmatpush1.msra.mxu0 0.0
  %3727 = vmatprep.subr.mxu0 0.0
  %3728 = vmatpush1.msra.mxu0 0.0
  %3729 = vmatprep.subr.mxu0 0.0
  %3730 = vmatpush1.msra.mxu0 0.0
  %3731 = vmatprep.subr.mxu0 0.0
  %3732 = vmatpush1.msra.mxu0 0.0
  %3733 = vmatprep.subr.mxu0 0.0
  %3734 = vmatpush1.msra.mxu0 0.0
  %3735 = vmatprep.subr.mxu0 0.0
  %3736 = vmatpush1.msra.mxu0 0.0
  %3737 = vmatprep.subr.mxu0 0.0
  %3738 = vmatpush1.msra.mxu0 0.0
  %3739 = vmatprep.subr.mxu0 0.0
  %3740 = vmatpush1.msra.mxu0 0.0
  %3741 = vmatprep.subr.mxu0 0.0
  %3742 = vmatpush1.msra.mxu0 0.0
  %3743 = vmatprep.subr.mxu0 0.0
  %3744 = vmatpush1.msra.mxu0 0.0
  %3745 = vmatprep.subr.mxu0 0.0
  %3746 = vmatpush1.msra.mxu0 0.0
  %3747 = vmatprep.subr.mxu0 0.0
  %3748 = vmatpush1.msra.mxu0 0.0
  %3749 = vmatprep.subr.mxu0 0.0
  %3750 = vmatpush1.msra.mxu0 0.0
  %3751 = vmatprep.subr.mxu0 0.0
  %3752 = vmatpush1.msra.mxu0 0.0
  %3753 = vmatprep.subr.mxu0 0.0
  %3754 = vmatpush1.msra.mxu0 0.0
  %3755 = vmatprep.subr.mxu0 0.0
  %3756 = vmatpush1.msra.mxu0 0.0
  %3757 = vmatprep.subr.mxu0 0.0
  %3758 = vmatpush1.msra.mxu0 0.0
  %3759 = vmatprep.subr.mxu0 0.0
  %3760 = vmatpush1.msra.mxu0 0.0
  %3761 = vmatprep.subr.mxu0 0.0
  %3762 = vmatpush1.msra.mxu0 0.0
  %3763 = vmatprep.subr.mxu0 0.0
  %3764 = vmatpush1.msra.mxu0 0.0
  %3765 = vmatprep.subr.mxu0 0.0
  %3766 = vmatpush1.msra.mxu0 0.0
  %3767 = vmatprep.subr.mxu0 0.0
  %3768 = vmatpush1.msra.mxu0 0.0
  %3769 = vmatprep.subr.mxu0 0.0
  %3770 = vmatpush1.msra.mxu0 0.0
  %3771 = vmatprep.subr.mxu0 0.0
  %3772 = vmatpush1.msra.mxu0 0.0
  %3773 = vmatprep.mubr.f32.mxu0 0.0
  %3774 = vmatmul.mubr.f32.gmra.mrb[0].mxu0 %v3514
  %v3775 = vpop.f32.mrb[0].mxu0
  %v3776 = vadd.f32 0.0, %v3775
  %v3777 = vpop.f32.mrb[0].mxu0
  %3778 = vmatprep.mubr.f32.mxu0 0.0
  %3779 = vmatmul.mubr.f32.gmra.mrb[0].mxu0 %v3517
  %v3780 = vpop.f32.mrb[0].mxu0
  %v3781 = vadd.f32 0.0, %v3780
  %v3782 = vpop.f32.mrb[0].mxu0
  %3783 = vmatprep.mubr.f32.mxu0 0.0
  %3784 = vmatmul.mubr.f32.gmra.mrb[0].mxu0 %v3520
  %v3785 = vpop.f32.mrb[0].mxu0
  %v3786 = vadd.f32 0.0, %v3785
  %v3787 = vpop.f32.mrb[0].mxu0
  %3788 = vmatprep.mubr.f32.mxu0 0.0
  %3789 = vmatmul.mubr.f32.gmra.mrb[0].mxu0 %v3523
  %v3790 = vpop.f32.mrb[0].mxu0
  %v3791 = vadd.f32 0.0, %v3790
  %v3792 = vpop.f32.mrb[0].mxu0
  %3793 = vmatprep.mubr.f32.mxu0 0.0
  %3794 = vmatmul.mubr.f32.gmra.mrb[0].mxu0 %v3526
  %v3795 = vpop.f32.mrb[0].mxu0
  %v3796 = vadd.f32 0.0, %v3795
  %v3797 = vpop.f32.mrb[0].mxu0
  %3798 = vmatprep.mubr.f32.mxu0 0.0
  %3799 = vmatmul.mubr.f32.gmra.mrb[0].mxu0 %v3529
  %v3800 = vpop.f32.mrb[0].mxu0
  %v3801 = vadd.f32 0.0, %v3800
  %v3802 = vpop.f32.mrb[0].mxu0
  %3803 = vmatprep.mubr.f32.mxu0 0.0
  %3804 = vmatmul.mubr.f32.gmra.mrb[0].mxu0 %v3532
  %v3805 = vpop.f32.mrb[0].mxu0
  %v3806 = vadd.f32 0.0, %v3805
  %v3807 = vpop.f32.mrb[0].mxu0
  %3808 = vmatprep.mubr.f32.mxu0 0.0
  %3809 = vmatmul.mubr.f32.gmra.mrb[0].mxu0 %v3535
  %v3810 = vpop.f32.mrb[0].mxu0
  %v3811 = vadd.f32 0.0, %v3810
  %v3812 = vpop.f32.mrb[0].mxu0
  %3813 = vmatprep.mubr.f32.mxu0 0.0
  %3814 = vmatmul.mubr.f32.gmra.mrb[0].mxu0 %v3538
  %v3815 = vpop.f32.mrb[0].mxu0
  %v3816 = vadd.f32 0.0, %v3815
  %v3817 = vpop.f32.mrb[0].mxu0
  %3818 = vmatprep.mubr.f32.mxu0 0.0
  %3819 = vmatmul.mubr.f32.gmra.mrb[0].mxu0 %v3541
  %v3820 = vpop.f32.mrb[0].mxu0
  %v3821 = vadd.f32 0.0, %v3820
  %v3822 = vpop.f32.mrb[0].mxu0
  %3823 = vmatprep.mubr.f32.mxu0 0.0
  %3824 = vmatmul.mubr.f32.gmra.mrb[0].mxu0 %v3544
  %v3825 = vpop.f32.mrb[0].mxu0
  %v3826 = vadd.f32 0.0, %v3825
  %v3827 = vpop.f32.mrb[0].mxu0
  %3828 = vmatprep.mubr.f32.mxu0 0.0
  %3829 = vmatmul.mubr.f32.gmra.mrb[0].mxu0 %v3547
  %v3830 = vpop.f32.mrb[0].mxu0
  %v3831 = vadd.f32 0.0, %v3830
  %v3832 = vpop.f32.mrb[0].mxu0
  %3833 = vmatprep.mubr.f32.mxu0 0.0
  %3834 = vmatmul.mubr.f32.gmra.mrb[0].mxu0 %v3550
  %v3835 = vpop.f32.mrb[0].mxu0
  %v3836 = vadd.f32 0.0, %v3835
  %v3837 = vpop.f32.mrb[0].mxu0
  %3838 = vmatprep.mubr.f32.mxu0 0.0
  %3839 = vmatmul.mubr.f32.gmra.mrb[0].mxu0 %v3553
  %v3840 = vpop.f32.mrb[0].mxu0
  %v3841 = vadd.f32 0.0, %v3840
  %v3842 = vpop.f32.mrb[0].mxu0
  %3843 = vmatprep.mubr.f32.mxu0 0.0
  %3844 = vmatmul.mubr.f32.gmra.mrb[0].mxu0 %v3556
  %v3845 = vpop.f32.mrb[0].mxu0
  %v3846 = vadd.f32 0.0, %v3845
  %v3847 = vpop.f32.mrb[0].mxu0
  %3848 = vmatprep.mubr.f32.mxu0 0.0
  %3849 = vmatmul.mubr.f32.gmra.mrb[0].mxu0 %v3559
  %v3850 = vpop.f32.mrb[0].mxu0
  %v3851 = vadd.f32 0.0, %v3850
  %v3852 = vpop.f32.mrb[0].mxu0
  %3853 = vmatprep.mubr.f32.mxu0 0.0
  %3854 = vmatmul.mubr.f32.gmra.mrb[0].mxu0 %v3562
  %v3855 = vpop.f32.mrb[0].mxu0
  %v3856 = vadd.f32 0.0, %v3855
  %v3857 = vpop.f32.mrb[0].mxu0
  %3858 = vmatprep.mubr.f32.mxu0 0.0
  %3859 = vmatmul.mubr.f32.gmra.mrb[0].mxu0 %v3565
  %v3860 = vpop.f32.mrb[0].mxu0
  %v3861 = vadd.f32 0.0, %v3860
  %v3862 = vpop.f32.mrb[0].mxu0
  %3863 = vmatprep.mubr.f32.mxu0 0.0
  %3864 = vmatmul.mubr.f32.gmra.mrb[0].mxu0 %v3568
  %v3865 = vpop.f32.mrb[0].mxu0
  %v3866 = vadd.f32 0.0, %v3865
  %v3867 = vpop.f32.mrb[0].mxu0
  %3868 = vmatprep.mubr.f32.mxu0 0.0
  %3869 = vmatmul.mubr.f32.gmra.mrb[0].mxu0 %v3571
  %v3870 = vpop.f32.mrb[0].mxu0
  %v3871 = vadd.f32 0.0, %v3870
  %v3872 = vpop.f32.mrb[0].mxu0
  %3873 = vmatprep.mubr.f32.mxu0 0.0
  %3874 = vmatmul.mubr.f32.gmra.mrb[0].mxu0 %v3574
  %v3875 = vpop.f32.mrb[0].mxu0
  %v3876 = vadd.f32 0.0, %v3875
  %v3877 = vpop.f32.mrb[0].mxu0
  %3878 = vmatprep.mubr.f32.mxu0 0.0
  %3879 = vmatmul.mubr.f32.gmra.mrb[0].mxu0 %v3577
  %v3880 = vpop.f32.mrb[0].mxu0
  %v3881 = vadd.f32 0.0, %v3880
  %v3882 = vpop.f32.mrb[0].mxu0
  %3883 = vmatprep.mubr.f32.mxu0 0.0
  %3884 = vmatmul.mubr.f32.gmra.mrb[0].mxu0 %v3580
  %v3885 = vpop.f32.mrb[0].mxu0
  %v3886 = vadd.f32 0.0, %v3885
  %v3887 = vpop.f32.mrb[0].mxu0
  %3888 = vmatprep.mubr.f32.mxu0 0.0
  %3889 = vmatmul.mubr.f32.gmra.mrb[0].mxu0 %v3583
  %v3890 = vpop.f32.mrb[0].mxu0
  %v3891 = vadd.f32 0.0, %v3890
  %v3892 = vpop.f32.mrb[0].mxu0
  %3893 = vmatprep.mubr.f32.mxu0 0.0
  %3894 = vmatmul.mubr.f32.gmra.mrb[0].mxu0 %v3586
  %v3895 = vpop.f32.mrb[0].mxu0
  %v3896 = vadd.f32 0.0, %v3895
  %v3897 = vpop.f32.mrb[0].mxu0
  %3898 = vmatprep.mubr.f32.mxu0 0.0
  %3899 = vmatmul.mubr.f32.gmra.mrb[0].mxu0 %v3589
  %v3900 = vpop.f32.mrb[0].mxu0
  %v3901 = vadd.f32 0.0, %v3900
  %v3902 = vpop.f32.mrb[0].mxu0
  %3903 = vmatprep.mubr.f32.mxu0 0.0
  %3904 = vmatmul.mubr.f32.gmra.mrb[0].mxu0 %v3592
  %v3905 = vpop.f32.mrb[0].mxu0
  %v3906 = vadd.f32 0.0, %v3905
  %v3907 = vpop.f32.mrb[0].mxu0
  %3908 = vmatprep.mubr.f32.mxu0 0.0
  %3909 = vmatmul.mubr.f32.gmra.mrb[0].mxu0 %v3595
  %v3910 = vpop.f32.mrb[0].mxu0
  %v3911 = vadd.f32 0.0, %v3910
  %v3912 = vpop.f32.mrb[0].mxu0
  %3913 = vmatprep.mubr.f32.mxu0 0.0
  %3914 = vmatmul.mubr.f32.gmra.mrb[0].mxu0 %v3598
  %v3915 = vpop.f32.mrb[0].mxu0
  %v3916 = vadd.f32 0.0, %v3915
  %v3917 = vpop.f32.mrb[0].mxu0
  %3918 = vmatprep.mubr.f32.mxu0 0.0
  %3919 = vmatmul.mubr.f32.gmra.mrb[0].mxu0 %v3601
  %v3920 = vpop.f32.mrb[0].mxu0
  %v3921 = vadd.f32 0.0, %v3920
  %v3922 = vpop.f32.mrb[0].mxu0
  %3923 = vmatprep.mubr.f32.mxu0 0.0
  %3924 = vmatmul.mubr.f32.gmra.mrb[0].mxu0 %v3604
  %v3925 = vpop.f32.mrb[0].mxu0
  %v3926 = vadd.f32 0.0, %v3925
  %v3927 = vpop.f32.mrb[0].mxu0
  %3928 = vmatprep.mubr.f32.mxu0 0.0
  %3929 = vmatmul.mubr.f32.gmra.mrb[0].mxu0 %v3607
  %v3930 = vpop.f32.mrb[0].mxu0
  %v3931 = vadd.f32 0.0, %v3930
  %v3932 = vpop.f32.mrb[0].mxu0
  %3933 = vmatprep.mubr.f32.mxu0 0.0
  %3934 = vmatmul.mubr.f32.gmra.mrb[0].mxu0 %v3610
  %v3935 = vpop.f32.mrb[0].mxu0
  %v3936 = vadd.f32 0.0, %v3935
  %v3937 = vpop.f32.mrb[0].mxu0
  %3938 = vmatprep.mubr.f32.mxu0 0.0
  %3939 = vmatmul.mubr.f32.gmra.mrb[0].mxu0 %v3613
  %v3940 = vpop.f32.mrb[0].mxu0
  %v3941 = vadd.f32 0.0, %v3940
  %v3942 = vpop.f32.mrb[0].mxu0
  %3943 = vmatprep.mubr.f32.mxu0 0.0
  %3944 = vmatmul.mubr.f32.gmra.mrb[0].mxu0 %v3616
  %v3945 = vpop.f32.mrb[0].mxu0
  %v3946 = vadd.f32 0.0, %v3945
  %v3947 = vpop.f32.mrb[0].mxu0
  %3948 = vmatprep.mubr.f32.mxu0 0.0
  %3949 = vmatmul.mubr.f32.gmra.mrb[0].mxu0 %v3619
  %v3950 = vpop.f32.mrb[0].mxu0
  %v3951 = vadd.f32 0.0, %v3950
  %v3952 = vpop.f32.mrb[0].mxu0
  %3953 = vmatprep.mubr.f32.mxu0 0.0
  %3954 = vmatmul.mubr.f32.gmra.mrb[0].mxu0 %v3622
  %v3955 = vpop.f32.mrb[0].mxu0
  %v3956 = vadd.f32 0.0, %v3955
  %v3957 = vpop.f32.mrb[0].mxu0
  %3958 = vmatprep.mubr.f32.mxu0 0.0
  %3959 = vmatmul.mubr.f32.gmra.mrb[0].mxu0 %v3625
  %v3960 = vpop.f32.mrb[0].mxu0
  %v3961 = vadd.f32 0.0, %v3960
  %v3962 = vpop.f32.mrb[0].mxu0
  %3963 = vmatprep.mubr.f32.mxu0 0.0
  %3964 = vmatmul.mubr.f32.gmra.mrb[0].mxu0 %v3628
  %v3965 = vpop.f32.mrb[0].mxu0
  %v3966 = vadd.f32 0.0, %v3965
  %v3967 = vpop.f32.mrb[0].mxu0
  %3968 = vmatprep.mubr.f32.mxu0 0.0
  %3969 = vmatmul.mubr.f32.gmra.mrb[0].mxu0 %v3631
  %v3970 = vpop.f32.mrb[0].mxu0
  %v3971 = vadd.f32 0.0, %v3970
  %v3972 = vpop.f32.mrb[0].mxu0
  %3973 = vmatprep.mubr.f32.mxu0 0.0
  %3974 = vmatmul.mubr.f32.gmra.mrb[0].mxu0 %v3634
  %v3975 = vpop.f32.mrb[0].mxu0
  %v3976 = vadd.f32 0.0, %v3975
  %v3977 = vpop.f32.mrb[0].mxu0
  %3978 = vmatprep.mubr.f32.mxu0 0.0
  %3979 = vmatmul.mubr.f32.gmra.mrb[0].mxu0 %v3637
  %v3980 = vpop.f32.mrb[0].mxu0
  %v3981 = vadd.f32 0.0, %v3980
  %v3982 = vpop.f32.mrb[0].mxu0
  %3983 = vmatprep.mubr.f32.mxu0 0.0
  %3984 = vmatmul.mubr.f32.gmra.mrb[0].mxu0 %v3640
  %v3985 = vpop.f32.mrb[0].mxu0
  %v3986 = vadd.f32 0.0, %v3985
  %v3987 = vpop.f32.mrb[0].mxu0
  %3988 = vmatprep.mubr.f32.mxu0 0.0
  %3989 = vmatmul.mubr.f32.gmra.mrb[0].mxu0 %v3643
  %v3990 = vpop.f32.mrb[0].mxu0
  %v3991 = vadd.f32 0.0, %v3990
  %v3992 = vpop.f32.mrb[0].mxu0
  %3993 = vmatprep.mubr.f32.mxu0 0.0
  %3994 = vmatmul.mubr.f32.gmra.mrb[0].mxu0 %v3646
  %v3995 = vpop.f32.mrb[0].mxu0
  %v3996 = vadd.f32 0.0, %v3995
  %v3997 = vpop.f32.mrb[0].mxu0
  %3998 = vmatprep.mubr.f32.mxu0 0.0
  %3999 = vmatmul.mubr.f32.gmra.mrb[0].mxu0 %v3649
  %v4000 = vpop.f32.mrb[0].mxu0
  %v4001 = vadd.f32 0.0, %v4000
  %v4002 = vpop.f32.mrb[0].mxu0
  %4003 = vmatprep.mubr.f32.mxu0 0.0
  %4004 = vmatmul.mubr.f32.gmra.mrb[0].mxu0 %v3652
  %v4005 = vpop.f32.mrb[0].mxu0
  %v4006 = vadd.f32 0.0, %v4005
  %v4007 = vpop.f32.mrb[0].mxu0
  %4008 = vmatprep.mubr.f32.mxu0 0.0
  %4009 = vmatmul.mubr.f32.gmra.mrb[0].mxu0 %v3655
  %v4010 = vpop.f32.mrb[0].mxu0
  %v4011 = vadd.f32 0.0, %v4010
  %v4012 = vpop.f32.mrb[0].mxu0
  %4013 = vmatprep.mubr.f32.mxu0 0.0
  %4014 = vmatmul.mubr.f32.gmra.mrb[0].mxu0 %v3658
  %v4015 = vpop.f32.mrb[0].mxu0
  %v4016 = vadd.f32 0.0, %v4015
  %v4017 = vpop.f32.mrb[0].mxu0
  %4018 = vmatprep.mubr.f32.mxu0 0.0
  %4019 = vmatmul.mubr.f32.gmra.mrb[0].mxu0 %v3661
  %v4020 = vpop.f32.mrb[0].mxu0
  %v4021 = vadd.f32 0.0, %v4020
  %v4022 = vpop.f32.mrb[0].mxu0
  %4023 = vmatprep.mubr.f32.mxu0 0.0
  %4024 = vmatmul.mubr.f32.gmra.mrb[0].mxu0 %v3664
  %v4025 = vpop.f32.mrb[0].mxu0
  %v4026 = vadd.f32 0.0, %v4025
  %v4027 = vpop.f32.mrb[0].mxu0
  %4028 = vmatprep.mubr.f32.mxu0 0.0
  %4029 = vmatmul.mubr.f32.gmra.mrb[0].mxu0 %v3667
  %v4030 = vpop.f32.mrb[0].mxu0
  %v4031 = vadd.f32 0.0, %v4030
  %v4032 = vpop.f32.mrb[0].mxu0
  %4033 = vmatprep.mubr.f32.mxu0 0.0
  %4034 = vmatmul.mubr.f32.gmra.mrb[0].mxu0 %v3670
  %v4035 = vpop.f32.mrb[0].mxu0
  %v4036 = vadd.f32 0.0, %v4035
  %v4037 = vpop.f32.mrb[0].mxu0
  %4038 = vmatprep.mubr.f32.mxu0 0.0
  %4039 = vmatmul.mubr.f32.gmra.mrb[0].mxu0 %v3673
  %v4040 = vpop.f32.mrb[0].mxu0
  %v4041 = vadd.f32 0.0, %v4040
  %v4042 = vpop.f32.mrb[0].mxu0
  %4043 = vmatprep.mubr.f32.mxu0 0.0
  %4044 = vmatmul.mubr.f32.gmra.mrb[0].mxu0 %v3676
  %v4045 = vpop.f32.mrb[0].mxu0
  %v4046 = vadd.f32 0.0, %v4045
  %v4047 = vpop.f32.mrb[0].mxu0
  %4048 = vmatprep.mubr.f32.mxu0 0.0
  %4049 = vmatmul.mubr.f32.gmra.mrb[0].mxu0 %v3679
  %v4050 = vpop.f32.mrb[0].mxu0
  %v4051 = vadd.f32 0.0, %v4050
  %v4052 = vpop.f32.mrb[0].mxu0
  %4053 = vmatprep.mubr.f32.mxu0 0.0
  %4054 = vmatmul.mubr.f32.gmra.mrb[0].mxu0 %v3682
  %v4055 = vpop.f32.mrb[0].mxu0
  %v4056 = vadd.f32 0.0, %v4055
  %v4057 = vpop.f32.mrb[0].mxu0
  %4058 = vmatprep.mubr.f32.mxu0 0.0
  %4059 = vmatmul.mubr.f32.gmra.mrb[0].mxu0 %v3685
  %v4060 = vpop.f32.mrb[0].mxu0
  %v4061 = vadd.f32 0.0, %v4060
  %v4062 = vpop.f32.mrb[0].mxu0
  %4063 = vmatprep.mubr.f32.mxu0 0.0
  %4064 = vmatmul.mubr.f32.gmra.mrb[0].mxu0 %v3688
  %v4065 = vpop.f32.mrb[0].mxu0
  %v4066 = vadd.f32 0.0, %v4065
  %v4067 = vpop.f32.mrb[0].mxu0
  %4068 = vmatprep.mubr.f32.mxu0 0.0
  %4069 = vmatmul.mubr.f32.gmra.mrb[0].mxu0 %v3691
  %v4070 = vpop.f32.mrb[0].mxu0
  %v4071 = vadd.f32 0.0, %v4070
  %v4072 = vpop.f32.mrb[0].mxu0
  %4073 = vmatprep.mubr.f32.mxu0 0.0
  %4074 = vmatmul.mubr.f32.gmra.mrb[0].mxu0 %v3694
  %v4075 = vpop.f32.mrb[0].mxu0
  %v4076 = vadd.f32 0.0, %v4075
  %v4077 = vpop.f32.mrb[0].mxu0
  %4078 = vmatprep.mubr.f32.mxu0 0.0
  %4079 = vmatmul.mubr.f32.gmra.mrb[0].mxu0 %v3697
  %v4080 = vpop.f32.mrb[0].mxu0
  %v4081 = vadd.f32 0.0, %v4080
  %v4082 = vpop.f32.mrb[0].mxu0
  %4083 = vmatprep.mubr.f32.mxu0 0.0
  %4084 = vmatmul.mubr.f32.gmra.mrb[0].mxu0 %v3700
  %v4085 = vpop.f32.mrb[0].mxu0
  %v4086 = vadd.f32 0.0, %v4085
  %v4087 = vpop.f32.mrb[0].mxu0
  %4088 = vmatprep.mubr.f32.mxu0 0.0
  %4089 = vmatmul.mubr.f32.gmra.mrb[0].mxu0 %v3703
  %v4090 = vpop.f32.mrb[0].mxu0
  %v4091 = vadd.f32 0.0, %v4090
  %v4092 = vpop.f32.mrb[0].mxu0
  %4093 = vdwg.mxu0
  %v4094 = vld [vmem:[%s3] sm:$0x1]
  %v4095 = vld [vmem:[%s3 + $0x1] sm:$0x1]
  %vm4096 = vcmask 64512
  %v4097 = vsel %vm4096, %v3776, 0.0
  %v4098 = vsel %vm4096, %v3781, 0.0
  %v4099 = vadd.f32 %v4097, %v4098
  %v4100 = vsel %vm4096, %v3786, 0.0
  %v4101 = vadd.f32 %v4099, %v4100
  %v4102 = vsel %vm4096, %v3791, 0.0
  %v4103 = vadd.f32 %v4101, %v4102
  %v4104 = vsel %vm4096, %v3796, 0.0
  %v4105 = vadd.f32 %v4103, %v4104
  %v4106 = vsel %vm4096, %v3801, 0.0
  %v4107 = vadd.f32 %v4105, %v4106
  %v4108 = vsel %vm4096, %v3806, 0.0
  %v4109 = vadd.f32 %v4107, %v4108
  %v4110 = vsel %vm4096, %v3811, 0.0
  %v4111 = vadd.f32 %v4109, %v4110
  %v4112 = vsel %vm4096, %v3816, 0.0
  %v4113 = vadd.f32 %v4111, %v4112
  %v4114 = vsel %vm4096, %v3821, 0.0
  %v4115 = vadd.f32 %v4113, %v4114
  %v4116 = vsel %vm4096, %v3826, 0.0
  %v4117 = vadd.f32 %v4115, %v4116
  %v4118 = vsel %vm4096, %v3831, 0.0
  %v4119 = vadd.f32 %v4117, %v4118
  %v4120 = vsel %vm4096, %v3836, 0.0
  %v4121 = vadd.f32 %v4119, %v4120
  %v4122 = vsel %vm4096, %v3841, 0.0
  %v4123 = vadd.f32 %v4121, %v4122
  %v4124 = vsel %vm4096, %v3846, 0.0
  %v4125 = vadd.f32 %v4123, %v4124
  %v4126 = vsel %vm4096, %v3851, 0.0
  %v4127 = vadd.f32 %v4125, %v4126
  %v4128 = vsel %vm4096, %v3856, 0.0
  %v4129 = vadd.f32 %v4127, %v4128
  %v4130 = vsel %vm4096, %v3861, 0.0
  %v4131 = vadd.f32 %v4129, %v4130
  %v4132 = vsel %vm4096, %v3866, 0.0
  %v4133 = vadd.f32 %v4131, %v4132
  %v4134 = vsel %vm4096, %v3871, 0.0
  %v4135 = vadd.f32 %v4133, %v4134
  %v4136 = vsel %vm4096, %v3876, 0.0
  %v4137 = vadd.f32 %v4135, %v4136
  %v4138 = vsel %vm4096, %v3881, 0.0
  %v4139 = vadd.f32 %v4137, %v4138
  %v4140 = vsel %vm4096, %v3886, 0.0
  %v4141 = vadd.f32 %v4139, %v4140
  %v4142 = vsel %vm4096, %v3891, 0.0
  %v4143 = vadd.f32 %v4141, %v4142
  %v4144 = vsel %vm4096, %v3896, 0.0
  %v4145 = vadd.f32 %v4143, %v4144
  %v4146 = vsel %vm4096, %v3901, 0.0
  %v4147 = vadd.f32 %v4145, %v4146
  %v4148 = vsel %vm4096, %v3906, 0.0
  %v4149 = vadd.f32 %v4147, %v4148
  %v4150 = vsel %vm4096, %v3911, 0.0
  %v4151 = vadd.f32 %v4149, %v4150
  %v4152 = vsel %vm4096, %v3916, 0.0
  %v4153 = vadd.f32 %v4151, %v4152
  %v4154 = vsel %vm4096, %v3921, 0.0
  %v4155 = vadd.f32 %v4153, %v4154
  %v4156 = vsel %vm4096, %v3926, 0.0
  %v4157 = vadd.f32 %v4155, %v4156
  %v4158 = vsel %vm4096, %v3931, 0.0
  %v4159 = vadd.f32 %v4157, %v4158
  %v4160 = vsel %vm4096, %v3936, 0.0
  %v4161 = vadd.f32 %v4159, %v4160
  %v4162 = vsel %vm4096, %v3941, 0.0
  %v4163 = vadd.f32 %v4161, %v4162
  %v4164 = vsel %vm4096, %v3946, 0.0
  %v4165 = vadd.f32 %v4163, %v4164
  %v4166 = vsel %vm4096, %v3951, 0.0
  %v4167 = vadd.f32 %v4165, %v4166
  %v4168 = vsel %vm4096, %v3956, 0.0
  %v4169 = vadd.f32 %v4167, %v4168
  %v4170 = vsel %vm4096, %v3961, 0.0
  %v4171 = vadd.f32 %v4169, %v4170
  %v4172 = vsel %vm4096, %v3966, 0.0
  %v4173 = vadd.f32 %v4171, %v4172
  %v4174 = vsel %vm4096, %v3971, 0.0
  %v4175 = vadd.f32 %v4173, %v4174
  %v4176 = vsel %vm4096, %v3976, 0.0
  %v4177 = vadd.f32 %v4175, %v4176
  %v4178 = vsel %vm4096, %v3981, 0.0
  %v4179 = vadd.f32 %v4177, %v4178
  %v4180 = vsel %vm4096, %v3986, 0.0
  %v4181 = vadd.f32 %v4179, %v4180
  %v4182 = vsel %vm4096, %v3991, 0.0
  %v4183 = vadd.f32 %v4181, %v4182
  %v4184 = vsel %vm4096, %v3996, 0.0
  %v4185 = vadd.f32 %v4183, %v4184
  %v4186 = vsel %vm4096, %v4001, 0.0
  %v4187 = vadd.f32 %v4185, %v4186
  %v4188 = vsel %vm4096, %v4006, 0.0
  %v4189 = vadd.f32 %v4187, %v4188
  %v4190 = vsel %vm4096, %v4011, 0.0
  %v4191 = vadd.f32 %v4189, %v4190
  %v4192 = vsel %vm4096, %v4016, 0.0
  %v4193 = vadd.f32 %v4191, %v4192
  %v4194 = vsel %vm4096, %v4021, 0.0
  %v4195 = vadd.f32 %v4193, %v4194
  %v4196 = vsel %vm4096, %v4026, 0.0
  %v4197 = vadd.f32 %v4195, %v4196
  %v4198 = vsel %vm4096, %v4031, 0.0
  %v4199 = vadd.f32 %v4197, %v4198
  %v4200 = vsel %vm4096, %v4036, 0.0
  %v4201 = vadd.f32 %v4199, %v4200
  %v4202 = vsel %vm4096, %v4041, 0.0
  %v4203 = vadd.f32 %v4201, %v4202
  %v4204 = vsel %vm4096, %v4046, 0.0
  %v4205 = vadd.f32 %v4203, %v4204
  %v4206 = vsel %vm4096, %v4051, 0.0
  %v4207 = vadd.f32 %v4205, %v4206
  %v4208 = vsel %vm4096, %v4056, 0.0
  %v4209 = vadd.f32 %v4207, %v4208
  %v4210 = vsel %vm4096, %v4061, 0.0
  %v4211 = vadd.f32 %v4209, %v4210
  %v4212 = vsel %vm4096, %v4066, 0.0
  %v4213 = vadd.f32 %v4211, %v4212
  %v4214 = vsel %vm4096, %v4071, 0.0
  %v4215 = vadd.f32 %v4213, %v4214
  %v4216 = vsel %vm4096, %v4076, 0.0
  %v4217 = vadd.f32 %v4215, %v4216
  %v4218 = vsel %vm4096, %v4081, 0.0
  %v4219 = vadd.f32 %v4217, %v4218
  %v4220 = vsel %vm4096, %v4086, 0.0
  %v4221 = vadd.f32 %v4219, %v4220
  %v4222 = vsel %vm4096, %v4091, 0.0
  %v4223 = vadd.f32 %v4221, %v4222
  %v4224 = vrot.slane %v4223, 4
  %v4225 = vadd.f32 %v4223, %v4224
  %v4226 = vrot.slane %v4225, 2
  %v4227 = vadd.f32 %v4225, %v4226
  %v4228 = vrot.slane %v4227, 1
  %v4229 = vadd.f32 %v4227, %v4228
  %v4230 = vmul.f32 %v4229, 0.001953125
  %v4231 = vmul.f32 %v3776, %v3776
  %v4232 = vmul.f32 %v3781, %v3781
  %v4233 = vmul.f32 %v3786, %v3786
  %v4234 = vmul.f32 %v3791, %v3791
  %v4235 = vmul.f32 %v3796, %v3796
  %v4236 = vmul.f32 %v3801, %v3801
  %v4237 = vmul.f32 %v3806, %v3806
  %v4238 = vmul.f32 %v3811, %v3811
  %v4239 = vmul.f32 %v3816, %v3816
  %v4240 = vmul.f32 %v3821, %v3821
  %v4241 = vmul.f32 %v3826, %v3826
  %v4242 = vmul.f32 %v3831, %v3831
  %v4243 = vmul.f32 %v3836, %v3836
  %v4244 = vmul.f32 %v3841, %v3841
  %v4245 = vmul.f32 %v3846, %v3846
  %v4246 = vmul.f32 %v3851, %v3851
  %v4247 = vmul.f32 %v3856, %v3856
  %v4248 = vmul.f32 %v3861, %v3861
  %v4249 = vmul.f32 %v3866, %v3866
  %v4250 = vmul.f32 %v3871, %v3871
  %v4251 = vmul.f32 %v3876, %v3876
  %v4252 = vmul.f32 %v3881, %v3881
  %v4253 = vmul.f32 %v3886, %v3886
  %v4254 = vmul.f32 %v3891, %v3891
  %v4255 = vmul.f32 %v3896, %v3896
  %v4256 = vmul.f32 %v3901, %v3901
  %v4257 = vmul.f32 %v3906, %v3906
  %v4258 = vmul.f32 %v3911, %v3911
  %v4259 = vmul.f32 %v3916, %v3916
  %v4260 = vmul.f32 %v3921, %v3921
  %v4261 = vmul.f32 %v3926, %v3926
  %v4262 = vmul.f32 %v3931, %v3931
  %v4263 = vmul.f32 %v3936, %v3936
  %v4264 = vmul.f32 %v3941, %v3941
  %v4265 = vmul.f32 %v3946, %v3946
  %v4266 = vmul.f32 %v3951, %v3951
  %v4267 = vmul.f32 %v3956, %v3956
  %v4268 = vmul.f32 %v3961, %v3961
  %v4269 = vmul.f32 %v3966, %v3966
  %v4270 = vmul.f32 %v3971, %v3971
  %v4271 = vmul.f32 %v3976, %v3976
  %v4272 = vmul.f32 %v3981, %v3981
  %v4273 = vmul.f32 %v3986, %v3986
  %v4274 = vmul.f32 %v3991, %v3991
  %v4275 = vmul.f32 %v3996, %v3996
  %v4276 = vmul.f32 %v4001, %v4001
  %v4277 = vmul.f32 %v4006, %v4006
  %v4278 = vmul.f32 %v4011, %v4011
  %v4279 = vmul.f32 %v4016, %v4016
  %v4280 = vmul.f32 %v4021, %v4021
  %v4281 = vmul.f32 %v4026, %v4026
  %v4282 = vmul.f32 %v4031, %v4031
  %v4283 = vmul.f32 %v4036, %v4036
  %v4284 = vmul.f32 %v4041, %v4041
  %v4285 = vmul.f32 %v4046, %v4046
  %v4286 = vmul.f32 %v4051, %v4051
  %v4287 = vmul.f32 %v4056, %v4056
  %v4288 = vmul.f32 %v4061, %v4061
  %v4289 = vmul.f32 %v4066, %v4066
  %v4290 = vmul.f32 %v4071, %v4071
  %v4291 = vmul.f32 %v4076, %v4076
  %v4292 = vmul.f32 %v4081, %v4081
  %v4293 = vmul.f32 %v4086, %v4086
  %v4294 = vmul.f32 %v4091, %v4091
  %v4295 = vsel %vm4096, %v4231, 0.0
  %v4296 = vsel %vm4096, %v4232, 0.0
  %v4297 = vadd.f32 %v4295, %v4296
  %v4298 = vsel %vm4096, %v4233, 0.0
  %v4299 = vadd.f32 %v4297, %v4298
  %v4300 = vsel %vm4096, %v4234, 0.0
  %v4301 = vadd.f32 %v4299, %v4300
  %v4302 = vsel %vm4096, %v4235, 0.0
  %v4303 = vadd.f32 %v4301, %v4302
  %v4304 = vsel %vm4096, %v4236, 0.0
  %v4305 = vadd.f32 %v4303, %v4304
  %v4306 = vsel %vm4096, %v4237, 0.0
  %v4307 = vadd.f32 %v4305, %v4306
  %v4308 = vsel %vm4096, %v4238, 0.0
  %v4309 = vadd.f32 %v4307, %v4308
  %v4310 = vsel %vm4096, %v4239, 0.0
  %v4311 = vadd.f32 %v4309, %v4310
  %v4312 = vsel %vm4096, %v4240, 0.0
  %v4313 = vadd.f32 %v4311, %v4312
  %v4314 = vsel %vm4096, %v4241, 0.0
  %v4315 = vadd.f32 %v4313, %v4314
  %v4316 = vsel %vm4096, %v4242, 0.0
  %v4317 = vadd.f32 %v4315, %v4316
  %v4318 = vsel %vm4096, %v4243, 0.0
  %v4319 = vadd.f32 %v4317, %v4318
  %v4320 = vsel %vm4096, %v4244, 0.0
  %v4321 = vadd.f32 %v4319, %v4320
  %v4322 = vsel %vm4096, %v4245, 0.0
  %v4323 = vadd.f32 %v4321, %v4322
  %v4324 = vsel %vm4096, %v4246, 0.0
  %v4325 = vadd.f32 %v4323, %v4324
  %v4326 = vsel %vm4096, %v4247, 0.0
  %v4327 = vadd.f32 %v4325, %v4326
  %v4328 = vsel %vm4096, %v4248, 0.0
  %v4329 = vadd.f32 %v4327, %v4328
  %v4330 = vsel %vm4096, %v4249, 0.0
  %v4331 = vadd.f32 %v4329, %v4330
  %v4332 = vsel %vm4096, %v4250, 0.0
  %v4333 = vadd.f32 %v4331, %v4332
  %v4334 = vsel %vm4096, %v4251, 0.0
  %v4335 = vadd.f32 %v4333, %v4334
  %v4336 = vsel %vm4096, %v4252, 0.0
  %v4337 = vadd.f32 %v4335, %v4336
  %v4338 = vsel %vm4096, %v4253, 0.0
  %v4339 = vadd.f32 %v4337, %v4338
  %v4340 = vsel %vm4096, %v4254, 0.0
  %v4341 = vadd.f32 %v4339, %v4340
  %v4342 = vsel %vm4096, %v4255, 0.0
  %v4343 = vadd.f32 %v4341, %v4342
  %v4344 = vsel %vm4096, %v4256, 0.0
  %v4345 = vadd.f32 %v4343, %v4344
  %v4346 = vsel %vm4096, %v4257, 0.0
  %v4347 = vadd.f32 %v4345, %v4346
  %v4348 = vsel %vm4096, %v4258, 0.0
  %v4349 = vadd.f32 %v4347, %v4348
  %v4350 = vsel %vm4096, %v4259, 0.0
  %v4351 = vadd.f32 %v4349, %v4350
  %v4352 = vsel %vm4096, %v4260, 0.0
  %v4353 = vadd.f32 %v4351, %v4352
  %v4354 = vsel %vm4096, %v4261, 0.0
  %v4355 = vadd.f32 %v4353, %v4354
  %v4356 = vsel %vm4096, %v4262, 0.0
  %v4357 = vadd.f32 %v4355, %v4356
  %v4358 = vsel %vm4096, %v4263, 0.0
  %v4359 = vadd.f32 %v4357, %v4358
  %v4360 = vsel %vm4096, %v4264, 0.0
  %v4361 = vadd.f32 %v4359, %v4360
  %v4362 = vsel %vm4096, %v4265, 0.0
  %v4363 = vadd.f32 %v4361, %v4362
  %v4364 = vsel %vm4096, %v4266, 0.0
  %v4365 = vadd.f32 %v4363, %v4364
  %v4366 = vsel %vm4096, %v4267, 0.0
  %v4367 = vadd.f32 %v4365, %v4366
  %v4368 = vsel %vm4096, %v4268, 0.0
  %v4369 = vadd.f32 %v4367, %v4368
  %v4370 = vsel %vm4096, %v4269, 0.0
  %v4371 = vadd.f32 %v4369, %v4370
  %v4372 = vsel %vm4096, %v4270, 0.0
  %v4373 = vadd.f32 %v4371, %v4372
  %v4374 = vsel %vm4096, %v4271, 0.0
  %v4375 = vadd.f32 %v4373, %v4374
  %v4376 = vsel %vm4096, %v4272, 0.0
  %v4377 = vadd.f32 %v4375, %v4376
  %v4378 = vsel %vm4096, %v4273, 0.0
  %v4379 = vadd.f32 %v4377, %v4378
  %v4380 = vsel %vm4096, %v4274, 0.0
  %v4381 = vadd.f32 %v4379, %v4380
  %v4382 = vsel %vm4096, %v4275, 0.0
  %v4383 = vadd.f32 %v4381, %v4382
  %v4384 = vsel %vm4096, %v4276, 0.0
  %v4385 = vadd.f32 %v4383, %v4384
  %v4386 = vsel %vm4096, %v4277, 0.0
  %v4387 = vadd.f32 %v4385, %v4386
  %v4388 = vsel %vm4096, %v4278, 0.0
  %v4389 = vadd.f32 %v4387, %v4388
  %v4390 = vsel %vm4096, %v4279, 0.0
  %v4391 = vadd.f32 %v4389, %v4390
  %v4392 = vsel %vm4096, %v4280, 0.0
  %v4393 = vadd.f32 %v4391, %v4392
  %v4394 = vsel %vm4096, %v4281, 0.0
  %v4395 = vadd.f32 %v4393, %v4394
  %v4396 = vsel %vm4096, %v4282, 0.0
  %v4397 = vadd.f32 %v4395, %v4396
  %v4398 = vsel %vm4096, %v4283, 0.0
  %v4399 = vadd.f32 %v4397, %v4398
  %v4400 = vsel %vm4096, %v4284, 0.0
  %v4401 = vadd.f32 %v4399, %v4400
  %v4402 = vsel %vm4096, %v4285, 0.0
  %v4403 = vadd.f32 %v4401, %v4402
  %v4404 = vsel %vm4096, %v4286, 0.0
  %v4405 = vadd.f32 %v4403, %v4404
  %v4406 = vsel %vm4096, %v4287, 0.0
  %v4407 = vadd.f32 %v4405, %v4406
  %v4408 = vsel %vm4096, %v4288, 0.0
  %v4409 = vadd.f32 %v4407, %v4408
  %v4410 = vsel %vm4096, %v4289, 0.0
  %v4411 = vadd.f32 %v4409, %v4410
  %v4412 = vsel %vm4096, %v4290, 0.0
  %v4413 = vadd.f32 %v4411, %v4412
  %v4414 = vsel %vm4096, %v4291, 0.0
  %v4415 = vadd.f32 %v4413, %v4414
  %v4416 = vsel %vm4096, %v4292, 0.0
  %v4417 = vadd.f32 %v4415, %v4416
  %v4418 = vsel %vm4096, %v4293, 0.0
  %v4419 = vadd.f32 %v4417, %v4418
  %v4420 = vsel %vm4096, %v4294, 0.0
  %v4421 = vadd.f32 %v4419, %v4420
  %v4422 = vrot.slane %v4421, 4
  %v4423 = vadd.f32 %v4421, %v4422
  %v4424 = vrot.slane %v4423, 2
  %v4425 = vadd.f32 %v4423, %v4424
  %v4426 = vrot.slane %v4425, 1
  %v4427 = vadd.f32 %v4425, %v4426
  %v4428 = vmul.f32 %v4427, 0.001953125
  %v4429 = vmul.f32 %v4230, %v4230
  %v4430 = vsub.f32 %v4428, %v4429
  %v4431 = vadd.f32 %v4430, 1e-05
  %v4432 = vrsqrt.pop %v4431
  %v4433 = vmul.f32 %v4094, %v4432
  %v4434 = vmul.f32 %v4230, %v4433
  %v4435 = vsub.f32 %v4095, %v4434
  %v4436 = vlaneseq
  %v4437 = vshrl.u32 %v4436, 7
  %v4438 = vsub.s32 0, %v4437
  %v4439 = vrot.slane %v4433, %v4438
  %v4440 = vmul.f32 %v3776, %v4439
  %v4441 = vmul.f32 %v3781, %v4439
  %v4442 = vmul.f32 %v3786, %v4439
  %v4443 = vmul.f32 %v3791, %v4439
  %v4444 = vmul.f32 %v3796, %v4439
  %v4445 = vmul.f32 %v3801, %v4439
  %v4446 = vmul.f32 %v3806, %v4439
  %v4447 = vmul.f32 %v3811, %v4439
  %v4448 = vmul.f32 %v3816, %v4439
  %v4449 = vmul.f32 %v3821, %v4439
  %v4450 = vmul.f32 %v3826, %v4439
  %v4451 = vmul.f32 %v3831, %v4439
  %v4452 = vmul.f32 %v3836, %v4439
  %v4453 = vmul.f32 %v3841, %v4439
  %v4454 = vmul.f32 %v3846, %v4439
  %v4455 = vmul.f32 %v3851, %v4439
  %v4456 = vmul.f32 %v3856, %v4439
  %v4457 = vmul.f32 %v3861, %v4439
  %v4458 = vmul.f32 %v3866, %v4439
  %v4459 = vmul.f32 %v3871, %v4439
  %v4460 = vmul.f32 %v3876, %v4439
  %v4461 = vmul.f32 %v3881, %v4439
  %v4462 = vmul.f32 %v3886, %v4439
  %v4463 = vmul.f32 %v3891, %v4439
  %v4464 = vmul.f32 %v3896, %v4439
  %v4465 = vmul.f32 %v3901, %v4439
  %v4466 = vmul.f32 %v3906, %v4439
  %v4467 = vmul.f32 %v3911, %v4439
  %v4468 = vmul.f32 %v3916, %v4439
  %v4469 = vmul.f32 %v3921, %v4439
  %v4470 = vmul.f32 %v3926, %v4439
  %v4471 = vmul.f32 %v3931, %v4439
  %v4472 = vmul.f32 %v3936, %v4439
  %v4473 = vmul.f32 %v3941, %v4439
  %v4474 = vmul.f32 %v3946, %v4439
  %v4475 = vmul.f32 %v3951, %v4439
  %v4476 = vmul.f32 %v3956, %v4439
  %v4477 = vmul.f32 %v3961, %v4439
  %v4478 = vmul.f32 %v3966, %v4439
  %v4479 = vmul.f32 %v3971, %v4439
  %v4480 = vmul.f32 %v3976, %v4439
  %v4481 = vmul.f32 %v3981, %v4439
  %v4482 = vmul.f32 %v3986, %v4439
  %v4483 = vmul.f32 %v3991, %v4439
  %v4484 = vmul.f32 %v3996, %v4439
  %v4485 = vmul.f32 %v4001, %v4439
  %v4486 = vmul.f32 %v4006, %v4439
  %v4487 = vmul.f32 %v4011, %v4439
  %v4488 = vmul.f32 %v4016, %v4439
  %v4489 = vmul.f32 %v4021, %v4439
  %v4490 = vmul.f32 %v4026, %v4439
  %v4491 = vmul.f32 %v4031, %v4439
  %v4492 = vmul.f32 %v4036, %v4439
  %v4493 = vmul.f32 %v4041, %v4439
  %v4494 = vmul.f32 %v4046, %v4439
  %v4495 = vmul.f32 %v4051, %v4439
  %v4496 = vmul.f32 %v4056, %v4439
  %v4497 = vmul.f32 %v4061, %v4439
  %v4498 = vmul.f32 %v4066, %v4439
  %v4499 = vmul.f32 %v4071, %v4439
  %v4500 = vmul.f32 %v4076, %v4439
  %v4501 = vmul.f32 %v4081, %v4439
  %v4502 = vmul.f32 %v4086, %v4439
  %v4503 = vmul.f32 %v4091, %v4439
  %v4504 = vlaneseq
  %v4505 = vshrl.u32 %v4504, 7
  %v4506 = vsub.s32 0, %v4505
  %v4507 = vrot.slane %v4435, %v4506
  %v4508 = vadd.f32 %v4440, %v4507
  %v4509 = vadd.f32 %v4441, %v4507
  %v4510 = vadd.f32 %v4442, %v4507
  %v4511 = vadd.f32 %v4443, %v4507
  %v4512 = vadd.f32 %v4444, %v4507
  %v4513 = vadd.f32 %v4445, %v4507
  %v4514 = vadd.f32 %v4446, %v4507
  %v4515 = vadd.f32 %v4447, %v4507
  %v4516 = vadd.f32 %v4448, %v4507
  %v4517 = vadd.f32 %v4449, %v4507
  %v4518 = vadd.f32 %v4450, %v4507
  %v4519 = vadd.f32 %v4451, %v4507
  %v4520 = vadd.f32 %v4452, %v4507
  %v4521 = vadd.f32 %v4453, %v4507
  %v4522 = vadd.f32 %v4454, %v4507
  %v4523 = vadd.f32 %v4455, %v4507
  %v4524 = vadd.f32 %v4456, %v4507
  %v4525 = vadd.f32 %v4457, %v4507
  %v4526 = vadd.f32 %v4458, %v4507
  %v4527 = vadd.f32 %v4459, %v4507
  %v4528 = vadd.f32 %v4460, %v4507
  %v4529 = vadd.f32 %v4461, %v4507
  %v4530 = vadd.f32 %v4462, %v4507
  %v4531 = vadd.f32 %v4463, %v4507
  %v4532 = vadd.f32 %v4464, %v4507
  %v4533 = vadd.f32 %v4465, %v4507
  %v4534 = vadd.f32 %v4466, %v4507
  %v4535 = vadd.f32 %v4467, %v4507
  %v4536 = vadd.f32 %v4468, %v4507
  %v4537 = vadd.f32 %v4469, %v4507
  %v4538 = vadd.f32 %v4470, %v4507
  %v4539 = vadd.f32 %v4471, %v4507
  %v4540 = vadd.f32 %v4472, %v4507
  %v4541 = vadd.f32 %v4473, %v4507
  %v4542 = vadd.f32 %v4474, %v4507
  %v4543 = vadd.f32 %v4475, %v4507
  %v4544 = vadd.f32 %v4476, %v4507
  %v4545 = vadd.f32 %v4477, %v4507
  %v4546 = vadd.f32 %v4478, %v4507
  %v4547 = vadd.f32 %v4479, %v4507
  %v4548 = vadd.f32 %v4480, %v4507
  %v4549 = vadd.f32 %v4481, %v4507
  %v4550 = vadd.f32 %v4482, %v4507
  %v4551 = vadd.f32 %v4483, %v4507
  %v4552 = vadd.f32 %v4484, %v4507
  %v4553 = vadd.f32 %v4485, %v4507
  %v4554 = vadd.f32 %v4486, %v4507
  %v4555 = vadd.f32 %v4487, %v4507
  %v4556 = vadd.f32 %v4488, %v4507
  %v4557 = vadd.f32 %v4489, %v4507
  %v4558 = vadd.f32 %v4490, %v4507
  %v4559 = vadd.f32 %v4491, %v4507
  %v4560 = vadd.f32 %v4492, %v4507
  %v4561 = vadd.f32 %v4493, %v4507
  %v4562 = vadd.f32 %v4494, %v4507
  %v4563 = vadd.f32 %v4495, %v4507
  %v4564 = vadd.f32 %v4496, %v4507
  %v4565 = vadd.f32 %v4497, %v4507
  %v4566 = vadd.f32 %v4498, %v4507
  %v4567 = vadd.f32 %v4499, %v4507
  %v4568 = vadd.f32 %v4500, %v4507
  %v4569 = vadd.f32 %v4501, %v4507
  %v4570 = vadd.f32 %v4502, %v4507
  %v4571 = vadd.f32 %v4503, %v4507
  %v4572 = vmax.f32 %v4508, 0.0
  %v4573 = vmax.f32 %v4509, 0.0
  %v4574 = vmax.f32 %v4510, 0.0
  %v4575 = vmax.f32 %v4511, 0.0
  %v4576 = vmax.f32 %v4512, 0.0
  %v4577 = vmax.f32 %v4513, 0.0
  %v4578 = vmax.f32 %v4514, 0.0
  %v4579 = vmax.f32 %v4515, 0.0
  %v4580 = vmax.f32 %v4516, 0.0
  %v4581 = vmax.f32 %v4517, 0.0
  %v4582 = vmax.f32 %v4518, 0.0
  %v4583 = vmax.f32 %v4519, 0.0
  %v4584 = vmax.f32 %v4520, 0.0
  %v4585 = vmax.f32 %v4521, 0.0
  %v4586 = vmax.f32 %v4522, 0.0
  %v4587 = vmax.f32 %v4523, 0.0
  %v4588 = vmax.f32 %v4524, 0.0
  %v4589 = vmax.f32 %v4525, 0.0
  %v4590 = vmax.f32 %v4526, 0.0
  %v4591 = vmax.f32 %v4527, 0.0
  %v4592 = vmax.f32 %v4528, 0.0
  %v4593 = vmax.f32 %v4529, 0.0
  %v4594 = vmax.f32 %v4530, 0.0
  %v4595 = vmax.f32 %v4531, 0.0
  %v4596 = vmax.f32 %v4532, 0.0
  %v4597 = vmax.f32 %v4533, 0.0
  %v4598 = vmax.f32 %v4534, 0.0
  %v4599 = vmax.f32 %v4535, 0.0
  %v4600 = vmax.f32 %v4536, 0.0
  %v4601 = vmax.f32 %v4537, 0.0
  %v4602 = vmax.f32 %v4538, 0.0
  %v4603 = vmax.f32 %v4539, 0.0
  %v4604 = vmax.f32 %v4540, 0.0
  %v4605 = vmax.f32 %v4541, 0.0
  %v4606 = vmax.f32 %v4542, 0.0
  %v4607 = vmax.f32 %v4543, 0.0
  %v4608 = vmax.f32 %v4544, 0.0
  %v4609 = vmax.f32 %v4545, 0.0
  %v4610 = vmax.f32 %v4546, 0.0
  %v4611 = vmax.f32 %v4547, 0.0
  %v4612 = vmax.f32 %v4548, 0.0
  %v4613 = vmax.f32 %v4549, 0.0
  %v4614 = vmax.f32 %v4550, 0.0
  %v4615 = vmax.f32 %v4551, 0.0
  %v4616 = vmax.f32 %v4552, 0.0
  %v4617 = vmax.f32 %v4553, 0.0
  %v4618 = vmax.f32 %v4554, 0.0
  %v4619 = vmax.f32 %v4555, 0.0
  %v4620 = vmax.f32 %v4556, 0.0
  %v4621 = vmax.f32 %v4557, 0.0
  %v4622 = vmax.f32 %v4558, 0.0
  %v4623 = vmax.f32 %v4559, 0.0
  %v4624 = vmax.f32 %v4560, 0.0
  %v4625 = vmax.f32 %v4561, 0.0
  %v4626 = vmax.f32 %v4562, 0.0
  %v4627 = vmax.f32 %v4563, 0.0
  %v4628 = vmax.f32 %v4564, 0.0
  %v4629 = vmax.f32 %v4565, 0.0
  %v4630 = vmax.f32 %v4566, 0.0
  %v4631 = vmax.f32 %v4567, 0.0
  %v4632 = vmax.f32 %v4568, 0.0
  %v4633 = vmax.f32 %v4569, 0.0
  %v4634 = vmax.f32 %v4570, 0.0
  %v4635 = vmax.f32 %v4571, 0.0
  %4636 = vst.msk [vmem:[#allocation4] sm:$0xff] %vm4096, 0.0
  %4637 = vst.msk [vmem:[#allocation4 + $0x8] sm:$0xff] %vm4096, 0.0
  %vm4638 = vcmask 58368
  %4639 = vst.msk [vmem:[#allocation4 + $0x10] sm:$0x3] %vm4638, 0.0
  %4640 = vst.msk [vmem:[#allocation4 + $0x1b0] sm:$0xff] %vm4096, 0.0
  %4641 = vst.msk [vmem:[#allocation4 + $0x1b8] sm:$0xff] %vm4096, 0.0
  %4642 = vst.msk [vmem:[#allocation4 + $0x1c0] sm:$0x3] %vm4638, 0.0
  %s4643 = scalar_lea.vmem [#allocation4], 408
  %4644 = vst.msk [vmem:[%s4643] sm:$0xff] %vm4096, 0.0
  %4645 = vst.msk [vmem:[%s4643 + $0x8] sm:$0xff] %vm4096, 0.0
  %4646 = vst.msk [vmem:[%s4643 + $0x10] sm:$0x3] %vm4638, 0.0
  %4647 = vst.msk [vmem:[%s4643 + $0x1b0] sm:$0xff] %vm4096, 0.0
  %4648 = vst.msk [vmem:[%s4643 + $0x1b8] sm:$0xff] %vm4096, 0.0
  %4649 = vst.msk [vmem:[%s4643 + $0x1c0] sm:$0x3] %vm4638, 0.0
  %vm4650 = vcmask 57344
  %4651 = vst.msk [vmem:[#allocation4] sm:$0x1] %vm4650, 0.0
  %4652 = vst.msk [vmem:[#allocation4 + $0x18] sm:$0x1] %vm4650, 0.0
  %4653 = vst.msk [vmem:[#allocation4 + $0x30] sm:$0x1] %vm4650, 0.0
  %4654 = vst.msk [vmem:[#allocation4 + $0x48] sm:$0x1] %vm4650, 0.0
  %4655 = vst.msk [vmem:[#allocation4 + $0x60] sm:$0x1] %vm4650, 0.0
  %4656 = vst.msk [vmem:[#allocation4 + $0x78] sm:$0x1] %vm4650, 0.0
  %4657 = vst.msk [vmem:[#allocation4 + $0x90] sm:$0x1] %vm4650, 0.0
  %4658 = vst.msk [vmem:[#allocation4 + $0xa8] sm:$0x1] %vm4650, 0.0
  %4659 = vst.msk [vmem:[#allocation4 + $0xc0] sm:$0x1] %vm4650, 0.0
  %4660 = vst.msk [vmem:[#allocation4 + $0xd8] sm:$0x1] %vm4650, 0.0
  %4661 = vst.msk [vmem:[#allocation4 + $0xf0] sm:$0x1] %vm4650, 0.0
  %4662 = vst.msk [vmem:[#allocation4 + $0x108] sm:$0x1] %vm4650, 0.0
  %4663 = vst.msk [vmem:[#allocation4 + $0x120] sm:$0x1] %vm4650, 0.0
  %4664 = vst.msk [vmem:[#allocation4 + $0x138] sm:$0x1] %vm4650, 0.0
  %4665 = vst.msk [vmem:[#allocation4 + $0x150] sm:$0x1] %vm4650, 0.0
  %4666 = vst.msk [vmem:[#allocation4 + $0x168] sm:$0x1] %vm4650, 0.0
  %4667 = vst.msk [vmem:[#allocation4 + $0x180] sm:$0x1] %vm4650, 0.0
  %4668 = vst.msk [vmem:[#allocation4 + $0x198] sm:$0x1] %vm4650, 0.0
  %4669 = vst.msk [vmem:[#allocation4 + $0x1b0] sm:$0x1] %vm4650, 0.0
  %4670 = vst.msk [vmem:[#allocation4 + $0x1c8] sm:$0x1] %vm4650, 0.0
  %4671 = vst.msk [vmem:[#allocation4 + $0x1e0] sm:$0x1] %vm4650, 0.0
  %4672 = vst.msk [vmem:[#allocation4 + $0x1f8] sm:$0x1] %vm4650, 0.0
  %4673 = vst.msk [vmem:[#allocation4 + $0x210] sm:$0x1] %vm4650, 0.0
  %4674 = vst.msk [vmem:[#allocation4 + $0x228] sm:$0x1] %vm4650, 0.0
  %4675 = vst.msk [vmem:[#allocation4 + $0x240] sm:$0x1] %vm4650, 0.0
  %4676 = vst.msk [vmem:[#allocation4 + $0x258] sm:$0x1] %vm4650, 0.0
  %4677 = vst.msk [vmem:[#allocation4 + $0x270] sm:$0x1] %vm4650, 0.0
  %4678 = vst.msk [vmem:[#allocation4 + $0x288] sm:$0x1] %vm4650, 0.0
  %4679 = vst.msk [vmem:[#allocation4 + $0x2a0] sm:$0x1] %vm4650, 0.0
  %4680 = vst.msk [vmem:[#allocation4 + $0x2b8] sm:$0x1] %vm4650, 0.0
  %4681 = vst.msk [vmem:[#allocation4 + $0x2d0] sm:$0x1] %vm4650, 0.0
  %4682 = vst.msk [vmem:[#allocation4 + $0x2e8] sm:$0x1] %vm4650, 0.0
  %4683 = vst.msk [vmem:[#allocation4 + $0x300] sm:$0x1] %vm4650, 0.0
  %4684 = vst.msk [vmem:[#allocation4 + $0x318] sm:$0x1] %vm4650, 0.0
  %4685 = vst.msk [vmem:[#allocation4 + $0x330] sm:$0x1] %vm4650, 0.0
  %4686 = vst.msk [vmem:[#allocation4 + $0x348] sm:$0x1] %vm4650, 0.0
  %4687 = vst.msk [vmem:[#allocation4 + $0x11] sm:$0x1] %vm4650, 0.0
  %4688 = vst.msk [vmem:[#allocation4 + $0x29] sm:$0x1] %vm4650, 0.0
  %4689 = vst.msk [vmem:[#allocation4 + $0x41] sm:$0x1] %vm4650, 0.0
  %4690 = vst.msk [vmem:[#allocation4 + $0x59] sm:$0x1] %vm4650, 0.0
  %4691 = vst.msk [vmem:[#allocation4 + $0x71] sm:$0x1] %vm4650, 0.0
  %4692 = vst.msk [vmem:[#allocation4 + $0x89] sm:$0x1] %vm4650, 0.0
  %4693 = vst.msk [vmem:[#allocation4 + $0xa1] sm:$0x1] %vm4650, 0.0
  %4694 = vst.msk [vmem:[#allocation4 + $0xb9] sm:$0x1] %vm4650, 0.0
  %4695 = vst.msk [vmem:[#allocation4 + $0xd1] sm:$0x1] %vm4650, 0.0
  %4696 = vst.msk [vmem:[#allocation4 + $0xe9] sm:$0x1] %vm4650, 0.0
  %4697 = vst.msk [vmem:[#allocation4 + $0x101] sm:$0x1] %vm4650, 0.0
  %4698 = vst.msk [vmem:[#allocation4 + $0x119] sm:$0x1] %vm4650, 0.0
  %4699 = vst.msk [vmem:[#allocation4 + $0x131] sm:$0x1] %vm4650, 0.0
  %4700 = vst.msk [vmem:[#allocation4 + $0x149] sm:$0x1] %vm4650, 0.0
  %4701 = vst.msk [vmem:[#allocation4 + $0x161] sm:$0x1] %vm4650, 0.0
  %4702 = vst.msk [vmem:[#allocation4 + $0x179] sm:$0x1] %vm4650, 0.0
  %4703 = vst.msk [vmem:[#allocation4 + $0x191] sm:$0x1] %vm4650, 0.0
  %4704 = vst.msk [vmem:[#allocation4 + $0x1a9] sm:$0x1] %vm4650, 0.0
  %4705 = vst.msk [vmem:[#allocation4 + $0x1c1] sm:$0x1] %vm4650, 0.0
  %4706 = vst.msk [vmem:[#allocation4 + $0x1d9] sm:$0x1] %vm4650, 0.0
  %4707 = vst.msk [vmem:[#allocation4 + $0x1f1] sm:$0x1] %vm4650, 0.0
  %4708 = vst.msk [vmem:[#allocation4 + $0x209] sm:$0x1] %vm4650, 0.0
  %4709 = vst.msk [vmem:[#allocation4 + $0x221] sm:$0x1] %vm4650, 0.0
  %4710 = vst.msk [vmem:[#allocation4 + $0x239] sm:$0x1] %vm4650, 0.0
  %4711 = vst.msk [vmem:[#allocation4 + $0x251] sm:$0x1] %vm4650, 0.0
  %4712 = vst.msk [vmem:[#allocation4 + $0x269] sm:$0x1] %vm4650, 0.0
  %4713 = vst.msk [vmem:[#allocation4 + $0x281] sm:$0x1] %vm4650, 0.0
  %4714 = vst.msk [vmem:[#allocation4 + $0x299] sm:$0x1] %vm4650, 0.0
  %4715 = vst.msk [vmem:[#allocation4 + $0x2b1] sm:$0x1] %vm4650, 0.0
  %4716 = vst.msk [vmem:[#allocation4 + $0x2c9] sm:$0x1] %vm4650, 0.0
  %4717 = vst.msk [vmem:[#allocation4 + $0x2e1] sm:$0x1] %vm4650, 0.0
  %4718 = vst.msk [vmem:[#allocation4 + $0x2f9] sm:$0x1] %vm4650, 0.0
  %4719 = vst.msk [vmem:[#allocation4 + $0x311] sm:$0x1] %vm4650, 0.0
  %4720 = vst.msk [vmem:[#allocation4 + $0x329] sm:$0x1] %vm4650, 0.0
  %4721 = vst.msk [vmem:[#allocation4 + $0x341] sm:$0x1] %vm4650, 0.0
  %4722 = vst.msk [vmem:[#allocation4 + $0x359] sm:$0x1] %vm4650, 0.0
  %s4723 = scalar_lea.vmem [#allocation4], 24
  %4724 = vst.msk [vmem:[%s4723 + $0x1] sm:$0xff] %vm4096, %v4572
  %4725 = vst.msk [vmem:[%s4723 + $0x9] sm:$0xff] %vm4096, %v4573
  %4726 = vst.msk [vmem:[%s4723 + $0x19] sm:$0xff] %vm4096, %v4574
  %4727 = vst.msk [vmem:[%s4723 + $0x21] sm:$0xff] %vm4096, %v4575
  %4728 = vst.msk [vmem:[%s4723 + $0x31] sm:$0xff] %vm4096, %v4576
  %4729 = vst.msk [vmem:[%s4723 + $0x39] sm:$0xff] %vm4096, %v4577
  %4730 = vst.msk [vmem:[%s4723 + $0x49] sm:$0xff] %vm4096, %v4578
  %4731 = vst.msk [vmem:[%s4723 + $0x51] sm:$0xff] %vm4096, %v4579
  %4732 = vst.msk [vmem:[%s4723 + $0x61] sm:$0xff] %vm4096, %v4580
  %4733 = vst.msk [vmem:[%s4723 + $0x69] sm:$0xff] %vm4096, %v4581
  %4734 = vst.msk [vmem:[%s4723 + $0x79] sm:$0xff] %vm4096, %v4582
  %4735 = vst.msk [vmem:[%s4723 + $0x81] sm:$0xff] %vm4096, %v4583
  %4736 = vst.msk [vmem:[%s4723 + $0x91] sm:$0xff] %vm4096, %v4584
  %4737 = vst.msk [vmem:[%s4723 + $0x99] sm:$0xff] %vm4096, %v4585
  %4738 = vst.msk [vmem:[%s4723 + $0xa9] sm:$0xff] %vm4096, %v4586
  %4739 = vst.msk [vmem:[%s4723 + $0xb1] sm:$0xff] %vm4096, %v4587
  %4740 = vst.msk [vmem:[%s4723 + $0xc1] sm:$0xff] %vm4096, %v4588
  %4741 = vst.msk [vmem:[%s4723 + $0xc9] sm:$0xff] %vm4096, %v4589
  %4742 = vst.msk [vmem:[%s4723 + $0xd9] sm:$0xff] %vm4096, %v4590
  %4743 = vst.msk [vmem:[%s4723 + $0xe1] sm:$0xff] %vm4096, %v4591
  %4744 = vst.msk [vmem:[%s4723 + $0xf1] sm:$0xff] %vm4096, %v4592
  %4745 = vst.msk [vmem:[%s4723 + $0xf9] sm:$0xff] %vm4096, %v4593
  %4746 = vst.msk [vmem:[%s4723 + $0x109] sm:$0xff] %vm4096, %v4594
  %4747 = vst.msk [vmem:[%s4723 + $0x111] sm:$0xff] %vm4096, %v4595
  %4748 = vst.msk [vmem:[%s4723 + $0x121] sm:$0xff] %vm4096, %v4596
  %4749 = vst.msk [vmem:[%s4723 + $0x129] sm:$0xff] %vm4096, %v4597
  %4750 = vst.msk [vmem:[%s4723 + $0x139] sm:$0xff] %vm4096, %v4598
  %4751 = vst.msk [vmem:[%s4723 + $0x141] sm:$0xff] %vm4096, %v4599
  %4752 = vst.msk [vmem:[%s4723 + $0x151] sm:$0xff] %vm4096, %v4600
  %4753 = vst.msk [vmem:[%s4723 + $0x159] sm:$0xff] %vm4096, %v4601
  %4754 = vst.msk [vmem:[%s4723 + $0x169] sm:$0xff] %vm4096, %v4602
  %4755 = vst.msk [vmem:[%s4723 + $0x171] sm:$0xff] %vm4096, %v4603
  %4756 = vst.msk [vmem:[%s4723 + $0x1b1] sm:$0xff] %vm4096, %v4604
  %4757 = vst.msk [vmem:[%s4723 + $0x1b9] sm:$0xff] %vm4096, %v4605
  %4758 = vst.msk [vmem:[%s4723 + $0x1c9] sm:$0xff] %vm4096, %v4606
  %4759 = vst.msk [vmem:[%s4723 + $0x1d1] sm:$0xff] %vm4096, %v4607
  %4760 = vst.msk [vmem:[%s4723 + $0x1e1] sm:$0xff] %vm4096, %v4608
  %4761 = vst.msk [vmem:[%s4723 + $0x1e9] sm:$0xff] %vm4096, %v4609
  %4762 = vst.msk [vmem:[%s4723 + $0x1f9] sm:$0xff] %vm4096, %v4610
  %4763 = vst.msk [vmem:[%s4723 + $0x201] sm:$0xff] %vm4096, %v4611
  %4764 = vst.msk [vmem:[%s4723 + $0x211] sm:$0xff] %vm4096, %v4612
  %4765 = vst.msk [vmem:[%s4723 + $0x219] sm:$0xff] %vm4096, %v4613
  %4766 = vst.msk [vmem:[%s4723 + $0x229] sm:$0xff] %vm4096, %v4614
  %4767 = vst.msk [vmem:[%s4723 + $0x231] sm:$0xff] %vm4096, %v4615
  %4768 = vst.msk [vmem:[%s4723 + $0x241] sm:$0xff] %vm4096, %v4616
  %4769 = vst.msk [vmem:[%s4723 + $0x249] sm:$0xff] %vm4096, %v4617
  %4770 = vst.msk [vmem:[%s4723 + $0x259] sm:$0xff] %vm4096, %v4618
  %4771 = vst.msk [vmem:[%s4723 + $0x261] sm:$0xff] %vm4096, %v4619
  %4772 = vst.msk [vmem:[%s4723 + $0x271] sm:$0xff] %vm4096, %v4620
  %4773 = vst.msk [vmem:[%s4723 + $0x279] sm:$0xff] %vm4096, %v4621
  %4774 = vst.msk [vmem:[%s4723 + $0x289] sm:$0xff] %vm4096, %v4622
  %4775 = vst.msk [vmem:[%s4723 + $0x291] sm:$0xff] %vm4096, %v4623
  %4776 = vst.msk [vmem:[%s4723 + $0x2a1] sm:$0xff] %vm4096, %v4624
  %4777 = vst.msk [vmem:[%s4723 + $0x2a9] sm:$0xff] %vm4096, %v4625
  %4778 = vst.msk [vmem:[%s4723 + $0x2b9] sm:$0xff] %vm4096, %v4626
  %4779 = vst.msk [vmem:[%s4723 + $0x2c1] sm:$0xff] %vm4096, %v4627
  %4780 = vst.msk [vmem:[%s4723 + $0x2d1] sm:$0xff] %vm4096, %v4628
  %4781 = vst.msk [vmem:[%s4723 + $0x2d9] sm:$0xff] %vm4096, %v4629
  %4782 = vst.msk [vmem:[%s4723 + $0x2e9] sm:$0xff] %vm4096, %v4630
  %4783 = vst.msk [vmem:[%s4723 + $0x2f1] sm:$0xff] %vm4096, %v4631
  %4784 = vst.msk [vmem:[%s4723 + $0x301] sm:$0xff] %vm4096, %v4632
  %4785 = vst.msk [vmem:[%s4723 + $0x309] sm:$0xff] %vm4096, %v4633
  %4786 = vst.msk [vmem:[%s4723 + $0x319] sm:$0xff] %vm4096, %v4634
  %4787 = vst.msk [vmem:[%s4723 + $0x321] sm:$0xff] %vm4096, %v4635
  %v4788 = vld [vmem:[#allocation4] sm:$0xff]
  %v4789 = vld [vmem:[#allocation4 + $0x8] sm:$0xff]
  %v4790 = vld [vmem:[#allocation4 + $0x18] sm:$0xff]
  %v4791 = vld [vmem:[#allocation4 + $0x20] sm:$0xff]
  %v4792 = vld [vmem:[#allocation4 + $0x30] sm:$0xff]
  %v4793 = vld [vmem:[#allocation4 + $0x38] sm:$0xff]
  %v4794 = vld [vmem:[#allocation4 + $0x48] sm:$0xff]
  %v4795 = vld [vmem:[#allocation4 + $0x50] sm:$0xff]
  %v4796 = vld [vmem:[#allocation4 + $0x60] sm:$0xff]
  %v4797 = vld [vmem:[#allocation4 + $0x68] sm:$0xff]
  %v4798 = vld [vmem:[#allocation4 + $0x78] sm:$0xff]
  %v4799 = vld [vmem:[#allocation4 + $0x80] sm:$0xff]
  %v4800 = vld [vmem:[#allocation4 + $0x90] sm:$0xff]
  %v4801 = vld [vmem:[#allocation4 + $0x98] sm:$0xff]
  %v4802 = vld [vmem:[#allocation4 + $0xa8] sm:$0xff]
  %v4803 = vld [vmem:[#allocation4 + $0xb0] sm:$0xff]
  %v4804 = vld [vmem:[#allocation4 + $0xc0] sm:$0xff]
  %v4805 = vld [vmem:[#allocation4 + $0xc8] sm:$0xff]
  %v4806 = vld [vmem:[#allocation4 + $0xd8] sm:$0xff]
  %v4807 = vld [vmem:[#allocation4 + $0xe0] sm:$0xff]
  %v4808 = vld [vmem:[#allocation4 + $0xf0] sm:$0xff]
  %v4809 = vld [vmem:[#allocation4 + $0xf8] sm:$0xff]
  %v4810 = vld [vmem:[#allocation4 + $0x108] sm:$0xff]
  %v4811 = vld [vmem:[#allocation4 + $0x110] sm:$0xff]
  %v4812 = vld [vmem:[#allocation4 + $0x120] sm:$0xff]
  %v4813 = vld [vmem:[#allocation4 + $0x128] sm:$0xff]
  %v4814 = vld [vmem:[#allocation4 + $0x138] sm:$0xff]
  %v4815 = vld [vmem:[#allocation4 + $0x140] sm:$0xff]
  %v4816 = vld [vmem:[#allocation4 + $0x150] sm:$0xff]
  %v4817 = vld [vmem:[#allocation4 + $0x158] sm:$0xff]
  %v4818 = vld [vmem:[#allocation4 + $0x168] sm:$0xff]
  %v4819 = vld [vmem:[#allocation4 + $0x170] sm:$0xff]
  %v4820 = vld [vmem:[#allocation4 + $0x1b0] sm:$0xff]
  %v4821 = vld [vmem:[#allocation4 + $0x1b8] sm:$0xff]
  %v4822 = vld [vmem:[#allocation4 + $0x1c8] sm:$0xff]
  %v4823 = vld [vmem:[#allocation4 + $0x1d0] sm:$0xff]
  %v4824 = vld [vmem:[#allocation4 + $0x1e0] sm:$0xff]
  %v4825 = vld [vmem:[#allocation4 + $0x1e8] sm:$0xff]
  %v4826 = vld [vmem:[#allocation4 + $0x1f8] sm:$0xff]
  %v4827 = vld [vmem:[#allocation4 + $0x200] sm:$0xff]
  %v4828 = vld [vmem:[#allocation4 + $0x210] sm:$0xff]
  %v4829 = vld [vmem:[#allocation4 + $0x218] sm:$0xff]
  %v4830 = vld [vmem:[#allocation4 + $0x228] sm:$0xff]
  %v4831 = vld [vmem:[#allocation4 + $0x230] sm:$0xff]
  %v4832 = vld [vmem:[#allocation4 + $0x240] sm:$0xff]
  %v4833 = vld [vmem:[#allocation4 + $0x248] sm:$0xff]
  %v4834 = vld [vmem:[#allocation4 + $0x258] sm:$0xff]
  %v4835 = vld [vmem:[#allocation4 + $0x260] sm:$0xff]
  %v4836 = vld [vmem:[#allocation4 + $0x270] sm:$0xff]
  %v4837 = vld [vmem:[#allocation4 + $0x278] sm:$0xff]
  %v4838 = vld [vmem:[#allocation4 + $0x288] sm:$0xff]
  %v4839 = vld [vmem:[#allocation4 + $0x290] sm:$0xff]
  %v4840 = vld [vmem:[#allocation4 + $0x2a0] sm:$0xff]
  %v4841 = vld [vmem:[#allocation4 + $0x2a8] sm:$0xff]
  %v4842 = vld [vmem:[#allocation4 + $0x2b8] sm:$0xff]
  %v4843 = vld [vmem:[#allocation4 + $0x2c0] sm:$0xff]
  %v4844 = vld [vmem:[#allocation4 + $0x2d0] sm:$0xff]
  %v4845 = vld [vmem:[#allocation4 + $0x2d8] sm:$0xff]
  %v4846 = vld [vmem:[#allocation4 + $0x2e8] sm:$0xff]
  %v4847 = vld [vmem:[#allocation4 + $0x2f0] sm:$0xff]
  %v4848 = vld [vmem:[#allocation4 + $0x300] sm:$0xff]
  %v4849 = vld [vmem:[#allocation4 + $0x308] sm:$0xff]
  %v4850 = vld [vmem:[#allocation4 + $0x318] sm:$0xff]
  %v4851 = vld [vmem:[#allocation4 + $0x320] sm:$0xff]
  %4852 = vst.msk [vmem:[#allocation5] sm:$0xff] %vm4096, %v4788
  %4853 = vst.msk [vmem:[#allocation5 + $0x8] sm:$0xff] %vm4096, %v4789
  %4854 = vst.msk [vmem:[#allocation5 + $0x10] sm:$0xff] %vm4096, %v4790
  %4855 = vst.msk [vmem:[#allocation5 + $0x18] sm:$0xff] %vm4096, %v4791
  %4856 = vst.msk [vmem:[#allocation5 + $0x20] sm:$0xff] %vm4096, %v4792
  %4857 = vst.msk [vmem:[#allocation5 + $0x28] sm:$0xff] %vm4096, %v4793
  %4858 = vst.msk [vmem:[#allocation5 + $0x30] sm:$0xff] %vm4096, %v4794
  %4859 = vst.msk [vmem:[#allocation5 + $0x38] sm:$0xff] %vm4096, %v4795
  %4860 = vst.msk [vmem:[#allocation5 + $0x40] sm:$0xff] %vm4096, %v4796
  %4861 = vst.msk [vmem:[#allocation5 + $0x48] sm:$0xff] %vm4096, %v4797
  %4862 = vst.msk [vmem:[#allocation5 + $0x50] sm:$0xff] %vm4096, %v4798
  %4863 = vst.msk [vmem:[#allocation5 + $0x58] sm:$0xff] %vm4096, %v4799
  %4864 = vst.msk [vmem:[#allocation5 + $0x60] sm:$0xff] %vm4096, %v4800
  %4865 = vst.msk [vmem:[#allocation5 + $0x68] sm:$0xff] %vm4096, %v4801
  %4866 = vst.msk [vmem:[#allocation5 + $0x70] sm:$0xff] %vm4096, %v4802
  %4867 = vst.msk [vmem:[#allocation5 + $0x78] sm:$0xff] %vm4096, %v4803
  %4868 = vst.msk [vmem:[#allocation5 + $0x80] sm:$0xff] %vm4096, %v4804
  %4869 = vst.msk [vmem:[#allocation5 + $0x88] sm:$0xff] %vm4096, %v4805
  %4870 = vst.msk [vmem:[#allocation5 + $0x90] sm:$0xff] %vm4096, %v4806
  %4871 = vst.msk [vmem:[#allocation5 + $0x98] sm:$0xff] %vm4096, %v4807
  %4872 = vst.msk [vmem:[#allocation5 + $0xa0] sm:$0xff] %vm4096, %v4808
  %4873 = vst.msk [vmem:[#allocation5 + $0xa8] sm:$0xff] %vm4096, %v4809
  %4874 = vst.msk [vmem:[#allocation5 + $0xb0] sm:$0xff] %vm4096, %v4810
  %4875 = vst.msk [vmem:[#allocation5 + $0xb8] sm:$0xff] %vm4096, %v4811
  %4876 = vst.msk [vmem:[#allocation5 + $0xc0] sm:$0xff] %vm4096, %v4812
  %4877 = vst.msk [vmem:[#allocation5 + $0xc8] sm:$0xff] %vm4096, %v4813
  %4878 = vst.msk [vmem:[#allocation5 + $0xd0] sm:$0xff] %vm4096, %v4814
  %4879 = vst.msk [vmem:[#allocation5 + $0xd8] sm:$0xff] %vm4096, %v4815
  %4880 = vst.msk [vmem:[#allocation5 + $0xe0] sm:$0xff] %vm4096, %v4816
  %4881 = vst.msk [vmem:[#allocation5 + $0xe8] sm:$0xff] %vm4096, %v4817
  %4882 = vst.msk [vmem:[#allocation5 + $0xf0] sm:$0xff] %vm4096, %v4818
  %4883 = vst.msk [vmem:[#allocation5 + $0xf8] sm:$0xff] %vm4096, %v4819
  %4884 = vst.msk [vmem:[#allocation5 + $0x100] sm:$0xff] %vm4096, %v4820
  %4885 = vst.msk [vmem:[#allocation5 + $0x108] sm:$0xff] %vm4096, %v4821
  %4886 = vst.msk [vmem:[#allocation5 + $0x110] sm:$0xff] %vm4096, %v4822
  %4887 = vst.msk [vmem:[#allocation5 + $0x118] sm:$0xff] %vm4096, %v4823
  %4888 = vst.msk [vmem:[#allocation5 + $0x120] sm:$0xff] %vm4096, %v4824
  %4889 = vst.msk [vmem:[#allocation5 + $0x128] sm:$0xff] %vm4096, %v4825
  %4890 = vst.msk [vmem:[#allocation5 + $0x130] sm:$0xff] %vm4096, %v4826
  %4891 = vst.msk [vmem:[#allocation5 + $0x138] sm:$0xff] %vm4096, %v4827
  %4892 = vst.msk [vmem:[#allocation5 + $0x140] sm:$0xff] %vm4096, %v4828
  %4893 = vst.msk [vmem:[#allocation5 + $0x148] sm:$0xff] %vm4096, %v4829
  %4894 = vst.msk [vmem:[#allocation5 + $0x150] sm:$0xff] %vm4096, %v4830
  %4895 = vst.msk [vmem:[#allocation5 + $0x158] sm:$0xff] %vm4096, %v4831
  %4896 = vst.msk [vmem:[#allocation5 + $0x160] sm:$0xff] %vm4096, %v4832
  %4897 = vst.msk [vmem:[#allocation5 + $0x168] sm:$0xff] %vm4096, %v4833
  %4898 = vst.msk [vmem:[#allocation5 + $0x170] sm:$0xff] %vm4096, %v4834
  %4899 = vst.msk [vmem:[#allocation5 + $0x178] sm:$0xff] %vm4096, %v4835
  %4900 = vst.msk [vmem:[#allocation5 + $0x180] sm:$0xff] %vm4096, %v4836
  %4901 = vst.msk [vmem:[#allocation5 + $0x188] sm:$0xff] %vm4096, %v4837
  %4902 = vst.msk [vmem:[#allocation5 + $0x190] sm:$0xff] %vm4096, %v4838
  %4903 = vst.msk [vmem:[#allocation5 + $0x198] sm:$0xff] %vm4096, %v4839
  %4904 = vst.msk [vmem:[#allocation5 + $0x1a0] sm:$0xff] %vm4096, %v4840
  %4905 = vst.msk [vmem:[#allocation5 + $0x1a8] sm:$0xff] %vm4096, %v4841
  %4906 = vst.msk [vmem:[#allocation5 + $0x1b0] sm:$0xff] %vm4096, %v4842
  %4907 = vst.msk [vmem:[#allocation5 + $0x1b8] sm:$0xff] %vm4096, %v4843
  %4908 = vst.msk [vmem:[#allocation5 + $0x1c0] sm:$0xff] %vm4096, %v4844
  %4909 = vst.msk [vmem:[#allocation5 + $0x1c8] sm:$0xff] %vm4096, %v4845
  %4910 = vst.msk [vmem:[#allocation5 + $0x1d0] sm:$0xff] %vm4096, %v4846
  %4911 = vst.msk [vmem:[#allocation5 + $0x1d8] sm:$0xff] %vm4096, %v4847
  %4912 = vst.msk [vmem:[#allocation5 + $0x1e0] sm:$0xff] %vm4096, %v4848
  %4913 = vst.msk [vmem:[#allocation5 + $0x1e8] sm:$0xff] %vm4096, %v4849
  %4914 = vst.msk [vmem:[#allocation5 + $0x1f0] sm:$0xff] %vm4096, %v4850
  %4915 = vst.msk [vmem:[#allocation5 + $0x1f8] sm:$0xff] %vm4096, %v4851
  %v4916 = vld [vmem:[#allocation4 + $0x1] sm:$0xff]
  %v4917 = vld [vmem:[#allocation4 + $0x9] sm:$0xff]
  %v4918 = vld [vmem:[#allocation4 + $0x19] sm:$0xff]
  %v4919 = vld [vmem:[#allocation4 + $0x21] sm:$0xff]
  %v4920 = vld [vmem:[#allocation4 + $0x31] sm:$0xff]
  %v4921 = vld [vmem:[#allocation4 + $0x39] sm:$0xff]
  %v4922 = vld [vmem:[#allocation4 + $0x49] sm:$0xff]
  %v4923 = vld [vmem:[#allocation4 + $0x51] sm:$0xff]
  %v4924 = vld [vmem:[#allocation4 + $0x61] sm:$0xff]
  %v4925 = vld [vmem:[#allocation4 + $0x69] sm:$0xff]
  %v4926 = vld [vmem:[#allocation4 + $0x79] sm:$0xff]
  %v4927 = vld [vmem:[#allocation4 + $0x81] sm:$0xff]
  %v4928 = vld [vmem:[#allocation4 + $0x91] sm:$0xff]
  %v4929 = vld [vmem:[#allocation4 + $0x99] sm:$0xff]
  %v4930 = vld [vmem:[#allocation4 + $0xa9] sm:$0xff]
  %v4931 = vld [vmem:[#allocation4 + $0xb1] sm:$0xff]
  %v4932 = vld [vmem:[#allocation4 + $0xc1] sm:$0xff]
  %v4933 = vld [vmem:[#allocation4 + $0xc9] sm:$0xff]
  %v4934 = vld [vmem:[#allocation4 + $0xd9] sm:$0xff]
  %v4935 = vld [vmem:[#allocation4 + $0xe1] sm:$0xff]
  %v4936 = vld [vmem:[#allocation4 + $0xf1] sm:$0xff]
  %v4937 = vld [vmem:[#allocation4 + $0xf9] sm:$0xff]
  %v4938 = vld [vmem:[#allocation4 + $0x109] sm:$0xff]
  %v4939 = vld [vmem:[#allocation4 + $0x111] sm:$0xff]
  %v4940 = vld [vmem:[#allocation4 + $0x121] sm:$0xff]
  %v4941 = vld [vmem:[#allocation4 + $0x129] sm:$0xff]
  %v4942 = vld [vmem:[#allocation4 + $0x139] sm:$0xff]
  %v4943 = vld [vmem:[#allocation4 + $0x141] sm:$0xff]
  %v4944 = vld [vmem:[#allocation4 + $0x151] sm:$0xff]
  %v4945 = vld [vmem:[#allocation4 + $0x159] sm:$0xff]
  %v4946 = vld [vmem:[#allocation4 + $0x169] sm:$0xff]
  %v4947 = vld [vmem:[#allocation4 + $0x171] sm:$0xff]
  %v4948 = vld [vmem:[#allocation4 + $0x1b1] sm:$0xff]
  %v4949 = vld [vmem:[#allocation4 + $0x1b9] sm:$0xff]
  %v4950 = vld [vmem:[#allocation4 + $0x1c9] sm:$0xff]
  %v4951 = vld [vmem:[#allocation4 + $0x1d1] sm:$0xff]
  %v4952 = vld [vmem:[#allocation4 + $0x1e1] sm:$0xff]
  %v4953 = vld [vmem:[#allocation4 + $0x1e9] sm:$0xff]
  %v4954 = vld [vmem:[#allocation4 + $0x1f9] sm:$0xff]
  %v4955 = vld [vmem:[#allocation4 + $0x201] sm:$0xff]
  %v4956 = vld [vmem:[#allocation4 + $0x211] sm:$0xff]
  %v4957 = vld [vmem:[#allocation4 + $0x219] sm:$0xff]
  %v4958 = vld [vmem:[#allocation4 + $0x229] sm:$0xff]
  %v4959 = vld [vmem:[#allocation4 + $0x231] sm:$0xff]
  %v4960 = vld [vmem:[#allocation4 + $0x241] sm:$0xff]
  %v4961 = vld [vmem:[#allocation4 + $0x249] sm:$0xff]
  %v4962 = vld [vmem:[#allocation4 + $0x259] sm:$0xff]
  %v4963 = vld [vmem:[#allocation4 + $0x261] sm:$0xff]
  %v4964 = vld [vmem:[#allocation4 + $0x271] sm:$0xff]
  %v4965 = vld [vmem:[#allocation4 + $0x279] sm:$0xff]
  %v4966 = vld [vmem:[#allocation4 + $0x289] sm:$0xff]
  %v4967 = vld [vmem:[#allocation4 + $0x291] sm:$0xff]
  %v4968 = vld [vmem:[#allocation4 + $0x2a1] sm:$0xff]
  %v4969 = vld [vmem:[#allocation4 + $0x2a9] sm:$0xff]
  %v4970 = vld [vmem:[#allocation4 + $0x2b9] sm:$0xff]
  %v4971 = vld [vmem:[#allocation4 + $0x2c1] sm:$0xff]
  %v4972 = vld [vmem:[#allocation4 + $0x2d1] sm:$0xff]
  %v4973 = vld [vmem:[#allocation4 + $0x2d9] sm:$0xff]
  %v4974 = vld [vmem:[#allocation4 + $0x2e9] sm:$0xff]
  %v4975 = vld [vmem:[#allocation4 + $0x2f1] sm:$0xff]
  %v4976 = vld [vmem:[#allocation4 + $0x301] sm:$0xff]
  %v4977 = vld [vmem:[#allocation4 + $0x309] sm:$0xff]
  %v4978 = vld [vmem:[#allocation4 + $0x319] sm:$0xff]
  %v4979 = vld [vmem:[#allocation4 + $0x321] sm:$0xff]
  %5044 = vrot.lane.b32.xlu0 %v4916, 8
  %v5045 = vpop.permute.xlu0 %5044
  %5046 = vrot.lane.b32.xlu0 %v4917, 8
  %v5047 = vpop.permute.xlu0 %5046
  %5048 = vrot.lane.b32.xlu0 %v4918, 8
  %v5049 = vpop.permute.xlu0 %5048
  %5050 = vrot.lane.b32.xlu0 %v4919, 8
  %v5051 = vpop.permute.xlu0 %5050
  %5052 = vrot.lane.b32.xlu0 %v4920, 8
  %v5053 = vpop.permute.xlu0 %5052
  %5054 = vrot.lane.b32.xlu0 %v4921, 8
  %v5055 = vpop.permute.xlu0 %5054
  %5056 = vrot.lane.b32.xlu0 %v4922, 8
  %v5057 = vpop.permute.xlu0 %5056
  %5058 = vrot.lane.b32.xlu0 %v4923, 8
  %v5059 = vpop.permute.xlu0 %5058
  %5060 = vrot.lane.b32.xlu0 %v4924, 8
  %v5061 = vpop.permute.xlu0 %5060
  %5062 = vrot.lane.b32.xlu0 %v4925, 8
  %v5063 = vpop.permute.xlu0 %5062
  %5064 = vrot.lane.b32.xlu0 %v4926, 8
  %v5065 = vpop.permute.xlu0 %5064
  %5066 = vrot.lane.b32.xlu0 %v4927, 8
  %v5067 = vpop.permute.xlu0 %5066
  %5068 = vrot.lane.b32.xlu0 %v4928, 8
  %v5069 = vpop.permute.xlu0 %5068
  %5070 = vrot.lane.b32.xlu0 %v4929, 8
  %v5071 = vpop.permute.xlu0 %5070
  %5072 = vrot.lane.b32.xlu0 %v4930, 8
  %v5073 = vpop.permute.xlu0 %5072
  %5074 = vrot.lane.b32.xlu0 %v4931, 8
  %v5075 = vpop.permute.xlu0 %5074
  %5076 = vrot.lane.b32.xlu0 %v4932, 8
  %v5077 = vpop.permute.xlu0 %5076
  %5078 = vrot.lane.b32.xlu0 %v4933, 8
  %v5079 = vpop.permute.xlu0 %5078
  %5080 = vrot.lane.b32.xlu0 %v4934, 8
  %v5081 = vpop.permute.xlu0 %5080
  %5082 = vrot.lane.b32.xlu0 %v4935, 8
  %v5083 = vpop.permute.xlu0 %5082
  %5084 = vrot.lane.b32.xlu0 %v4936, 8
  %v5085 = vpop.permute.xlu0 %5084
  %5086 = vrot.lane.b32.xlu0 %v4937, 8
  %v5087 = vpop.permute.xlu0 %5086
  %5088 = vrot.lane.b32.xlu0 %v4938, 8
  %v5089 = vpop.permute.xlu0 %5088
  %5090 = vrot.lane.b32.xlu0 %v4939, 8
  %v5091 = vpop.permute.xlu0 %5090
  %5092 = vrot.lane.b32.xlu0 %v4940, 8
  %v5093 = vpop.permute.xlu0 %5092
  %5094 = vrot.lane.b32.xlu0 %v4941, 8
  %v5095 = vpop.permute.xlu0 %5094
  %5096 = vrot.lane.b32.xlu0 %v4942, 8
  %v5097 = vpop.permute.xlu0 %5096
  %5098 = vrot.lane.b32.xlu0 %v4943, 8
  %v5099 = vpop.permute.xlu0 %5098
  %5100 = vrot.lane.b32.xlu0 %v4944, 8
  %v5101 = vpop.permute.xlu0 %5100
  %5102 = vrot.lane.b32.xlu0 %v4945, 8
  %v5103 = vpop.permute.xlu0 %5102
  %5104 = vrot.lane.b32.xlu0 %v4946, 8
  %v5105 = vpop.permute.xlu0 %5104
  %5106 = vrot.lane.b32.xlu0 %v4947, 8
  %v5107 = vpop.permute.xlu0 %5106
  %5108 = vrot.lane.b32.xlu0 %v4948, 8
  %v5109 = vpop.permute.xlu0 %5108
  %5110 = vrot.lane.b32.xlu0 %v4949, 8
  %v5111 = vpop.permute.xlu0 %5110
  %5112 = vrot.lane.b32.xlu0 %v4950, 8
  %v5113 = vpop.permute.xlu0 %5112
  %5114 = vrot.lane.b32.xlu0 %v4951, 8
  %v5115 = vpop.permute.xlu0 %5114
  %5116 = vrot.lane.b32.xlu0 %v4952, 8
  %v5117 = vpop.permute.xlu0 %5116
  %5118 = vrot.lane.b32.xlu0 %v4953, 8
  %v5119 = vpop.permute.xlu0 %5118
  %5120 = vrot.lane.b32.xlu0 %v4954, 8
  %v5121 = vpop.permute.xlu0 %5120
  %5122 = vrot.lane.b32.xlu0 %v4955, 8
  %v5123 = vpop.permute.xlu0 %5122
  %5124 = vrot.lane.b32.xlu0 %v4956, 8
  %v5125 = vpop.permute.xlu0 %5124
  %5126 = vrot.lane.b32.xlu0 %v4957, 8
  %v5127 = vpop.permute.xlu0 %5126
  %5128 = vrot.lane.b32.xlu0 %v4958, 8
  %v5129 = vpop.permute.xlu0 %5128
  %5130 = vrot.lane.b32.xlu0 %v4959, 8
  %v5131 = vpop.permute.xlu0 %5130
  %5132 = vrot.lane.b32.xlu0 %v4960, 8
  %v5133 = vpop.permute.xlu0 %5132
  %5134 = vrot.lane.b32.xlu0 %v4961, 8
  %v5135 = vpop.permute.xlu0 %5134
  %5136 = vrot.lane.b32.xlu0 %v4962, 8
  %v5137 = vpop.permute.xlu0 %5136
  %5138 = vrot.lane.b32.xlu0 %v4963, 8
  %v5139 = vpop.permute.xlu0 %5138
  %5140 = vrot.lane.b32.xlu0 %v4964, 8
  %v5141 = vpop.permute.xlu0 %5140
  %5142 = vrot.lane.b32.xlu0 %v4965, 8
  %v5143 = vpop.permute.xlu0 %5142
  %5144 = vrot.lane.b32.xlu0 %v4966, 8
  %v5145 = vpop.permute.xlu0 %5144
  %5146 = vrot.lane.b32.xlu0 %v4967, 8
  %v5147 = vpop.permute.xlu0 %5146
  %5148 = vrot.lane.b32.xlu0 %v4968, 8
  %v5149 = vpop.permute.xlu0 %5148
  %5150 = vrot.lane.b32.xlu0 %v4969, 8
  %v5151 = vpop.permute.xlu0 %5150
  %5152 = vrot.lane.b32.xlu0 %v4970, 8
  %v5153 = vpop.permute.xlu0 %5152
  %5154 = vrot.lane.b32.xlu0 %v4971, 8
  %v5155 = vpop.permute.xlu0 %5154
  %5156 = vrot.lane.b32.xlu0 %v4972, 8
  %v5157 = vpop.permute.xlu0 %5156
  %5158 = vrot.lane.b32.xlu0 %v4973, 8
  %v5159 = vpop.permute.xlu0 %5158
  %5160 = vrot.lane.b32.xlu0 %v4974, 8
  %v5161 = vpop.permute.xlu0 %5160
  %5162 = vrot.lane.b32.xlu0 %v4975, 8
  %v5163 = vpop.permute.xlu0 %5162
  %5164 = vrot.lane.b32.xlu0 %v4976, 8
  %v5165 = vpop.permute.xlu0 %5164
  %5166 = vrot.lane.b32.xlu0 %v4977, 8
  %v5167 = vpop.permute.xlu0 %5166
  %5168 = vrot.lane.b32.xlu0 %v4978, 8
  %v5169 = vpop.permute.xlu0 %5168
  %5170 = vrot.lane.b32.xlu0 %v4979, 8
  %v5171 = vpop.permute.xlu0 %5170
  %vm5236 = vcmask 130112
  %5237 = vst.msk [vmem:[#allocation5] sm:$0xff] %vm5236, %v5045
  %5238 = vst.msk [vmem:[#allocation5 + $0x8] sm:$0xff] %vm5236, %v5047
  %5239 = vst.msk [vmem:[#allocation5 + $0x10] sm:$0xff] %vm5236, %v5049
  %5240 = vst.msk [vmem:[#allocation5 + $0x18] sm:$0xff] %vm5236, %v5051
  %5241 = vst.msk [vmem:[#allocation5 + $0x20] sm:$0xff] %vm5236, %v5053
  %5242 = vst.msk [vmem:[#allocation5 + $0x28] sm:$0xff] %vm5236, %v5055
  %5243 = vst.msk [vmem:[#allocation5 + $0x30] sm:$0xff] %vm5236, %v5057
  %5244 = vst.msk [vmem:[#allocation5 + $0x38] sm:$0xff] %vm5236, %v5059
  %5245 = vst.msk [vmem:[#allocation5 + $0x40] sm:$0xff] %vm5236, %v5061
  %5246 = vst.msk [vmem:[#allocation5 + $0x48] sm:$0xff] %vm5236, %v5063
  %5247 = vst.msk [vmem:[#allocation5 + $0x50] sm:$0xff] %vm5236, %v5065
  %5248 = vst.msk [vmem:[#allocation5 + $0x58] sm:$0xff] %vm5236, %v5067
  %5249 = vst.msk [vmem:[#allocation5 + $0x60] sm:$0xff] %vm5236, %v5069
  %5250 = vst.msk [vmem:[#allocation5 + $0x68] sm:$0xff] %vm5236, %v5071
  %5251 = vst.msk [vmem:[#allocation5 + $0x70] sm:$0xff] %vm5236, %v5073
  %5252 = vst.msk [vmem:[#allocation5 + $0x78] sm:$0xff] %vm5236, %v5075
  %5253 = vst.msk [vmem:[#allocation5 + $0x80] sm:$0xff] %vm5236, %v5077
  %5254 = vst.msk [vmem:[#allocation5 + $0x88] sm:$0xff] %vm5236, %v5079
  %5255 = vst.msk [vmem:[#allocation5 + $0x90] sm:$0xff] %vm5236, %v5081
  %5256 = vst.msk [vmem:[#allocation5 + $0x98] sm:$0xff] %vm5236, %v5083
  %5257 = vst.msk [vmem:[#allocation5 + $0xa0] sm:$0xff] %vm5236, %v5085
  %5258 = vst.msk [vmem:[#allocation5 + $0xa8] sm:$0xff] %vm5236, %v5087
  %5259 = vst.msk [vmem:[#allocation5 + $0xb0] sm:$0xff] %vm5236, %v5089
  %5260 = vst.msk [vmem:[#allocation5 + $0xb8] sm:$0xff] %vm5236, %v5091
  %5261 = vst.msk [vmem:[#allocation5 + $0xc0] sm:$0xff] %vm5236, %v5093
  %5262 = vst.msk [vmem:[#allocation5 + $0xc8] sm:$0xff] %vm5236, %v5095
  %5263 = vst.msk [vmem:[#allocation5 + $0xd0] sm:$0xff] %vm5236, %v5097
  %5264 = vst.msk [vmem:[#allocation5 + $0xd8] sm:$0xff] %vm5236, %v5099
  %5265 = vst.msk [vmem:[#allocation5 + $0xe0] sm:$0xff] %vm5236, %v5101
  %5266 = vst.msk [vmem:[#allocation5 + $0xe8] sm:$0xff] %vm5236, %v5103
  %5267 = vst.msk [vmem:[#allocation5 + $0xf0] sm:$0xff] %vm5236, %v5105
  %5268 = vst.msk [vmem:[#allocation5 + $0xf8] sm:$0xff] %vm5236, %v5107
  %5269 = vst.msk [vmem:[#allocation5 + $0x100] sm:$0xff] %vm5236, %v5109
  %5270 = vst.msk [vmem:[#allocation5 + $0x108] sm:$0xff] %vm5236, %v5111
  %5271 = vst.msk [vmem:[#allocation5 + $0x110] sm:$0xff] %vm5236, %v5113
  %5272 = vst.msk [vmem:[#allocation5 + $0x118] sm:$0xff] %vm5236, %v5115
  %5273 = vst.msk [vmem:[#allocation5 + $0x120] sm:$0xff] %vm5236, %v5117
  %5274 = vst.msk [vmem:[#allocation5 + $0x128] sm:$0xff] %vm5236, %v5119
  %5275 = vst.msk [vmem:[#allocation5 + $0x130] sm:$0xff] %vm5236, %v5121
  %5276 = vst.msk [vmem:[#allocation5 + $0x138] sm:$0xff] %vm5236, %v5123
  %5277 = vst.msk [vmem:[#allocation5 + $0x140] sm:$0xff] %vm5236, %v5125
  %5278 = vst.msk [vmem:[#allocation5 + $0x148] sm:$0xff] %vm5236, %v5127
  %5279 = vst.msk [vmem:[#allocation5 + $0x150] sm:$0xff] %vm5236, %v5129
  %5280 = vst.msk [vmem:[#allocation5 + $0x158] sm:$0xff] %vm5236, %v5131
  %5281 = vst.msk [vmem:[#allocation5 + $0x160] sm:$0xff] %vm5236, %v5133
  %5282 = vst.msk [vmem:[#allocation5 + $0x168] sm:$0xff] %vm5236, %v5135
  %5283 = vst.msk [vmem:[#allocation5 + $0x170] sm:$0xff] %vm5236, %v5137
  %5284 = vst.msk [vmem:[#allocation5 + $0x178] sm:$0xff] %vm5236, %v5139
  %5285 = vst.msk [vmem:[#allocation5 + $0x180] sm:$0xff] %vm5236, %v5141
  %5286 = vst.msk [vmem:[#allocation5 + $0x188] sm:$0xff] %vm5236, %v5143
  %5287 = vst.msk [vmem:[#allocation5 + $0x190] sm:$0xff] %vm5236, %v5145
  %5288 = vst.msk [vmem:[#allocation5 + $0x198] sm:$0xff] %vm5236, %v5147
  %5289 = vst.msk [vmem:[#allocation5 + $0x1a0] sm:$0xff] %vm5236, %v5149
  %5290 = vst.msk [vmem:[#allocation5 + $0x1a8] sm:$0xff] %vm5236, %v5151
  %5291 = vst.msk [vmem:[#allocation5 + $0x1b0] sm:$0xff] %vm5236, %v5153
  %5292 = vst.msk [vmem:[#allocation5 + $0x1b8] sm:$0xff] %vm5236, %v5155
  %5293 = vst.msk [vmem:[#allocation5 + $0x1c0] sm:$0xff] %vm5236, %v5157
  %5294 = vst.msk [vmem:[#allocation5 + $0x1c8] sm:$0xff] %vm5236, %v5159
  %5295 = vst.msk [vmem:[#allocation5 + $0x1d0] sm:$0xff] %vm5236, %v5161
  %5296 = vst.msk [vmem:[#allocation5 + $0x1d8] sm:$0xff] %vm5236, %v5163
  %5297 = vst.msk [vmem:[#allocation5 + $0x1e0] sm:$0xff] %vm5236, %v5165
  %5298 = vst.msk [vmem:[#allocation5 + $0x1e8] sm:$0xff] %vm5236, %v5167
  %5299 = vst.msk [vmem:[#allocation5 + $0x1f0] sm:$0xff] %vm5236, %v5169
  %5300 = vst.msk [vmem:[#allocation5 + $0x1f8] sm:$0xff] %vm5236, %v5171
  %v5301 = vld [vmem:[#allocation4 + $0x2] sm:$0xff]
  %v5302 = vld [vmem:[#allocation4 + $0xa] sm:$0xff]
  %v5303 = vld [vmem:[#allocation4 + $0x1a] sm:$0xff]
  %v5304 = vld [vmem:[#allocation4 + $0x22] sm:$0xff]
  %v5305 = vld [vmem:[#allocation4 + $0x32] sm:$0xff]
  %v5306 = vld [vmem:[#allocation4 + $0x3a] sm:$0xff]
  %v5307 = vld [vmem:[#allocation4 + $0x4a] sm:$0xff]
  %v5308 = vld [vmem:[#allocation4 + $0x52] sm:$0xff]
  %v5309 = vld [vmem:[#allocation4 + $0x62] sm:$0xff]
  %v5310 = vld [vmem:[#allocation4 + $0x6a] sm:$0xff]
  %v5311 = vld [vmem:[#allocation4 + $0x7a] sm:$0xff]
  %v5312 = vld [vmem:[#allocation4 + $0x82] sm:$0xff]
  %v5313 = vld [vmem:[#allocation4 + $0x92] sm:$0xff]
  %v5314 = vld [vmem:[#allocation4 + $0x9a] sm:$0xff]
  %v5315 = vld [vmem:[#allocation4 + $0xaa] sm:$0xff]
  %v5316 = vld [vmem:[#allocation4 + $0xb2] sm:$0xff]
  %v5317 = vld [vmem:[#allocation4 + $0xc2] sm:$0xff]
  %v5318 = vld [vmem:[#allocation4 + $0xca] sm:$0xff]
  %v5319 = vld [vmem:[#allocation4 + $0xda] sm:$0xff]
  %v5320 = vld [vmem:[#allocation4 + $0xe2] sm:$0xff]
  %v5321 = vld [vmem:[#allocation4 + $0xf2] sm:$0xff]
  %v5322 = vld [vmem:[#allocation4 + $0xfa] sm:$0xff]
  %v5323 = vld [vmem:[#allocation4 + $0x10a] sm:$0xff]
  %v5324 = vld [vmem:[#allocation4 + $0x112] sm:$0xff]
  %v5325 = vld [vmem:[#allocation4 + $0x122] sm:$0xff]
  %v5326 = vld [vmem:[#allocation4 + $0x12a] sm:$0xff]
  %v5327 = vld [vmem:[#allocation4 + $0x13a] sm:$0xff]
  %v5328 = vld [vmem:[#allocation4 + $0x142] sm:$0xff]
  %v5329 = vld [vmem:[#allocation4 + $0x152] sm:$0xff]
  %v5330 = vld [vmem:[#allocation4 + $0x15a] sm:$0xff]
  %v5331 = vld [vmem:[#allocation4 + $0x16a] sm:$0xff]
  %v5332 = vld [vmem:[#allocation4 + $0x172] sm:$0xff]
  %v5333 = vld [vmem:[#allocation4 + $0x1b2] sm:$0xff]
  %v5334 = vld [vmem:[#allocation4 + $0x1ba] sm:$0xff]
  %v5335 = vld [vmem:[#allocation4 + $0x1ca] sm:$0xff]
  %v5336 = vld [vmem:[#allocation4 + $0x1d2] sm:$0xff]
  %v5337 = vld [vmem:[#allocation4 + $0x1e2] sm:$0xff]
  %v5338 = vld [vmem:[#allocation4 + $0x1ea] sm:$0xff]
  %v5339 = vld [vmem:[#allocation4 + $0x1fa] sm:$0xff]
  %v5340 = vld [vmem:[#allocation4 + $0x202] sm:$0xff]
  %v5341 = vld [vmem:[#allocation4 + $0x212] sm:$0xff]
  %v5342 = vld [vmem:[#allocation4 + $0x21a] sm:$0xff]
  %v5343 = vld [vmem:[#allocation4 + $0x22a] sm:$0xff]
  %v5344 = vld [vmem:[#allocation4 + $0x232] sm:$0xff]
  %v5345 = vld [vmem:[#allocation4 + $0x242] sm:$0xff]
  %v5346 = vld [vmem:[#allocation4 + $0x24a] sm:$0xff]
  %v5347 = vld [vmem:[#allocation4 + $0x25a] sm:$0xff]
  %v5348 = vld [vmem:[#allocation4 + $0x262] sm:$0xff]
  %v5349 = vld [vmem:[#allocation4 + $0x272] sm:$0xff]
  %v5350 = vld [vmem:[#allocation4 + $0x27a] sm:$0xff]
  %v5351 = vld [vmem:[#allocation4 + $0x28a] sm:$0xff]
  %v5352 = vld [vmem:[#allocation4 + $0x292] sm:$0xff]
  %v5353 = vld [vmem:[#allocation4 + $0x2a2] sm:$0xff]
  %v5354 = vld [vmem:[#allocation4 + $0x2aa] sm:$0xff]
  %v5355 = vld [vmem:[#allocation4 + $0x2ba] sm:$0xff]
  %v5356 = vld [vmem:[#allocation4 + $0x2c2] sm:$0xff]
  %v5357 = vld [vmem:[#allocation4 + $0x2d2] sm:$0xff]
  %v5358 = vld [vmem:[#allocation4 + $0x2da] sm:$0xff]
  %v5359 = vld [vmem:[#allocation4 + $0x2ea] sm:$0xff]
  %v5360 = vld [vmem:[#allocation4 + $0x2f2] sm:$0xff]
  %v5361 = vld [vmem:[#allocation4 + $0x302] sm:$0xff]
  %v5362 = vld [vmem:[#allocation4 + $0x30a] sm:$0xff]
  %v5363 = vld [vmem:[#allocation4 + $0x31a] sm:$0xff]
  %v5364 = vld [vmem:[#allocation4 + $0x322] sm:$0xff]
  %5429 = vrot.lane.b32.xlu0 %v5301, 16
  %v5430 = vpop.permute.xlu0 %5429
  %5431 = vrot.lane.b32.xlu0 %v5302, 16
  %v5432 = vpop.permute.xlu0 %5431
  %5433 = vrot.lane.b32.xlu0 %v5303, 16
  %v5434 = vpop.permute.xlu0 %5433
  %5435 = vrot.lane.b32.xlu0 %v5304, 16
  %v5436 = vpop.permute.xlu0 %5435
  %5437 = vrot.lane.b32.xlu0 %v5305, 16
  %v5438 = vpop.permute.xlu0 %5437
  %5439 = vrot.lane.b32.xlu0 %v5306, 16
  %v5440 = vpop.permute.xlu0 %5439
  %5441 = vrot.lane.b32.xlu0 %v5307, 16
  %v5442 = vpop.permute.xlu0 %5441
  %5443 = vrot.lane.b32.xlu0 %v5308, 16
  %v5444 = vpop.permute.xlu0 %5443
  %5445 = vrot.lane.b32.xlu0 %v5309, 16
  %v5446 = vpop.permute.xlu0 %5445
  %5447 = vrot.lane.b32.xlu0 %v5310, 16
  %v5448 = vpop.permute.xlu0 %5447
  %5449 = vrot.lane.b32.xlu0 %v5311, 16
  %v5450 = vpop.permute.xlu0 %5449
  %5451 = vrot.lane.b32.xlu0 %v5312, 16
  %v5452 = vpop.permute.xlu0 %5451
  %5453 = vrot.lane.b32.xlu0 %v5313, 16
  %v5454 = vpop.permute.xlu0 %5453
  %5455 = vrot.lane.b32.xlu0 %v5314, 16
  %v5456 = vpop.permute.xlu0 %5455
  %5457 = vrot.lane.b32.xlu0 %v5315, 16
  %v5458 = vpop.permute.xlu0 %5457
  %5459 = vrot.lane.b32.xlu0 %v5316, 16
  %v5460 = vpop.permute.xlu0 %5459
  %5461 = vrot.lane.b32.xlu0 %v5317, 16
  %v5462 = vpop.permute.xlu0 %5461
  %5463 = vrot.lane.b32.xlu0 %v5318, 16
  %v5464 = vpop.permute.xlu0 %5463
  %5465 = vrot.lane.b32.xlu0 %v5319, 16
  %v5466 = vpop.permute.xlu0 %5465
  %5467 = vrot.lane.b32.xlu0 %v5320, 16
  %v5468 = vpop.permute.xlu0 %5467
  %5469 = vrot.lane.b32.xlu0 %v5321, 16
  %v5470 = vpop.permute.xlu0 %5469
  %5471 = vrot.lane.b32.xlu0 %v5322, 16
  %v5472 = vpop.permute.xlu0 %5471
  %5473 = vrot.lane.b32.xlu0 %v5323, 16
  %v5474 = vpop.permute.xlu0 %5473
  %5475 = vrot.lane.b32.xlu0 %v5324, 16
  %v5476 = vpop.permute.xlu0 %5475
  %5477 = vrot.lane.b32.xlu0 %v5325, 16
  %v5478 = vpop.permute.xlu0 %5477
  %5479 = vrot.lane.b32.xlu0 %v5326, 16
  %v5480 = vpop.permute.xlu0 %5479
  %5481 = vrot.lane.b32.xlu0 %v5327, 16
  %v5482 = vpop.permute.xlu0 %5481
  %5483 = vrot.lane.b32.xlu0 %v5328, 16
  %v5484 = vpop.permute.xlu0 %5483
  %5485 = vrot.lane.b32.xlu0 %v5329, 16
  %v5486 = vpop.permute.xlu0 %5485
  %5487 = vrot.lane.b32.xlu0 %v5330, 16
  %v5488 = vpop.permute.xlu0 %5487
  %5489 = vrot.lane.b32.xlu0 %v5331, 16
  %v5490 = vpop.permute.xlu0 %5489
  %5491 = vrot.lane.b32.xlu0 %v5332, 16
  %v5492 = vpop.permute.xlu0 %5491
  %5493 = vrot.lane.b32.xlu0 %v5333, 16
  %v5494 = vpop.permute.xlu0 %5493
  %5495 = vrot.lane.b32.xlu0 %v5334, 16
  %v5496 = vpop.permute.xlu0 %5495
  %5497 = vrot.lane.b32.xlu0 %v5335, 16
  %v5498 = vpop.permute.xlu0 %5497
  %5499 = vrot.lane.b32.xlu0 %v5336, 16
  %v5500 = vpop.permute.xlu0 %5499
  %5501 = vrot.lane.b32.xlu0 %v5337, 16
  %v5502 = vpop.permute.xlu0 %5501
  %5503 = vrot.lane.b32.xlu0 %v5338, 16
  %v5504 = vpop.permute.xlu0 %5503
  %5505 = vrot.lane.b32.xlu0 %v5339, 16
  %v5506 = vpop.permute.xlu0 %5505
  %5507 = vrot.lane.b32.xlu0 %v5340, 16
  %v5508 = vpop.permute.xlu0 %5507
  %5509 = vrot.lane.b32.xlu0 %v5341, 16
  %v5510 = vpop.permute.xlu0 %5509
  %5511 = vrot.lane.b32.xlu0 %v5342, 16
  %v5512 = vpop.permute.xlu0 %5511
  %5513 = vrot.lane.b32.xlu0 %v5343, 16
  %v5514 = vpop.permute.xlu0 %5513
  %5515 = vrot.lane.b32.xlu0 %v5344, 16
  %v5516 = vpop.permute.xlu0 %5515
  %5517 = vrot.lane.b32.xlu0 %v5345, 16
  %v5518 = vpop.permute.xlu0 %5517
  %5519 = vrot.lane.b32.xlu0 %v5346, 16
  %v5520 = vpop.permute.xlu0 %5519
  %5521 = vrot.lane.b32.xlu0 %v5347, 16
  %v5522 = vpop.permute.xlu0 %5521
  %5523 = vrot.lane.b32.xlu0 %v5348, 16
  %v5524 = vpop.permute.xlu0 %5523
  %5525 = vrot.lane.b32.xlu0 %v5349, 16
  %v5526 = vpop.permute.xlu0 %5525
  %5527 = vrot.lane.b32.xlu0 %v5350, 16
  %v5528 = vpop.permute.xlu0 %5527
  %5529 = vrot.lane.b32.xlu0 %v5351, 16
  %v5530 = vpop.permute.xlu0 %5529
  %5531 = vrot.lane.b32.xlu0 %v5352, 16
  %v5532 = vpop.permute.xlu0 %5531
  %5533 = vrot.lane.b32.xlu0 %v5353, 16
  %v5534 = vpop.permute.xlu0 %5533
  %5535 = vrot.lane.b32.xlu0 %v5354, 16
  %v5536 = vpop.permute.xlu0 %5535
  %5537 = vrot.lane.b32.xlu0 %v5355, 16
  %v5538 = vpop.permute.xlu0 %5537
  %5539 = vrot.lane.b32.xlu0 %v5356, 16
  %v5540 = vpop.permute.xlu0 %5539
  %5541 = vrot.lane.b32.xlu0 %v5357, 16
  %v5542 = vpop.permute.xlu0 %5541
  %5543 = vrot.lane.b32.xlu0 %v5358, 16
  %v5544 = vpop.permute.xlu0 %5543
  %5545 = vrot.lane.b32.xlu0 %v5359, 16
  %v5546 = vpop.permute.xlu0 %5545
  %5547 = vrot.lane.b32.xlu0 %v5360, 16
  %v5548 = vpop.permute.xlu0 %5547
  %5549 = vrot.lane.b32.xlu0 %v5361, 16
  %v5550 = vpop.permute.xlu0 %5549
  %5551 = vrot.lane.b32.xlu0 %v5362, 16
  %v5552 = vpop.permute.xlu0 %5551
  %5553 = vrot.lane.b32.xlu0 %v5363, 16
  %v5554 = vpop.permute.xlu0 %5553
  %5555 = vrot.lane.b32.xlu0 %v5364, 16
  %v5556 = vpop.permute.xlu0 %5555
  %vm5621 = vcmask 195712
  %5622 = vst.msk [vmem:[#allocation5] sm:$0xff] %vm5621, %v5430
  %5623 = vst.msk [vmem:[#allocation5 + $0x8] sm:$0xff] %vm5621, %v5432
  %5624 = vst.msk [vmem:[#allocation5 + $0x10] sm:$0xff] %vm5621, %v5434
  %5625 = vst.msk [vmem:[#allocation5 + $0x18] sm:$0xff] %vm5621, %v5436
  %5626 = vst.msk [vmem:[#allocation5 + $0x20] sm:$0xff] %vm5621, %v5438
  %5627 = vst.msk [vmem:[#allocation5 + $0x28] sm:$0xff] %vm5621, %v5440
  %5628 = vst.msk [vmem:[#allocation5 + $0x30] sm:$0xff] %vm5621, %v5442
  %5629 = vst.msk [vmem:[#allocation5 + $0x38] sm:$0xff] %vm5621, %v5444
  %5630 = vst.msk [vmem:[#allocation5 + $0x40] sm:$0xff] %vm5621, %v5446
  %5631 = vst.msk [vmem:[#allocation5 + $0x48] sm:$0xff] %vm5621, %v5448
  %5632 = vst.msk [vmem:[#allocation5 + $0x50] sm:$0xff] %vm5621, %v5450
  %5633 = vst.msk [vmem:[#allocation5 + $0x58] sm:$0xff] %vm5621, %v5452
  %5634 = vst.msk [vmem:[#allocation5 + $0x60] sm:$0xff] %vm5621, %v5454
  %5635 = vst.msk [vmem:[#allocation5 + $0x68] sm:$0xff] %vm5621, %v5456
  %5636 = vst.msk [vmem:[#allocation5 + $0x70] sm:$0xff] %vm5621, %v5458
  %5637 = vst.msk [vmem:[#allocation5 + $0x78] sm:$0xff] %vm5621, %v5460
  %5638 = vst.msk [vmem:[#allocation5 + $0x80] sm:$0xff] %vm5621, %v5462
  %5639 = vst.msk [vmem:[#allocation5 + $0x88] sm:$0xff] %vm5621, %v5464
  %5640 = vst.msk [vmem:[#allocation5 + $0x90] sm:$0xff] %vm5621, %v5466
  %5641 = vst.msk [vmem:[#allocation5 + $0x98] sm:$0xff] %vm5621, %v5468
  %5642 = vst.msk [vmem:[#allocation5 + $0xa0] sm:$0xff] %vm5621, %v5470
  %5643 = vst.msk [vmem:[#allocation5 + $0xa8] sm:$0xff] %vm5621, %v5472
  %5644 = vst.msk [vmem:[#allocation5 + $0xb0] sm:$0xff] %vm5621, %v5474
  %5645 = vst.msk [vmem:[#allocation5 + $0xb8] sm:$0xff] %vm5621, %v5476
  %5646 = vst.msk [vmem:[#allocation5 + $0xc0] sm:$0xff] %vm5621, %v5478
  %5647 = vst.msk [vmem:[#allocation5 + $0xc8] sm:$0xff] %vm5621, %v5480
  %5648 = vst.msk [vmem:[#allocation5 + $0xd0] sm:$0xff] %vm5621, %v5482
  %5649 = vst.msk [vmem:[#allocation5 + $0xd8] sm:$0xff] %vm5621, %v5484
  %5650 = vst.msk [vmem:[#allocation5 + $0xe0] sm:$0xff] %vm5621, %v5486
  %5651 = vst.msk [vmem:[#allocation5 + $0xe8] sm:$0xff] %vm5621, %v5488
  %5652 = vst.msk [vmem:[#allocation5 + $0xf0] sm:$0xff] %vm5621, %v5490
  %5653 = vst.msk [vmem:[#allocation5 + $0xf8] sm:$0xff] %vm5621, %v5492
  %5654 = vst.msk [vmem:[#allocation5 + $0x100] sm:$0xff] %vm5621, %v5494
  %5655 = vst.msk [vmem:[#allocation5 + $0x108] sm:$0xff] %vm5621, %v5496
  %5656 = vst.msk [vmem:[#allocation5 + $0x110] sm:$0xff] %vm5621, %v5498
  %5657 = vst.msk [vmem:[#allocation5 + $0x118] sm:$0xff] %vm5621, %v5500
  %5658 = vst.msk [vmem:[#allocation5 + $0x120] sm:$0xff] %vm5621, %v5502
  %5659 = vst.msk [vmem:[#allocation5 + $0x128] sm:$0xff] %vm5621, %v5504
  %5660 = vst.msk [vmem:[#allocation5 + $0x130] sm:$0xff] %vm5621, %v5506
  %5661 = vst.msk [vmem:[#allocation5 + $0x138] sm:$0xff] %vm5621, %v5508
  %5662 = vst.msk [vmem:[#allocation5 + $0x140] sm:$0xff] %vm5621, %v5510
  %5663 = vst.msk [vmem:[#allocation5 + $0x148] sm:$0xff] %vm5621, %v5512
  %5664 = vst.msk [vmem:[#allocation5 + $0x150] sm:$0xff] %vm5621, %v5514
  %5665 = vst.msk [vmem:[#allocation5 + $0x158] sm:$0xff] %vm5621, %v5516
  %5666 = vst.msk [vmem:[#allocation5 + $0x160] sm:$0xff] %vm5621, %v5518
  %5667 = vst.msk [vmem:[#allocation5 + $0x168] sm:$0xff] %vm5621, %v5520
  %5668 = vst.msk [vmem:[#allocation5 + $0x170] sm:$0xff] %vm5621, %v5522
  %5669 = vst.msk [vmem:[#allocation5 + $0x178] sm:$0xff] %vm5621, %v5524
  %5670 = vst.msk [vmem:[#allocation5 + $0x180] sm:$0xff] %vm5621, %v5526
  %5671 = vst.msk [vmem:[#allocation5 + $0x188] sm:$0xff] %vm5621, %v5528
  %5672 = vst.msk [vmem:[#allocation5 + $0x190] sm:$0xff] %vm5621, %v5530
  %5673 = vst.msk [vmem:[#allocation5 + $0x198] sm:$0xff] %vm5621, %v5532
  %5674 = vst.msk [vmem:[#allocation5 + $0x1a0] sm:$0xff] %vm5621, %v5534
  %5675 = vst.msk [vmem:[#allocation5 + $0x1a8] sm:$0xff] %vm5621, %v5536
  %5676 = vst.msk [vmem:[#allocation5 + $0x1b0] sm:$0xff] %vm5621, %v5538
  %5677 = vst.msk [vmem:[#allocation5 + $0x1b8] sm:$0xff] %vm5621, %v5540
  %5678 = vst.msk [vmem:[#allocation5 + $0x1c0] sm:$0xff] %vm5621, %v5542
  %5679 = vst.msk [vmem:[#allocation5 + $0x1c8] sm:$0xff] %vm5621, %v5544
  %5680 = vst.msk [vmem:[#allocation5 + $0x1d0] sm:$0xff] %vm5621, %v5546
  %5681 = vst.msk [vmem:[#allocation5 + $0x1d8] sm:$0xff] %vm5621, %v5548
  %5682 = vst.msk [vmem:[#allocation5 + $0x1e0] sm:$0xff] %vm5621, %v5550
  %5683 = vst.msk [vmem:[#allocation5 + $0x1e8] sm:$0xff] %vm5621, %v5552
  %5684 = vst.msk [vmem:[#allocation5 + $0x1f0] sm:$0xff] %vm5621, %v5554
  %5685 = vst.msk [vmem:[#allocation5 + $0x1f8] sm:$0xff] %vm5621, %v5556
  %v5686 = vld [vmem:[%s4723] sm:$0xff]
  %v5687 = vld [vmem:[%s4723 + $0x8] sm:$0xff]
  %v5688 = vld [vmem:[%s4723 + $0x18] sm:$0xff]
  %v5689 = vld [vmem:[%s4723 + $0x20] sm:$0xff]
  %v5690 = vld [vmem:[%s4723 + $0x30] sm:$0xff]
  %v5691 = vld [vmem:[%s4723 + $0x38] sm:$0xff]
  %v5692 = vld [vmem:[%s4723 + $0x48] sm:$0xff]
  %v5693 = vld [vmem:[%s4723 + $0x50] sm:$0xff]
  %v5694 = vld [vmem:[%s4723 + $0x60] sm:$0xff]
  %v5695 = vld [vmem:[%s4723 + $0x68] sm:$0xff]
  %v5696 = vld [vmem:[%s4723 + $0x78] sm:$0xff]
  %v5697 = vld [vmem:[%s4723 + $0x80] sm:$0xff]
  %v5698 = vld [vmem:[%s4723 + $0x90] sm:$0xff]
  %v5699 = vld [vmem:[%s4723 + $0x98] sm:$0xff]
  %v5700 = vld [vmem:[%s4723 + $0xa8] sm:$0xff]
  %v5701 = vld [vmem:[%s4723 + $0xb0] sm:$0xff]
  %v5702 = vld [vmem:[%s4723 + $0xc0] sm:$0xff]
  %v5703 = vld [vmem:[%s4723 + $0xc8] sm:$0xff]
  %v5704 = vld [vmem:[%s4723 + $0xd8] sm:$0xff]
  %v5705 = vld [vmem:[%s4723 + $0xe0] sm:$0xff]
  %v5706 = vld [vmem:[%s4723 + $0xf0] sm:$0xff]
  %v5707 = vld [vmem:[%s4723 + $0xf8] sm:$0xff]
  %v5708 = vld [vmem:[%s4723 + $0x108] sm:$0xff]
  %v5709 = vld [vmem:[%s4723 + $0x110] sm:$0xff]
  %v5710 = vld [vmem:[%s4723 + $0x120] sm:$0xff]
  %v5711 = vld [vmem:[%s4723 + $0x128] sm:$0xff]
  %v5712 = vld [vmem:[%s4723 + $0x138] sm:$0xff]
  %v5713 = vld [vmem:[%s4723 + $0x140] sm:$0xff]
  %v5714 = vld [vmem:[%s4723 + $0x150] sm:$0xff]
  %v5715 = vld [vmem:[%s4723 + $0x158] sm:$0xff]
  %v5716 = vld [vmem:[%s4723 + $0x168] sm:$0xff]
  %v5717 = vld [vmem:[%s4723 + $0x170] sm:$0xff]
  %v5718 = vld [vmem:[%s4723 + $0x1b0] sm:$0xff]
  %v5719 = vld [vmem:[%s4723 + $0x1b8] sm:$0xff]
  %v5720 = vld [vmem:[%s4723 + $0x1c8] sm:$0xff]
  %v5721 = vld [vmem:[%s4723 + $0x1d0] sm:$0xff]
  %v5722 = vld [vmem:[%s4723 + $0x1e0] sm:$0xff]
  %v5723 = vld [vmem:[%s4723 + $0x1e8] sm:$0xff]
  %v5724 = vld [vmem:[%s4723 + $0x1f8] sm:$0xff]
  %v5725 = vld [vmem:[%s4723 + $0x200] sm:$0xff]
  %v5726 = vld [vmem:[%s4723 + $0x210] sm:$0xff]
  %v5727 = vld [vmem:[%s4723 + $0x218] sm:$0xff]
  %v5728 = vld [vmem:[%s4723 + $0x228] sm:$0xff]
  %v5729 = vld [vmem:[%s4723 + $0x230] sm:$0xff]
  %v5730 = vld [vmem:[%s4723 + $0x240] sm:$0xff]
  %v5731 = vld [vmem:[%s4723 + $0x248] sm:$0xff]
  %v5732 = vld [vmem:[%s4723 + $0x258] sm:$0xff]
  %v5733 = vld [vmem:[%s4723 + $0x260] sm:$0xff]
  %v5734 = vld [vmem:[%s4723 + $0x270] sm:$0xff]
  %v5735 = vld [vmem:[%s4723 + $0x278] sm:$0xff]
  %v5736 = vld [vmem:[%s4723 + $0x288] sm:$0xff]
  %v5737 = vld [vmem:[%s4723 + $0x290] sm:$0xff]
  %v5738 = vld [vmem:[%s4723 + $0x2a0] sm:$0xff]
  %v5739 = vld [vmem:[%s4723 + $0x2a8] sm:$0xff]
  %v5740 = vld [vmem:[%s4723 + $0x2b8] sm:$0xff]
  %v5741 = vld [vmem:[%s4723 + $0x2c0] sm:$0xff]
  %v5742 = vld [vmem:[%s4723 + $0x2d0] sm:$0xff]
  %v5743 = vld [vmem:[%s4723 + $0x2d8] sm:$0xff]
  %v5744 = vld [vmem:[%s4723 + $0x2e8] sm:$0xff]
  %v5745 = vld [vmem:[%s4723 + $0x2f0] sm:$0xff]
  %v5746 = vld [vmem:[%s4723 + $0x300] sm:$0xff]
  %v5747 = vld [vmem:[%s4723 + $0x308] sm:$0xff]
  %v5748 = vld [vmem:[%s4723 + $0x318] sm:$0xff]
  %v5749 = vld [vmem:[%s4723 + $0x320] sm:$0xff]
  %5814 = vrot.lane.b32.xlu0 %v5686, 24
  %v5815 = vpop.permute.xlu0 %5814
  %5816 = vrot.lane.b32.xlu0 %v5687, 24
  %v5817 = vpop.permute.xlu0 %5816
  %5818 = vrot.lane.b32.xlu0 %v5688, 24
  %v5819 = vpop.permute.xlu0 %5818
  %5820 = vrot.lane.b32.xlu0 %v5689, 24
  %v5821 = vpop.permute.xlu0 %5820
  %5822 = vrot.lane.b32.xlu0 %v5690, 24
  %v5823 = vpop.permute.xlu0 %5822
  %5824 = vrot.lane.b32.xlu0 %v5691, 24
  %v5825 = vpop.permute.xlu0 %5824
  %5826 = vrot.lane.b32.xlu0 %v5692, 24
  %v5827 = vpop.permute.xlu0 %5826
  %5828 = vrot.lane.b32.xlu0 %v5693, 24
  %v5829 = vpop.permute.xlu0 %5828
  %5830 = vrot.lane.b32.xlu0 %v5694, 24
  %v5831 = vpop.permute.xlu0 %5830
  %5832 = vrot.lane.b32.xlu0 %v5695, 24
  %v5833 = vpop.permute.xlu0 %5832
  %5834 = vrot.lane.b32.xlu0 %v5696, 24
  %v5835 = vpop.permute.xlu0 %5834
  %5836 = vrot.lane.b32.xlu0 %v5697, 24
  %v5837 = vpop.permute.xlu0 %5836
  %5838 = vrot.lane.b32.xlu0 %v5698, 24
  %v5839 = vpop.permute.xlu0 %5838
  %5840 = vrot.lane.b32.xlu0 %v5699, 24
  %v5841 = vpop.permute.xlu0 %5840
  %5842 = vrot.lane.b32.xlu0 %v5700, 24
  %v5843 = vpop.permute.xlu0 %5842
  %5844 = vrot.lane.b32.xlu0 %v5701, 24
  %v5845 = vpop.permute.xlu0 %5844
  %5846 = vrot.lane.b32.xlu0 %v5702, 24
  %v5847 = vpop.permute.xlu0 %5846
  %5848 = vrot.lane.b32.xlu0 %v5703, 24
  %v5849 = vpop.permute.xlu0 %5848
  %5850 = vrot.lane.b32.xlu0 %v5704, 24
  %v5851 = vpop.permute.xlu0 %5850
  %5852 = vrot.lane.b32.xlu0 %v5705, 24
  %v5853 = vpop.permute.xlu0 %5852
  %5854 = vrot.lane.b32.xlu0 %v5706, 24
  %v5855 = vpop.permute.xlu0 %5854
  %5856 = vrot.lane.b32.xlu0 %v5707, 24
  %v5857 = vpop.permute.xlu0 %5856
  %5858 = vrot.lane.b32.xlu0 %v5708, 24
  %v5859 = vpop.permute.xlu0 %5858
  %5860 = vrot.lane.b32.xlu0 %v5709, 24
  %v5861 = vpop.permute.xlu0 %5860
  %5862 = vrot.lane.b32.xlu0 %v5710, 24
  %v5863 = vpop.permute.xlu0 %5862
  %5864 = vrot.lane.b32.xlu0 %v5711, 24
  %v5865 = vpop.permute.xlu0 %5864
  %5866 = vrot.lane.b32.xlu0 %v5712, 24
  %v5867 = vpop.permute.xlu0 %5866
  %5868 = vrot.lane.b32.xlu0 %v5713, 24
  %v5869 = vpop.permute.xlu0 %5868
  %5870 = vrot.lane.b32.xlu0 %v5714, 24
  %v5871 = vpop.permute.xlu0 %5870
  %5872 = vrot.lane.b32.xlu0 %v5715, 24
  %v5873 = vpop.permute.xlu0 %5872
  %5874 = vrot.lane.b32.xlu0 %v5716, 24
  %v5875 = vpop.permute.xlu0 %5874
  %5876 = vrot.lane.b32.xlu0 %v5717, 24
  %v5877 = vpop.permute.xlu0 %5876
  %5878 = vrot.lane.b32.xlu0 %v5718, 24
  %v5879 = vpop.permute.xlu0 %5878
  %5880 = vrot.lane.b32.xlu0 %v5719, 24
  %v5881 = vpop.permute.xlu0 %5880
  %5882 = vrot.lane.b32.xlu0 %v5720, 24
  %v5883 = vpop.permute.xlu0 %5882
  %5884 = vrot.lane.b32.xlu0 %v5721, 24
  %v5885 = vpop.permute.xlu0 %5884
  %5886 = vrot.lane.b32.xlu0 %v5722, 24
  %v5887 = vpop.permute.xlu0 %5886
  %5888 = vrot.lane.b32.xlu0 %v5723, 24
  %v5889 = vpop.permute.xlu0 %5888
  %5890 = vrot.lane.b32.xlu0 %v5724, 24
  %v5891 = vpop.permute.xlu0 %5890
  %5892 = vrot.lane.b32.xlu0 %v5725, 24
  %v5893 = vpop.permute.xlu0 %5892
  %5894 = vrot.lane.b32.xlu0 %v5726, 24
  %v5895 = vpop.permute.xlu0 %5894
  %5896 = vrot.lane.b32.xlu0 %v5727, 24
  %v5897 = vpop.permute.xlu0 %5896
  %5898 = vrot.lane.b32.xlu0 %v5728, 24
  %v5899 = vpop.permute.xlu0 %5898
  %5900 = vrot.lane.b32.xlu0 %v5729, 24
  %v5901 = vpop.permute.xlu0 %5900
  %5902 = vrot.lane.b32.xlu0 %v5730, 24
  %v5903 = vpop.permute.xlu0 %5902
  %5904 = vrot.lane.b32.xlu0 %v5731, 24
  %v5905 = vpop.permute.xlu0 %5904
  %5906 = vrot.lane.b32.xlu0 %v5732, 24
  %v5907 = vpop.permute.xlu0 %5906
  %5908 = vrot.lane.b32.xlu0 %v5733, 24
  %v5909 = vpop.permute.xlu0 %5908
  %5910 = vrot.lane.b32.xlu0 %v5734, 24
  %v5911 = vpop.permute.xlu0 %5910
  %5912 = vrot.lane.b32.xlu0 %v5735, 24
  %v5913 = vpop.permute.xlu0 %5912
  %5914 = vrot.lane.b32.xlu0 %v5736, 24
  %v5915 = vpop.permute.xlu0 %5914
  %5916 = vrot.lane.b32.xlu0 %v5737, 24
  %v5917 = vpop.permute.xlu0 %5916
  %5918 = vrot.lane.b32.xlu0 %v5738, 24
  %v5919 = vpop.permute.xlu0 %5918
  %5920 = vrot.lane.b32.xlu0 %v5739, 24
  %v5921 = vpop.permute.xlu0 %5920
  %5922 = vrot.lane.b32.xlu0 %v5740, 24
  %v5923 = vpop.permute.xlu0 %5922
  %5924 = vrot.lane.b32.xlu0 %v5741, 24
  %v5925 = vpop.permute.xlu0 %5924
  %5926 = vrot.lane.b32.xlu0 %v5742, 24
  %v5927 = vpop.permute.xlu0 %5926
  %5928 = vrot.lane.b32.xlu0 %v5743, 24
  %v5929 = vpop.permute.xlu0 %5928
  %5930 = vrot.lane.b32.xlu0 %v5744, 24
  %v5931 = vpop.permute.xlu0 %5930
  %5932 = vrot.lane.b32.xlu0 %v5745, 24
  %v5933 = vpop.permute.xlu0 %5932
  %5934 = vrot.lane.b32.xlu0 %v5746, 24
  %v5935 = vpop.permute.xlu0 %5934
  %5936 = vrot.lane.b32.xlu0 %v5747, 24
  %v5937 = vpop.permute.xlu0 %5936
  %5938 = vrot.lane.b32.xlu0 %v5748, 24
  %v5939 = vpop.permute.xlu0 %5938
  %5940 = vrot.lane.b32.xlu0 %v5749, 24
  %v5941 = vpop.permute.xlu0 %5940
  %vm6006 = vcmask 261312
  %6007 = vst.msk [vmem:[#allocation5] sm:$0xff] %vm6006, %v5815
  %6008 = vst.msk [vmem:[#allocation5 + $0x8] sm:$0xff] %vm6006, %v5817
  %6009 = vst.msk [vmem:[#allocation5 + $0x10] sm:$0xff] %vm6006, %v5819
  %6010 = vst.msk [vmem:[#allocation5 + $0x18] sm:$0xff] %vm6006, %v5821
  %6011 = vst.msk [vmem:[#allocation5 + $0x20] sm:$0xff] %vm6006, %v5823
  %6012 = vst.msk [vmem:[#allocation5 + $0x28] sm:$0xff] %vm6006, %v5825
  %6013 = vst.msk [vmem:[#allocation5 + $0x30] sm:$0xff] %vm6006, %v5827
  %6014 = vst.msk [vmem:[#allocation5 + $0x38] sm:$0xff] %vm6006, %v5829
  %6015 = vst.msk [vmem:[#allocation5 + $0x40] sm:$0xff] %vm6006, %v5831
  %6016 = vst.msk [vmem:[#allocation5 + $0x48] sm:$0xff] %vm6006, %v5833
  %6017 = vst.msk [vmem:[#allocation5 + $0x50] sm:$0xff] %vm6006, %v5835
  %6018 = vst.msk [vmem:[#allocation5 + $0x58] sm:$0xff] %vm6006, %v5837
  %6019 = vst.msk [vmem:[#allocation5 + $0x60] sm:$0xff] %vm6006, %v5839
  %6020 = vst.msk [vmem:[#allocation5 + $0x68] sm:$0xff] %vm6006, %v5841
  %6021 = vst.msk [vmem:[#allocation5 + $0x70] sm:$0xff] %vm6006, %v5843
  %6022 = vst.msk [vmem:[#allocation5 + $0x78] sm:$0xff] %vm6006, %v5845
  %6023 = vst.msk [vmem:[#allocation5 + $0x80] sm:$0xff] %vm6006, %v5847
  %6024 = vst.msk [vmem:[#allocation5 + $0x88] sm:$0xff] %vm6006, %v5849
  %6025 = vst.msk [vmem:[#allocation5 + $0x90] sm:$0xff] %vm6006, %v5851
  %6026 = vst.msk [vmem:[#allocation5 + $0x98] sm:$0xff] %vm6006, %v5853
  %6027 = vst.msk [vmem:[#allocation5 + $0xa0] sm:$0xff] %vm6006, %v5855
  %6028 = vst.msk [vmem:[#allocation5 + $0xa8] sm:$0xff] %vm6006, %v5857
  %6029 = vst.msk [vmem:[#allocation5 + $0xb0] sm:$0xff] %vm6006, %v5859
  %6030 = vst.msk [vmem:[#allocation5 + $0xb8] sm:$0xff] %vm6006, %v5861
  %6031 = vst.msk [vmem:[#allocation5 + $0xc0] sm:$0xff] %vm6006, %v5863
  %6032 = vst.msk [vmem:[#allocation5 + $0xc8] sm:$0xff] %vm6006, %v5865
  %6033 = vst.msk [vmem:[#allocation5 + $0xd0] sm:$0xff] %vm6006, %v5867
  %6034 = vst.msk [vmem:[#allocation5 + $0xd8] sm:$0xff] %vm6006, %v5869
  %6035 = vst.msk [vmem:[#allocation5 + $0xe0] sm:$0xff] %vm6006, %v5871
  %6036 = vst.msk [vmem:[#allocation5 + $0xe8] sm:$0xff] %vm6006, %v5873
  %6037 = vst.msk [vmem:[#allocation5 + $0xf0] sm:$0xff] %vm6006, %v5875
  %6038 = vst.msk [vmem:[#allocation5 + $0xf8] sm:$0xff] %vm6006, %v5877
  %6039 = vst.msk [vmem:[#allocation5 + $0x100] sm:$0xff] %vm6006, %v5879
  %6040 = vst.msk [vmem:[#allocation5 + $0x108] sm:$0xff] %vm6006, %v5881
  %6041 = vst.msk [vmem:[#allocation5 + $0x110] sm:$0xff] %vm6006, %v5883
  %6042 = vst.msk [vmem:[#allocation5 + $0x118] sm:$0xff] %vm6006, %v5885
  %6043 = vst.msk [vmem:[#allocation5 + $0x120] sm:$0xff] %vm6006, %v5887
  %6044 = vst.msk [vmem:[#allocation5 + $0x128] sm:$0xff] %vm6006, %v5889
  %6045 = vst.msk [vmem:[#allocation5 + $0x130] sm:$0xff] %vm6006, %v5891
  %6046 = vst.msk [vmem:[#allocation5 + $0x138] sm:$0xff] %vm6006, %v5893
  %6047 = vst.msk [vmem:[#allocation5 + $0x140] sm:$0xff] %vm6006, %v5895
  %6048 = vst.msk [vmem:[#allocation5 + $0x148] sm:$0xff] %vm6006, %v5897
  %6049 = vst.msk [vmem:[#allocation5 + $0x150] sm:$0xff] %vm6006, %v5899
  %6050 = vst.msk [vmem:[#allocation5 + $0x158] sm:$0xff] %vm6006, %v5901
  %6051 = vst.msk [vmem:[#allocation5 + $0x160] sm:$0xff] %vm6006, %v5903
  %6052 = vst.msk [vmem:[#allocation5 + $0x168] sm:$0xff] %vm6006, %v5905
  %6053 = vst.msk [vmem:[#allocation5 + $0x170] sm:$0xff] %vm6006, %v5907
  %6054 = vst.msk [vmem:[#allocation5 + $0x178] sm:$0xff] %vm6006, %v5909
  %6055 = vst.msk [vmem:[#allocation5 + $0x180] sm:$0xff] %vm6006, %v5911
  %6056 = vst.msk [vmem:[#allocation5 + $0x188] sm:$0xff] %vm6006, %v5913
  %6057 = vst.msk [vmem:[#allocation5 + $0x190] sm:$0xff] %vm6006, %v5915
  %6058 = vst.msk [vmem:[#allocation5 + $0x198] sm:$0xff] %vm6006, %v5917
  %6059 = vst.msk [vmem:[#allocation5 + $0x1a0] sm:$0xff] %vm6006, %v5919
  %6060 = vst.msk [vmem:[#allocation5 + $0x1a8] sm:$0xff] %vm6006, %v5921
  %6061 = vst.msk [vmem:[#allocation5 + $0x1b0] sm:$0xff] %vm6006, %v5923
  %6062 = vst.msk [vmem:[#allocation5 + $0x1b8] sm:$0xff] %vm6006, %v5925
  %6063 = vst.msk [vmem:[#allocation5 + $0x1c0] sm:$0xff] %vm6006, %v5927
  %6064 = vst.msk [vmem:[#allocation5 + $0x1c8] sm:$0xff] %vm6006, %v5929
  %6065 = vst.msk [vmem:[#allocation5 + $0x1d0] sm:$0xff] %vm6006, %v5931
  %6066 = vst.msk [vmem:[#allocation5 + $0x1d8] sm:$0xff] %vm6006, %v5933
  %6067 = vst.msk [vmem:[#allocation5 + $0x1e0] sm:$0xff] %vm6006, %v5935
  %6068 = vst.msk [vmem:[#allocation5 + $0x1e8] sm:$0xff] %vm6006, %v5937
  %6069 = vst.msk [vmem:[#allocation5 + $0x1f0] sm:$0xff] %vm6006, %v5939
  %6070 = vst.msk [vmem:[#allocation5 + $0x1f8] sm:$0xff] %vm6006, %v5941
  %v6071 = vld [vmem:[%s4723 + $0x1] sm:$0xff]
  %v6072 = vld [vmem:[%s4723 + $0x9] sm:$0xff]
  %v6073 = vld [vmem:[%s4723 + $0x19] sm:$0xff]
  %v6074 = vld [vmem:[%s4723 + $0x21] sm:$0xff]
  %v6075 = vld [vmem:[%s4723 + $0x31] sm:$0xff]
  %v6076 = vld [vmem:[%s4723 + $0x39] sm:$0xff]
  %v6077 = vld [vmem:[%s4723 + $0x49] sm:$0xff]
  %v6078 = vld [vmem:[%s4723 + $0x51] sm:$0xff]
  %v6079 = vld [vmem:[%s4723 + $0x61] sm:$0xff]
  %v6080 = vld [vmem:[%s4723 + $0x69] sm:$0xff]
  %v6081 = vld [vmem:[%s4723 + $0x79] sm:$0xff]
  %v6082 = vld [vmem:[%s4723 + $0x81] sm:$0xff]
  %v6083 = vld [vmem:[%s4723 + $0x91] sm:$0xff]
  %v6084 = vld [vmem:[%s4723 + $0x99] sm:$0xff]
  %v6085 = vld [vmem:[%s4723 + $0xa9] sm:$0xff]
  %v6086 = vld [vmem:[%s4723 + $0xb1] sm:$0xff]
  %v6087 = vld [vmem:[%s4723 + $0xc1] sm:$0xff]
  %v6088 = vld [vmem:[%s4723 + $0xc9] sm:$0xff]
  %v6089 = vld [vmem:[%s4723 + $0xd9] sm:$0xff]
  %v6090 = vld [vmem:[%s4723 + $0xe1] sm:$0xff]
  %v6091 = vld [vmem:[%s4723 + $0xf1] sm:$0xff]
  %v6092 = vld [vmem:[%s4723 + $0xf9] sm:$0xff]
  %v6093 = vld [vmem:[%s4723 + $0x109] sm:$0xff]
  %v6094 = vld [vmem:[%s4723 + $0x111] sm:$0xff]
  %v6095 = vld [vmem:[%s4723 + $0x121] sm:$0xff]
  %v6096 = vld [vmem:[%s4723 + $0x129] sm:$0xff]
  %v6097 = vld [vmem:[%s4723 + $0x139] sm:$0xff]
  %v6098 = vld [vmem:[%s4723 + $0x141] sm:$0xff]
  %v6099 = vld [vmem:[%s4723 + $0x151] sm:$0xff]
  %v6100 = vld [vmem:[%s4723 + $0x159] sm:$0xff]
  %v6101 = vld [vmem:[%s4723 + $0x169] sm:$0xff]
  %v6102 = vld [vmem:[%s4723 + $0x171] sm:$0xff]
  %v6103 = vld [vmem:[%s4723 + $0x1b1] sm:$0xff]
  %v6104 = vld [vmem:[%s4723 + $0x1b9] sm:$0xff]
  %v6105 = vld [vmem:[%s4723 + $0x1c9] sm:$0xff]
  %v6106 = vld [vmem:[%s4723 + $0x1d1] sm:$0xff]
  %v6107 = vld [vmem:[%s4723 + $0x1e1] sm:$0xff]
  %v6108 = vld [vmem:[%s4723 + $0x1e9] sm:$0xff]
  %v6109 = vld [vmem:[%s4723 + $0x1f9] sm:$0xff]
  %v6110 = vld [vmem:[%s4723 + $0x201] sm:$0xff]
  %v6111 = vld [vmem:[%s4723 + $0x211] sm:$0xff]
  %v6112 = vld [vmem:[%s4723 + $0x219] sm:$0xff]
  %v6113 = vld [vmem:[%s4723 + $0x229] sm:$0xff]
  %v6114 = vld [vmem:[%s4723 + $0x231] sm:$0xff]
  %v6115 = vld [vmem:[%s4723 + $0x241] sm:$0xff]
  %v6116 = vld [vmem:[%s4723 + $0x249] sm:$0xff]
  %v6117 = vld [vmem:[%s4723 + $0x259] sm:$0xff]
  %v6118 = vld [vmem:[%s4723 + $0x261] sm:$0xff]
  %v6119 = vld [vmem:[%s4723 + $0x271] sm:$0xff]
  %v6120 = vld [vmem:[%s4723 + $0x279] sm:$0xff]
  %v6121 = vld [vmem:[%s4723 + $0x289] sm:$0xff]
  %v6122 = vld [vmem:[%s4723 + $0x291] sm:$0xff]
  %v6123 = vld [vmem:[%s4723 + $0x2a1] sm:$0xff]
  %v6124 = vld [vmem:[%s4723 + $0x2a9] sm:$0xff]
  %v6125 = vld [vmem:[%s4723 + $0x2b9] sm:$0xff]
  %v6126 = vld [vmem:[%s4723 + $0x2c1] sm:$0xff]
  %v6127 = vld [vmem:[%s4723 + $0x2d1] sm:$0xff]
  %v6128 = vld [vmem:[%s4723 + $0x2d9] sm:$0xff]
  %v6129 = vld [vmem:[%s4723 + $0x2e9] sm:$0xff]
  %v6130 = vld [vmem:[%s4723 + $0x2f1] sm:$0xff]
  %v6131 = vld [vmem:[%s4723 + $0x301] sm:$0xff]
  %v6132 = vld [vmem:[%s4723 + $0x309] sm:$0xff]
  %v6133 = vld [vmem:[%s4723 + $0x319] sm:$0xff]
  %v6134 = vld [vmem:[%s4723 + $0x321] sm:$0xff]
  %6199 = vrot.lane.b32.xlu0 %v6071, 32
  %v6200 = vpop.permute.xlu0 %6199
  %6201 = vrot.lane.b32.xlu0 %v6072, 32
  %v6202 = vpop.permute.xlu0 %6201
  %6203 = vrot.lane.b32.xlu0 %v6073, 32
  %v6204 = vpop.permute.xlu0 %6203
  %6205 = vrot.lane.b32.xlu0 %v6074, 32
  %v6206 = vpop.permute.xlu0 %6205
  %6207 = vrot.lane.b32.xlu0 %v6075, 32
  %v6208 = vpop.permute.xlu0 %6207
  %6209 = vrot.lane.b32.xlu0 %v6076, 32
  %v6210 = vpop.permute.xlu0 %6209
  %6211 = vrot.lane.b32.xlu0 %v6077, 32
  %v6212 = vpop.permute.xlu0 %6211
  %6213 = vrot.lane.b32.xlu0 %v6078, 32
  %v6214 = vpop.permute.xlu0 %6213
  %6215 = vrot.lane.b32.xlu0 %v6079, 32
  %v6216 = vpop.permute.xlu0 %6215
  %6217 = vrot.lane.b32.xlu0 %v6080, 32
  %v6218 = vpop.permute.xlu0 %6217
  %6219 = vrot.lane.b32.xlu0 %v6081, 32
  %v6220 = vpop.permute.xlu0 %6219
  %6221 = vrot.lane.b32.xlu0 %v6082, 32
  %v6222 = vpop.permute.xlu0 %6221
  %6223 = vrot.lane.b32.xlu0 %v6083, 32
  %v6224 = vpop.permute.xlu0 %6223
  %6225 = vrot.lane.b32.xlu0 %v6084, 32
  %v6226 = vpop.permute.xlu0 %6225
  %6227 = vrot.lane.b32.xlu0 %v6085, 32
  %v6228 = vpop.permute.xlu0 %6227
  %6229 = vrot.lane.b32.xlu0 %v6086, 32
  %v6230 = vpop.permute.xlu0 %6229
  %6231 = vrot.lane.b32.xlu0 %v6087, 32
  %v6232 = vpop.permute.xlu0 %6231
  %6233 = vrot.lane.b32.xlu0 %v6088, 32
  %v6234 = vpop.permute.xlu0 %6233
  %6235 = vrot.lane.b32.xlu0 %v6089, 32
  %v6236 = vpop.permute.xlu0 %6235
  %6237 = vrot.lane.b32.xlu0 %v6090, 32
  %v6238 = vpop.permute.xlu0 %6237
  %6239 = vrot.lane.b32.xlu0 %v6091, 32
  %v6240 = vpop.permute.xlu0 %6239
  %6241 = vrot.lane.b32.xlu0 %v6092, 32
  %v6242 = vpop.permute.xlu0 %6241
  %6243 = vrot.lane.b32.xlu0 %v6093, 32
  %v6244 = vpop.permute.xlu0 %6243
  %6245 = vrot.lane.b32.xlu0 %v6094, 32
  %v6246 = vpop.permute.xlu0 %6245
  %6247 = vrot.lane.b32.xlu0 %v6095, 32
  %v6248 = vpop.permute.xlu0 %6247
  %6249 = vrot.lane.b32.xlu0 %v6096, 32
  %v6250 = vpop.permute.xlu0 %6249
  %6251 = vrot.lane.b32.xlu0 %v6097, 32
  %v6252 = vpop.permute.xlu0 %6251
  %6253 = vrot.lane.b32.xlu0 %v6098, 32
  %v6254 = vpop.permute.xlu0 %6253
  %6255 = vrot.lane.b32.xlu0 %v6099, 32
  %v6256 = vpop.permute.xlu0 %6255
  %6257 = vrot.lane.b32.xlu0 %v6100, 32
  %v6258 = vpop.permute.xlu0 %6257
  %6259 = vrot.lane.b32.xlu0 %v6101, 32
  %v6260 = vpop.permute.xlu0 %6259
  %6261 = vrot.lane.b32.xlu0 %v6102, 32
  %v6262 = vpop.permute.xlu0 %6261
  %6263 = vrot.lane.b32.xlu0 %v6103, 32
  %v6264 = vpop.permute.xlu0 %6263
  %6265 = vrot.lane.b32.xlu0 %v6104, 32
  %v6266 = vpop.permute.xlu0 %6265
  %6267 = vrot.lane.b32.xlu0 %v6105, 32
  %v6268 = vpop.permute.xlu0 %6267
  %6269 = vrot.lane.b32.xlu0 %v6106, 32
  %v6270 = vpop.permute.xlu0 %6269
  %6271 = vrot.lane.b32.xlu0 %v6107, 32
  %v6272 = vpop.permute.xlu0 %6271
  %6273 = vrot.lane.b32.xlu0 %v6108, 32
  %v6274 = vpop.permute.xlu0 %6273
  %6275 = vrot.lane.b32.xlu0 %v6109, 32
  %v6276 = vpop.permute.xlu0 %6275
  %6277 = vrot.lane.b32.xlu0 %v6110, 32
  %v6278 = vpop.permute.xlu0 %6277
  %6279 = vrot.lane.b32.xlu0 %v6111, 32
  %v6280 = vpop.permute.xlu0 %6279
  %6281 = vrot.lane.b32.xlu0 %v6112, 32
  %v6282 = vpop.permute.xlu0 %6281
  %6283 = vrot.lane.b32.xlu0 %v6113, 32
  %v6284 = vpop.permute.xlu0 %6283
  %6285 = vrot.lane.b32.xlu0 %v6114, 32
  %v6286 = vpop.permute.xlu0 %6285
  %6287 = vrot.lane.b32.xlu0 %v6115, 32
  %v6288 = vpop.permute.xlu0 %6287
  %6289 = vrot.lane.b32.xlu0 %v6116, 32
  %v6290 = vpop.permute.xlu0 %6289
  %6291 = vrot.lane.b32.xlu0 %v6117, 32
  %v6292 = vpop.permute.xlu0 %6291
  %6293 = vrot.lane.b32.xlu0 %v6118, 32
  %v6294 = vpop.permute.xlu0 %6293
  %6295 = vrot.lane.b32.xlu0 %v6119, 32
  %v6296 = vpop.permute.xlu0 %6295
  %6297 = vrot.lane.b32.xlu0 %v6120, 32
  %v6298 = vpop.permute.xlu0 %6297
  %6299 = vrot.lane.b32.xlu0 %v6121, 32
  %v6300 = vpop.permute.xlu0 %6299
  %6301 = vrot.lane.b32.xlu0 %v6122, 32
  %v6302 = vpop.permute.xlu0 %6301
  %6303 = vrot.lane.b32.xlu0 %v6123, 32
  %v6304 = vpop.permute.xlu0 %6303
  %6305 = vrot.lane.b32.xlu0 %v6124, 32
  %v6306 = vpop.permute.xlu0 %6305
  %6307 = vrot.lane.b32.xlu0 %v6125, 32
  %v6308 = vpop.permute.xlu0 %6307
  %6309 = vrot.lane.b32.xlu0 %v6126, 32
  %v6310 = vpop.permute.xlu0 %6309
  %6311 = vrot.lane.b32.xlu0 %v6127, 32
  %v6312 = vpop.permute.xlu0 %6311
  %6313 = vrot.lane.b32.xlu0 %v6128, 32
  %v6314 = vpop.permute.xlu0 %6313
  %6315 = vrot.lane.b32.xlu0 %v6129, 32
  %v6316 = vpop.permute.xlu0 %6315
  %6317 = vrot.lane.b32.xlu0 %v6130, 32
  %v6318 = vpop.permute.xlu0 %6317
  %6319 = vrot.lane.b32.xlu0 %v6131, 32
  %v6320 = vpop.permute.xlu0 %6319
  %6321 = vrot.lane.b32.xlu0 %v6132, 32
  %v6322 = vpop.permute.xlu0 %6321
  %6323 = vrot.lane.b32.xlu0 %v6133, 32
  %v6324 = vpop.permute.xlu0 %6323
  %6325 = vrot.lane.b32.xlu0 %v6134, 32
  %v6326 = vpop.permute.xlu0 %6325
  %vm6391 = vcmask 326912
  %6392 = vst.msk [vmem:[#allocation5] sm:$0xff] %vm6391, %v6200
  %6393 = vst.msk [vmem:[#allocation5 + $0x8] sm:$0xff] %vm6391, %v6202
  %6394 = vst.msk [vmem:[#allocation5 + $0x10] sm:$0xff] %vm6391, %v6204
  %6395 = vst.msk [vmem:[#allocation5 + $0x18] sm:$0xff] %vm6391, %v6206
  %6396 = vst.msk [vmem:[#allocation5 + $0x20] sm:$0xff] %vm6391, %v6208
  %6397 = vst.msk [vmem:[#allocation5 + $0x28] sm:$0xff] %vm6391, %v6210
  %6398 = vst.msk [vmem:[#allocation5 + $0x30] sm:$0xff] %vm6391, %v6212
  %6399 = vst.msk [vmem:[#allocation5 + $0x38] sm:$0xff] %vm6391, %v6214
  %6400 = vst.msk [vmem:[#allocation5 + $0x40] sm:$0xff] %vm6391, %v6216
  %6401 = vst.msk [vmem:[#allocation5 + $0x48] sm:$0xff] %vm6391, %v6218
  %6402 = vst.msk [vmem:[#allocation5 + $0x50] sm:$0xff] %vm6391, %v6220
  %6403 = vst.msk [vmem:[#allocation5 + $0x58] sm:$0xff] %vm6391, %v6222
  %6404 = vst.msk [vmem:[#allocation5 + $0x60] sm:$0xff] %vm6391, %v6224
  %6405 = vst.msk [vmem:[#allocation5 + $0x68] sm:$0xff] %vm6391, %v6226
  %6406 = vst.msk [vmem:[#allocation5 + $0x70] sm:$0xff] %vm6391, %v6228
  %6407 = vst.msk [vmem:[#allocation5 + $0x78] sm:$0xff] %vm6391, %v6230
  %6408 = vst.msk [vmem:[#allocation5 + $0x80] sm:$0xff] %vm6391, %v6232
  %6409 = vst.msk [vmem:[#allocation5 + $0x88] sm:$0xff] %vm6391, %v6234
  %6410 = vst.msk [vmem:[#allocation5 + $0x90] sm:$0xff] %vm6391, %v6236
  %6411 = vst.msk [vmem:[#allocation5 + $0x98] sm:$0xff] %vm6391, %v6238
  %6412 = vst.msk [vmem:[#allocation5 + $0xa0] sm:$0xff] %vm6391, %v6240
  %6413 = vst.msk [vmem:[#allocation5 + $0xa8] sm:$0xff] %vm6391, %v6242
  %6414 = vst.msk [vmem:[#allocation5 + $0xb0] sm:$0xff] %vm6391, %v6244
  %6415 = vst.msk [vmem:[#allocation5 + $0xb8] sm:$0xff] %vm6391, %v6246
  %6416 = vst.msk [vmem:[#allocation5 + $0xc0] sm:$0xff] %vm6391, %v6248
  %6417 = vst.msk [vmem:[#allocation5 + $0xc8] sm:$0xff] %vm6391, %v6250
  %6418 = vst.msk [vmem:[#allocation5 + $0xd0] sm:$0xff] %vm6391, %v6252
  %6419 = vst.msk [vmem:[#allocation5 + $0xd8] sm:$0xff] %vm6391, %v6254
  %6420 = vst.msk [vmem:[#allocation5 + $0xe0] sm:$0xff] %vm6391, %v6256
  %6421 = vst.msk [vmem:[#allocation5 + $0xe8] sm:$0xff] %vm6391, %v6258
  %6422 = vst.msk [vmem:[#allocation5 + $0xf0] sm:$0xff] %vm6391, %v6260
  %6423 = vst.msk [vmem:[#allocation5 + $0xf8] sm:$0xff] %vm6391, %v6262
  %6424 = vst.msk [vmem:[#allocation5 + $0x100] sm:$0xff] %vm6391, %v6264
  %6425 = vst.msk [vmem:[#allocation5 + $0x108] sm:$0xff] %vm6391, %v6266
  %6426 = vst.msk [vmem:[#allocation5 + $0x110] sm:$0xff] %vm6391, %v6268
  %6427 = vst.msk [vmem:[#allocation5 + $0x118] sm:$0xff] %vm6391, %v6270
  %6428 = vst.msk [vmem:[#allocation5 + $0x120] sm:$0xff] %vm6391, %v6272
  %6429 = vst.msk [vmem:[#allocation5 + $0x128] sm:$0xff] %vm6391, %v6274
  %6430 = vst.msk [vmem:[#allocation5 + $0x130] sm:$0xff] %vm6391, %v6276
  %6431 = vst.msk [vmem:[#allocation5 + $0x138] sm:$0xff] %vm6391, %v6278
  %6432 = vst.msk [vmem:[#allocation5 + $0x140] sm:$0xff] %vm6391, %v6280
  %6433 = vst.msk [vmem:[#allocation5 + $0x148] sm:$0xff] %vm6391, %v6282
  %6434 = vst.msk [vmem:[#allocation5 + $0x150] sm:$0xff] %vm6391, %v6284
  %6435 = vst.msk [vmem:[#allocation5 + $0x158] sm:$0xff] %vm6391, %v6286
  %6436 = vst.msk [vmem:[#allocation5 + $0x160] sm:$0xff] %vm6391, %v6288
  %6437 = vst.msk [vmem:[#allocation5 + $0x168] sm:$0xff] %vm6391, %v6290
  %6438 = vst.msk [vmem:[#allocation5 + $0x170] sm:$0xff] %vm6391, %v6292
  %6439 = vst.msk [vmem:[#allocation5 + $0x178] sm:$0xff] %vm6391, %v6294
  %6440 = vst.msk [vmem:[#allocation5 + $0x180] sm:$0xff] %vm6391, %v6296
  %6441 = vst.msk [vmem:[#allocation5 + $0x188] sm:$0xff] %vm6391, %v6298
  %6442 = vst.msk [vmem:[#allocation5 + $0x190] sm:$0xff] %vm6391, %v6300
  %6443 = vst.msk [vmem:[#allocation5 + $0x198] sm:$0xff] %vm6391, %v6302
  %6444 = vst.msk [vmem:[#allocation5 + $0x1a0] sm:$0xff] %vm6391, %v6304
  %6445 = vst.msk [vmem:[#allocation5 + $0x1a8] sm:$0xff] %vm6391, %v6306
  %6446 = vst.msk [vmem:[#allocation5 + $0x1b0] sm:$0xff] %vm6391, %v6308
  %6447 = vst.msk [vmem:[#allocation5 + $0x1b8] sm:$0xff] %vm6391, %v6310
  %6448 = vst.msk [vmem:[#allocation5 + $0x1c0] sm:$0xff] %vm6391, %v6312
  %6449 = vst.msk [vmem:[#allocation5 + $0x1c8] sm:$0xff] %vm6391, %v6314
  %6450 = vst.msk [vmem:[#allocation5 + $0x1d0] sm:$0xff] %vm6391, %v6316
  %6451 = vst.msk [vmem:[#allocation5 + $0x1d8] sm:$0xff] %vm6391, %v6318
  %6452 = vst.msk [vmem:[#allocation5 + $0x1e0] sm:$0xff] %vm6391, %v6320
  %6453 = vst.msk [vmem:[#allocation5 + $0x1e8] sm:$0xff] %vm6391, %v6322
  %6454 = vst.msk [vmem:[#allocation5 + $0x1f0] sm:$0xff] %vm6391, %v6324
  %6455 = vst.msk [vmem:[#allocation5 + $0x1f8] sm:$0xff] %vm6391, %v6326
  %v6456 = vld [vmem:[%s4723 + $0x2] sm:$0xff]
  %v6457 = vld [vmem:[%s4723 + $0xa] sm:$0xff]
  %v6458 = vld [vmem:[%s4723 + $0x1a] sm:$0xff]
  %v6459 = vld [vmem:[%s4723 + $0x22] sm:$0xff]
  %v6460 = vld [vmem:[%s4723 + $0x32] sm:$0xff]
  %v6461 = vld [vmem:[%s4723 + $0x3a] sm:$0xff]
  %v6462 = vld [vmem:[%s4723 + $0x4a] sm:$0xff]
  %v6463 = vld [vmem:[%s4723 + $0x52] sm:$0xff]
  %v6464 = vld [vmem:[%s4723 + $0x62] sm:$0xff]
  %v6465 = vld [vmem:[%s4723 + $0x6a] sm:$0xff]
  %v6466 = vld [vmem:[%s4723 + $0x7a] sm:$0xff]
  %v6467 = vld [vmem:[%s4723 + $0x82] sm:$0xff]
  %v6468 = vld [vmem:[%s4723 + $0x92] sm:$0xff]
  %v6469 = vld [vmem:[%s4723 + $0x9a] sm:$0xff]
  %v6470 = vld [vmem:[%s4723 + $0xaa] sm:$0xff]
  %v6471 = vld [vmem:[%s4723 + $0xb2] sm:$0xff]
  %v6472 = vld [vmem:[%s4723 + $0xc2] sm:$0xff]
  %v6473 = vld [vmem:[%s4723 + $0xca] sm:$0xff]
  %v6474 = vld [vmem:[%s4723 + $0xda] sm:$0xff]
  %v6475 = vld [vmem:[%s4723 + $0xe2] sm:$0xff]
  %v6476 = vld [vmem:[%s4723 + $0xf2] sm:$0xff]
  %v6477 = vld [vmem:[%s4723 + $0xfa] sm:$0xff]
  %v6478 = vld [vmem:[%s4723 + $0x10a] sm:$0xff]
  %v6479 = vld [vmem:[%s4723 + $0x112] sm:$0xff]
  %v6480 = vld [vmem:[%s4723 + $0x122] sm:$0xff]
  %v6481 = vld [vmem:[%s4723 + $0x12a] sm:$0xff]
  %v6482 = vld [vmem:[%s4723 + $0x13a] sm:$0xff]
  %v6483 = vld [vmem:[%s4723 + $0x142] sm:$0xff]
  %v6484 = vld [vmem:[%s4723 + $0x152] sm:$0xff]
  %v6485 = vld [vmem:[%s4723 + $0x15a] sm:$0xff]
  %v6486 = vld [vmem:[%s4723 + $0x16a] sm:$0xff]
  %v6487 = vld [vmem:[%s4723 + $0x172] sm:$0xff]
  %v6488 = vld [vmem:[%s4723 + $0x1b2] sm:$0xff]
  %v6489 = vld [vmem:[%s4723 + $0x1ba] sm:$0xff]
  %v6490 = vld [vmem:[%s4723 + $0x1ca] sm:$0xff]
  %v6491 = vld [vmem:[%s4723 + $0x1d2] sm:$0xff]
  %v6492 = vld [vmem:[%s4723 + $0x1e2] sm:$0xff]
  %v6493 = vld [vmem:[%s4723 + $0x1ea] sm:$0xff]
  %v6494 = vld [vmem:[%s4723 + $0x1fa] sm:$0xff]
  %v6495 = vld [vmem:[%s4723 + $0x202] sm:$0xff]
  %v6496 = vld [vmem:[%s4723 + $0x212] sm:$0xff]
  %v6497 = vld [vmem:[%s4723 + $0x21a] sm:$0xff]
  %v6498 = vld [vmem:[%s4723 + $0x22a] sm:$0xff]
  %v6499 = vld [vmem:[%s4723 + $0x232] sm:$0xff]
  %v6500 = vld [vmem:[%s4723 + $0x242] sm:$0xff]
  %v6501 = vld [vmem:[%s4723 + $0x24a] sm:$0xff]
  %v6502 = vld [vmem:[%s4723 + $0x25a] sm:$0xff]
  %v6503 = vld [vmem:[%s4723 + $0x262] sm:$0xff]
  %v6504 = vld [vmem:[%s4723 + $0x272] sm:$0xff]
  %v6505 = vld [vmem:[%s4723 + $0x27a] sm:$0xff]
  %v6506 = vld [vmem:[%s4723 + $0x28a] sm:$0xff]
  %v6507 = vld [vmem:[%s4723 + $0x292] sm:$0xff]
  %v6508 = vld [vmem:[%s4723 + $0x2a2] sm:$0xff]
  %v6509 = vld [vmem:[%s4723 + $0x2aa] sm:$0xff]
  %v6510 = vld [vmem:[%s4723 + $0x2ba] sm:$0xff]
  %v6511 = vld [vmem:[%s4723 + $0x2c2] sm:$0xff]
  %v6512 = vld [vmem:[%s4723 + $0x2d2] sm:$0xff]
  %v6513 = vld [vmem:[%s4723 + $0x2da] sm:$0xff]
  %v6514 = vld [vmem:[%s4723 + $0x2ea] sm:$0xff]
  %v6515 = vld [vmem:[%s4723 + $0x2f2] sm:$0xff]
  %v6516 = vld [vmem:[%s4723 + $0x302] sm:$0xff]
  %v6517 = vld [vmem:[%s4723 + $0x30a] sm:$0xff]
  %v6518 = vld [vmem:[%s4723 + $0x31a] sm:$0xff]
  %v6519 = vld [vmem:[%s4723 + $0x322] sm:$0xff]
  %6584 = vrot.lane.b32.xlu0 %v6456, 40
  %v6585 = vpop.permute.xlu0 %6584
  %6586 = vrot.lane.b32.xlu0 %v6457, 40
  %v6587 = vpop.permute.xlu0 %6586
  %6588 = vrot.lane.b32.xlu0 %v6458, 40
  %v6589 = vpop.permute.xlu0 %6588
  %6590 = vrot.lane.b32.xlu0 %v6459, 40
  %v6591 = vpop.permute.xlu0 %6590
  %6592 = vrot.lane.b32.xlu0 %v6460, 40
  %v6593 = vpop.permute.xlu0 %6592
  %6594 = vrot.lane.b32.xlu0 %v6461, 40
  %v6595 = vpop.permute.xlu0 %6594
  %6596 = vrot.lane.b32.xlu0 %v6462, 40
  %v6597 = vpop.permute.xlu0 %6596
  %6598 = vrot.lane.b32.xlu0 %v6463, 40
  %v6599 = vpop.permute.xlu0 %6598
  %6600 = vrot.lane.b32.xlu0 %v6464, 40
  %v6601 = vpop.permute.xlu0 %6600
  %6602 = vrot.lane.b32.xlu0 %v6465, 40
  %v6603 = vpop.permute.xlu0 %6602
  %6604 = vrot.lane.b32.xlu0 %v6466, 40
  %v6605 = vpop.permute.xlu0 %6604
  %6606 = vrot.lane.b32.xlu0 %v6467, 40
  %v6607 = vpop.permute.xlu0 %6606
  %6608 = vrot.lane.b32.xlu0 %v6468, 40
  %v6609 = vpop.permute.xlu0 %6608
  %6610 = vrot.lane.b32.xlu0 %v6469, 40
  %v6611 = vpop.permute.xlu0 %6610
  %6612 = vrot.lane.b32.xlu0 %v6470, 40
  %v6613 = vpop.permute.xlu0 %6612
  %6614 = vrot.lane.b32.xlu0 %v6471, 40
  %v6615 = vpop.permute.xlu0 %6614
  %6616 = vrot.lane.b32.xlu0 %v6472, 40
  %v6617 = vpop.permute.xlu0 %6616
  %6618 = vrot.lane.b32.xlu0 %v6473, 40
  %v6619 = vpop.permute.xlu0 %6618
  %6620 = vrot.lane.b32.xlu0 %v6474, 40
  %v6621 = vpop.permute.xlu0 %6620
  %6622 = vrot.lane.b32.xlu0 %v6475, 40
  %v6623 = vpop.permute.xlu0 %6622
  %6624 = vrot.lane.b32.xlu0 %v6476, 40
  %v6625 = vpop.permute.xlu0 %6624
  %6626 = vrot.lane.b32.xlu0 %v6477, 40
  %v6627 = vpop.permute.xlu0 %6626
  %6628 = vrot.lane.b32.xlu0 %v6478, 40
  %v6629 = vpop.permute.xlu0 %6628
  %6630 = vrot.lane.b32.xlu0 %v6479, 40
  %v6631 = vpop.permute.xlu0 %6630
  %6632 = vrot.lane.b32.xlu0 %v6480, 40
  %v6633 = vpop.permute.xlu0 %6632
  %6634 = vrot.lane.b32.xlu0 %v6481, 40
  %v6635 = vpop.permute.xlu0 %6634
  %6636 = vrot.lane.b32.xlu0 %v6482, 40
  %v6637 = vpop.permute.xlu0 %6636
  %6638 = vrot.lane.b32.xlu0 %v6483, 40
  %v6639 = vpop.permute.xlu0 %6638
  %6640 = vrot.lane.b32.xlu0 %v6484, 40
  %v6641 = vpop.permute.xlu0 %6640
  %6642 = vrot.lane.b32.xlu0 %v6485, 40
  %v6643 = vpop.permute.xlu0 %6642
  %6644 = vrot.lane.b32.xlu0 %v6486, 40
  %v6645 = vpop.permute.xlu0 %6644
  %6646 = vrot.lane.b32.xlu0 %v6487, 40
  %v6647 = vpop.permute.xlu0 %6646
  %6648 = vrot.lane.b32.xlu0 %v6488, 40
  %v6649 = vpop.permute.xlu0 %6648
  %6650 = vrot.lane.b32.xlu0 %v6489, 40
  %v6651 = vpop.permute.xlu0 %6650
  %6652 = vrot.lane.b32.xlu0 %v6490, 40
  %v6653 = vpop.permute.xlu0 %6652
  %6654 = vrot.lane.b32.xlu0 %v6491, 40
  %v6655 = vpop.permute.xlu0 %6654
  %6656 = vrot.lane.b32.xlu0 %v6492, 40
  %v6657 = vpop.permute.xlu0 %6656
  %6658 = vrot.lane.b32.xlu0 %v6493, 40
  %v6659 = vpop.permute.xlu0 %6658
  %6660 = vrot.lane.b32.xlu0 %v6494, 40
  %v6661 = vpop.permute.xlu0 %6660
  %6662 = vrot.lane.b32.xlu0 %v6495, 40
  %v6663 = vpop.permute.xlu0 %6662
  %6664 = vrot.lane.b32.xlu0 %v6496, 40
  %v6665 = vpop.permute.xlu0 %6664
  %6666 = vrot.lane.b32.xlu0 %v6497, 40
  %v6667 = vpop.permute.xlu0 %6666
  %6668 = vrot.lane.b32.xlu0 %v6498, 40
  %v6669 = vpop.permute.xlu0 %6668
  %6670 = vrot.lane.b32.xlu0 %v6499, 40
  %v6671 = vpop.permute.xlu0 %6670
  %6672 = vrot.lane.b32.xlu0 %v6500, 40
  %v6673 = vpop.permute.xlu0 %6672
  %6674 = vrot.lane.b32.xlu0 %v6501, 40
  %v6675 = vpop.permute.xlu0 %6674
  %6676 = vrot.lane.b32.xlu0 %v6502, 40
  %v6677 = vpop.permute.xlu0 %6676
  %6678 = vrot.lane.b32.xlu0 %v6503, 40
  %v6679 = vpop.permute.xlu0 %6678
  %6680 = vrot.lane.b32.xlu0 %v6504, 40
  %v6681 = vpop.permute.xlu0 %6680
  %6682 = vrot.lane.b32.xlu0 %v6505, 40
  %v6683 = vpop.permute.xlu0 %6682
  %6684 = vrot.lane.b32.xlu0 %v6506, 40
  %v6685 = vpop.permute.xlu0 %6684
  %6686 = vrot.lane.b32.xlu0 %v6507, 40
  %v6687 = vpop.permute.xlu0 %6686
  %6688 = vrot.lane.b32.xlu0 %v6508, 40
  %v6689 = vpop.permute.xlu0 %6688
  %6690 = vrot.lane.b32.xlu0 %v6509, 40
  %v6691 = vpop.permute.xlu0 %6690
  %6692 = vrot.lane.b32.xlu0 %v6510, 40
  %v6693 = vpop.permute.xlu0 %6692
  %6694 = vrot.lane.b32.xlu0 %v6511, 40
  %v6695 = vpop.permute.xlu0 %6694
  %6696 = vrot.lane.b32.xlu0 %v6512, 40
  %v6697 = vpop.permute.xlu0 %6696
  %6698 = vrot.lane.b32.xlu0 %v6513, 40
  %v6699 = vpop.permute.xlu0 %6698
  %6700 = vrot.lane.b32.xlu0 %v6514, 40
  %v6701 = vpop.permute.xlu0 %6700
  %6702 = vrot.lane.b32.xlu0 %v6515, 40
  %v6703 = vpop.permute.xlu0 %6702
  %6704 = vrot.lane.b32.xlu0 %v6516, 40
  %v6705 = vpop.permute.xlu0 %6704
  %6706 = vrot.lane.b32.xlu0 %v6517, 40
  %v6707 = vpop.permute.xlu0 %6706
  %6708 = vrot.lane.b32.xlu0 %v6518, 40
  %v6709 = vpop.permute.xlu0 %6708
  %6710 = vrot.lane.b32.xlu0 %v6519, 40
  %v6711 = vpop.permute.xlu0 %6710
  %vm6776 = vcmask 392512
  %6777 = vst.msk [vmem:[#allocation5] sm:$0xff] %vm6776, %v6585
  %6778 = vst.msk [vmem:[#allocation5 + $0x8] sm:$0xff] %vm6776, %v6587
  %6779 = vst.msk [vmem:[#allocation5 + $0x10] sm:$0xff] %vm6776, %v6589
  %6780 = vst.msk [vmem:[#allocation5 + $0x18] sm:$0xff] %vm6776, %v6591
  %6781 = vst.msk [vmem:[#allocation5 + $0x20] sm:$0xff] %vm6776, %v6593
  %6782 = vst.msk [vmem:[#allocation5 + $0x28] sm:$0xff] %vm6776, %v6595
  %6783 = vst.msk [vmem:[#allocation5 + $0x30] sm:$0xff] %vm6776, %v6597
  %6784 = vst.msk [vmem:[#allocation5 + $0x38] sm:$0xff] %vm6776, %v6599
  %6785 = vst.msk [vmem:[#allocation5 + $0x40] sm:$0xff] %vm6776, %v6601
  %6786 = vst.msk [vmem:[#allocation5 + $0x48] sm:$0xff] %vm6776, %v6603
  %6787 = vst.msk [vmem:[#allocation5 + $0x50] sm:$0xff] %vm6776, %v6605
  %6788 = vst.msk [vmem:[#allocation5 + $0x58] sm:$0xff] %vm6776, %v6607
  %6789 = vst.msk [vmem:[#allocation5 + $0x60] sm:$0xff] %vm6776, %v6609
  %6790 = vst.msk [vmem:[#allocation5 + $0x68] sm:$0xff] %vm6776, %v6611
  %6791 = vst.msk [vmem:[#allocation5 + $0x70] sm:$0xff] %vm6776, %v6613
  %6792 = vst.msk [vmem:[#allocation5 + $0x78] sm:$0xff] %vm6776, %v6615
  %6793 = vst.msk [vmem:[#allocation5 + $0x80] sm:$0xff] %vm6776, %v6617
  %6794 = vst.msk [vmem:[#allocation5 + $0x88] sm:$0xff] %vm6776, %v6619
  %6795 = vst.msk [vmem:[#allocation5 + $0x90] sm:$0xff] %vm6776, %v6621
  %6796 = vst.msk [vmem:[#allocation5 + $0x98] sm:$0xff] %vm6776, %v6623
  %6797 = vst.msk [vmem:[#allocation5 + $0xa0] sm:$0xff] %vm6776, %v6625
  %6798 = vst.msk [vmem:[#allocation5 + $0xa8] sm:$0xff] %vm6776, %v6627
  %6799 = vst.msk [vmem:[#allocation5 + $0xb0] sm:$0xff] %vm6776, %v6629
  %6800 = vst.msk [vmem:[#allocation5 + $0xb8] sm:$0xff] %vm6776, %v6631
  %6801 = vst.msk [vmem:[#allocation5 + $0xc0] sm:$0xff] %vm6776, %v6633
  %6802 = vst.msk [vmem:[#allocation5 + $0xc8] sm:$0xff] %vm6776, %v6635
  %6803 = vst.msk [vmem:[#allocation5 + $0xd0] sm:$0xff] %vm6776, %v6637
  %6804 = vst.msk [vmem:[#allocation5 + $0xd8] sm:$0xff] %vm6776, %v6639
  %6805 = vst.msk [vmem:[#allocation5 + $0xe0] sm:$0xff] %vm6776, %v6641
  %6806 = vst.msk [vmem:[#allocation5 + $0xe8] sm:$0xff] %vm6776, %v6643
  %6807 = vst.msk [vmem:[#allocation5 + $0xf0] sm:$0xff] %vm6776, %v6645
  %6808 = vst.msk [vmem:[#allocation5 + $0xf8] sm:$0xff] %vm6776, %v6647
  %6809 = vst.msk [vmem:[#allocation5 + $0x100] sm:$0xff] %vm6776, %v6649
  %6810 = vst.msk [vmem:[#allocation5 + $0x108] sm:$0xff] %vm6776, %v6651
  %6811 = vst.msk [vmem:[#allocation5 + $0x110] sm:$0xff] %vm6776, %v6653
  %6812 = vst.msk [vmem:[#allocation5 + $0x118] sm:$0xff] %vm6776, %v6655
  %6813 = vst.msk [vmem:[#allocation5 + $0x120] sm:$0xff] %vm6776, %v6657
  %6814 = vst.msk [vmem:[#allocation5 + $0x128] sm:$0xff] %vm6776, %v6659
  %6815 = vst.msk [vmem:[#allocation5 + $0x130] sm:$0xff] %vm6776, %v6661
  %6816 = vst.msk [vmem:[#allocation5 + $0x138] sm:$0xff] %vm6776, %v6663
  %6817 = vst.msk [vmem:[#allocation5 + $0x140] sm:$0xff] %vm6776, %v6665
  %6818 = vst.msk [vmem:[#allocation5 + $0x148] sm:$0xff] %vm6776, %v6667
  %6819 = vst.msk [vmem:[#allocation5 + $0x150] sm:$0xff] %vm6776, %v6669
  %6820 = vst.msk [vmem:[#allocation5 + $0x158] sm:$0xff] %vm6776, %v6671
  %6821 = vst.msk [vmem:[#allocation5 + $0x160] sm:$0xff] %vm6776, %v6673
  %6822 = vst.msk [vmem:[#allocation5 + $0x168] sm:$0xff] %vm6776, %v6675
  %6823 = vst.msk [vmem:[#allocation5 + $0x170] sm:$0xff] %vm6776, %v6677
  %6824 = vst.msk [vmem:[#allocation5 + $0x178] sm:$0xff] %vm6776, %v6679
  %6825 = vst.msk [vmem:[#allocation5 + $0x180] sm:$0xff] %vm6776, %v6681
  %6826 = vst.msk [vmem:[#allocation5 + $0x188] sm:$0xff] %vm6776, %v6683
  %6827 = vst.msk [vmem:[#allocation5 + $0x190] sm:$0xff] %vm6776, %v6685
  %6828 = vst.msk [vmem:[#allocation5 + $0x198] sm:$0xff] %vm6776, %v6687
  %6829 = vst.msk [vmem:[#allocation5 + $0x1a0] sm:$0xff] %vm6776, %v6689
  %6830 = vst.msk [vmem:[#allocation5 + $0x1a8] sm:$0xff] %vm6776, %v6691
  %6831 = vst.msk [vmem:[#allocation5 + $0x1b0] sm:$0xff] %vm6776, %v6693
  %6832 = vst.msk [vmem:[#allocation5 + $0x1b8] sm:$0xff] %vm6776, %v6695
  %6833 = vst.msk [vmem:[#allocation5 + $0x1c0] sm:$0xff] %vm6776, %v6697
  %6834 = vst.msk [vmem:[#allocation5 + $0x1c8] sm:$0xff] %vm6776, %v6699
  %6835 = vst.msk [vmem:[#allocation5 + $0x1d0] sm:$0xff] %vm6776, %v6701
  %6836 = vst.msk [vmem:[#allocation5 + $0x1d8] sm:$0xff] %vm6776, %v6703
  %6837 = vst.msk [vmem:[#allocation5 + $0x1e0] sm:$0xff] %vm6776, %v6705
  %6838 = vst.msk [vmem:[#allocation5 + $0x1e8] sm:$0xff] %vm6776, %v6707
  %6839 = vst.msk [vmem:[#allocation5 + $0x1f0] sm:$0xff] %vm6776, %v6709
  %6840 = vst.msk [vmem:[#allocation5 + $0x1f8] sm:$0xff] %vm6776, %v6711
  %s6841 = scalar_lea.vmem [#allocation4], 48
  %v6842 = vld [vmem:[%s6841] sm:$0xff]
  %v6843 = vld [vmem:[%s6841 + $0x8] sm:$0xff]
  %v6844 = vld [vmem:[%s6841 + $0x18] sm:$0xff]
  %v6845 = vld [vmem:[%s6841 + $0x20] sm:$0xff]
  %v6846 = vld [vmem:[%s6841 + $0x30] sm:$0xff]
  %v6847 = vld [vmem:[%s6841 + $0x38] sm:$0xff]
  %v6848 = vld [vmem:[%s6841 + $0x48] sm:$0xff]
  %v6849 = vld [vmem:[%s6841 + $0x50] sm:$0xff]
  %v6850 = vld [vmem:[%s6841 + $0x60] sm:$0xff]
  %v6851 = vld [vmem:[%s6841 + $0x68] sm:$0xff]
  %v6852 = vld [vmem:[%s6841 + $0x78] sm:$0xff]
  %v6853 = vld [vmem:[%s6841 + $0x80] sm:$0xff]
  %v6854 = vld [vmem:[%s6841 + $0x90] sm:$0xff]
  %v6855 = vld [vmem:[%s6841 + $0x98] sm:$0xff]
  %v6856 = vld [vmem:[%s6841 + $0xa8] sm:$0xff]
  %v6857 = vld [vmem:[%s6841 + $0xb0] sm:$0xff]
  %v6858 = vld [vmem:[%s6841 + $0xc0] sm:$0xff]
  %v6859 = vld [vmem:[%s6841 + $0xc8] sm:$0xff]
  %v6860 = vld [vmem:[%s6841 + $0xd8] sm:$0xff]
  %v6861 = vld [vmem:[%s6841 + $0xe0] sm:$0xff]
  %v6862 = vld [vmem:[%s6841 + $0xf0] sm:$0xff]
  %v6863 = vld [vmem:[%s6841 + $0xf8] sm:$0xff]
  %v6864 = vld [vmem:[%s6841 + $0x108] sm:$0xff]
  %v6865 = vld [vmem:[%s6841 + $0x110] sm:$0xff]
  %v6866 = vld [vmem:[%s6841 + $0x120] sm:$0xff]
  %v6867 = vld [vmem:[%s6841 + $0x128] sm:$0xff]
  %v6868 = vld [vmem:[%s6841 + $0x138] sm:$0xff]
  %v6869 = vld [vmem:[%s6841 + $0x140] sm:$0xff]
  %v6870 = vld [vmem:[%s6841 + $0x150] sm:$0xff]
  %v6871 = vld [vmem:[%s6841 + $0x158] sm:$0xff]
  %v6872 = vld [vmem:[%s6841 + $0x168] sm:$0xff]
  %v6873 = vld [vmem:[%s6841 + $0x170] sm:$0xff]
  %v6874 = vld [vmem:[%s6841 + $0x1b0] sm:$0xff]
  %v6875 = vld [vmem:[%s6841 + $0x1b8] sm:$0xff]
  %v6876 = vld [vmem:[%s6841 + $0x1c8] sm:$0xff]
  %v6877 = vld [vmem:[%s6841 + $0x1d0] sm:$0xff]
  %v6878 = vld [vmem:[%s6841 + $0x1e0] sm:$0xff]
  %v6879 = vld [vmem:[%s6841 + $0x1e8] sm:$0xff]
  %v6880 = vld [vmem:[%s6841 + $0x1f8] sm:$0xff]
  %v6881 = vld [vmem:[%s6841 + $0x200] sm:$0xff]
  %v6882 = vld [vmem:[%s6841 + $0x210] sm:$0xff]
  %v6883 = vld [vmem:[%s6841 + $0x218] sm:$0xff]
  %v6884 = vld [vmem:[%s6841 + $0x228] sm:$0xff]
  %v6885 = vld [vmem:[%s6841 + $0x230] sm:$0xff]
  %v6886 = vld [vmem:[%s6841 + $0x240] sm:$0xff]
  %v6887 = vld [vmem:[%s6841 + $0x248] sm:$0xff]
  %v6888 = vld [vmem:[%s6841 + $0x258] sm:$0xff]
  %v6889 = vld [vmem:[%s6841 + $0x260] sm:$0xff]
  %v6890 = vld [vmem:[%s6841 + $0x270] sm:$0xff]
  %v6891 = vld [vmem:[%s6841 + $0x278] sm:$0xff]
  %v6892 = vld [vmem:[%s6841 + $0x288] sm:$0xff]
  %v6893 = vld [vmem:[%s6841 + $0x290] sm:$0xff]
  %v6894 = vld [vmem:[%s6841 + $0x2a0] sm:$0xff]
  %v6895 = vld [vmem:[%s6841 + $0x2a8] sm:$0xff]
  %v6896 = vld [vmem:[%s6841 + $0x2b8] sm:$0xff]
  %v6897 = vld [vmem:[%s6841 + $0x2c0] sm:$0xff]
  %v6898 = vld [vmem:[%s6841 + $0x2d0] sm:$0xff]
  %v6899 = vld [vmem:[%s6841 + $0x2d8] sm:$0xff]
  %v6900 = vld [vmem:[%s6841 + $0x2e8] sm:$0xff]
  %v6901 = vld [vmem:[%s6841 + $0x2f0] sm:$0xff]
  %v6902 = vld [vmem:[%s6841 + $0x300] sm:$0xff]
  %v6903 = vld [vmem:[%s6841 + $0x308] sm:$0xff]
  %v6904 = vld [vmem:[%s6841 + $0x318] sm:$0xff]
  %v6905 = vld [vmem:[%s6841 + $0x320] sm:$0xff]
  %6970 = vrot.lane.b32.xlu0 %v6842, 48
  %v6971 = vpop.permute.xlu0 %6970
  %6972 = vrot.lane.b32.xlu0 %v6843, 48
  %v6973 = vpop.permute.xlu0 %6972
  %6974 = vrot.lane.b32.xlu0 %v6844, 48
  %v6975 = vpop.permute.xlu0 %6974
  %6976 = vrot.lane.b32.xlu0 %v6845, 48
  %v6977 = vpop.permute.xlu0 %6976
  %6978 = vrot.lane.b32.xlu0 %v6846, 48
  %v6979 = vpop.permute.xlu0 %6978
  %6980 = vrot.lane.b32.xlu0 %v6847, 48
  %v6981 = vpop.permute.xlu0 %6980
  %6982 = vrot.lane.b32.xlu0 %v6848, 48
  %v6983 = vpop.permute.xlu0 %6982
  %6984 = vrot.lane.b32.xlu0 %v6849, 48
  %v6985 = vpop.permute.xlu0 %6984
  %6986 = vrot.lane.b32.xlu0 %v6850, 48
  %v6987 = vpop.permute.xlu0 %6986
  %6988 = vrot.lane.b32.xlu0 %v6851, 48
  %v6989 = vpop.permute.xlu0 %6988
  %6990 = vrot.lane.b32.xlu0 %v6852, 48
  %v6991 = vpop.permute.xlu0 %6990
  %6992 = vrot.lane.b32.xlu0 %v6853, 48
  %v6993 = vpop.permute.xlu0 %6992
  %6994 = vrot.lane.b32.xlu0 %v6854, 48
  %v6995 = vpop.permute.xlu0 %6994
  %6996 = vrot.lane.b32.xlu0 %v6855, 48
  %v6997 = vpop.permute.xlu0 %6996
  %6998 = vrot.lane.b32.xlu0 %v6856, 48
  %v6999 = vpop.permute.xlu0 %6998
  %7000 = vrot.lane.b32.xlu0 %v6857, 48
  %v7001 = vpop.permute.xlu0 %7000
  %7002 = vrot.lane.b32.xlu0 %v6858, 48
  %v7003 = vpop.permute.xlu0 %7002
  %7004 = vrot.lane.b32.xlu0 %v6859, 48
  %v7005 = vpop.permute.xlu0 %7004
  %7006 = vrot.lane.b32.xlu0 %v6860, 48
  %v7007 = vpop.permute.xlu0 %7006
  %7008 = vrot.lane.b32.xlu0 %v6861, 48
  %v7009 = vpop.permute.xlu0 %7008
  %7010 = vrot.lane.b32.xlu0 %v6862, 48
  %v7011 = vpop.permute.xlu0 %7010
  %7012 = vrot.lane.b32.xlu0 %v6863, 48
  %v7013 = vpop.permute.xlu0 %7012
  %7014 = vrot.lane.b32.xlu0 %v6864, 48
  %v7015 = vpop.permute.xlu0 %7014
  %7016 = vrot.lane.b32.xlu0 %v6865, 48
  %v7017 = vpop.permute.xlu0 %7016
  %7018 = vrot.lane.b32.xlu0 %v6866, 48
  %v7019 = vpop.permute.xlu0 %7018
  %7020 = vrot.lane.b32.xlu0 %v6867, 48
  %v7021 = vpop.permute.xlu0 %7020
  %7022 = vrot.lane.b32.xlu0 %v6868, 48
  %v7023 = vpop.permute.xlu0 %7022
  %7024 = vrot.lane.b32.xlu0 %v6869, 48
  %v7025 = vpop.permute.xlu0 %7024
  %7026 = vrot.lane.b32.xlu0 %v6870, 48
  %v7027 = vpop.permute.xlu0 %7026
  %7028 = vrot.lane.b32.xlu0 %v6871, 48
  %v7029 = vpop.permute.xlu0 %7028
  %7030 = vrot.lane.b32.xlu0 %v6872, 48
  %v7031 = vpop.permute.xlu0 %7030
  %7032 = vrot.lane.b32.xlu0 %v6873, 48
  %v7033 = vpop.permute.xlu0 %7032
  %7034 = vrot.lane.b32.xlu0 %v6874, 48
  %v7035 = vpop.permute.xlu0 %7034
  %7036 = vrot.lane.b32.xlu0 %v6875, 48
  %v7037 = vpop.permute.xlu0 %7036
  %7038 = vrot.lane.b32.xlu0 %v6876, 48
  %v7039 = vpop.permute.xlu0 %7038
  %7040 = vrot.lane.b32.xlu0 %v6877, 48
  %v7041 = vpop.permute.xlu0 %7040
  %7042 = vrot.lane.b32.xlu0 %v6878, 48
  %v7043 = vpop.permute.xlu0 %7042
  %7044 = vrot.lane.b32.xlu0 %v6879, 48
  %v7045 = vpop.permute.xlu0 %7044
  %7046 = vrot.lane.b32.xlu0 %v6880, 48
  %v7047 = vpop.permute.xlu0 %7046
  %7048 = vrot.lane.b32.xlu0 %v6881, 48
  %v7049 = vpop.permute.xlu0 %7048
  %7050 = vrot.lane.b32.xlu0 %v6882, 48
  %v7051 = vpop.permute.xlu0 %7050
  %7052 = vrot.lane.b32.xlu0 %v6883, 48
  %v7053 = vpop.permute.xlu0 %7052
  %7054 = vrot.lane.b32.xlu0 %v6884, 48
  %v7055 = vpop.permute.xlu0 %7054
  %7056 = vrot.lane.b32.xlu0 %v6885, 48
  %v7057 = vpop.permute.xlu0 %7056
  %7058 = vrot.lane.b32.xlu0 %v6886, 48
  %v7059 = vpop.permute.xlu0 %7058
  %7060 = vrot.lane.b32.xlu0 %v6887, 48
  %v7061 = vpop.permute.xlu0 %7060
  %7062 = vrot.lane.b32.xlu0 %v6888, 48
  %v7063 = vpop.permute.xlu0 %7062
  %7064 = vrot.lane.b32.xlu0 %v6889, 48
  %v7065 = vpop.permute.xlu0 %7064
  %7066 = vrot.lane.b32.xlu0 %v6890, 48
  %v7067 = vpop.permute.xlu0 %7066
  %7068 = vrot.lane.b32.xlu0 %v6891, 48
  %v7069 = vpop.permute.xlu0 %7068
  %7070 = vrot.lane.b32.xlu0 %v6892, 48
  %v7071 = vpop.permute.xlu0 %7070
  %7072 = vrot.lane.b32.xlu0 %v6893, 48
  %v7073 = vpop.permute.xlu0 %7072
  %7074 = vrot.lane.b32.xlu0 %v6894, 48
  %v7075 = vpop.permute.xlu0 %7074
  %7076 = vrot.lane.b32.xlu0 %v6895, 48
  %v7077 = vpop.permute.xlu0 %7076
  %7078 = vrot.lane.b32.xlu0 %v6896, 48
  %v7079 = vpop.permute.xlu0 %7078
  %7080 = vrot.lane.b32.xlu0 %v6897, 48
  %v7081 = vpop.permute.xlu0 %7080
  %7082 = vrot.lane.b32.xlu0 %v6898, 48
  %v7083 = vpop.permute.xlu0 %7082
  %7084 = vrot.lane.b32.xlu0 %v6899, 48
  %v7085 = vpop.permute.xlu0 %7084
  %7086 = vrot.lane.b32.xlu0 %v6900, 48
  %v7087 = vpop.permute.xlu0 %7086
  %7088 = vrot.lane.b32.xlu0 %v6901, 48
  %v7089 = vpop.permute.xlu0 %7088
  %7090 = vrot.lane.b32.xlu0 %v6902, 48
  %v7091 = vpop.permute.xlu0 %7090
  %7092 = vrot.lane.b32.xlu0 %v6903, 48
  %v7093 = vpop.permute.xlu0 %7092
  %7094 = vrot.lane.b32.xlu0 %v6904, 48
  %v7095 = vpop.permute.xlu0 %7094
  %7096 = vrot.lane.b32.xlu0 %v6905, 48
  %v7097 = vpop.permute.xlu0 %7096
  %vm7162 = vcmask 458112
  %7163 = vst.msk [vmem:[#allocation5] sm:$0xff] %vm7162, %v6971
  %7164 = vst.msk [vmem:[#allocation5 + $0x8] sm:$0xff] %vm7162, %v6973
  %7165 = vst.msk [vmem:[#allocation5 + $0x10] sm:$0xff] %vm7162, %v6975
  %7166 = vst.msk [vmem:[#allocation5 + $0x18] sm:$0xff] %vm7162, %v6977
  %7167 = vst.msk [vmem:[#allocation5 + $0x20] sm:$0xff] %vm7162, %v6979
  %7168 = vst.msk [vmem:[#allocation5 + $0x28] sm:$0xff] %vm7162, %v6981
  %7169 = vst.msk [vmem:[#allocation5 + $0x30] sm:$0xff] %vm7162, %v6983
  %7170 = vst.msk [vmem:[#allocation5 + $0x38] sm:$0xff] %vm7162, %v6985
  %7171 = vst.msk [vmem:[#allocation5 + $0x40] sm:$0xff] %vm7162, %v6987
  %7172 = vst.msk [vmem:[#allocation5 + $0x48] sm:$0xff] %vm7162, %v6989
  %7173 = vst.msk [vmem:[#allocation5 + $0x50] sm:$0xff] %vm7162, %v6991
  %7174 = vst.msk [vmem:[#allocation5 + $0x58] sm:$0xff] %vm7162, %v6993
  %7175 = vst.msk [vmem:[#allocation5 + $0x60] sm:$0xff] %vm7162, %v6995
  %7176 = vst.msk [vmem:[#allocation5 + $0x68] sm:$0xff] %vm7162, %v6997
  %7177 = vst.msk [vmem:[#allocation5 + $0x70] sm:$0xff] %vm7162, %v6999
  %7178 = vst.msk [vmem:[#allocation5 + $0x78] sm:$0xff] %vm7162, %v7001
  %7179 = vst.msk [vmem:[#allocation5 + $0x80] sm:$0xff] %vm7162, %v7003
  %7180 = vst.msk [vmem:[#allocation5 + $0x88] sm:$0xff] %vm7162, %v7005
  %7181 = vst.msk [vmem:[#allocation5 + $0x90] sm:$0xff] %vm7162, %v7007
  %7182 = vst.msk [vmem:[#allocation5 + $0x98] sm:$0xff] %vm7162, %v7009
  %7183 = vst.msk [vmem:[#allocation5 + $0xa0] sm:$0xff] %vm7162, %v7011
  %7184 = vst.msk [vmem:[#allocation5 + $0xa8] sm:$0xff] %vm7162, %v7013
  %7185 = vst.msk [vmem:[#allocation5 + $0xb0] sm:$0xff] %vm7162, %v7015
  %7186 = vst.msk [vmem:[#allocation5 + $0xb8] sm:$0xff] %vm7162, %v7017
  %7187 = vst.msk [vmem:[#allocation5 + $0xc0] sm:$0xff] %vm7162, %v7019
  %7188 = vst.msk [vmem:[#allocation5 + $0xc8] sm:$0xff] %vm7162, %v7021
  %7189 = vst.msk [vmem:[#allocation5 + $0xd0] sm:$0xff] %vm7162, %v7023
  %7190 = vst.msk [vmem:[#allocation5 + $0xd8] sm:$0xff] %vm7162, %v7025
  %7191 = vst.msk [vmem:[#allocation5 + $0xe0] sm:$0xff] %vm7162, %v7027
  %7192 = vst.msk [vmem:[#allocation5 + $0xe8] sm:$0xff] %vm7162, %v7029
  %7193 = vst.msk [vmem:[#allocation5 + $0xf0] sm:$0xff] %vm7162, %v7031
  %7194 = vst.msk [vmem:[#allocation5 + $0xf8] sm:$0xff] %vm7162, %v7033
  %7195 = vst.msk [vmem:[#allocation5 + $0x100] sm:$0xff] %vm7162, %v7035
  %7196 = vst.msk [vmem:[#allocation5 + $0x108] sm:$0xff] %vm7162, %v7037
  %7197 = vst.msk [vmem:[#allocation5 + $0x110] sm:$0xff] %vm7162, %v7039
  %7198 = vst.msk [vmem:[#allocation5 + $0x118] sm:$0xff] %vm7162, %v7041
  %7199 = vst.msk [vmem:[#allocation5 + $0x120] sm:$0xff] %vm7162, %v7043
  %7200 = vst.msk [vmem:[#allocation5 + $0x128] sm:$0xff] %vm7162, %v7045
  %7201 = vst.msk [vmem:[#allocation5 + $0x130] sm:$0xff] %vm7162, %v7047
  %7202 = vst.msk [vmem:[#allocation5 + $0x138] sm:$0xff] %vm7162, %v7049
  %7203 = vst.msk [vmem:[#allocation5 + $0x140] sm:$0xff] %vm7162, %v7051
  %7204 = vst.msk [vmem:[#allocation5 + $0x148] sm:$0xff] %vm7162, %v7053
  %7205 = vst.msk [vmem:[#allocation5 + $0x150] sm:$0xff] %vm7162, %v7055
  %7206 = vst.msk [vmem:[#allocation5 + $0x158] sm:$0xff] %vm7162, %v7057
  %7207 = vst.msk [vmem:[#allocation5 + $0x160] sm:$0xff] %vm7162, %v7059
  %7208 = vst.msk [vmem:[#allocation5 + $0x168] sm:$0xff] %vm7162, %v7061
  %7209 = vst.msk [vmem:[#allocation5 + $0x170] sm:$0xff] %vm7162, %v7063
  %7210 = vst.msk [vmem:[#allocation5 + $0x178] sm:$0xff] %vm7162, %v7065
  %7211 = vst.msk [vmem:[#allocation5 + $0x180] sm:$0xff] %vm7162, %v7067
  %7212 = vst.msk [vmem:[#allocation5 + $0x188] sm:$0xff] %vm7162, %v7069
  %7213 = vst.msk [vmem:[#allocation5 + $0x190] sm:$0xff] %vm7162, %v7071
  %7214 = vst.msk [vmem:[#allocation5 + $0x198] sm:$0xff] %vm7162, %v7073
  %7215 = vst.msk [vmem:[#allocation5 + $0x1a0] sm:$0xff] %vm7162, %v7075
  %7216 = vst.msk [vmem:[#allocation5 + $0x1a8] sm:$0xff] %vm7162, %v7077
  %7217 = vst.msk [vmem:[#allocation5 + $0x1b0] sm:$0xff] %vm7162, %v7079
  %7218 = vst.msk [vmem:[#allocation5 + $0x1b8] sm:$0xff] %vm7162, %v7081
  %7219 = vst.msk [vmem:[#allocation5 + $0x1c0] sm:$0xff] %vm7162, %v7083
  %7220 = vst.msk [vmem:[#allocation5 + $0x1c8] sm:$0xff] %vm7162, %v7085
  %7221 = vst.msk [vmem:[#allocation5 + $0x1d0] sm:$0xff] %vm7162, %v7087
  %7222 = vst.msk [vmem:[#allocation5 + $0x1d8] sm:$0xff] %vm7162, %v7089
  %7223 = vst.msk [vmem:[#allocation5 + $0x1e0] sm:$0xff] %vm7162, %v7091
  %7224 = vst.msk [vmem:[#allocation5 + $0x1e8] sm:$0xff] %vm7162, %v7093
  %7225 = vst.msk [vmem:[#allocation5 + $0x1f0] sm:$0xff] %vm7162, %v7095
  %7226 = vst.msk [vmem:[#allocation5 + $0x1f8] sm:$0xff] %vm7162, %v7097
  %v7227 = vld [vmem:[%s6841 + $0x1] sm:$0xff]
  %v7228 = vld [vmem:[%s6841 + $0x9] sm:$0xff]
  %v7229 = vld [vmem:[%s6841 + $0x19] sm:$0xff]
  %v7230 = vld [vmem:[%s6841 + $0x21] sm:$0xff]
  %v7231 = vld [vmem:[%s6841 + $0x31] sm:$0xff]
  %v7232 = vld [vmem:[%s6841 + $0x39] sm:$0xff]
  %v7233 = vld [vmem:[%s6841 + $0x49] sm:$0xff]
  %v7234 = vld [vmem:[%s6841 + $0x51] sm:$0xff]
  %v7235 = vld [vmem:[%s6841 + $0x61] sm:$0xff]
  %v7236 = vld [vmem:[%s6841 + $0x69] sm:$0xff]
  %v7237 = vld [vmem:[%s6841 + $0x79] sm:$0xff]
  %v7238 = vld [vmem:[%s6841 + $0x81] sm:$0xff]
  %v7239 = vld [vmem:[%s6841 + $0x91] sm:$0xff]
  %v7240 = vld [vmem:[%s6841 + $0x99] sm:$0xff]
  %v7241 = vld [vmem:[%s6841 + $0xa9] sm:$0xff]
  %v7242 = vld [vmem:[%s6841 + $0xb1] sm:$0xff]
  %v7243 = vld [vmem:[%s6841 + $0xc1] sm:$0xff]
  %v7244 = vld [vmem:[%s6841 + $0xc9] sm:$0xff]
  %v7245 = vld [vmem:[%s6841 + $0xd9] sm:$0xff]
  %v7246 = vld [vmem:[%s6841 + $0xe1] sm:$0xff]
  %v7247 = vld [vmem:[%s6841 + $0xf1] sm:$0xff]
  %v7248 = vld [vmem:[%s6841 + $0xf9] sm:$0xff]
  %v7249 = vld [vmem:[%s6841 + $0x109] sm:$0xff]
  %v7250 = vld [vmem:[%s6841 + $0x111] sm:$0xff]
  %v7251 = vld [vmem:[%s6841 + $0x121] sm:$0xff]
  %v7252 = vld [vmem:[%s6841 + $0x129] sm:$0xff]
  %v7253 = vld [vmem:[%s6841 + $0x139] sm:$0xff]
  %v7254 = vld [vmem:[%s6841 + $0x141] sm:$0xff]
  %v7255 = vld [vmem:[%s6841 + $0x151] sm:$0xff]
  %v7256 = vld [vmem:[%s6841 + $0x159] sm:$0xff]
  %v7257 = vld [vmem:[%s6841 + $0x169] sm:$0xff]
  %v7258 = vld [vmem:[%s6841 + $0x171] sm:$0xff]
  %v7259 = vld [vmem:[%s6841 + $0x1b1] sm:$0xff]
  %v7260 = vld [vmem:[%s6841 + $0x1b9] sm:$0xff]
  %v7261 = vld [vmem:[%s6841 + $0x1c9] sm:$0xff]
  %v7262 = vld [vmem:[%s6841 + $0x1d1] sm:$0xff]
  %v7263 = vld [vmem:[%s6841 + $0x1e1] sm:$0xff]
  %v7264 = vld [vmem:[%s6841 + $0x1e9] sm:$0xff]
  %v7265 = vld [vmem:[%s6841 + $0x1f9] sm:$0xff]
  %v7266 = vld [vmem:[%s6841 + $0x201] sm:$0xff]
  %v7267 = vld [vmem:[%s6841 + $0x211] sm:$0xff]
  %v7268 = vld [vmem:[%s6841 + $0x219] sm:$0xff]
  %v7269 = vld [vmem:[%s6841 + $0x229] sm:$0xff]
  %v7270 = vld [vmem:[%s6841 + $0x231] sm:$0xff]
  %v7271 = vld [vmem:[%s6841 + $0x241] sm:$0xff]
  %v7272 = vld [vmem:[%s6841 + $0x249] sm:$0xff]
  %v7273 = vld [vmem:[%s6841 + $0x259] sm:$0xff]
  %v7274 = vld [vmem:[%s6841 + $0x261] sm:$0xff]
  %v7275 = vld [vmem:[%s6841 + $0x271] sm:$0xff]
  %v7276 = vld [vmem:[%s6841 + $0x279] sm:$0xff]
  %v7277 = vld [vmem:[%s6841 + $0x289] sm:$0xff]
  %v7278 = vld [vmem:[%s6841 + $0x291] sm:$0xff]
  %v7279 = vld [vmem:[%s6841 + $0x2a1] sm:$0xff]
  %v7280 = vld [vmem:[%s6841 + $0x2a9] sm:$0xff]
  %v7281 = vld [vmem:[%s6841 + $0x2b9] sm:$0xff]
  %v7282 = vld [vmem:[%s6841 + $0x2c1] sm:$0xff]
  %v7283 = vld [vmem:[%s6841 + $0x2d1] sm:$0xff]
  %v7284 = vld [vmem:[%s6841 + $0x2d9] sm:$0xff]
  %v7285 = vld [vmem:[%s6841 + $0x2e9] sm:$0xff]
  %v7286 = vld [vmem:[%s6841 + $0x2f1] sm:$0xff]
  %v7287 = vld [vmem:[%s6841 + $0x301] sm:$0xff]
  %v7288 = vld [vmem:[%s6841 + $0x309] sm:$0xff]
  %v7289 = vld [vmem:[%s6841 + $0x319] sm:$0xff]
  %v7290 = vld [vmem:[%s6841 + $0x321] sm:$0xff]
  %7355 = vrot.lane.b32.xlu0 %v7227, 56
  %v7356 = vpop.permute.xlu0 %7355
  %7357 = vrot.lane.b32.xlu0 %v7228, 56
  %v7358 = vpop.permute.xlu0 %7357
  %7359 = vrot.lane.b32.xlu0 %v7229, 56
  %v7360 = vpop.permute.xlu0 %7359
  %7361 = vrot.lane.b32.xlu0 %v7230, 56
  %v7362 = vpop.permute.xlu0 %7361
  %7363 = vrot.lane.b32.xlu0 %v7231, 56
  %v7364 = vpop.permute.xlu0 %7363
  %7365 = vrot.lane.b32.xlu0 %v7232, 56
  %v7366 = vpop.permute.xlu0 %7365
  %7367 = vrot.lane.b32.xlu0 %v7233, 56
  %v7368 = vpop.permute.xlu0 %7367
  %7369 = vrot.lane.b32.xlu0 %v7234, 56
  %v7370 = vpop.permute.xlu0 %7369
  %7371 = vrot.lane.b32.xlu0 %v7235, 56
  %v7372 = vpop.permute.xlu0 %7371
  %7373 = vrot.lane.b32.xlu0 %v7236, 56
  %v7374 = vpop.permute.xlu0 %7373
  %7375 = vrot.lane.b32.xlu0 %v7237, 56
  %v7376 = vpop.permute.xlu0 %7375
  %7377 = vrot.lane.b32.xlu0 %v7238, 56
  %v7378 = vpop.permute.xlu0 %7377
  %7379 = vrot.lane.b32.xlu0 %v7239, 56
  %v7380 = vpop.permute.xlu0 %7379
  %7381 = vrot.lane.b32.xlu0 %v7240, 56
  %v7382 = vpop.permute.xlu0 %7381
  %7383 = vrot.lane.b32.xlu0 %v7241, 56
  %v7384 = vpop.permute.xlu0 %7383
  %7385 = vrot.lane.b32.xlu0 %v7242, 56
  %v7386 = vpop.permute.xlu0 %7385
  %7387 = vrot.lane.b32.xlu0 %v7243, 56
  %v7388 = vpop.permute.xlu0 %7387
  %7389 = vrot.lane.b32.xlu0 %v7244, 56
  %v7390 = vpop.permute.xlu0 %7389
  %7391 = vrot.lane.b32.xlu0 %v7245, 56
  %v7392 = vpop.permute.xlu0 %7391
  %7393 = vrot.lane.b32.xlu0 %v7246, 56
  %v7394 = vpop.permute.xlu0 %7393
  %7395 = vrot.lane.b32.xlu0 %v7247, 56
  %v7396 = vpop.permute.xlu0 %7395
  %7397 = vrot.lane.b32.xlu0 %v7248, 56
  %v7398 = vpop.permute.xlu0 %7397
  %7399 = vrot.lane.b32.xlu0 %v7249, 56
  %v7400 = vpop.permute.xlu0 %7399
  %7401 = vrot.lane.b32.xlu0 %v7250, 56
  %v7402 = vpop.permute.xlu0 %7401
  %7403 = vrot.lane.b32.xlu0 %v7251, 56
  %v7404 = vpop.permute.xlu0 %7403
  %7405 = vrot.lane.b32.xlu0 %v7252, 56
  %v7406 = vpop.permute.xlu0 %7405
  %7407 = vrot.lane.b32.xlu0 %v7253, 56
  %v7408 = vpop.permute.xlu0 %7407
  %7409 = vrot.lane.b32.xlu0 %v7254, 56
  %v7410 = vpop.permute.xlu0 %7409
  %7411 = vrot.lane.b32.xlu0 %v7255, 56
  %v7412 = vpop.permute.xlu0 %7411
  %7413 = vrot.lane.b32.xlu0 %v7256, 56
  %v7414 = vpop.permute.xlu0 %7413
  %7415 = vrot.lane.b32.xlu0 %v7257, 56
  %v7416 = vpop.permute.xlu0 %7415
  %7417 = vrot.lane.b32.xlu0 %v7258, 56
  %v7418 = vpop.permute.xlu0 %7417
  %7419 = vrot.lane.b32.xlu0 %v7259, 56
  %v7420 = vpop.permute.xlu0 %7419
  %7421 = vrot.lane.b32.xlu0 %v7260, 56
  %v7422 = vpop.permute.xlu0 %7421
  %7423 = vrot.lane.b32.xlu0 %v7261, 56
  %v7424 = vpop.permute.xlu0 %7423
  %7425 = vrot.lane.b32.xlu0 %v7262, 56
  %v7426 = vpop.permute.xlu0 %7425
  %7427 = vrot.lane.b32.xlu0 %v7263, 56
  %v7428 = vpop.permute.xlu0 %7427
  %7429 = vrot.lane.b32.xlu0 %v7264, 56
  %v7430 = vpop.permute.xlu0 %7429
  %7431 = vrot.lane.b32.xlu0 %v7265, 56
  %v7432 = vpop.permute.xlu0 %7431
  %7433 = vrot.lane.b32.xlu0 %v7266, 56
  %v7434 = vpop.permute.xlu0 %7433
  %7435 = vrot.lane.b32.xlu0 %v7267, 56
  %v7436 = vpop.permute.xlu0 %7435
  %7437 = vrot.lane.b32.xlu0 %v7268, 56
  %v7438 = vpop.permute.xlu0 %7437
  %7439 = vrot.lane.b32.xlu0 %v7269, 56
  %v7440 = vpop.permute.xlu0 %7439
  %7441 = vrot.lane.b32.xlu0 %v7270, 56
  %v7442 = vpop.permute.xlu0 %7441
  %7443 = vrot.lane.b32.xlu0 %v7271, 56
  %v7444 = vpop.permute.xlu0 %7443
  %7445 = vrot.lane.b32.xlu0 %v7272, 56
  %v7446 = vpop.permute.xlu0 %7445
  %7447 = vrot.lane.b32.xlu0 %v7273, 56
  %v7448 = vpop.permute.xlu0 %7447
  %7449 = vrot.lane.b32.xlu0 %v7274, 56
  %v7450 = vpop.permute.xlu0 %7449
  %7451 = vrot.lane.b32.xlu0 %v7275, 56
  %v7452 = vpop.permute.xlu0 %7451
  %7453 = vrot.lane.b32.xlu0 %v7276, 56
  %v7454 = vpop.permute.xlu0 %7453
  %7455 = vrot.lane.b32.xlu0 %v7277, 56
  %v7456 = vpop.permute.xlu0 %7455
  %7457 = vrot.lane.b32.xlu0 %v7278, 56
  %v7458 = vpop.permute.xlu0 %7457
  %7459 = vrot.lane.b32.xlu0 %v7279, 56
  %v7460 = vpop.permute.xlu0 %7459
  %7461 = vrot.lane.b32.xlu0 %v7280, 56
  %v7462 = vpop.permute.xlu0 %7461
  %7463 = vrot.lane.b32.xlu0 %v7281, 56
  %v7464 = vpop.permute.xlu0 %7463
  %7465 = vrot.lane.b32.xlu0 %v7282, 56
  %v7466 = vpop.permute.xlu0 %7465
  %7467 = vrot.lane.b32.xlu0 %v7283, 56
  %v7468 = vpop.permute.xlu0 %7467
  %7469 = vrot.lane.b32.xlu0 %v7284, 56
  %v7470 = vpop.permute.xlu0 %7469
  %7471 = vrot.lane.b32.xlu0 %v7285, 56
  %v7472 = vpop.permute.xlu0 %7471
  %7473 = vrot.lane.b32.xlu0 %v7286, 56
  %v7474 = vpop.permute.xlu0 %7473
  %7475 = vrot.lane.b32.xlu0 %v7287, 56
  %v7476 = vpop.permute.xlu0 %7475
  %7477 = vrot.lane.b32.xlu0 %v7288, 56
  %v7478 = vpop.permute.xlu0 %7477
  %7479 = vrot.lane.b32.xlu0 %v7289, 56
  %v7480 = vpop.permute.xlu0 %7479
  %7481 = vrot.lane.b32.xlu0 %v7290, 56
  %v7482 = vpop.permute.xlu0 %7481
  %vm7547 = vcmask 523712
  %7548 = vst.msk [vmem:[#allocation5] sm:$0xff] %vm7547, %v7356
  %7549 = vst.msk [vmem:[#allocation5 + $0x8] sm:$0xff] %vm7547, %v7358
  %7550 = vst.msk [vmem:[#allocation5 + $0x10] sm:$0xff] %vm7547, %v7360
  %7551 = vst.msk [vmem:[#allocation5 + $0x18] sm:$0xff] %vm7547, %v7362
  %7552 = vst.msk [vmem:[#allocation5 + $0x20] sm:$0xff] %vm7547, %v7364
  %7553 = vst.msk [vmem:[#allocation5 + $0x28] sm:$0xff] %vm7547, %v7366
  %7554 = vst.msk [vmem:[#allocation5 + $0x30] sm:$0xff] %vm7547, %v7368
  %7555 = vst.msk [vmem:[#allocation5 + $0x38] sm:$0xff] %vm7547, %v7370
  %7556 = vst.msk [vmem:[#allocation5 + $0x40] sm:$0xff] %vm7547, %v7372
  %7557 = vst.msk [vmem:[#allocation5 + $0x48] sm:$0xff] %vm7547, %v7374
  %7558 = vst.msk [vmem:[#allocation5 + $0x50] sm:$0xff] %vm7547, %v7376
  %7559 = vst.msk [vmem:[#allocation5 + $0x58] sm:$0xff] %vm7547, %v7378
  %7560 = vst.msk [vmem:[#allocation5 + $0x60] sm:$0xff] %vm7547, %v7380
  %7561 = vst.msk [vmem:[#allocation5 + $0x68] sm:$0xff] %vm7547, %v7382
  %7562 = vst.msk [vmem:[#allocation5 + $0x70] sm:$0xff] %vm7547, %v7384
  %7563 = vst.msk [vmem:[#allocation5 + $0x78] sm:$0xff] %vm7547, %v7386
  %7564 = vst.msk [vmem:[#allocation5 + $0x80] sm:$0xff] %vm7547, %v7388
  %7565 = vst.msk [vmem:[#allocation5 + $0x88] sm:$0xff] %vm7547, %v7390
  %7566 = vst.msk [vmem:[#allocation5 + $0x90] sm:$0xff] %vm7547, %v7392
  %7567 = vst.msk [vmem:[#allocation5 + $0x98] sm:$0xff] %vm7547, %v7394
  %7568 = vst.msk [vmem:[#allocation5 + $0xa0] sm:$0xff] %vm7547, %v7396
  %7569 = vst.msk [vmem:[#allocation5 + $0xa8] sm:$0xff] %vm7547, %v7398
  %7570 = vst.msk [vmem:[#allocation5 + $0xb0] sm:$0xff] %vm7547, %v7400
  %7571 = vst.msk [vmem:[#allocation5 + $0xb8] sm:$0xff] %vm7547, %v7402
  %7572 = vst.msk [vmem:[#allocation5 + $0xc0] sm:$0xff] %vm7547, %v7404
  %7573 = vst.msk [vmem:[#allocation5 + $0xc8] sm:$0xff] %vm7547, %v7406
  %7574 = vst.msk [vmem:[#allocation5 + $0xd0] sm:$0xff] %vm7547, %v7408
  %7575 = vst.msk [vmem:[#allocation5 + $0xd8] sm:$0xff] %vm7547, %v7410
  %7576 = vst.msk [vmem:[#allocation5 + $0xe0] sm:$0xff] %vm7547, %v7412
  %7577 = vst.msk [vmem:[#allocation5 + $0xe8] sm:$0xff] %vm7547, %v7414
  %7578 = vst.msk [vmem:[#allocation5 + $0xf0] sm:$0xff] %vm7547, %v7416
  %7579 = vst.msk [vmem:[#allocation5 + $0xf8] sm:$0xff] %vm7547, %v7418
  %7580 = vst.msk [vmem:[#allocation5 + $0x100] sm:$0xff] %vm7547, %v7420
  %7581 = vst.msk [vmem:[#allocation5 + $0x108] sm:$0xff] %vm7547, %v7422
  %7582 = vst.msk [vmem:[#allocation5 + $0x110] sm:$0xff] %vm7547, %v7424
  %7583 = vst.msk [vmem:[#allocation5 + $0x118] sm:$0xff] %vm7547, %v7426
  %7584 = vst.msk [vmem:[#allocation5 + $0x120] sm:$0xff] %vm7547, %v7428
  %7585 = vst.msk [vmem:[#allocation5 + $0x128] sm:$0xff] %vm7547, %v7430
  %7586 = vst.msk [vmem:[#allocation5 + $0x130] sm:$0xff] %vm7547, %v7432
  %7587 = vst.msk [vmem:[#allocation5 + $0x138] sm:$0xff] %vm7547, %v7434
  %7588 = vst.msk [vmem:[#allocation5 + $0x140] sm:$0xff] %vm7547, %v7436
  %7589 = vst.msk [vmem:[#allocation5 + $0x148] sm:$0xff] %vm7547, %v7438
  %7590 = vst.msk [vmem:[#allocation5 + $0x150] sm:$0xff] %vm7547, %v7440
  %7591 = vst.msk [vmem:[#allocation5 + $0x158] sm:$0xff] %vm7547, %v7442
  %7592 = vst.msk [vmem:[#allocation5 + $0x160] sm:$0xff] %vm7547, %v7444
  %7593 = vst.msk [vmem:[#allocation5 + $0x168] sm:$0xff] %vm7547, %v7446
  %7594 = vst.msk [vmem:[#allocation5 + $0x170] sm:$0xff] %vm7547, %v7448
  %7595 = vst.msk [vmem:[#allocation5 + $0x178] sm:$0xff] %vm7547, %v7450
  %7596 = vst.msk [vmem:[#allocation5 + $0x180] sm:$0xff] %vm7547, %v7452
  %7597 = vst.msk [vmem:[#allocation5 + $0x188] sm:$0xff] %vm7547, %v7454
  %7598 = vst.msk [vmem:[#allocation5 + $0x190] sm:$0xff] %vm7547, %v7456
  %7599 = vst.msk [vmem:[#allocation5 + $0x198] sm:$0xff] %vm7547, %v7458
  %7600 = vst.msk [vmem:[#allocation5 + $0x1a0] sm:$0xff] %vm7547, %v7460
  %7601 = vst.msk [vmem:[#allocation5 + $0x1a8] sm:$0xff] %vm7547, %v7462
  %7602 = vst.msk [vmem:[#allocation5 + $0x1b0] sm:$0xff] %vm7547, %v7464
  %7603 = vst.msk [vmem:[#allocation5 + $0x1b8] sm:$0xff] %vm7547, %v7466
  %7604 = vst.msk [vmem:[#allocation5 + $0x1c0] sm:$0xff] %vm7547, %v7468
  %7605 = vst.msk [vmem:[#allocation5 + $0x1c8] sm:$0xff] %vm7547, %v7470
  %7606 = vst.msk [vmem:[#allocation5 + $0x1d0] sm:$0xff] %vm7547, %v7472
  %7607 = vst.msk [vmem:[#allocation5 + $0x1d8] sm:$0xff] %vm7547, %v7474
  %7608 = vst.msk [vmem:[#allocation5 + $0x1e0] sm:$0xff] %vm7547, %v7476
  %7609 = vst.msk [vmem:[#allocation5 + $0x1e8] sm:$0xff] %vm7547, %v7478
  %7610 = vst.msk [vmem:[#allocation5 + $0x1f0] sm:$0xff] %vm7547, %v7480
  %7611 = vst.msk [vmem:[#allocation5 + $0x1f8] sm:$0xff] %vm7547, %v7482
  %v7612 = vld [vmem:[%s6841 + $0x2] sm:$0xff]
  %v7613 = vld [vmem:[%s6841 + $0xa] sm:$0xff]
  %v7614 = vld [vmem:[%s6841 + $0x1a] sm:$0xff]
  %v7615 = vld [vmem:[%s6841 + $0x22] sm:$0xff]
  %v7616 = vld [vmem:[%s6841 + $0x32] sm:$0xff]
  %v7617 = vld [vmem:[%s6841 + $0x3a] sm:$0xff]
  %v7618 = vld [vmem:[%s6841 + $0x4a] sm:$0xff]
  %v7619 = vld [vmem:[%s6841 + $0x52] sm:$0xff]
  %v7620 = vld [vmem:[%s6841 + $0x62] sm:$0xff]
  %v7621 = vld [vmem:[%s6841 + $0x6a] sm:$0xff]
  %v7622 = vld [vmem:[%s6841 + $0x7a] sm:$0xff]
  %v7623 = vld [vmem:[%s6841 + $0x82] sm:$0xff]
  %v7624 = vld [vmem:[%s6841 + $0x92] sm:$0xff]
  %v7625 = vld [vmem:[%s6841 + $0x9a] sm:$0xff]
  %v7626 = vld [vmem:[%s6841 + $0xaa] sm:$0xff]
  %v7627 = vld [vmem:[%s6841 + $0xb2] sm:$0xff]
  %v7628 = vld [vmem:[%s6841 + $0xc2] sm:$0xff]
  %v7629 = vld [vmem:[%s6841 + $0xca] sm:$0xff]
  %v7630 = vld [vmem:[%s6841 + $0xda] sm:$0xff]
  %v7631 = vld [vmem:[%s6841 + $0xe2] sm:$0xff]
  %v7632 = vld [vmem:[%s6841 + $0xf2] sm:$0xff]
  %v7633 = vld [vmem:[%s6841 + $0xfa] sm:$0xff]
  %v7634 = vld [vmem:[%s6841 + $0x10a] sm:$0xff]
  %v7635 = vld [vmem:[%s6841 + $0x112] sm:$0xff]
  %v7636 = vld [vmem:[%s6841 + $0x122] sm:$0xff]
  %v7637 = vld [vmem:[%s6841 + $0x12a] sm:$0xff]
  %v7638 = vld [vmem:[%s6841 + $0x13a] sm:$0xff]
  %v7639 = vld [vmem:[%s6841 + $0x142] sm:$0xff]
  %v7640 = vld [vmem:[%s6841 + $0x152] sm:$0xff]
  %v7641 = vld [vmem:[%s6841 + $0x15a] sm:$0xff]
  %v7642 = vld [vmem:[%s6841 + $0x16a] sm:$0xff]
  %v7643 = vld [vmem:[%s6841 + $0x172] sm:$0xff]
  %v7644 = vld [vmem:[%s6841 + $0x1b2] sm:$0xff]
  %v7645 = vld [vmem:[%s6841 + $0x1ba] sm:$0xff]
  %v7646 = vld [vmem:[%s6841 + $0x1ca] sm:$0xff]
  %v7647 = vld [vmem:[%s6841 + $0x1d2] sm:$0xff]
  %v7648 = vld [vmem:[%s6841 + $0x1e2] sm:$0xff]
  %v7649 = vld [vmem:[%s6841 + $0x1ea] sm:$0xff]
  %v7650 = vld [vmem:[%s6841 + $0x1fa] sm:$0xff]
  %v7651 = vld [vmem:[%s6841 + $0x202] sm:$0xff]
  %v7652 = vld [vmem:[%s6841 + $0x212] sm:$0xff]
  %v7653 = vld [vmem:[%s6841 + $0x21a] sm:$0xff]
  %v7654 = vld [vmem:[%s6841 + $0x22a] sm:$0xff]
  %v7655 = vld [vmem:[%s6841 + $0x232] sm:$0xff]
  %v7656 = vld [vmem:[%s6841 + $0x242] sm:$0xff]
  %v7657 = vld [vmem:[%s6841 + $0x24a] sm:$0xff]
  %v7658 = vld [vmem:[%s6841 + $0x25a] sm:$0xff]
  %v7659 = vld [vmem:[%s6841 + $0x262] sm:$0xff]
  %v7660 = vld [vmem:[%s6841 + $0x272] sm:$0xff]
  %v7661 = vld [vmem:[%s6841 + $0x27a] sm:$0xff]
  %v7662 = vld [vmem:[%s6841 + $0x28a] sm:$0xff]
  %v7663 = vld [vmem:[%s6841 + $0x292] sm:$0xff]
  %v7664 = vld [vmem:[%s6841 + $0x2a2] sm:$0xff]
  %v7665 = vld [vmem:[%s6841 + $0x2aa] sm:$0xff]
  %v7666 = vld [vmem:[%s6841 + $0x2ba] sm:$0xff]
  %v7667 = vld [vmem:[%s6841 + $0x2c2] sm:$0xff]
  %v7668 = vld [vmem:[%s6841 + $0x2d2] sm:$0xff]
  %v7669 = vld [vmem:[%s6841 + $0x2da] sm:$0xff]
  %v7670 = vld [vmem:[%s6841 + $0x2ea] sm:$0xff]
  %v7671 = vld [vmem:[%s6841 + $0x2f2] sm:$0xff]
  %v7672 = vld [vmem:[%s6841 + $0x302] sm:$0xff]
  %v7673 = vld [vmem:[%s6841 + $0x30a] sm:$0xff]
  %v7674 = vld [vmem:[%s6841 + $0x31a] sm:$0xff]
  %v7675 = vld [vmem:[%s6841 + $0x322] sm:$0xff]
  %7740 = vrot.lane.b32.xlu0 %v7612, 64
  %v7741 = vpop.permute.xlu0 %7740
  %7742 = vrot.lane.b32.xlu0 %v7613, 64
  %v7743 = vpop.permute.xlu0 %7742
  %7744 = vrot.lane.b32.xlu0 %v7614, 64
  %v7745 = vpop.permute.xlu0 %7744
  %7746 = vrot.lane.b32.xlu0 %v7615, 64
  %v7747 = vpop.permute.xlu0 %7746
  %7748 = vrot.lane.b32.xlu0 %v7616, 64
  %v7749 = vpop.permute.xlu0 %7748
  %7750 = vrot.lane.b32.xlu0 %v7617, 64
  %v7751 = vpop.permute.xlu0 %7750
  %7752 = vrot.lane.b32.xlu0 %v7618, 64
  %v7753 = vpop.permute.xlu0 %7752
  %7754 = vrot.lane.b32.xlu0 %v7619, 64
  %v7755 = vpop.permute.xlu0 %7754
  %7756 = vrot.lane.b32.xlu0 %v7620, 64
  %v7757 = vpop.permute.xlu0 %7756
  %7758 = vrot.lane.b32.xlu0 %v7621, 64
  %v7759 = vpop.permute.xlu0 %7758
  %7760 = vrot.lane.b32.xlu0 %v7622, 64
  %v7761 = vpop.permute.xlu0 %7760
  %7762 = vrot.lane.b32.xlu0 %v7623, 64
  %v7763 = vpop.permute.xlu0 %7762
  %7764 = vrot.lane.b32.xlu0 %v7624, 64
  %v7765 = vpop.permute.xlu0 %7764
  %7766 = vrot.lane.b32.xlu0 %v7625, 64
  %v7767 = vpop.permute.xlu0 %7766
  %7768 = vrot.lane.b32.xlu0 %v7626, 64
  %v7769 = vpop.permute.xlu0 %7768
  %7770 = vrot.lane.b32.xlu0 %v7627, 64
  %v7771 = vpop.permute.xlu0 %7770
  %7772 = vrot.lane.b32.xlu0 %v7628, 64
  %v7773 = vpop.permute.xlu0 %7772
  %7774 = vrot.lane.b32.xlu0 %v7629, 64
  %v7775 = vpop.permute.xlu0 %7774
  %7776 = vrot.lane.b32.xlu0 %v7630, 64
  %v7777 = vpop.permute.xlu0 %7776
  %7778 = vrot.lane.b32.xlu0 %v7631, 64
  %v7779 = vpop.permute.xlu0 %7778
  %7780 = vrot.lane.b32.xlu0 %v7632, 64
  %v7781 = vpop.permute.xlu0 %7780
  %7782 = vrot.lane.b32.xlu0 %v7633, 64
  %v7783 = vpop.permute.xlu0 %7782
  %7784 = vrot.lane.b32.xlu0 %v7634, 64
  %v7785 = vpop.permute.xlu0 %7784
  %7786 = vrot.lane.b32.xlu0 %v7635, 64
  %v7787 = vpop.permute.xlu0 %7786
  %7788 = vrot.lane.b32.xlu0 %v7636, 64
  %v7789 = vpop.permute.xlu0 %7788
  %7790 = vrot.lane.b32.xlu0 %v7637, 64
  %v7791 = vpop.permute.xlu0 %7790
  %7792 = vrot.lane.b32.xlu0 %v7638, 64
  %v7793 = vpop.permute.xlu0 %7792
  %7794 = vrot.lane.b32.xlu0 %v7639, 64
  %v7795 = vpop.permute.xlu0 %7794
  %7796 = vrot.lane.b32.xlu0 %v7640, 64
  %v7797 = vpop.permute.xlu0 %7796
  %7798 = vrot.lane.b32.xlu0 %v7641, 64
  %v7799 = vpop.permute.xlu0 %7798
  %7800 = vrot.lane.b32.xlu0 %v7642, 64
  %v7801 = vpop.permute.xlu0 %7800
  %7802 = vrot.lane.b32.xlu0 %v7643, 64
  %v7803 = vpop.permute.xlu0 %7802
  %7804 = vrot.lane.b32.xlu0 %v7644, 64
  %v7805 = vpop.permute.xlu0 %7804
  %7806 = vrot.lane.b32.xlu0 %v7645, 64
  %v7807 = vpop.permute.xlu0 %7806
  %7808 = vrot.lane.b32.xlu0 %v7646, 64
  %v7809 = vpop.permute.xlu0 %7808
  %7810 = vrot.lane.b32.xlu0 %v7647, 64
  %v7811 = vpop.permute.xlu0 %7810
  %7812 = vrot.lane.b32.xlu0 %v7648, 64
  %v7813 = vpop.permute.xlu0 %7812
  %7814 = vrot.lane.b32.xlu0 %v7649, 64
  %v7815 = vpop.permute.xlu0 %7814
  %7816 = vrot.lane.b32.xlu0 %v7650, 64
  %v7817 = vpop.permute.xlu0 %7816
  %7818 = vrot.lane.b32.xlu0 %v7651, 64
  %v7819 = vpop.permute.xlu0 %7818
  %7820 = vrot.lane.b32.xlu0 %v7652, 64
  %v7821 = vpop.permute.xlu0 %7820
  %7822 = vrot.lane.b32.xlu0 %v7653, 64
  %v7823 = vpop.permute.xlu0 %7822
  %7824 = vrot.lane.b32.xlu0 %v7654, 64
  %v7825 = vpop.permute.xlu0 %7824
  %7826 = vrot.lane.b32.xlu0 %v7655, 64
  %v7827 = vpop.permute.xlu0 %7826
  %7828 = vrot.lane.b32.xlu0 %v7656, 64
  %v7829 = vpop.permute.xlu0 %7828
  %7830 = vrot.lane.b32.xlu0 %v7657, 64
  %v7831 = vpop.permute.xlu0 %7830
  %7832 = vrot.lane.b32.xlu0 %v7658, 64
  %v7833 = vpop.permute.xlu0 %7832
  %7834 = vrot.lane.b32.xlu0 %v7659, 64
  %v7835 = vpop.permute.xlu0 %7834
  %7836 = vrot.lane.b32.xlu0 %v7660, 64
  %v7837 = vpop.permute.xlu0 %7836
  %7838 = vrot.lane.b32.xlu0 %v7661, 64
  %v7839 = vpop.permute.xlu0 %7838
  %7840 = vrot.lane.b32.xlu0 %v7662, 64
  %v7841 = vpop.permute.xlu0 %7840
  %7842 = vrot.lane.b32.xlu0 %v7663, 64
  %v7843 = vpop.permute.xlu0 %7842
  %7844 = vrot.lane.b32.xlu0 %v7664, 64
  %v7845 = vpop.permute.xlu0 %7844
  %7846 = vrot.lane.b32.xlu0 %v7665, 64
  %v7847 = vpop.permute.xlu0 %7846
  %7848 = vrot.lane.b32.xlu0 %v7666, 64
  %v7849 = vpop.permute.xlu0 %7848
  %7850 = vrot.lane.b32.xlu0 %v7667, 64
  %v7851 = vpop.permute.xlu0 %7850
  %7852 = vrot.lane.b32.xlu0 %v7668, 64
  %v7853 = vpop.permute.xlu0 %7852
  %7854 = vrot.lane.b32.xlu0 %v7669, 64
  %v7855 = vpop.permute.xlu0 %7854
  %7856 = vrot.lane.b32.xlu0 %v7670, 64
  %v7857 = vpop.permute.xlu0 %7856
  %7858 = vrot.lane.b32.xlu0 %v7671, 64
  %v7859 = vpop.permute.xlu0 %7858
  %7860 = vrot.lane.b32.xlu0 %v7672, 64
  %v7861 = vpop.permute.xlu0 %7860
  %7862 = vrot.lane.b32.xlu0 %v7673, 64
  %v7863 = vpop.permute.xlu0 %7862
  %7864 = vrot.lane.b32.xlu0 %v7674, 64
  %v7865 = vpop.permute.xlu0 %7864
  %7866 = vrot.lane.b32.xlu0 %v7675, 64
  %v7867 = vpop.permute.xlu0 %7866
  %vm7932 = vcmask 589312
  %7933 = vst.msk [vmem:[#allocation5] sm:$0xff] %vm7932, %v7741
  %7934 = vst.msk [vmem:[#allocation5 + $0x8] sm:$0xff] %vm7932, %v7743
  %7935 = vst.msk [vmem:[#allocation5 + $0x10] sm:$0xff] %vm7932, %v7745
  %7936 = vst.msk [vmem:[#allocation5 + $0x18] sm:$0xff] %vm7932, %v7747
  %7937 = vst.msk [vmem:[#allocation5 + $0x20] sm:$0xff] %vm7932, %v7749
  %7938 = vst.msk [vmem:[#allocation5 + $0x28] sm:$0xff] %vm7932, %v7751
  %7939 = vst.msk [vmem:[#allocation5 + $0x30] sm:$0xff] %vm7932, %v7753
  %7940 = vst.msk [vmem:[#allocation5 + $0x38] sm:$0xff] %vm7932, %v7755
  %7941 = vst.msk [vmem:[#allocation5 + $0x40] sm:$0xff] %vm7932, %v7757
  %7942 = vst.msk [vmem:[#allocation5 + $0x48] sm:$0xff] %vm7932, %v7759
  %7943 = vst.msk [vmem:[#allocation5 + $0x50] sm:$0xff] %vm7932, %v7761
  %7944 = vst.msk [vmem:[#allocation5 + $0x58] sm:$0xff] %vm7932, %v7763
  %7945 = vst.msk [vmem:[#allocation5 + $0x60] sm:$0xff] %vm7932, %v7765
  %7946 = vst.msk [vmem:[#allocation5 + $0x68] sm:$0xff] %vm7932, %v7767
  %7947 = vst.msk [vmem:[#allocation5 + $0x70] sm:$0xff] %vm7932, %v7769
  %7948 = vst.msk [vmem:[#allocation5 + $0x78] sm:$0xff] %vm7932, %v7771
  %7949 = vst.msk [vmem:[#allocation5 + $0x80] sm:$0xff] %vm7932, %v7773
  %7950 = vst.msk [vmem:[#allocation5 + $0x88] sm:$0xff] %vm7932, %v7775
  %7951 = vst.msk [vmem:[#allocation5 + $0x90] sm:$0xff] %vm7932, %v7777
  %7952 = vst.msk [vmem:[#allocation5 + $0x98] sm:$0xff] %vm7932, %v7779
  %7953 = vst.msk [vmem:[#allocation5 + $0xa0] sm:$0xff] %vm7932, %v7781
  %7954 = vst.msk [vmem:[#allocation5 + $0xa8] sm:$0xff] %vm7932, %v7783
  %7955 = vst.msk [vmem:[#allocation5 + $0xb0] sm:$0xff] %vm7932, %v7785
  %7956 = vst.msk [vmem:[#allocation5 + $0xb8] sm:$0xff] %vm7932, %v7787
  %7957 = vst.msk [vmem:[#allocation5 + $0xc0] sm:$0xff] %vm7932, %v7789
  %7958 = vst.msk [vmem:[#allocation5 + $0xc8] sm:$0xff] %vm7932, %v7791
  %7959 = vst.msk [vmem:[#allocation5 + $0xd0] sm:$0xff] %vm7932, %v7793
  %7960 = vst.msk [vmem:[#allocation5 + $0xd8] sm:$0xff] %vm7932, %v7795
  %7961 = vst.msk [vmem:[#allocation5 + $0xe0] sm:$0xff] %vm7932, %v7797
  %7962 = vst.msk [vmem:[#allocation5 + $0xe8] sm:$0xff] %vm7932, %v7799
  %7963 = vst.msk [vmem:[#allocation5 + $0xf0] sm:$0xff] %vm7932, %v7801
  %7964 = vst.msk [vmem:[#allocation5 + $0xf8] sm:$0xff] %vm7932, %v7803
  %7965 = vst.msk [vmem:[#allocation5 + $0x100] sm:$0xff] %vm7932, %v7805
  %7966 = vst.msk [vmem:[#allocation5 + $0x108] sm:$0xff] %vm7932, %v7807
  %7967 = vst.msk [vmem:[#allocation5 + $0x110] sm:$0xff] %vm7932, %v7809
  %7968 = vst.msk [vmem:[#allocation5 + $0x118] sm:$0xff] %vm7932, %v7811
  %7969 = vst.msk [vmem:[#allocation5 + $0x120] sm:$0xff] %vm7932, %v7813
  %7970 = vst.msk [vmem:[#allocation5 + $0x128] sm:$0xff] %vm7932, %v7815
  %7971 = vst.msk [vmem:[#allocation5 + $0x130] sm:$0xff] %vm7932, %v7817
  %7972 = vst.msk [vmem:[#allocation5 + $0x138] sm:$0xff] %vm7932, %v7819
  %7973 = vst.msk [vmem:[#allocation5 + $0x140] sm:$0xff] %vm7932, %v7821
  %7974 = vst.msk [vmem:[#allocation5 + $0x148] sm:$0xff] %vm7932, %v7823
  %7975 = vst.msk [vmem:[#allocation5 + $0x150] sm:$0xff] %vm7932, %v7825
  %7976 = vst.msk [vmem:[#allocation5 + $0x158] sm:$0xff] %vm7932, %v7827
  %7977 = vst.msk [vmem:[#allocation5 + $0x160] sm:$0xff] %vm7932, %v7829
  %7978 = vst.msk [vmem:[#allocation5 + $0x168] sm:$0xff] %vm7932, %v7831
  %7979 = vst.msk [vmem:[#allocation5 + $0x170] sm:$0xff] %vm7932, %v7833
  %7980 = vst.msk [vmem:[#allocation5 + $0x178] sm:$0xff] %vm7932, %v7835
  %7981 = vst.msk [vmem:[#allocation5 + $0x180] sm:$0xff] %vm7932, %v7837
  %7982 = vst.msk [vmem:[#allocation5 + $0x188] sm:$0xff] %vm7932, %v7839
  %7983 = vst.msk [vmem:[#allocation5 + $0x190] sm:$0xff] %vm7932, %v7841
  %7984 = vst.msk [vmem:[#allocation5 + $0x198] sm:$0xff] %vm7932, %v7843
  %7985 = vst.msk [vmem:[#allocation5 + $0x1a0] sm:$0xff] %vm7932, %v7845
  %7986 = vst.msk [vmem:[#allocation5 + $0x1a8] sm:$0xff] %vm7932, %v7847
  %7987 = vst.msk [vmem:[#allocation5 + $0x1b0] sm:$0xff] %vm7932, %v7849
  %7988 = vst.msk [vmem:[#allocation5 + $0x1b8] sm:$0xff] %vm7932, %v7851
  %7989 = vst.msk [vmem:[#allocation5 + $0x1c0] sm:$0xff] %vm7932, %v7853
  %7990 = vst.msk [vmem:[#allocation5 + $0x1c8] sm:$0xff] %vm7932, %v7855
  %7991 = vst.msk [vmem:[#allocation5 + $0x1d0] sm:$0xff] %vm7932, %v7857
  %7992 = vst.msk [vmem:[#allocation5 + $0x1d8] sm:$0xff] %vm7932, %v7859
  %7993 = vst.msk [vmem:[#allocation5 + $0x1e0] sm:$0xff] %vm7932, %v7861
  %7994 = vst.msk [vmem:[#allocation5 + $0x1e8] sm:$0xff] %vm7932, %v7863
  %7995 = vst.msk [vmem:[#allocation5 + $0x1f0] sm:$0xff] %vm7932, %v7865
  %7996 = vst.msk [vmem:[#allocation5 + $0x1f8] sm:$0xff] %vm7932, %v7867
  %v7997 = vld [vmem:[#allocation5] sm:$0xff]
  %v7998 = vld [vmem:[#allocation5 + $0x8] sm:$0xff]
  %v7999 = vld [vmem:[#allocation5 + $0x10] sm:$0xff]
  %v8000 = vld [vmem:[#allocation5 + $0x18] sm:$0xff]
  %v8001 = vld [vmem:[#allocation5 + $0x20] sm:$0xff]
  %v8002 = vld [vmem:[#allocation5 + $0x28] sm:$0xff]
  %v8003 = vld [vmem:[#allocation5 + $0x30] sm:$0xff]
  %v8004 = vld [vmem:[#allocation5 + $0x38] sm:$0xff]
  %v8005 = vld [vmem:[#allocation5 + $0x40] sm:$0xff]
  %v8006 = vld [vmem:[#allocation5 + $0x48] sm:$0xff]
  %v8007 = vld [vmem:[#allocation5 + $0x50] sm:$0xff]
  %v8008 = vld [vmem:[#allocation5 + $0x58] sm:$0xff]
  %v8009 = vld [vmem:[#allocation5 + $0x60] sm:$0xff]
  %v8010 = vld [vmem:[#allocation5 + $0x68] sm:$0xff]
  %v8011 = vld [vmem:[#allocation5 + $0x70] sm:$0xff]
  %v8012 = vld [vmem:[#allocation5 + $0x78] sm:$0xff]
  %v8013 = vld [vmem:[#allocation5 + $0x80] sm:$0xff]
  %v8014 = vld [vmem:[#allocation5 + $0x88] sm:$0xff]
  %v8015 = vld [vmem:[#allocation5 + $0x90] sm:$0xff]
  %v8016 = vld [vmem:[#allocation5 + $0x98] sm:$0xff]
  %v8017 = vld [vmem:[#allocation5 + $0xa0] sm:$0xff]
  %v8018 = vld [vmem:[#allocation5 + $0xa8] sm:$0xff]
  %v8019 = vld [vmem:[#allocation5 + $0xb0] sm:$0xff]
  %v8020 = vld [vmem:[#allocation5 + $0xb8] sm:$0xff]
  %v8021 = vld [vmem:[#allocation5 + $0xc0] sm:$0xff]
  %v8022 = vld [vmem:[#allocation5 + $0xc8] sm:$0xff]
  %v8023 = vld [vmem:[#allocation5 + $0xd0] sm:$0xff]
  %v8024 = vld [vmem:[#allocation5 + $0xd8] sm:$0xff]
  %v8025 = vld [vmem:[#allocation5 + $0xe0] sm:$0xff]
  %v8026 = vld [vmem:[#allocation5 + $0xe8] sm:$0xff]
  %v8027 = vld [vmem:[#allocation5 + $0xf0] sm:$0xff]
  %v8028 = vld [vmem:[#allocation5 + $0xf8] sm:$0xff]
  %v8029 = vld [vmem:[#allocation5 + $0x100] sm:$0xff]
  %v8030 = vld [vmem:[#allocation5 + $0x108] sm:$0xff]
  %v8031 = vld [vmem:[#allocation5 + $0x110] sm:$0xff]
  %v8032 = vld [vmem:[#allocation5 + $0x118] sm:$0xff]
  %v8033 = vld [vmem:[#allocation5 + $0x120] sm:$0xff]
  %v8034 = vld [vmem:[#allocation5 + $0x128] sm:$0xff]
  %v8035 = vld [vmem:[#allocation5 + $0x130] sm:$0xff]
  %v8036 = vld [vmem:[#allocation5 + $0x138] sm:$0xff]
  %v8037 = vld [vmem:[#allocation5 + $0x140] sm:$0xff]
  %v8038 = vld [vmem:[#allocation5 + $0x148] sm:$0xff]
  %v8039 = vld [vmem:[#allocation5 + $0x150] sm:$0xff]
  %v8040 = vld [vmem:[#allocation5 + $0x158] sm:$0xff]
  %v8041 = vld [vmem:[#allocation5 + $0x160] sm:$0xff]
  %v8042 = vld [vmem:[#allocation5 + $0x168] sm:$0xff]
  %v8043 = vld [vmem:[#allocation5 + $0x170] sm:$0xff]
  %v8044 = vld [vmem:[#allocation5 + $0x178] sm:$0xff]
  %v8045 = vld [vmem:[#allocation5 + $0x180] sm:$0xff]
  %v8046 = vld [vmem:[#allocation5 + $0x188] sm:$0xff]
  %v8047 = vld [vmem:[#allocation5 + $0x190] sm:$0xff]
  %v8048 = vld [vmem:[#allocation5 + $0x198] sm:$0xff]
  %v8049 = vld [vmem:[#allocation5 + $0x1a0] sm:$0xff]
  %v8050 = vld [vmem:[#allocation5 + $0x1a8] sm:$0xff]
  %v8051 = vld [vmem:[#allocation5 + $0x1b0] sm:$0xff]
  %v8052 = vld [vmem:[#allocation5 + $0x1b8] sm:$0xff]
  %v8053 = vld [vmem:[#allocation5 + $0x1c0] sm:$0xff]
  %v8054 = vld [vmem:[#allocation5 + $0x1c8] sm:$0xff]
  %v8055 = vld [vmem:[#allocation5 + $0x1d0] sm:$0xff]
  %v8056 = vld [vmem:[#allocation5 + $0x1d8] sm:$0xff]
  %v8057 = vld [vmem:[#allocation5 + $0x1e0] sm:$0xff]
  %v8058 = vld [vmem:[#allocation5 + $0x1e8] sm:$0xff]
  %v8059 = vld [vmem:[#allocation5 + $0x1f0] sm:$0xff]
  %v8060 = vld [vmem:[#allocation5 + $0x1f8] sm:$0xff]
  %v8061 = vld [vmem:[%s2] sm:$0xff]
  %v8062 = vld [vmem:[%s2 + $0x8] sm:$0xff]
  %v8063 = vld [vmem:[%s2 + $0x10] sm:$0xff]
  %v8064 = vld [vmem:[%s2 + $0x18] sm:$0xff]
  %v8065 = vld [vmem:[%s2 + $0x20] sm:$0xff]
  %v8066 = vld [vmem:[%s2 + $0x28] sm:$0xff]
  %v8067 = vld [vmem:[%s2 + $0x30] sm:$0xff]
  %v8068 = vld [vmem:[%s2 + $0x38] sm:$0xff]
  %v8069 = vld [vmem:[%s2 + $0x40] sm:$0xff]
  %vm8070 = vcmask 588800
  %v8072 = vsel %vm8070, %v7997, 0
  %v8075 = vsel %vm8070, %v7998, 0
  %v8078 = vsel %vm8070, %v7999, 0
  %v8081 = vsel %vm8070, %v8000, 0
  %v8084 = vsel %vm8070, %v8001, 0
  %v8087 = vsel %vm8070, %v8002, 0
  %v8090 = vsel %vm8070, %v8003, 0
  %v8093 = vsel %vm8070, %v8004, 0
  %v8096 = vsel %vm8070, %v8005, 0
  %v8099 = vsel %vm8070, %v8006, 0
  %v8102 = vsel %vm8070, %v8007, 0
  %v8105 = vsel %vm8070, %v8008, 0
  %v8108 = vsel %vm8070, %v8009, 0
  %v8111 = vsel %vm8070, %v8010, 0
  %v8114 = vsel %vm8070, %v8011, 0
  %v8117 = vsel %vm8070, %v8012, 0
  %v8120 = vsel %vm8070, %v8013, 0
  %v8123 = vsel %vm8070, %v8014, 0
  %v8126 = vsel %vm8070, %v8015, 0
  %v8129 = vsel %vm8070, %v8016, 0
  %v8132 = vsel %vm8070, %v8017, 0
  %v8135 = vsel %vm8070, %v8018, 0
  %v8138 = vsel %vm8070, %v8019, 0
  %v8141 = vsel %vm8070, %v8020, 0
  %v8144 = vsel %vm8070, %v8021, 0
  %v8147 = vsel %vm8070, %v8022, 0
  %v8150 = vsel %vm8070, %v8023, 0
  %v8153 = vsel %vm8070, %v8024, 0
  %v8156 = vsel %vm8070, %v8025, 0
  %v8159 = vsel %vm8070, %v8026, 0
  %v8162 = vsel %vm8070, %v8027, 0
  %v8165 = vsel %vm8070, %v8028, 0
  %v8168 = vsel %vm8070, %v8029, 0
  %v8171 = vsel %vm8070, %v8030, 0
  %v8174 = vsel %vm8070, %v8031, 0
  %v8177 = vsel %vm8070, %v8032, 0
  %v8180 = vsel %vm8070, %v8033, 0
  %v8183 = vsel %vm8070, %v8034, 0
  %v8186 = vsel %vm8070, %v8035, 0
  %v8189 = vsel %vm8070, %v8036, 0
  %v8192 = vsel %vm8070, %v8037, 0
  %v8195 = vsel %vm8070, %v8038, 0
  %v8198 = vsel %vm8070, %v8039, 0
  %v8201 = vsel %vm8070, %v8040, 0
  %v8204 = vsel %vm8070, %v8041, 0
  %v8207 = vsel %vm8070, %v8042, 0
  %v8210 = vsel %vm8070, %v8043, 0
  %v8213 = vsel %vm8070, %v8044, 0
  %v8216 = vsel %vm8070, %v8045, 0
  %v8219 = vsel %vm8070, %v8046, 0
  %v8222 = vsel %vm8070, %v8047, 0
  %v8225 = vsel %vm8070, %v8048, 0
  %v8228 = vsel %vm8070, %v8049, 0
  %v8231 = vsel %vm8070, %v8050, 0
  %v8234 = vsel %vm8070, %v8051, 0
  %v8237 = vsel %vm8070, %v8052, 0
  %v8240 = vsel %vm8070, %v8053, 0
  %v8243 = vsel %vm8070, %v8054, 0
  %v8246 = vsel %vm8070, %v8055, 0
  %v8249 = vsel %vm8070, %v8056, 0
  %v8252 = vsel %vm8070, %v8057, 0
  %v8255 = vsel %vm8070, %v8058, 0
  %v8258 = vsel %vm8070, %v8059, 0
  %v8261 = vsel %vm8070, %v8060, 0
  %8263 = vmatprep.subr.mxu0 0.0
  %8264 = vmatpush1.msra.mxu0 %v8061
  %8265 = vmatprep.subr.mxu0 0.0
  %8266 = vmatpush1.msra.mxu0 %v8062
  %8267 = vmatprep.subr.mxu0 0.0
  %8268 = vmatpush1.msra.mxu0 %v8063
  %8269 = vmatprep.subr.mxu0 0.0
  %8270 = vmatpush1.msra.mxu0 %v8064
  %8271 = vmatprep.subr.mxu0 0.0
  %8272 = vmatpush1.msra.mxu0 %v8065
  %8273 = vmatprep.subr.mxu0 0.0
  %8274 = vmatpush1.msra.mxu0 %v8066
  %8275 = vmatprep.subr.mxu0 0.0
  %8276 = vmatpush1.msra.mxu0 %v8067
  %8277 = vmatprep.subr.mxu0 0.0
  %8278 = vmatpush1.msra.mxu0 %v8068
  %8279 = vmatprep.subr.mxu0 0.0
  %8280 = vmatpush1.msra.mxu0 %v8069
  %8281 = vmatprep.subr.mxu0 0.0
  %8282 = vmatpush1.msra.mxu0 0.0
  %8283 = vmatprep.subr.mxu0 0.0
  %8284 = vmatpush1.msra.mxu0 0.0
  %8285 = vmatprep.subr.mxu0 0.0
  %8286 = vmatpush1.msra.mxu0 0.0
  %8287 = vmatprep.subr.mxu0 0.0
  %8288 = vmatpush1.msra.mxu0 0.0
  %8289 = vmatprep.subr.mxu0 0.0
  %8290 = vmatpush1.msra.mxu0 0.0
  %8291 = vmatprep.subr.mxu0 0.0
  %8292 = vmatpush1.msra.mxu0 0.0
  %8293 = vmatprep.subr.mxu0 0.0
  %8294 = vmatpush1.msra.mxu0 0.0
  %8295 = vmatprep.subr.mxu0 0.0
  %8296 = vmatpush1.msra.mxu0 0.0
  %8297 = vmatprep.subr.mxu0 0.0
  %8298 = vmatpush1.msra.mxu0 0.0
  %8299 = vmatprep.subr.mxu0 0.0
  %8300 = vmatpush1.msra.mxu0 0.0
  %8301 = vmatprep.subr.mxu0 0.0
  %8302 = vmatpush1.msra.mxu0 0.0
  %8303 = vmatprep.subr.mxu0 0.0
  %8304 = vmatpush1.msra.mxu0 0.0
  %8305 = vmatprep.subr.mxu0 0.0
  %8306 = vmatpush1.msra.mxu0 0.0
  %8307 = vmatprep.subr.mxu0 0.0
  %8308 = vmatpush1.msra.mxu0 0.0
  %8309 = vmatprep.subr.mxu0 0.0
  %8310 = vmatpush1.msra.mxu0 0.0
  %8311 = vmatprep.subr.mxu0 0.0
  %8312 = vmatpush1.msra.mxu0 0.0
  %8313 = vmatprep.subr.mxu0 0.0
  %8314 = vmatpush1.msra.mxu0 0.0
  %8315 = vmatprep.subr.mxu0 0.0
  %8316 = vmatpush1.msra.mxu0 0.0
  %8317 = vmatprep.subr.mxu0 0.0
  %8318 = vmatpush1.msra.mxu0 0.0
  %8319 = vmatprep.subr.mxu0 0.0
  %8320 = vmatpush1.msra.mxu0 0.0
  %8321 = vmatprep.subr.mxu0 0.0
  %8322 = vmatpush1.msra.mxu0 0.0
  %8323 = vmatprep.subr.mxu0 0.0
  %8324 = vmatpush1.msra.mxu0 0.0
  %8325 = vmatprep.subr.mxu0 0.0
  %8326 = vmatpush1.msra.mxu0 0.0
  %8327 = vmatprep.mubr.f32.mxu0 0.0
  %8328 = vmatmul.mubr.f32.gmra.mrb[0].mxu0 %v8072
  %v8329 = vpop.f32.mrb[0].mxu0
  %v8330 = vadd.f32 0.0, %v8329
  %v8331 = vpop.f32.mrb[0].mxu0
  %8332 = vmatprep.mubr.f32.mxu0 0.0
  %8333 = vmatmul.mubr.f32.gmra.mrb[0].mxu0 %v8075
  %v8334 = vpop.f32.mrb[0].mxu0
  %v8335 = vadd.f32 0.0, %v8334
  %v8336 = vpop.f32.mrb[0].mxu0
  %8337 = vmatprep.mubr.f32.mxu0 0.0
  %8338 = vmatmul.mubr.f32.gmra.mrb[0].mxu0 %v8078
  %v8339 = vpop.f32.mrb[0].mxu0
  %v8340 = vadd.f32 0.0, %v8339
  %v8341 = vpop.f32.mrb[0].mxu0
  %8342 = vmatprep.mubr.f32.mxu0 0.0
  %8343 = vmatmul.mubr.f32.gmra.mrb[0].mxu0 %v8081
  %v8344 = vpop.f32.mrb[0].mxu0
  %v8345 = vadd.f32 0.0, %v8344
  %v8346 = vpop.f32.mrb[0].mxu0
  %8347 = vmatprep.mubr.f32.mxu0 0.0
  %8348 = vmatmul.mubr.f32.gmra.mrb[0].mxu0 %v8084
  %v8349 = vpop.f32.mrb[0].mxu0
  %v8350 = vadd.f32 0.0, %v8349
  %v8351 = vpop.f32.mrb[0].mxu0
  %8352 = vmatprep.mubr.f32.mxu0 0.0
  %8353 = vmatmul.mubr.f32.gmra.mrb[0].mxu0 %v8087
  %v8354 = vpop.f32.mrb[0].mxu0
  %v8355 = vadd.f32 0.0, %v8354
  %v8356 = vpop.f32.mrb[0].mxu0
  %8357 = vmatprep.mubr.f32.mxu0 0.0
  %8358 = vmatmul.mubr.f32.gmra.mrb[0].mxu0 %v8090
  %v8359 = vpop.f32.mrb[0].mxu0
  %v8360 = vadd.f32 0.0, %v8359
  %v8361 = vpop.f32.mrb[0].mxu0
  %8362 = vmatprep.mubr.f32.mxu0 0.0
  %8363 = vmatmul.mubr.f32.gmra.mrb[0].mxu0 %v8093
  %v8364 = vpop.f32.mrb[0].mxu0
  %v8365 = vadd.f32 0.0, %v8364
  %v8366 = vpop.f32.mrb[0].mxu0
  %8367 = vmatprep.mubr.f32.mxu0 0.0
  %8368 = vmatmul.mubr.f32.gmra.mrb[0].mxu0 %v8096
  %v8369 = vpop.f32.mrb[0].mxu0
  %v8370 = vadd.f32 0.0, %v8369
  %v8371 = vpop.f32.mrb[0].mxu0
  %8372 = vmatprep.mubr.f32.mxu0 0.0
  %8373 = vmatmul.mubr.f32.gmra.mrb[0].mxu0 %v8099
  %v8374 = vpop.f32.mrb[0].mxu0
  %v8375 = vadd.f32 0.0, %v8374
  %v8376 = vpop.f32.mrb[0].mxu0
  %8377 = vmatprep.mubr.f32.mxu0 0.0
  %8378 = vmatmul.mubr.f32.gmra.mrb[0].mxu0 %v8102
  %v8379 = vpop.f32.mrb[0].mxu0
  %v8380 = vadd.f32 0.0, %v8379
  %v8381 = vpop.f32.mrb[0].mxu0
  %8382 = vmatprep.mubr.f32.mxu0 0.0
  %8383 = vmatmul.mubr.f32.gmra.mrb[0].mxu0 %v8105
  %v8384 = vpop.f32.mrb[0].mxu0
  %v8385 = vadd.f32 0.0, %v8384
  %v8386 = vpop.f32.mrb[0].mxu0
  %8387 = vmatprep.mubr.f32.mxu0 0.0
  %8388 = vmatmul.mubr.f32.gmra.mrb[0].mxu0 %v8108
  %v8389 = vpop.f32.mrb[0].mxu0
  %v8390 = vadd.f32 0.0, %v8389
  %v8391 = vpop.f32.mrb[0].mxu0
  %8392 = vmatprep.mubr.f32.mxu0 0.0
  %8393 = vmatmul.mubr.f32.gmra.mrb[0].mxu0 %v8111
  %v8394 = vpop.f32.mrb[0].mxu0
  %v8395 = vadd.f32 0.0, %v8394
  %v8396 = vpop.f32.mrb[0].mxu0
  %8397 = vmatprep.mubr.f32.mxu0 0.0
  %8398 = vmatmul.mubr.f32.gmra.mrb[0].mxu0 %v8114
  %v8399 = vpop.f32.mrb[0].mxu0
  %v8400 = vadd.f32 0.0, %v8399
  %v8401 = vpop.f32.mrb[0].mxu0
  %8402 = vmatprep.mubr.f32.mxu0 0.0
  %8403 = vmatmul.mubr.f32.gmra.mrb[0].mxu0 %v8117
  %v8404 = vpop.f32.mrb[0].mxu0
  %v8405 = vadd.f32 0.0, %v8404
  %v8406 = vpop.f32.mrb[0].mxu0
  %8407 = vmatprep.mubr.f32.mxu0 0.0
  %8408 = vmatmul.mubr.f32.gmra.mrb[0].mxu0 %v8120
  %v8409 = vpop.f32.mrb[0].mxu0
  %v8410 = vadd.f32 0.0, %v8409
  %v8411 = vpop.f32.mrb[0].mxu0
  %8412 = vmatprep.mubr.f32.mxu0 0.0
  %8413 = vmatmul.mubr.f32.gmra.mrb[0].mxu0 %v8123
  %v8414 = vpop.f32.mrb[0].mxu0
  %v8415 = vadd.f32 0.0, %v8414
  %v8416 = vpop.f32.mrb[0].mxu0
  %8417 = vmatprep.mubr.f32.mxu0 0.0
  %8418 = vmatmul.mubr.f32.gmra.mrb[0].mxu0 %v8126
  %v8419 = vpop.f32.mrb[0].mxu0
  %v8420 = vadd.f32 0.0, %v8419
  %v8421 = vpop.f32.mrb[0].mxu0
  %8422 = vmatprep.mubr.f32.mxu0 0.0
  %8423 = vmatmul.mubr.f32.gmra.mrb[0].mxu0 %v8129
  %v8424 = vpop.f32.mrb[0].mxu0
  %v8425 = vadd.f32 0.0, %v8424
  %v8426 = vpop.f32.mrb[0].mxu0
  %8427 = vmatprep.mubr.f32.mxu0 0.0
  %8428 = vmatmul.mubr.f32.gmra.mrb[0].mxu0 %v8132
  %v8429 = vpop.f32.mrb[0].mxu0
  %v8430 = vadd.f32 0.0, %v8429
  %v8431 = vpop.f32.mrb[0].mxu0
  %8432 = vmatprep.mubr.f32.mxu0 0.0
  %8433 = vmatmul.mubr.f32.gmra.mrb[0].mxu0 %v8135
  %v8434 = vpop.f32.mrb[0].mxu0
  %v8435 = vadd.f32 0.0, %v8434
  %v8436 = vpop.f32.mrb[0].mxu0
  %8437 = vmatprep.mubr.f32.mxu0 0.0
  %8438 = vmatmul.mubr.f32.gmra.mrb[0].mxu0 %v8138
  %v8439 = vpop.f32.mrb[0].mxu0
  %v8440 = vadd.f32 0.0, %v8439
  %v8441 = vpop.f32.mrb[0].mxu0
  %8442 = vmatprep.mubr.f32.mxu0 0.0
  %8443 = vmatmul.mubr.f32.gmra.mrb[0].mxu0 %v8141
  %v8444 = vpop.f32.mrb[0].mxu0
  %v8445 = vadd.f32 0.0, %v8444
  %v8446 = vpop.f32.mrb[0].mxu0
  %8447 = vmatprep.mubr.f32.mxu0 0.0
  %8448 = vmatmul.mubr.f32.gmra.mrb[0].mxu0 %v8144
  %v8449 = vpop.f32.mrb[0].mxu0
  %v8450 = vadd.f32 0.0, %v8449
  %v8451 = vpop.f32.mrb[0].mxu0
  %8452 = vmatprep.mubr.f32.mxu0 0.0
  %8453 = vmatmul.mubr.f32.gmra.mrb[0].mxu0 %v8147
  %v8454 = vpop.f32.mrb[0].mxu0
  %v8455 = vadd.f32 0.0, %v8454
  %v8456 = vpop.f32.mrb[0].mxu0
  %8457 = vmatprep.mubr.f32.mxu0 0.0
  %8458 = vmatmul.mubr.f32.gmra.mrb[0].mxu0 %v8150
  %v8459 = vpop.f32.mrb[0].mxu0
  %v8460 = vadd.f32 0.0, %v8459
  %v8461 = vpop.f32.mrb[0].mxu0
  %8462 = vmatprep.mubr.f32.mxu0 0.0
  %8463 = vmatmul.mubr.f32.gmra.mrb[0].mxu0 %v8153
  %v8464 = vpop.f32.mrb[0].mxu0
  %v8465 = vadd.f32 0.0, %v8464
  %v8466 = vpop.f32.mrb[0].mxu0
  %8467 = vmatprep.mubr.f32.mxu0 0.0
  %8468 = vmatmul.mubr.f32.gmra.mrb[0].mxu0 %v8156
  %v8469 = vpop.f32.mrb[0].mxu0
  %v8470 = vadd.f32 0.0, %v8469
  %v8471 = vpop.f32.mrb[0].mxu0
  %8472 = vmatprep.mubr.f32.mxu0 0.0
  %8473 = vmatmul.mubr.f32.gmra.mrb[0].mxu0 %v8159
  %v8474 = vpop.f32.mrb[0].mxu0
  %v8475 = vadd.f32 0.0, %v8474
  %v8476 = vpop.f32.mrb[0].mxu0
  %8477 = vmatprep.mubr.f32.mxu0 0.0
  %8478 = vmatmul.mubr.f32.gmra.mrb[0].mxu0 %v8162
  %v8479 = vpop.f32.mrb[0].mxu0
  %v8480 = vadd.f32 0.0, %v8479
  %v8481 = vpop.f32.mrb[0].mxu0
  %8482 = vmatprep.mubr.f32.mxu0 0.0
  %8483 = vmatmul.mubr.f32.gmra.mrb[0].mxu0 %v8165
  %v8484 = vpop.f32.mrb[0].mxu0
  %v8485 = vadd.f32 0.0, %v8484
  %v8486 = vpop.f32.mrb[0].mxu0
  %8487 = vmatprep.mubr.f32.mxu0 0.0
  %8488 = vmatmul.mubr.f32.gmra.mrb[0].mxu0 %v8168
  %v8489 = vpop.f32.mrb[0].mxu0
  %v8490 = vadd.f32 0.0, %v8489
  %v8491 = vpop.f32.mrb[0].mxu0
  %8492 = vmatprep.mubr.f32.mxu0 0.0
  %8493 = vmatmul.mubr.f32.gmra.mrb[0].mxu0 %v8171
  %v8494 = vpop.f32.mrb[0].mxu0
  %v8495 = vadd.f32 0.0, %v8494
  %v8496 = vpop.f32.mrb[0].mxu0
  %8497 = vmatprep.mubr.f32.mxu0 0.0
  %8498 = vmatmul.mubr.f32.gmra.mrb[0].mxu0 %v8174
  %v8499 = vpop.f32.mrb[0].mxu0
  %v8500 = vadd.f32 0.0, %v8499
  %v8501 = vpop.f32.mrb[0].mxu0
  %8502 = vmatprep.mubr.f32.mxu0 0.0
  %8503 = vmatmul.mubr.f32.gmra.mrb[0].mxu0 %v8177
  %v8504 = vpop.f32.mrb[0].mxu0
  %v8505 = vadd.f32 0.0, %v8504
  %v8506 = vpop.f32.mrb[0].mxu0
  %8507 = vmatprep.mubr.f32.mxu0 0.0
  %8508 = vmatmul.mubr.f32.gmra.mrb[0].mxu0 %v8180
  %v8509 = vpop.f32.mrb[0].mxu0
  %v8510 = vadd.f32 0.0, %v8509
  %v8511 = vpop.f32.mrb[0].mxu0
  %8512 = vmatprep.mubr.f32.mxu0 0.0
  %8513 = vmatmul.mubr.f32.gmra.mrb[0].mxu0 %v8183
  %v8514 = vpop.f32.mrb[0].mxu0
  %v8515 = vadd.f32 0.0, %v8514
  %v8516 = vpop.f32.mrb[0].mxu0
  %8517 = vmatprep.mubr.f32.mxu0 0.0
  %8518 = vmatmul.mubr.f32.gmra.mrb[0].mxu0 %v8186
  %v8519 = vpop.f32.mrb[0].mxu0
  %v8520 = vadd.f32 0.0, %v8519
  %v8521 = vpop.f32.mrb[0].mxu0
  %8522 = vmatprep.mubr.f32.mxu0 0.0
  %8523 = vmatmul.mubr.f32.gmra.mrb[0].mxu0 %v8189
  %v8524 = vpop.f32.mrb[0].mxu0
  %v8525 = vadd.f32 0.0, %v8524
  %v8526 = vpop.f32.mrb[0].mxu0
  %8527 = vmatprep.mubr.f32.mxu0 0.0
  %8528 = vmatmul.mubr.f32.gmra.mrb[0].mxu0 %v8192
  %v8529 = vpop.f32.mrb[0].mxu0
  %v8530 = vadd.f32 0.0, %v8529
  %v8531 = vpop.f32.mrb[0].mxu0
  %8532 = vmatprep.mubr.f32.mxu0 0.0
  %8533 = vmatmul.mubr.f32.gmra.mrb[0].mxu0 %v8195
  %v8534 = vpop.f32.mrb[0].mxu0
  %v8535 = vadd.f32 0.0, %v8534
  %v8536 = vpop.f32.mrb[0].mxu0
  %8537 = vmatprep.mubr.f32.mxu0 0.0
  %8538 = vmatmul.mubr.f32.gmra.mrb[0].mxu0 %v8198
  %v8539 = vpop.f32.mrb[0].mxu0
  %v8540 = vadd.f32 0.0, %v8539
  %v8541 = vpop.f32.mrb[0].mxu0
  %8542 = vmatprep.mubr.f32.mxu0 0.0
  %8543 = vmatmul.mubr.f32.gmra.mrb[0].mxu0 %v8201
  %v8544 = vpop.f32.mrb[0].mxu0
  %v8545 = vadd.f32 0.0, %v8544
  %v8546 = vpop.f32.mrb[0].mxu0
  %8547 = vmatprep.mubr.f32.mxu0 0.0
  %8548 = vmatmul.mubr.f32.gmra.mrb[0].mxu0 %v8204
  %v8549 = vpop.f32.mrb[0].mxu0
  %v8550 = vadd.f32 0.0, %v8549
  %v8551 = vpop.f32.mrb[0].mxu0
  %8552 = vmatprep.mubr.f32.mxu0 0.0
  %8553 = vmatmul.mubr.f32.gmra.mrb[0].mxu0 %v8207
  %v8554 = vpop.f32.mrb[0].mxu0
  %v8555 = vadd.f32 0.0, %v8554
  %v8556 = vpop.f32.mrb[0].mxu0
  %8557 = vmatprep.mubr.f32.mxu0 0.0
  %8558 = vmatmul.mubr.f32.gmra.mrb[0].mxu0 %v8210
  %v8559 = vpop.f32.mrb[0].mxu0
  %v8560 = vadd.f32 0.0, %v8559
  %v8561 = vpop.f32.mrb[0].mxu0
  %8562 = vmatprep.mubr.f32.mxu0 0.0
  %8563 = vmatmul.mubr.f32.gmra.mrb[0].mxu0 %v8213
  %v8564 = vpop.f32.mrb[0].mxu0
  %v8565 = vadd.f32 0.0, %v8564
  %v8566 = vpop.f32.mrb[0].mxu0
  %8567 = vmatprep.mubr.f32.mxu0 0.0
  %8568 = vmatmul.mubr.f32.gmra.mrb[0].mxu0 %v8216
  %v8569 = vpop.f32.mrb[0].mxu0
  %v8570 = vadd.f32 0.0, %v8569
  %v8571 = vpop.f32.mrb[0].mxu0
  %8572 = vmatprep.mubr.f32.mxu0 0.0
  %8573 = vmatmul.mubr.f32.gmra.mrb[0].mxu0 %v8219
  %v8574 = vpop.f32.mrb[0].mxu0
  %v8575 = vadd.f32 0.0, %v8574
  %v8576 = vpop.f32.mrb[0].mxu0
  %8577 = vmatprep.mubr.f32.mxu0 0.0
  %8578 = vmatmul.mubr.f32.gmra.mrb[0].mxu0 %v8222
  %v8579 = vpop.f32.mrb[0].mxu0
  %v8580 = vadd.f32 0.0, %v8579
  %v8581 = vpop.f32.mrb[0].mxu0
  %8582 = vmatprep.mubr.f32.mxu0 0.0
  %8583 = vmatmul.mubr.f32.gmra.mrb[0].mxu0 %v8225
  %v8584 = vpop.f32.mrb[0].mxu0
  %v8585 = vadd.f32 0.0, %v8584
  %v8586 = vpop.f32.mrb[0].mxu0
  %8587 = vmatprep.mubr.f32.mxu0 0.0
  %8588 = vmatmul.mubr.f32.gmra.mrb[0].mxu0 %v8228
  %v8589 = vpop.f32.mrb[0].mxu0
  %v8590 = vadd.f32 0.0, %v8589
  %v8591 = vpop.f32.mrb[0].mxu0
  %8592 = vmatprep.mubr.f32.mxu0 0.0
  %8593 = vmatmul.mubr.f32.gmra.mrb[0].mxu0 %v8231
  %v8594 = vpop.f32.mrb[0].mxu0
  %v8595 = vadd.f32 0.0, %v8594
  %v8596 = vpop.f32.mrb[0].mxu0
  %8597 = vmatprep.mubr.f32.mxu0 0.0
  %8598 = vmatmul.mubr.f32.gmra.mrb[0].mxu0 %v8234
  %v8599 = vpop.f32.mrb[0].mxu0
  %v8600 = vadd.f32 0.0, %v8599
  %v8601 = vpop.f32.mrb[0].mxu0
  %8602 = vmatprep.mubr.f32.mxu0 0.0
  %8603 = vmatmul.mubr.f32.gmra.mrb[0].mxu0 %v8237
  %v8604 = vpop.f32.mrb[0].mxu0
  %v8605 = vadd.f32 0.0, %v8604
  %v8606 = vpop.f32.mrb[0].mxu0
  %8607 = vmatprep.mubr.f32.mxu0 0.0
  %8608 = vmatmul.mubr.f32.gmra.mrb[0].mxu0 %v8240
  %v8609 = vpop.f32.mrb[0].mxu0
  %v8610 = vadd.f32 0.0, %v8609
  %v8611 = vpop.f32.mrb[0].mxu0
  %8612 = vmatprep.mubr.f32.mxu0 0.0
  %8613 = vmatmul.mubr.f32.gmra.mrb[0].mxu0 %v8243
  %v8614 = vpop.f32.mrb[0].mxu0
  %v8615 = vadd.f32 0.0, %v8614
  %v8616 = vpop.f32.mrb[0].mxu0
  %8617 = vmatprep.mubr.f32.mxu0 0.0
  %8618 = vmatmul.mubr.f32.gmra.mrb[0].mxu0 %v8246
  %v8619 = vpop.f32.mrb[0].mxu0
  %v8620 = vadd.f32 0.0, %v8619
  %v8621 = vpop.f32.mrb[0].mxu0
  %8622 = vmatprep.mubr.f32.mxu0 0.0
  %8623 = vmatmul.mubr.f32.gmra.mrb[0].mxu0 %v8249
  %v8624 = vpop.f32.mrb[0].mxu0
  %v8625 = vadd.f32 0.0, %v8624
  %v8626 = vpop.f32.mrb[0].mxu0
  %8627 = vmatprep.mubr.f32.mxu0 0.0
  %8628 = vmatmul.mubr.f32.gmra.mrb[0].mxu0 %v8252
  %v8629 = vpop.f32.mrb[0].mxu0
  %v8630 = vadd.f32 0.0, %v8629
  %v8631 = vpop.f32.mrb[0].mxu0
  %8632 = vmatprep.mubr.f32.mxu0 0.0
  %8633 = vmatmul.mubr.f32.gmra.mrb[0].mxu0 %v8255
  %v8634 = vpop.f32.mrb[0].mxu0
  %v8635 = vadd.f32 0.0, %v8634
  %v8636 = vpop.f32.mrb[0].mxu0
  %8637 = vmatprep.mubr.f32.mxu0 0.0
  %8638 = vmatmul.mubr.f32.gmra.mrb[0].mxu0 %v8258
  %v8639 = vpop.f32.mrb[0].mxu0
  %v8640 = vadd.f32 0.0, %v8639
  %v8641 = vpop.f32.mrb[0].mxu0
  %8642 = vmatprep.mubr.f32.mxu0 0.0
  %8643 = vmatmul.mubr.f32.gmra.mrb[0].mxu0 %v8261
  %v8644 = vpop.f32.mrb[0].mxu0
  %v8645 = vadd.f32 0.0, %v8644
  %v8646 = vpop.f32.mrb[0].mxu0
  %8647 = vdwg.mxu0
  %v8648 = vld [vmem:[%s3 + $0x2] sm:$0x1]
  %v8649 = vld [vmem:[%s3 + $0x3] sm:$0x1]
  %v8650 = vsel %vm4096, %v8330, 0.0
  %v8651 = vsel %vm4096, %v8335, 0.0
  %v8652 = vadd.f32 %v8650, %v8651
  %v8653 = vsel %vm4096, %v8340, 0.0
  %v8654 = vadd.f32 %v8652, %v8653
  %v8655 = vsel %vm4096, %v8345, 0.0
  %v8656 = vadd.f32 %v8654, %v8655
  %v8657 = vsel %vm4096, %v8350, 0.0
  %v8658 = vadd.f32 %v8656, %v8657
  %v8659 = vsel %vm4096, %v8355, 0.0
  %v8660 = vadd.f32 %v8658, %v8659
  %v8661 = vsel %vm4096, %v8360, 0.0
  %v8662 = vadd.f32 %v8660, %v8661
  %v8663 = vsel %vm4096, %v8365, 0.0
  %v8664 = vadd.f32 %v8662, %v8663
  %v8665 = vsel %vm4096, %v8370, 0.0
  %v8666 = vadd.f32 %v8664, %v8665
  %v8667 = vsel %vm4096, %v8375, 0.0
  %v8668 = vadd.f32 %v8666, %v8667
  %v8669 = vsel %vm4096, %v8380, 0.0
  %v8670 = vadd.f32 %v8668, %v8669
  %v8671 = vsel %vm4096, %v8385, 0.0
  %v8672 = vadd.f32 %v8670, %v8671
  %v8673 = vsel %vm4096, %v8390, 0.0
  %v8674 = vadd.f32 %v8672, %v8673
  %v8675 = vsel %vm4096, %v8395, 0.0
  %v8676 = vadd.f32 %v8674, %v8675
  %v8677 = vsel %vm4096, %v8400, 0.0
  %v8678 = vadd.f32 %v8676, %v8677
  %v8679 = vsel %vm4096, %v8405, 0.0
  %v8680 = vadd.f32 %v8678, %v8679
  %v8681 = vsel %vm4096, %v8410, 0.0
  %v8682 = vadd.f32 %v8680, %v8681
  %v8683 = vsel %vm4096, %v8415, 0.0
  %v8684 = vadd.f32 %v8682, %v8683
  %v8685 = vsel %vm4096, %v8420, 0.0
  %v8686 = vadd.f32 %v8684, %v8685
  %v8687 = vsel %vm4096, %v8425, 0.0
  %v8688 = vadd.f32 %v8686, %v8687
  %v8689 = vsel %vm4096, %v8430, 0.0
  %v8690 = vadd.f32 %v8688, %v8689
  %v8691 = vsel %vm4096, %v8435, 0.0
  %v8692 = vadd.f32 %v8690, %v8691
  %v8693 = vsel %vm4096, %v8440, 0.0
  %v8694 = vadd.f32 %v8692, %v8693
  %v8695 = vsel %vm4096, %v8445, 0.0
  %v8696 = vadd.f32 %v8694, %v8695
  %v8697 = vsel %vm4096, %v8450, 0.0
  %v8698 = vadd.f32 %v8696, %v8697
  %v8699 = vsel %vm4096, %v8455, 0.0
  %v8700 = vadd.f32 %v8698, %v8699
  %v8701 = vsel %vm4096, %v8460, 0.0
  %v8702 = vadd.f32 %v8700, %v8701
  %v8703 = vsel %vm4096, %v8465, 0.0
  %v8704 = vadd.f32 %v8702, %v8703
  %v8705 = vsel %vm4096, %v8470, 0.0
  %v8706 = vadd.f32 %v8704, %v8705
  %v8707 = vsel %vm4096, %v8475, 0.0
  %v8708 = vadd.f32 %v8706, %v8707
  %v8709 = vsel %vm4096, %v8480, 0.0
  %v8710 = vadd.f32 %v8708, %v8709
  %v8711 = vsel %vm4096, %v8485, 0.0
  %v8712 = vadd.f32 %v8710, %v8711
  %v8713 = vsel %vm4096, %v8490, 0.0
  %v8714 = vadd.f32 %v8712, %v8713
  %v8715 = vsel %vm4096, %v8495, 0.0
  %v8716 = vadd.f32 %v8714, %v8715
  %v8717 = vsel %vm4096, %v8500, 0.0
  %v8718 = vadd.f32 %v8716, %v8717
  %v8719 = vsel %vm4096, %v8505, 0.0
  %v8720 = vadd.f32 %v8718, %v8719
  %v8721 = vsel %vm4096, %v8510, 0.0
  %v8722 = vadd.f32 %v8720, %v8721
  %v8723 = vsel %vm4096, %v8515, 0.0
  %v8724 = vadd.f32 %v8722, %v8723
  %v8725 = vsel %vm4096, %v8520, 0.0
  %v8726 = vadd.f32 %v8724, %v8725
  %v8727 = vsel %vm4096, %v8525, 0.0
  %v8728 = vadd.f32 %v8726, %v8727
  %v8729 = vsel %vm4096, %v8530, 0.0
  %v8730 = vadd.f32 %v8728, %v8729
  %v8731 = vsel %vm4096, %v8535, 0.0
  %v8732 = vadd.f32 %v8730, %v8731
  %v8733 = vsel %vm4096, %v8540, 0.0
  %v8734 = vadd.f32 %v8732, %v8733
  %v8735 = vsel %vm4096, %v8545, 0.0
  %v8736 = vadd.f32 %v8734, %v8735
  %v8737 = vsel %vm4096, %v8550, 0.0
  %v8738 = vadd.f32 %v8736, %v8737
  %v8739 = vsel %vm4096, %v8555, 0.0
  %v8740 = vadd.f32 %v8738, %v8739
  %v8741 = vsel %vm4096, %v8560, 0.0
  %v8742 = vadd.f32 %v8740, %v8741
  %v8743 = vsel %vm4096, %v8565, 0.0
  %v8744 = vadd.f32 %v8742, %v8743
  %v8745 = vsel %vm4096, %v8570, 0.0
  %v8746 = vadd.f32 %v8744, %v8745
  %v8747 = vsel %vm4096, %v8575, 0.0
  %v8748 = vadd.f32 %v8746, %v8747
  %v8749 = vsel %vm4096, %v8580, 0.0
  %v8750 = vadd.f32 %v8748, %v8749
  %v8751 = vsel %vm4096, %v8585, 0.0
  %v8752 = vadd.f32 %v8750, %v8751
  %v8753 = vsel %vm4096, %v8590, 0.0
  %v8754 = vadd.f32 %v8752, %v8753
  %v8755 = vsel %vm4096, %v8595, 0.0
  %v8756 = vadd.f32 %v8754, %v8755
  %v8757 = vsel %vm4096, %v8600, 0.0
  %v8758 = vadd.f32 %v8756, %v8757
  %v8759 = vsel %vm4096, %v8605, 0.0
  %v8760 = vadd.f32 %v8758, %v8759
  %v8761 = vsel %vm4096, %v8610, 0.0
  %v8762 = vadd.f32 %v8760, %v8761
  %v8763 = vsel %vm4096, %v8615, 0.0
  %v8764 = vadd.f32 %v8762, %v8763
  %v8765 = vsel %vm4096, %v8620, 0.0
  %v8766 = vadd.f32 %v8764, %v8765
  %v8767 = vsel %vm4096, %v8625, 0.0
  %v8768 = vadd.f32 %v8766, %v8767
  %v8769 = vsel %vm4096, %v8630, 0.0
  %v8770 = vadd.f32 %v8768, %v8769
  %v8771 = vsel %vm4096, %v8635, 0.0
  %v8772 = vadd.f32 %v8770, %v8771
  %v8773 = vsel %vm4096, %v8640, 0.0
  %v8774 = vadd.f32 %v8772, %v8773
  %v8775 = vsel %vm4096, %v8645, 0.0
  %v8776 = vadd.f32 %v8774, %v8775
  %v8777 = vrot.slane %v8776, 4
  %v8778 = vadd.f32 %v8776, %v8777
  %v8779 = vrot.slane %v8778, 2
  %v8780 = vadd.f32 %v8778, %v8779
  %v8781 = vrot.slane %v8780, 1
  %v8782 = vadd.f32 %v8780, %v8781
  %v8783 = vmul.f32 %v8782, 0.001953125
  %v8784 = vmul.f32 %v8330, %v8330
  %v8785 = vmul.f32 %v8335, %v8335
  %v8786 = vmul.f32 %v8340, %v8340
  %v8787 = vmul.f32 %v8345, %v8345
  %v8788 = vmul.f32 %v8350, %v8350
  %v8789 = vmul.f32 %v8355, %v8355
  %v8790 = vmul.f32 %v8360, %v8360
  %v8791 = vmul.f32 %v8365, %v8365
  %v8792 = vmul.f32 %v8370, %v8370
  %v8793 = vmul.f32 %v8375, %v8375
  %v8794 = vmul.f32 %v8380, %v8380
  %v8795 = vmul.f32 %v8385, %v8385
  %v8796 = vmul.f32 %v8390, %v8390
  %v8797 = vmul.f32 %v8395, %v8395
  %v8798 = vmul.f32 %v8400, %v8400
  %v8799 = vmul.f32 %v8405, %v8405
  %v8800 = vmul.f32 %v8410, %v8410
  %v8801 = vmul.f32 %v8415, %v8415
  %v8802 = vmul.f32 %v8420, %v8420
  %v8803 = vmul.f32 %v8425, %v8425
  %v8804 = vmul.f32 %v8430, %v8430
  %v8805 = vmul.f32 %v8435, %v8435
  %v8806 = vmul.f32 %v8440, %v8440
  %v8807 = vmul.f32 %v8445, %v8445
  %v8808 = vmul.f32 %v8450, %v8450
  %v8809 = vmul.f32 %v8455, %v8455
  %v8810 = vmul.f32 %v8460, %v8460
  %v8811 = vmul.f32 %v8465, %v8465
  %v8812 = vmul.f32 %v8470, %v8470
  %v8813 = vmul.f32 %v8475, %v8475
  %v8814 = vmul.f32 %v8480, %v8480
  %v8815 = vmul.f32 %v8485, %v8485
  %v8816 = vmul.f32 %v8490, %v8490
  %v8817 = vmul.f32 %v8495, %v8495
  %v8818 = vmul.f32 %v8500, %v8500
  %v8819 = vmul.f32 %v8505, %v8505
  %v8820 = vmul.f32 %v8510, %v8510
  %v8821 = vmul.f32 %v8515, %v8515
  %v8822 = vmul.f32 %v8520, %v8520
  %v8823 = vmul.f32 %v8525, %v8525
  %v8824 = vmul.f32 %v8530, %v8530
  %v8825 = vmul.f32 %v8535, %v8535
  %v8826 = vmul.f32 %v8540, %v8540
  %v8827 = vmul.f32 %v8545, %v8545
  %v8828 = vmul.f32 %v8550, %v8550
  %v8829 = vmul.f32 %v8555, %v8555
  %v8830 = vmul.f32 %v8560, %v8560
  %v8831 = vmul.f32 %v8565, %v8565
  %v8832 = vmul.f32 %v8570, %v8570
  %v8833 = vmul.f32 %v8575, %v8575
  %v8834 = vmul.f32 %v8580, %v8580
  %v8835 = vmul.f32 %v8585, %v8585
  %v8836 = vmul.f32 %v8590, %v8590
  %v8837 = vmul.f32 %v8595, %v8595
  %v8838 = vmul.f32 %v8600, %v8600
  %v8839 = vmul.f32 %v8605, %v8605
  %v8840 = vmul.f32 %v8610, %v8610
  %v8841 = vmul.f32 %v8615, %v8615
  %v8842 = vmul.f32 %v8620, %v8620
  %v8843 = vmul.f32 %v8625, %v8625
  %v8844 = vmul.f32 %v8630, %v8630
  %v8845 = vmul.f32 %v8635, %v8635
  %v8846 = vmul.f32 %v8640, %v8640
  %v8847 = vmul.f32 %v8645, %v8645
  %v8848 = vsel %vm4096, %v8784, 0.0
  %v8849 = vsel %vm4096, %v8785, 0.0
  %v8850 = vadd.f32 %v8848, %v8849
  %v8851 = vsel %vm4096, %v8786, 0.0
  %v8852 = vadd.f32 %v8850, %v8851
  %v8853 = vsel %vm4096, %v8787, 0.0
  %v8854 = vadd.f32 %v8852, %v8853
  %v8855 = vsel %vm4096, %v8788, 0.0
  %v8856 = vadd.f32 %v8854, %v8855
  %v8857 = vsel %vm4096, %v8789, 0.0
  %v8858 = vadd.f32 %v8856, %v8857
  %v8859 = vsel %vm4096, %v8790, 0.0
  %v8860 = vadd.f32 %v8858, %v8859
  %v8861 = vsel %vm4096, %v8791, 0.0
  %v8862 = vadd.f32 %v8860, %v8861
  %v8863 = vsel %vm4096, %v8792, 0.0
  %v8864 = vadd.f32 %v8862, %v8863
  %v8865 = vsel %vm4096, %v8793, 0.0
  %v8866 = vadd.f32 %v8864, %v8865
  %v8867 = vsel %vm4096, %v8794, 0.0
  %v8868 = vadd.f32 %v8866, %v8867
  %v8869 = vsel %vm4096, %v8795, 0.0
  %v8870 = vadd.f32 %v8868, %v8869
  %v8871 = vsel %vm4096, %v8796, 0.0
  %v8872 = vadd.f32 %v8870, %v8871
  %v8873 = vsel %vm4096, %v8797, 0.0
  %v8874 = vadd.f32 %v8872, %v8873
  %v8875 = vsel %vm4096, %v8798, 0.0
  %v8876 = vadd.f32 %v8874, %v8875
  %v8877 = vsel %vm4096, %v8799, 0.0
  %v8878 = vadd.f32 %v8876, %v8877
  %v8879 = vsel %vm4096, %v8800, 0.0
  %v8880 = vadd.f32 %v8878, %v8879
  %v8881 = vsel %vm4096, %v8801, 0.0
  %v8882 = vadd.f32 %v8880, %v8881
  %v8883 = vsel %vm4096, %v8802, 0.0
  %v8884 = vadd.f32 %v8882, %v8883
  %v8885 = vsel %vm4096, %v8803, 0.0
  %v8886 = vadd.f32 %v8884, %v8885
  %v8887 = vsel %vm4096, %v8804, 0.0
  %v8888 = vadd.f32 %v8886, %v8887
  %v8889 = vsel %vm4096, %v8805, 0.0
  %v8890 = vadd.f32 %v8888, %v8889
  %v8891 = vsel %vm4096, %v8806, 0.0
  %v8892 = vadd.f32 %v8890, %v8891
  %v8893 = vsel %vm4096, %v8807, 0.0
  %v8894 = vadd.f32 %v8892, %v8893
  %v8895 = vsel %vm4096, %v8808, 0.0
  %v8896 = vadd.f32 %v8894, %v8895
  %v8897 = vsel %vm4096, %v8809, 0.0
  %v8898 = vadd.f32 %v8896, %v8897
  %v8899 = vsel %vm4096, %v8810, 0.0
  %v8900 = vadd.f32 %v8898, %v8899
  %v8901 = vsel %vm4096, %v8811, 0.0
  %v8902 = vadd.f32 %v8900, %v8901
  %v8903 = vsel %vm4096, %v8812, 0.0
  %v8904 = vadd.f32 %v8902, %v8903
  %v8905 = vsel %vm4096, %v8813, 0.0
  %v8906 = vadd.f32 %v8904, %v8905
  %v8907 = vsel %vm4096, %v8814, 0.0
  %v8908 = vadd.f32 %v8906, %v8907
  %v8909 = vsel %vm4096, %v8815, 0.0
  %v8910 = vadd.f32 %v8908, %v8909
  %v8911 = vsel %vm4096, %v8816, 0.0
  %v8912 = vadd.f32 %v8910, %v8911
  %v8913 = vsel %vm4096, %v8817, 0.0
  %v8914 = vadd.f32 %v8912, %v8913
  %v8915 = vsel %vm4096, %v8818, 0.0
  %v8916 = vadd.f32 %v8914, %v8915
  %v8917 = vsel %vm4096, %v8819, 0.0
  %v8918 = vadd.f32 %v8916, %v8917
  %v8919 = vsel %vm4096, %v8820, 0.0
  %v8920 = vadd.f32 %v8918, %v8919
  %v8921 = vsel %vm4096, %v8821, 0.0
  %v8922 = vadd.f32 %v8920, %v8921
  %v8923 = vsel %vm4096, %v8822, 0.0
  %v8924 = vadd.f32 %v8922, %v8923
  %v8925 = vsel %vm4096, %v8823, 0.0
  %v8926 = vadd.f32 %v8924, %v8925
  %v8927 = vsel %vm4096, %v8824, 0.0
  %v8928 = vadd.f32 %v8926, %v8927
  %v8929 = vsel %vm4096, %v8825, 0.0
  %v8930 = vadd.f32 %v8928, %v8929
  %v8931 = vsel %vm4096, %v8826, 0.0
  %v8932 = vadd.f32 %v8930, %v8931
  %v8933 = vsel %vm4096, %v8827, 0.0
  %v8934 = vadd.f32 %v8932, %v8933
  %v8935 = vsel %vm4096, %v8828, 0.0
  %v8936 = vadd.f32 %v8934, %v8935
  %v8937 = vsel %vm4096, %v8829, 0.0
  %v8938 = vadd.f32 %v8936, %v8937
  %v8939 = vsel %vm4096, %v8830, 0.0
  %v8940 = vadd.f32 %v8938, %v8939
  %v8941 = vsel %vm4096, %v8831, 0.0
  %v8942 = vadd.f32 %v8940, %v8941
  %v8943 = vsel %vm4096, %v8832, 0.0
  %v8944 = vadd.f32 %v8942, %v8943
  %v8945 = vsel %vm4096, %v8833, 0.0
  %v8946 = vadd.f32 %v8944, %v8945
  %v8947 = vsel %vm4096, %v8834, 0.0
  %v8948 = vadd.f32 %v8946, %v8947
  %v8949 = vsel %vm4096, %v8835, 0.0
  %v8950 = vadd.f32 %v8948, %v8949
  %v8951 = vsel %vm4096, %v8836, 0.0
  %v8952 = vadd.f32 %v8950, %v8951
  %v8953 = vsel %vm4096, %v8837, 0.0
  %v8954 = vadd.f32 %v8952, %v8953
  %v8955 = vsel %vm4096, %v8838, 0.0
  %v8956 = vadd.f32 %v8954, %v8955
  %v8957 = vsel %vm4096, %v8839, 0.0
  %v8958 = vadd.f32 %v8956, %v8957
  %v8959 = vsel %vm4096, %v8840, 0.0
  %v8960 = vadd.f32 %v8958, %v8959
  %v8961 = vsel %vm4096, %v8841, 0.0
  %v8962 = vadd.f32 %v8960, %v8961
  %v8963 = vsel %vm4096, %v8842, 0.0
  %v8964 = vadd.f32 %v8962, %v8963
  %v8965 = vsel %vm4096, %v8843, 0.0
  %v8966 = vadd.f32 %v8964, %v8965
  %v8967 = vsel %vm4096, %v8844, 0.0
  %v8968 = vadd.f32 %v8966, %v8967
  %v8969 = vsel %vm4096, %v8845, 0.0
  %v8970 = vadd.f32 %v8968, %v8969
  %v8971 = vsel %vm4096, %v8846, 0.0
  %v8972 = vadd.f32 %v8970, %v8971
  %v8973 = vsel %vm4096, %v8847, 0.0
  %v8974 = vadd.f32 %v8972, %v8973
  %v8975 = vrot.slane %v8974, 4
  %v8976 = vadd.f32 %v8974, %v8975
  %v8977 = vrot.slane %v8976, 2
  %v8978 = vadd.f32 %v8976, %v8977
  %v8979 = vrot.slane %v8978, 1
  %v8980 = vadd.f32 %v8978, %v8979
  %v8981 = vmul.f32 %v8980, 0.001953125
  %v8982 = vmul.f32 %v8783, %v8783
  %v8983 = vsub.f32 %v8981, %v8982
  %v8984 = vadd.f32 %v8983, 1e-05
  %v8985 = vrsqrt.pop %v8984
  %v8986 = vmul.f32 %v8648, %v8985
  %v8987 = vmul.f32 %v8783, %v8986
  %v8988 = vsub.f32 %v8649, %v8987
  %v8989 = vlaneseq
  %v8990 = vshrl.u32 %v8989, 7
  %v8991 = vsub.s32 0, %v8990
  %v8992 = vrot.slane %v8986, %v8991
  %v8993 = vmul.f32 %v8330, %v8992
  %v8994 = vmul.f32 %v8335, %v8992
  %v8995 = vmul.f32 %v8340, %v8992
  %v8996 = vmul.f32 %v8345, %v8992
  %v8997 = vmul.f32 %v8350, %v8992
  %v8998 = vmul.f32 %v8355, %v8992
  %v8999 = vmul.f32 %v8360, %v8992
  %v9000 = vmul.f32 %v8365, %v8992
  %v9001 = vmul.f32 %v8370, %v8992
  %v9002 = vmul.f32 %v8375, %v8992
  %v9003 = vmul.f32 %v8380, %v8992
  %v9004 = vmul.f32 %v8385, %v8992
  %v9005 = vmul.f32 %v8390, %v8992
  %v9006 = vmul.f32 %v8395, %v8992
  %v9007 = vmul.f32 %v8400, %v8992
  %v9008 = vmul.f32 %v8405, %v8992
  %v9009 = vmul.f32 %v8410, %v8992
  %v9010 = vmul.f32 %v8415, %v8992
  %v9011 = vmul.f32 %v8420, %v8992
  %v9012 = vmul.f32 %v8425, %v8992
  %v9013 = vmul.f32 %v8430, %v8992
  %v9014 = vmul.f32 %v8435, %v8992
  %v9015 = vmul.f32 %v8440, %v8992
  %v9016 = vmul.f32 %v8445, %v8992
  %v9017 = vmul.f32 %v8450, %v8992
  %v9018 = vmul.f32 %v8455, %v8992
  %v9019 = vmul.f32 %v8460, %v8992
  %v9020 = vmul.f32 %v8465, %v8992
  %v9021 = vmul.f32 %v8470, %v8992
  %v9022 = vmul.f32 %v8475, %v8992
  %v9023 = vmul.f32 %v8480, %v8992
  %v9024 = vmul.f32 %v8485, %v8992
  %v9025 = vmul.f32 %v8490, %v8992
  %v9026 = vmul.f32 %v8495, %v8992
  %v9027 = vmul.f32 %v8500, %v8992
  %v9028 = vmul.f32 %v8505, %v8992
  %v9029 = vmul.f32 %v8510, %v8992
  %v9030 = vmul.f32 %v8515, %v8992
  %v9031 = vmul.f32 %v8520, %v8992
  %v9032 = vmul.f32 %v8525, %v8992
  %v9033 = vmul.f32 %v8530, %v8992
  %v9034 = vmul.f32 %v8535, %v8992
  %v9035 = vmul.f32 %v8540, %v8992
  %v9036 = vmul.f32 %v8545, %v8992
  %v9037 = vmul.f32 %v8550, %v8992
  %v9038 = vmul.f32 %v8555, %v8992
  %v9039 = vmul.f32 %v8560, %v8992
  %v9040 = vmul.f32 %v8565, %v8992
  %v9041 = vmul.f32 %v8570, %v8992
  %v9042 = vmul.f32 %v8575, %v8992
  %v9043 = vmul.f32 %v8580, %v8992
  %v9044 = vmul.f32 %v8585, %v8992
  %v9045 = vmul.f32 %v8590, %v8992
  %v9046 = vmul.f32 %v8595, %v8992
  %v9047 = vmul.f32 %v8600, %v8992
  %v9048 = vmul.f32 %v8605, %v8992
  %v9049 = vmul.f32 %v8610, %v8992
  %v9050 = vmul.f32 %v8615, %v8992
  %v9051 = vmul.f32 %v8620, %v8992
  %v9052 = vmul.f32 %v8625, %v8992
  %v9053 = vmul.f32 %v8630, %v8992
  %v9054 = vmul.f32 %v8635, %v8992
  %v9055 = vmul.f32 %v8640, %v8992
  %v9056 = vmul.f32 %v8645, %v8992
  %v9057 = vlaneseq
  %v9058 = vshrl.u32 %v9057, 7
  %v9059 = vsub.s32 0, %v9058
  %v9060 = vrot.slane %v8988, %v9059
  %v9061 = vadd.f32 %v8993, %v9060
  %v9062 = vadd.f32 %v8994, %v9060
  %v9063 = vadd.f32 %v8995, %v9060
  %v9064 = vadd.f32 %v8996, %v9060
  %v9065 = vadd.f32 %v8997, %v9060
  %v9066 = vadd.f32 %v8998, %v9060
  %v9067 = vadd.f32 %v8999, %v9060
  %v9068 = vadd.f32 %v9000, %v9060
  %v9069 = vadd.f32 %v9001, %v9060
  %v9070 = vadd.f32 %v9002, %v9060
  %v9071 = vadd.f32 %v9003, %v9060
  %v9072 = vadd.f32 %v9004, %v9060
  %v9073 = vadd.f32 %v9005, %v9060
  %v9074 = vadd.f32 %v9006, %v9060
  %v9075 = vadd.f32 %v9007, %v9060
  %v9076 = vadd.f32 %v9008, %v9060
  %v9077 = vadd.f32 %v9009, %v9060
  %v9078 = vadd.f32 %v9010, %v9060
  %v9079 = vadd.f32 %v9011, %v9060
  %v9080 = vadd.f32 %v9012, %v9060
  %v9081 = vadd.f32 %v9013, %v9060
  %v9082 = vadd.f32 %v9014, %v9060
  %v9083 = vadd.f32 %v9015, %v9060
  %v9084 = vadd.f32 %v9016, %v9060
  %v9085 = vadd.f32 %v9017, %v9060
  %v9086 = vadd.f32 %v9018, %v9060
  %v9087 = vadd.f32 %v9019, %v9060
  %v9088 = vadd.f32 %v9020, %v9060
  %v9089 = vadd.f32 %v9021, %v9060
  %v9090 = vadd.f32 %v9022, %v9060
  %v9091 = vadd.f32 %v9023, %v9060
  %v9092 = vadd.f32 %v9024, %v9060
  %v9093 = vadd.f32 %v9025, %v9060
  %v9094 = vadd.f32 %v9026, %v9060
  %v9095 = vadd.f32 %v9027, %v9060
  %v9096 = vadd.f32 %v9028, %v9060
  %v9097 = vadd.f32 %v9029, %v9060
  %v9098 = vadd.f32 %v9030, %v9060
  %v9099 = vadd.f32 %v9031, %v9060
  %v9100 = vadd.f32 %v9032, %v9060
  %v9101 = vadd.f32 %v9033, %v9060
  %v9102 = vadd.f32 %v9034, %v9060
  %v9103 = vadd.f32 %v9035, %v9060
  %v9104 = vadd.f32 %v9036, %v9060
  %v9105 = vadd.f32 %v9037, %v9060
  %v9106 = vadd.f32 %v9038, %v9060
  %v9107 = vadd.f32 %v9039, %v9060
  %v9108 = vadd.f32 %v9040, %v9060
  %v9109 = vadd.f32 %v9041, %v9060
  %v9110 = vadd.f32 %v9042, %v9060
  %v9111 = vadd.f32 %v9043, %v9060
  %v9112 = vadd.f32 %v9044, %v9060
  %v9113 = vadd.f32 %v9045, %v9060
  %v9114 = vadd.f32 %v9046, %v9060
  %v9115 = vadd.f32 %v9047, %v9060
  %v9116 = vadd.f32 %v9048, %v9060
  %v9117 = vadd.f32 %v9049, %v9060
  %v9118 = vadd.f32 %v9050, %v9060
  %v9119 = vadd.f32 %v9051, %v9060
  %v9120 = vadd.f32 %v9052, %v9060
  %v9121 = vadd.f32 %v9053, %v9060
  %v9122 = vadd.f32 %v9054, %v9060
  %v9123 = vadd.f32 %v9055, %v9060
  %v9124 = vadd.f32 %v9056, %v9060
  %v9125 = vmax.f32 %v9061, 0.0
  %v9126 = vmax.f32 %v9062, 0.0
  %v9127 = vmax.f32 %v9063, 0.0
  %v9128 = vmax.f32 %v9064, 0.0
  %v9129 = vmax.f32 %v9065, 0.0
  %v9130 = vmax.f32 %v9066, 0.0
  %v9131 = vmax.f32 %v9067, 0.0
  %v9132 = vmax.f32 %v9068, 0.0
  %v9133 = vmax.f32 %v9069, 0.0
  %v9134 = vmax.f32 %v9070, 0.0
  %v9135 = vmax.f32 %v9071, 0.0
  %v9136 = vmax.f32 %v9072, 0.0
  %v9137 = vmax.f32 %v9073, 0.0
  %v9138 = vmax.f32 %v9074, 0.0
  %v9139 = vmax.f32 %v9075, 0.0
  %v9140 = vmax.f32 %v9076, 0.0
  %v9141 = vmax.f32 %v9077, 0.0
  %v9142 = vmax.f32 %v9078, 0.0
  %v9143 = vmax.f32 %v9079, 0.0
  %v9144 = vmax.f32 %v9080, 0.0
  %v9145 = vmax.f32 %v9081, 0.0
  %v9146 = vmax.f32 %v9082, 0.0
  %v9147 = vmax.f32 %v9083, 0.0
  %v9148 = vmax.f32 %v9084, 0.0
  %v9149 = vmax.f32 %v9085, 0.0
  %v9150 = vmax.f32 %v9086, 0.0
  %v9151 = vmax.f32 %v9087, 0.0
  %v9152 = vmax.f32 %v9088, 0.0
  %v9153 = vmax.f32 %v9089, 0.0
  %v9154 = vmax.f32 %v9090, 0.0
  %v9155 = vmax.f32 %v9091, 0.0
  %v9156 = vmax.f32 %v9092, 0.0
  %v9157 = vmax.f32 %v9093, 0.0
  %v9158 = vmax.f32 %v9094, 0.0
  %v9159 = vmax.f32 %v9095, 0.0
  %v9160 = vmax.f32 %v9096, 0.0
  %v9161 = vmax.f32 %v9097, 0.0
  %v9162 = vmax.f32 %v9098, 0.0
  %v9163 = vmax.f32 %v9099, 0.0
  %v9164 = vmax.f32 %v9100, 0.0
  %v9165 = vmax.f32 %v9101, 0.0
  %v9166 = vmax.f32 %v9102, 0.0
  %v9167 = vmax.f32 %v9103, 0.0
  %v9168 = vmax.f32 %v9104, 0.0
  %v9169 = vmax.f32 %v9105, 0.0
  %v9170 = vmax.f32 %v9106, 0.0
  %v9171 = vmax.f32 %v9107, 0.0
  %v9172 = vmax.f32 %v9108, 0.0
  %v9173 = vmax.f32 %v9109, 0.0
  %v9174 = vmax.f32 %v9110, 0.0
  %v9175 = vmax.f32 %v9111, 0.0
  %v9176 = vmax.f32 %v9112, 0.0
  %v9177 = vmax.f32 %v9113, 0.0
  %v9178 = vmax.f32 %v9114, 0.0
  %v9179 = vmax.f32 %v9115, 0.0
  %v9180 = vmax.f32 %v9116, 0.0
  %v9181 = vmax.f32 %v9117, 0.0
  %v9182 = vmax.f32 %v9118, 0.0
  %v9183 = vmax.f32 %v9119, 0.0
  %v9184 = vmax.f32 %v9120, 0.0
  %v9185 = vmax.f32 %v9121, 0.0
  %v9186 = vmax.f32 %v9122, 0.0
  %v9187 = vmax.f32 %v9123, 0.0
  %v9188 = vmax.f32 %v9124, 0.0
  %9189 = vst.msk [vmem:[%s4] sm:$0xff] %vm4096, %v9125
  %9190 = vst.msk [vmem:[%s4 + $0x8] sm:$0xff] %vm4096, %v9126
  %9191 = vst.msk [vmem:[%s4 + $0x10] sm:$0xff] %vm4096, %v9127
  %9192 = vst.msk [vmem:[%s4 + $0x18] sm:$0xff] %vm4096, %v9128
  %9193 = vst.msk [vmem:[%s4 + $0x20] sm:$0xff] %vm4096, %v9129
  %9194 = vst.msk [vmem:[%s4 + $0x28] sm:$0xff] %vm4096, %v9130
  %9195 = vst.msk [vmem:[%s4 + $0x30] sm:$0xff] %vm4096, %v9131
  %9196 = vst.msk [vmem:[%s4 + $0x38] sm:$0xff] %vm4096, %v9132
  %9197 = vst.msk [vmem:[%s4 + $0x40] sm:$0xff] %vm4096, %v9133
  %9198 = vst.msk [vmem:[%s4 + $0x48] sm:$0xff] %vm4096, %v9134
  %9199 = vst.msk [vmem:[%s4 + $0x50] sm:$0xff] %vm4096, %v9135
  %9200 = vst.msk [vmem:[%s4 + $0x58] sm:$0xff] %vm4096, %v9136
  %9201 = vst.msk [vmem:[%s4 + $0x60] sm:$0xff] %vm4096, %v9137
  %9202 = vst.msk [vmem:[%s4 + $0x68] sm:$0xff] %vm4096, %v9138
  %9203 = vst.msk [vmem:[%s4 + $0x70] sm:$0xff] %vm4096, %v9139
  %9204 = vst.msk [vmem:[%s4 + $0x78] sm:$0xff] %vm4096, %v9140
  %9205 = vst.msk [vmem:[%s4 + $0x80] sm:$0xff] %vm4096, %v9141
  %9206 = vst.msk [vmem:[%s4 + $0x88] sm:$0xff] %vm4096, %v9142
  %9207 = vst.msk [vmem:[%s4 + $0x90] sm:$0xff] %vm4096, %v9143
  %9208 = vst.msk [vmem:[%s4 + $0x98] sm:$0xff] %vm4096, %v9144
  %9209 = vst.msk [vmem:[%s4 + $0xa0] sm:$0xff] %vm4096, %v9145
  %9210 = vst.msk [vmem:[%s4 + $0xa8] sm:$0xff] %vm4096, %v9146
  %9211 = vst.msk [vmem:[%s4 + $0xb0] sm:$0xff] %vm4096, %v9147
  %9212 = vst.msk [vmem:[%s4 + $0xb8] sm:$0xff] %vm4096, %v9148
  %9213 = vst.msk [vmem:[%s4 + $0xc0] sm:$0xff] %vm4096, %v9149
  %9214 = vst.msk [vmem:[%s4 + $0xc8] sm:$0xff] %vm4096, %v9150
  %9215 = vst.msk [vmem:[%s4 + $0xd0] sm:$0xff] %vm4096, %v9151
  %9216 = vst.msk [vmem:[%s4 + $0xd8] sm:$0xff] %vm4096, %v9152
  %9217 = vst.msk [vmem:[%s4 + $0xe0] sm:$0xff] %vm4096, %v9153
  %9218 = vst.msk [vmem:[%s4 + $0xe8] sm:$0xff] %vm4096, %v9154
  %9219 = vst.msk [vmem:[%s4 + $0xf0] sm:$0xff] %vm4096, %v9155
  %9220 = vst.msk [vmem:[%s4 + $0xf8] sm:$0xff] %vm4096, %v9156
  %9221 = vst.msk [vmem:[%s4 + $0x100] sm:$0xff] %vm4096, %v9157
  %9222 = vst.msk [vmem:[%s4 + $0x108] sm:$0xff] %vm4096, %v9158
  %9223 = vst.msk [vmem:[%s4 + $0x110] sm:$0xff] %vm4096, %v9159
  %9224 = vst.msk [vmem:[%s4 + $0x118] sm:$0xff] %vm4096, %v9160
  %9225 = vst.msk [vmem:[%s4 + $0x120] sm:$0xff] %vm4096, %v9161
  %9226 = vst.msk [vmem:[%s4 + $0x128] sm:$0xff] %vm4096, %v9162
  %9227 = vst.msk [vmem:[%s4 + $0x130] sm:$0xff] %vm4096, %v9163
  %9228 = vst.msk [vmem:[%s4 + $0x138] sm:$0xff] %vm4096, %v9164
  %9229 = vst.msk [vmem:[%s4 + $0x140] sm:$0xff] %vm4096, %v9165
  %9230 = vst.msk [vmem:[%s4 + $0x148] sm:$0xff] %vm4096, %v9166
  %9231 = vst.msk [vmem:[%s4 + $0x150] sm:$0xff] %vm4096, %v9167
  %9232 = vst.msk [vmem:[%s4 + $0x158] sm:$0xff] %vm4096, %v9168
  %9233 = vst.msk [vmem:[%s4 + $0x160] sm:$0xff] %vm4096, %v9169
  %9234 = vst.msk [vmem:[%s4 + $0x168] sm:$0xff] %vm4096, %v9170
  %9235 = vst.msk [vmem:[%s4 + $0x170] sm:$0xff] %vm4096, %v9171
  %9236 = vst.msk [vmem:[%s4 + $0x178] sm:$0xff] %vm4096, %v9172
  %9237 = vst.msk [vmem:[%s4 + $0x180] sm:$0xff] %vm4096, %v9173
  %9238 = vst.msk [vmem:[%s4 + $0x188] sm:$0xff] %vm4096, %v9174
  %9239 = vst.msk [vmem:[%s4 + $0x190] sm:$0xff] %vm4096, %v9175
  %9240 = vst.msk [vmem:[%s4 + $0x198] sm:$0xff] %vm4096, %v9176
  %9241 = vst.msk [vmem:[%s4 + $0x1a0] sm:$0xff] %vm4096, %v9177
  %9242 = vst.msk [vmem:[%s4 + $0x1a8] sm:$0xff] %vm4096, %v9178
  %9243 = vst.msk [vmem:[%s4 + $0x1b0] sm:$0xff] %vm4096, %v9179
  %9244 = vst.msk [vmem:[%s4 + $0x1b8] sm:$0xff] %vm4096, %v9180
  %9245 = vst.msk [vmem:[%s4 + $0x1c0] sm:$0xff] %vm4096, %v9181
  %9246 = vst.msk [vmem:[%s4 + $0x1c8] sm:$0xff] %vm4096, %v9182
  %9247 = vst.msk [vmem:[%s4 + $0x1d0] sm:$0xff] %vm4096, %v9183
  %9248 = vst.msk [vmem:[%s4 + $0x1d8] sm:$0xff] %vm4096, %v9184
  %9249 = vst.msk [vmem:[%s4 + $0x1e0] sm:$0xff] %vm4096, %v9185
  %9250 = vst.msk [vmem:[%s4 + $0x1e8] sm:$0xff] %vm4096, %v9186
  %9251 = vst.msk [vmem:[%s4 + $0x1f0] sm:$0xff] %vm4096, %v9187
  %9252 = vst.msk [vmem:[%s4 + $0x1f8] sm:$0xff] %vm4096, %v9188
  // Predicated region
  $region18: #{double_conv_forward.1} parent=0 // pred_check
    _
  $region19: #{double_conv_forward.1} parent=0 // pred_check_branch
    %9254 = sbr.rel (0) target = $region21
  $region20: #{double_conv_forward.1} parent=0 // pred_region
    _
  $region21: #{double_conv_forward.1} parent=0 // pred_fallthru
    _
  // Predicated region
  $region22: #{double_conv_forward.1} parent=0 // pred_check
    _
  $region23: #{double_conv_forward.1} parent=0 // pred_check_branch
    %9256 = sbr.rel (0) target = $region25
  $region24: #{double_conv_forward.1} parent=0 // pred_region
    _
  $region25: #{double_conv_forward.1} parent=0 // pred_fallthru
    _

</llo_original>
